<compile_context>
chip_gen: v7x
topology: tpu7x:2x2x1
jax: 0.10.0
libtpu: 0.0.40
codegen_flags: <defaults>
</compile_context>

<pallas_src>
import numpy as np
import jax
import jax.numpy as jnp
from jax.experimental import pallas as pl
from jax.experimental.pallas import tpu as pltpu


# ---------------------------------------------------------------------------
# Pallas kernel 1: plain matmul + bias   (1x1 feature reduction, prob layer)
#   col3: (Nb, K, S) bf16,  w: (rows, K) bf16,  b: (rows, 1) f32
#   out : (Nb, rows, S) f32,  grid over Nb ("parallel" -> megacore)
# ---------------------------------------------------------------------------
def _matmul_bias_kernel(col_ref, w_ref, b_ref, o_ref):
    o_ref[0] = (
        jnp.dot(w_ref[...], col_ref[0], preferred_element_type=jnp.float32)
        + b_ref[...]
    )


def pallas_matmul_bias(col3, w, b):
    Nb, K, S = col3.shape
    rows = w.shape[0]
    return pl.pallas_call(
        _matmul_bias_kernel,
        out_shape=jax.ShapeDtypeStruct((Nb, rows, S), jnp.float32),
        grid=(Nb,),
        in_specs=[
            pl.BlockSpec((1, K, S), lambda i: (i, 0, 0)),
            pl.BlockSpec((rows, K), lambda i: (0, 0)),
            pl.BlockSpec((rows, 1), lambda i: (0, 0)),
        ],
        out_specs=pl.BlockSpec((1, rows, S), lambda i: (i, 0, 0)),
        compiler_params=pltpu.CompilerParams(dimension_semantics=("parallel",)),
    )(col3.astype(jnp.bfloat16),
      w.astype(jnp.bfloat16),
      b.reshape(rows, 1).astype(jnp.float32))


# ---------------------------------------------------------------------------
# Pallas kernel 2: fused matmul + bias + GroupNorm + ReLU
#   One batch sample per grid step.  Group statistics via a (G, rows) indicator
#   matmul (pre-scaled by 1/count) + lane-axis sums; gamma/beta are (rows, 1).
# ---------------------------------------------------------------------------
def _matmul_gn_relu_kernel(col_ref, w_ref, b_ref, gamma_ref, beta_ref,
                           sg_ref, sgt_ref, o_ref):
    x = (jnp.dot(w_ref[...], col_ref[0], preferred_element_type=jnp.float32)
         + b_ref[...])                                           # (rows, S) f32
    s1 = jnp.sum(x, axis=1, keepdims=True)                       # (rows, 1)
    s2 = jnp.sum(x * x, axis=1, keepdims=True)
    m_g = jnp.dot(sg_ref[...], s1, preferred_element_type=jnp.float32)     # (G,1) mean
    m2_g = jnp.dot(sg_ref[...], s2, preferred_element_type=jnp.float32)    # (G,1) E[x^2]
    mean = jnp.dot(sgt_ref[...], m_g, preferred_element_type=jnp.float32)   # (rows,1)
    mean2 = jnp.dot(sgt_ref[...], m2_g, preferred_element_type=jnp.float32)
    var = jnp.maximum(mean2 - mean * mean, 0.0)
    xh = (x - mean) * jax.lax.rsqrt(var + 1e-5)
    o_ref[0] = jnp.maximum(xh * gamma_ref[...] + beta_ref[...], 0.0)


def _fused_matmul_gn_relu_call(col3, wm_bf16, bias, gamma_rows, beta_rows,
                               group_of_row, num_groups):
    B, K, S = col3.shape
    rows = wm_bf16.shape[0]
    G = num_groups
    count = (rows // G) * S                       # elements per (batch, group)
    gor = np.asarray(group_of_row)
    sg = np.zeros((G, rows), np.float32)
    sg[gor, np.arange(rows)] = 1.0 / count        # scaled group-sum indicator
    sgt = np.zeros((rows, G), np.float32)
    sgt[np.arange(rows), gor] = 1.0               # broadcast-back indicator
    return pl.pallas_call(
        _matmul_gn_relu_kernel,
        out_shape=jax.ShapeDtypeStruct((B, rows, S), jnp.float32),
        grid=(B,),
        in_specs=[
            pl.BlockSpec((1, K, S), lambda b: (b, 0, 0)),
            pl.BlockSpec((rows, K), lambda b: (0, 0)),
            pl.BlockSpec((rows, 1), lambda b: (0, 0)),
            pl.BlockSpec((rows, 1), lambda b: (0, 0)),
            pl.BlockSpec((rows, 1), lambda b: (0, 0)),
            pl.BlockSpec((G, rows), lambda b: (0, 0)),
            pl.BlockSpec((rows, G), lambda b: (0, 0)),
        ],
        out_specs=pl.BlockSpec((1, rows, S), lambda b: (b, 0, 0)),
        compiler_params=pltpu.CompilerParams(dimension_semantics=("parallel",)),
    )(col3.astype(jnp.bfloat16), wm_bf16,
      bias.reshape(rows, 1).astype(jnp.float32),
      gamma_rows.reshape(rows, 1).astype(jnp.float32),
      beta_rows.reshape(rows, 1).astype(jnp.float32),
      jnp.asarray(sg), jnp.asarray(sgt))


# ---------------------------------------------------------------------------
# Pallas kernel 3: softmax over hypotheses + plane regression (all batches in
# one block, batched einsum on the MXU; hypothesis rows padded 3 -> 8)
# ---------------------------------------------------------------------------
def _softmax_reg_kernel(c_ref, h_ref, o_ref):
    c = c_ref[...]                                   # (B, n, hw) f32
    m = jnp.max(c, axis=1, keepdims=True)
    e = jnp.exp(c - m)
    p = e / jnp.sum(e, axis=1, keepdims=True)        # softmax over hypotheses
    o_ref[...] = jnp.einsum('bkn,bnj->bkj', h_ref[...], p,
                            preferred_element_type=jnp.float32)


def pallas_softmax_plane_regression(cost, hypos):
    """cost: (B, n, H, W); hypos: (B, n, 3) -> plane map (B, 3, H, W)."""
    B, n, H, W = cost.shape
    hw = H * W
    c = cost.reshape(B, n, hw).astype(jnp.float32)
    hyp_t = jnp.transpose(hypos, (0, 2, 1)).astype(jnp.float32)       # (B, 3, n)
    hyp_p = jnp.zeros((B, 8, n), jnp.float32).at[:, :3].set(hyp_t)    # pad rows 3->8
    out = pl.pallas_call(
        _softmax_reg_kernel,
        out_shape=jax.ShapeDtypeStruct((B, 8, hw), jnp.float32),
        grid=(1,),
        in_specs=[
            pl.BlockSpec((B, n, hw), lambda i: (0, 0, 0)),
            pl.BlockSpec((B, 8, n), lambda i: (0, 0, 0)),
        ],
        out_specs=pl.BlockSpec((B, 8, hw), lambda i: (0, 0, 0)),
        compiler_params=pltpu.CompilerParams(dimension_semantics=("arbitrary",)),
    )(c, hyp_p)
    return out[:, :3].reshape(B, 3, H, W)


# ---------------------------------------------------------------------------
# Conv wrappers built on the fused Pallas kernels (NCDHW kept end-to-end)
# ---------------------------------------------------------------------------
def _im2col_taps(x, stride):
    """x: (B, Cin, D, H, W) -> col3: (B, 27*Cin, Do*Ho*Wo), pad=1, k=3."""
    B, Cin, D, H, W = x.shape
    xp = jnp.pad(x, ((0, 0), (0, 0), (1, 1), (1, 1), (1, 1)))
    Do = (D + 2 - 3) // stride + 1
    Ho = (H + 2 - 3) // stride + 1
    Wo = (W + 2 - 3) // stride + 1
    taps = []
    for a in range(3):
        for bb in range(3):
            for cc in range(3):
                taps.append(xp[:, :,
                               a:a + Do * stride:stride,
                               bb:bb + Ho * stride:stride,
                               cc:cc + Wo * stride:stride])
    col = jnp.stack(taps, axis=1).reshape(B, 27 * Cin, Do * Ho * Wo)
    # TODO(synk): at production resolutions move this 27-tap expansion into the
    # Pallas kernel (strided VMEM reads + accumulation) to avoid the HBM blow-up.
    return col, (Do, Ho, Wo)


def conv3d_gn_relu(x, p, stride=1, num_groups=8):
    """Conv3d(k=3,pad=1,bias) + GroupNorm(8) + ReLU, fused in one pallas_call."""
    w, b, gamma, beta = p['w'], p['b'], p['gamma'], p['beta']
    B, Cin = x.shape[0], x.shape[1]
    Cout = w.shape[0]
    col, (Do, Ho, Wo) = _im2col_taps(x, stride)
    wm = w.transpose(0, 2, 3, 4, 1).reshape(Cout, 27 * Cin).astype(jnp.bfloat16)
    group_of_row = np.arange(Cout) // (Cout // num_groups)
    y = _fused_matmul_gn_relu_call(col, wm, b, gamma, beta, group_of_row, num_groups)
    return y.reshape(B, Cout, Do, Ho, Wo)


def conv3d_plain(x, p):
    """Conv3d(k=3,pad=1,bias), no norm / activation (the `prob` layer).

    Output rows are zero-padded to 8 so the MXU matmul / stores use full
    sublanes; the real channel(s) are sliced back afterwards."""
    w, b = p['w'], p['b']
    B, Cin = x.shape[0], x.shape[1]
    Cout = w.shape[0]
    col, (Do, Ho, Wo) = _im2col_taps(x, 1)
    rows_pad = max(8, Cout)
    wm = jnp.zeros((rows_pad, 27 * Cin), w.dtype).at[:Cout].set(
        w.transpose(0, 2, 3, 4, 1).reshape(Cout, 27 * Cin))
    bp = jnp.zeros((rows_pad,), jnp.float32).at[:Cout].set(b)
    y = pallas_matmul_bias(col, wm, bp)
    return y[:, :Cout].reshape(B, Cout, Do, Ho, Wo)


def _phase_k(p_, o_):
    """ConvTranspose3d(k=3,s=2,p=1,op=1) per-dim (phase, offset) -> kernel idx."""
    if p_ == 0:
        return 1 if o_ == 0 else None
    return 2 if o_ == 0 else 0


def deconv3d_gn_relu(x, p, num_groups=8):
    """ConvTranspose3d(k=3,s=2,p=1,op=1,bias=False) + GN(8) + ReLU.

    Decomposed by output stride phase: one fused matmul over an 8-tap stack and
    a block weight matrix (8*Cout, 8*Cin); GN stats computed on the pre-shuffle
    accumulator (equivalent since the pixel shuffle is a permutation)."""
    w_t, gamma, beta = p['w'], p['gamma'], p['beta']       # w_t: (Cin, Cout, 3,3,3)
    B, Cin, D, H, W = x.shape
    Cout = w_t.shape[1]
    xp = jnp.pad(x, ((0, 0), (0, 0), (0, 1), (0, 1), (0, 1)))
    taps = []
    for od in (0, 1):
        for oh in (0, 1):
            for ow in (0, 1):
                taps.append(xp[:, :, od:od + D, oh:oh + H, ow:ow + W])
    col = jnp.stack(taps, axis=1).reshape(B, 8 * Cin, D * H * W)

    rows_blocks = []
    for pd in (0, 1):
        for ph in (0, 1):
            for pw in (0, 1):
                blk = []
                for od in (0, 1):
                    for oh in (0, 1):
                        for ow in (0, 1):
                            kd, kh, kw = _phase_k(pd, od), _phase_k(ph, oh), _phase_k(pw, ow)
                            if kd is None or kh is None or kw is None:
                                blk.append(jnp.zeros((Cout, Cin), w_t.dtype))
                            else:
                                blk.append(w_t[:, :, kd, kh, kw].T)   # (Cout, Cin)
                rows_blocks.append(jnp.concatenate(blk, axis=1))      # (Cout, 8*Cin)
    w_big = jnp.concatenate(rows_blocks, axis=0).astype(jnp.bfloat16)  # (8*Cout, 8*Cin)

    rows = 8 * Cout
    gamma_rows = jnp.tile(gamma, 8)
    beta_rows = jnp.tile(beta, 8)
    bias_rows = jnp.zeros((rows,), jnp.float32)
    group_of_row = (np.arange(rows) % Cout) // (Cout // num_groups)
    y = _fused_matmul_gn_relu_call(col, w_big, bias_rows, gamma_rows, beta_rows,
                                   group_of_row, num_groups)
    # depth-to-space: rows are ordered (pd, ph, pw, cout)
    y = y.reshape(B, 2, 2, 2, Cout, D, H, W)
    y = y.transpose(0, 4, 5, 1, 6, 2, 7, 3).reshape(B, Cout, 2 * D, 2 * H, 2 * W)
    return y


# ---------------------------------------------------------------------------
# Plain-JAX glue (geometry, sampling, pooling, upsampling)
# ---------------------------------------------------------------------------
def make_grids(w, h):
    xxs, yys = np.meshgrid(np.arange(w), np.arange(h))
    xys = np.ones((h, w, 3), np.float32)
    xys[..., 0] = xxs
    xys[..., 1] = yys
    return jnp.asarray(xys)


def get_src_coords(homo_grids, grids):
    B, N = homo_grids.shape[:2]
    h, w, _ = grids.shape
    g = grids.reshape(h * w, 3).T                               # (3, h*w)
    src = jnp.einsum('bnij,jk->bnik', homo_grids, g)            # (B, N, 3, h*w)
    src = src.transpose(0, 1, 3, 2).reshape(B, N, h, w, 3)
    xys = src[..., :2] / (src[..., 2:3] + 1e-10)
    workspace = jnp.array([(w - 1) / 2.0, (h - 1) / 2.0], jnp.float32)
    return xys / workspace - 1.0


def grid_sample_bilinear_zeros(feat, coords):
    """F.grid_sample(mode='bilinear', padding_mode='zeros', align_corners=True)."""
    # TODO(synk): data-dependent gather kept in plain JAX (no clean BlockSpec mapping).
    B, C, H, W = feat.shape
    Hg, Wg = coords.shape[1], coords.shape[2]
    x = (coords[..., 0] + 1.0) * (W - 1) / 2.0
    y = (coords[..., 1] + 1.0) * (H - 1) / 2.0
    x0f = jnp.floor(x)
    y0f = jnp.floor(y)
    flat = feat.reshape(B, C, H * W)

    def tap(xf, yf):
        valid = (xf >= 0) & (xf <= W - 1) & (yf >= 0) & (yf <= H - 1)
        xi = jnp.clip(xf, 0, W - 1).astype(jnp.int32)
        yi = jnp.clip(yf, 0, H - 1).astype(jnp.int32)
        idx = (yi * W + xi).reshape(B, 1, Hg * Wg)
        idx = jnp.broadcast_to(idx, (B, C, Hg * Wg))
        v = jnp.take_along_axis(flat, idx, axis=2).reshape(B, C, Hg, Wg)
        return v * valid.astype(feat.dtype).reshape(B, 1, Hg, Wg)

    wx1 = (x - x0f)[:, None]
    wx0 = 1.0 - wx1
    wy1 = (y - y0f)[:, None]
    wy0 = 1.0 - wy1
    v00 = tap(x0f, y0f)
    v01 = tap(x0f + 1, y0f)
    v10 = tap(x0f, y0f + 1)
    v11 = tap(x0f + 1, y0f + 1)
    return v00 * wy0 * wx0 + v01 * wy0 * wx1 + v10 * wy1 * wx0 + v11 * wy1 * wx1


def src_warp(src_coords, src_feat):
    b, n, h, w, _ = src_coords.shape
    c = src_feat.shape[1]
    coords = src_coords.reshape(b, n * h, w, 2)
    warped = grid_sample_bilinear_zeros(src_feat, coords)       # (b, c, n*h, w)
    return warped.reshape(b, c, n, h, w)


def avg_pool2x2(x):
    B, C, H, W = x.shape
    return x.reshape(B, C, H // 2, 2, W // 2, 2).mean(axis=(3, 5))


def interpolate_bilinear_align_corners(x, out_h, out_w):
    B, C, H, W = x.shape
    ys = jnp.linspace(0.0, H - 1.0, out_h)
    xs = jnp.linspace(0.0, W - 1.0, out_w)
    y0 = jnp.floor(ys).astype(jnp.int32)
    y1 = jnp.minimum(y0 + 1, H - 1)
    x0 = jnp.floor(xs).astype(jnp.int32)
    x1 = jnp.minimum(x0 + 1, W - 1)
    wy = (ys - y0)[None, None, :, None]
    wx = (xs - x0)[None, None, None, :]
    v00 = x[:, :, y0][:, :, :, x0]
    v01 = x[:, :, y0][:, :, :, x1]
    v10 = x[:, :, y1][:, :, :, x0]
    v11 = x[:, :, y1][:, :, :, x1]
    return (v00 * (1 - wy) * (1 - wx) + v01 * (1 - wy) * wx
            + v10 * wy * (1 - wx) + v11 * wy * wx)


# ---------------------------------------------------------------------------
# Parameters (deterministic, mimicking _init_weights: N(0, sqrt(2/n)) convs)
# ---------------------------------------------------------------------------
def init_params(key, in_channels=32, reduct_channels=8):
    keys = jax.random.split(key, 10)
    p = {}
    n = 1 * 1 * reduct_channels
    p['feat_reduction'] = {
        'w': jnp.sqrt(2.0 / n) * jax.random.normal(keys[0], (reduct_channels, in_channels, 1, 1), jnp.float32),
        'b': jnp.zeros((reduct_channels,), jnp.float32),
    }

    def conv3d_block(k, cin, cout):
        nn_ = 27 * cout
        return {'w': jnp.sqrt(2.0 / nn_) * jax.random.normal(k, (cout, cin, 3, 3, 3), jnp.float32),
                'b': jnp.zeros((cout,), jnp.float32),
                'gamma': jnp.ones((cout,), jnp.float32),
                'beta': jnp.zeros((cout,), jnp.float32)}

    def deconv3d_block(k, cin, cout):
        nn_ = 27 * cout
        return {'w': jnp.sqrt(2.0 / nn_) * jax.random.normal(k, (cin, cout, 3, 3, 3), jnp.float32),
                'gamma': jnp.ones((cout,), jnp.float32),
                'beta': jnp.zeros((cout,), jnp.float32)}

    p['conv0'] = conv3d_block(keys[1], 8, 8)
    p['conv1'] = conv3d_block(keys[2], 8, 16)
    p['conv2'] = conv3d_block(keys[3], 16, 16)
    p['conv3'] = conv3d_block(keys[4], 16, 32)
    p['conv4'] = conv3d_block(keys[5], 32, 32)
    p['conv6'] = conv3d_block(keys[6], 32, 32)
    p['conv9'] = deconv3d_block(keys[7], 32, 16)
    p['conv11'] = deconv3d_block(keys[8], 16, 8)
    p['prob'] = {'w': jnp.sqrt(2.0 / 27) * jax.random.normal(keys[9], (1, 8, 3, 3, 3), jnp.float32),
                 'b': jnp.zeros((1,), jnp.float32)}
    return p


# ---------------------------------------------------------------------------
# Forward pass (is_test=True inference path of StereoNet.forward)
# ---------------------------------------------------------------------------
def stereonet_forward(params, ref_feat, src_feat, homo_grids, hypos, ref_img, feat_grids):
    # feature reduction: 2x2 avg-pool commuted in front of the 1x1 conv (exact),
    # then a single fused matmul+bias over [ref; src] stacked on the batch axis.
    ref_p = avg_pool2x2(ref_feat)
    src_p = avg_pool2x2(src_feat)
    B, Cin, h, w = ref_p.shape
    Cr = params['feat_reduction']['w'].shape[0]
    x_cat = jnp.concatenate([ref_p, src_p], axis=0).reshape(2 * B, Cin, h * w)
    red = pallas_matmul_bias(x_cat,
                             params['feat_reduction']['w'].reshape(Cr, Cin),
                             params['feat_reduction']['b'])
    red = red.reshape(2, B, Cr, h, w)
    ref_r, src_r = red[0], red[1]                               # (B, Cr, h, w)

    # homography warping of source features over plane hypotheses
    src_coords = get_src_coords(homo_grids, feat_grids)         # (B, n, h, w, 2)
    warped = src_warp(src_coords, src_r)                        # (B, Cr, n, h, w)

    # 'var' cost volume
    ref_vol = jnp.broadcast_to(ref_r[:, :, None], warped.shape)
    fv_sum = warped + ref_vol
    fv_sq = warped ** 2 + ref_vol ** 2
    feat_volume = fv_sq / 2.0 - (fv_sum / 2.0) ** 2              # (B, Cr, n, h, w)

    # cost regularization (fused conv+GN+ReLU kernels, NCDHW end-to-end)
    conv0 = conv3d_gn_relu(feat_volume, params['conv0'], stride=1)
    conv2 = conv3d_gn_relu(conv3d_gn_relu(conv0, params['conv1'], stride=2),
                           params['conv2'], stride=1)
    conv4 = conv3d_gn_relu(conv3d_gn_relu(conv2, params['conv3'], stride=2),
                           params['conv4'], stride=1)
    vol = conv4 + conv3d_gn_relu(conv4, params['conv6'], stride=1)   # pool=True branch
    vol = conv2 + deconv3d_gn_relu(vol, params['conv9'])
    vol = conv0 + deconv3d_gn_relu(vol, params['conv11'])
    cost_reg = conv3d_plain(vol, params['prob'])[:, 0]           # (B, n, h, w)

    # softmax over hypotheses + plane regression (fused Pallas kernel)
    pred_plane_map = pallas_softmax_plane_regression(cost_reg, hypos)

    # bilinear upsample to image resolution (align_corners=True)
    pred_plane_map = interpolate_bilinear_align_corners(
        pred_plane_map, ref_img.shape[-2], ref_img.shape[-1])

    # TODO(synk): refine net / RAFT upsample / training losses are disabled by cfg
    # (APPLY_REFINE=False, RAFT_UPSAMPLE=False, is_test=True) and not implemented.
    return pred_plane_map, None, None, None, None, None


if __name__ == "__main__":
    key = jax.random.PRNGKey(0)
    kp, k1, k2, k3, k4, k5 = jax.random.split(key, 6)

    B = 2
    IN_CHANNELS = 32
    STEREO_H = STEREO_W = 16      # pooled to 8x8 inside the net
    IMG_H = IMG_W = 32
    N_HYPOS = 8                   # N_HYPOS_PER_AXIS=2 -> 2**3

    params = init_params(kp, in_channels=IN_CHANNELS, reduct_channels=8)

    ref_feat = jax.random.normal(k1, (B, IN_CHANNELS, STEREO_H, STEREO_W), jnp.float32)
    src_feat = jax.random.normal(k2, (B, IN_CHANNELS, STEREO_H, STEREO_W), jnp.float32)
    homo_grids = jnp.eye(3, dtype=jnp.float32)[None, None] + \
        0.01 * jax.random.normal(k3, (B, N_HYPOS, 3, 3), jnp.float32)
    hypos = 0.1 * jax.random.normal(k4, (B, N_HYPOS, 3), jnp.float32)
    ref_img = jax.random.normal(k5, (B, 3, IMG_H, IMG_W), jnp.float32)

    # feat_grids are built at the pooled stereo resolution (pool halves H/W)
    feat_grids = make_grids(STEREO_W // 2, STEREO_H // 2)

    fwd = jax.jit(stereonet_forward)
    outs = fwd(params, ref_feat, src_feat, homo_grids, hypos, ref_img, feat_grids)
    pred_plane_map = jax.block_until_ready(outs[0])
    assert pred_plane_map.shape == (B, 3, IMG_H, IMG_W)
    assert bool(jnp.all(jnp.isfinite(pred_plane_map)))
    print("KERNEL_OK")
</pallas_src>

<mosaic_0001>
module attributes {stable_mosaic.version = 11 : i64} {
  func.func @_matmul_bias_kernel(%arg0: i32, %arg1: memref<1x32x64xbf16, #tpu.memory_space<vmem>>, %arg2: memref<8x32xbf16, #tpu.memory_space<vmem>>, %arg3: memref<8x1xf32, #tpu.memory_space<vmem>>, %arg4: memref<1x8x64xf32, #tpu.memory_space<vmem>>) attributes {dimension_semantics = [#tpu.dimension_semantics<parallel>], iteration_bounds = array<i64: 4>, scalar_prefetch = 0 : i64, scratch_operands = 0 : i64, tpu.core_type = #tpu.core_type<tc>, window_params = [{transform_indices = @transform_0, window_bounds = array<i64: 1, 32, 64>}, {pipeline_mode = #tpu.pipeline_mode<synchronous>, transform_indices = @transform_1, window_bounds = array<i64: 8, 32>}, {pipeline_mode = #tpu.pipeline_mode<synchronous>, transform_indices = @transform_2, window_bounds = array<i64: 8, 1>}, {transform_indices = @transform_3, window_bounds = array<i64: 1, 8, 64>}]} {
    %c0 = arith.constant 0 : index
    %c0_0 = arith.constant 0 : index
    %0 = vector.load %arg2[%c0, %c0_0] : memref<8x32xbf16, #tpu.memory_space<vmem>>, vector<8x32xbf16>
    %c0_1 = arith.constant 0 : index
    %c0_2 = arith.constant 0 : index
    %c0_3 = arith.constant 0 : index
    %1 = vector.load %arg1[%c0_1, %c0_2, %c0_3] : memref<1x32x64xbf16, #tpu.memory_space<vmem>>, vector<1x32x64xbf16>
    %2 = vector.shape_cast %1 : vector<1x32x64xbf16> to vector<32x64xbf16>
    %cst = arith.constant dense<0.000000e+00> : vector<8x64xf32>
    %3 = tpu.matmul %0, %2, %cst {dimension_numbers = #tpu.dot_dimension_numbers<[1], [0], [0], [1], [0, 0, 1, 1], [], []>} : vector<8x32xbf16>, vector<32x64xbf16>, vector<8x64xf32> -> vector<8x64xf32>
    %c0_4 = arith.constant 0 : index
    %c0_5 = arith.constant 0 : index
    %4 = vector.load %arg3[%c0_4, %c0_5] : memref<8x1xf32, #tpu.memory_space<vmem>>, vector<8x1xf32>
    %5 = vector.broadcast %4 : vector<8x1xf32> to vector<8x64xf32>
    %6 = arith.addf %3, %5 : vector<8x64xf32>
    %c0_6 = arith.constant 0 : index
    %c0_7 = arith.constant 0 : index
    %c0_8 = arith.constant 0 : index
    %7 = vector.load %arg4[%c0_6, %c0_7, %c0_8] : memref<1x8x64xf32, #tpu.memory_space<vmem>>, vector<1x8x64xf32>
    %8 = vector.shape_cast %7 : vector<1x8x64xf32> to vector<8x64xf32>
    %9 = vector.shape_cast %6 : vector<8x64xf32> to vector<1x8x64xf32>
    tpu.vector_store %arg4[%c0_6, %c0_7, %c0_8], %9 {strides = array<i32>} : memref<1x8x64xf32, #tpu.memory_space<vmem>>, vector<1x8x64xf32>,
    return
  }
  func.func @transform_0(%arg0: i32) -> (i32, i32, i32) {
    %c0_i32 = arith.constant 0 : i32
    %c0_i32_0 = arith.constant 0 : i32
    %c0_i32_1 = arith.constant 0 : i32
    return %arg0, %c0_i32, %c0_i32_0 : i32, i32, i32
  }
  func.func @transform_1(%arg0: i32) -> (i32, i32) {
    %c0_i32 = arith.constant 0 : i32
    %c0_i32_0 = arith.constant 0 : i32
    %c0_i32_1 = arith.constant 0 : i32
    return %c0_i32, %c0_i32_0 : i32, i32
  }
  func.func @transform_2(%arg0: i32) -> (i32, i32) {
    %c0_i32 = arith.constant 0 : i32
    %c0_i32_0 = arith.constant 0 : i32
    %c0_i32_1 = arith.constant 0 : i32
    return %c0_i32, %c0_i32_0 : i32, i32
  }
  func.func @transform_3(%arg0: i32) -> (i32, i32, i32) {
    %c0_i32 = arith.constant 0 : i32
    %c0_i32_0 = arith.constant 0 : i32
    %c0_i32_1 = arith.constant 0 : i32
    return %arg0, %c0_i32, %c0_i32_0 : i32, i32, i32
  }
}

module attributes {stable_mosaic.version = 11 : i64} {
  func.func @_matmul_gn_relu_kernel(%arg0: i32, %arg1: memref<1x216x512xbf16, #tpu.memory_space<vmem>>, %arg2: memref<8x216xbf16, #tpu.memory_space<vmem>>, %arg3: memref<8x1xf32, #tpu.memory_space<vmem>>, %arg4: memref<8x1xf32, #tpu.memory_space<vmem>>, %arg5: memref<8x1xf32, #tpu.memory_space<vmem>>, %arg6: memref<8x8xf32, #tpu.memory_space<vmem>>, %arg7: memref<8x8xf32, #tpu.memory_space<vmem>>, %arg8: memref<1x8x512xf32, #tpu.memory_space<vmem>>) attributes {dimension_semantics = [#tpu.dimension_semantics<parallel>], iteration_bounds = array<i64: 2>, scalar_prefetch = 0 : i64, scratch_operands = 0 : i64, tpu.core_type = #tpu.core_type<tc>, window_params = [{transform_indices = @transform_0, window_bounds = array<i64: 1, 216, 512>}, {pipeline_mode = #tpu.pipeline_mode<synchronous>, transform_indices = @transform_1, window_bounds = array<i64: 8, 216>}, {pipeline_mode = #tpu.pipeline_mode<synchronous>, transform_indices = @transform_2, window_bounds = array<i64: 8, 1>}, {pipeline_mode = #tpu.pipeline_mode<synchronous>, transform_indices = @transform_3, window_bounds = array<i64: 8, 1>}, {pipeline_mode = #tpu.pipeline_mode<synchronous>, transform_indices = @transform_4, window_bounds = array<i64: 8, 1>}, {pipeline_mode = #tpu.pipeline_mode<synchronous>, transform_indices = @transform_5, window_bounds = array<i64: 8, 8>}, {pipeline_mode = #tpu.pipeline_mode<synchronous>, transform_indices = @transform_6, window_bounds = array<i64: 8, 8>}, {transform_indices = @transform_7, window_bounds = array<i64: 1, 8, 512>}]} {
    %c0 = arith.constant 0 : index
    %c0_0 = arith.constant 0 : index
    %0 = vector.load %arg2[%c0, %c0_0] : memref<8x216xbf16, #tpu.memory_space<vmem>>, vector<8x216xbf16>
    %c0_1 = arith.constant 0 : index
    %c0_2 = arith.constant 0 : index
    %c0_3 = arith.constant 0 : index
    %1 = vector.load %arg1[%c0_1, %c0_2, %c0_3] : memref<1x216x512xbf16, #tpu.memory_space<vmem>>, vector<1x216x512xbf16>
    %2 = vector.shape_cast %1 : vector<1x216x512xbf16> to vector<216x512xbf16>
    %cst = arith.constant dense<0.000000e+00> : vector<8x512xf32>
    %3 = tpu.matmul %0, %2, %cst {dimension_numbers = #tpu.dot_dimension_numbers<[1], [0], [0], [1], [0, 0, 1, 1], [], []>} : vector<8x216xbf16>, vector<216x512xbf16>, vector<8x512xf32> -> vector<8x512xf32>
    %c0_4 = arith.constant 0 : index
    %c0_5 = arith.constant 0 : index
    %4 = vector.load %arg3[%c0_4, %c0_5] : memref<8x1xf32, #tpu.memory_space<vmem>>, vector<8x1xf32>
    %5 = vector.broadcast %4 : vector<8x1xf32> to vector<8x512xf32>
    %6 = arith.addf %3, %5 : vector<8x512xf32>
    %cst_6 = arith.constant dense<0.000000e+00> : vector<8xf32>
    %7 = vector.multi_reduction <add>, %6, %cst_6 [1] : vector<8x512xf32> to vector<8xf32>
    %8 = vector.shape_cast %7 : vector<8xf32> to vector<8x1xf32>
    %9 = arith.mulf %6, %6 : vector<8x512xf32>
    %cst_7 = arith.constant dense<0.000000e+00> : vector<8xf32>
    %10 = vector.multi_reduction <add>, %9, %cst_7 [1] : vector<8x512xf32> to vector<8xf32>
    %11 = vector.shape_cast %10 : vector<8xf32> to vector<8x1xf32>
    %c0_8 = arith.constant 0 : index
    %c0_9 = arith.constant 0 : index
    %12 = vector.load %arg6[%c0_8, %c0_9] : memref<8x8xf32, #tpu.memory_space<vmem>>, vector<8x8xf32>
    %cst_10 = arith.constant dense<0.000000e+00> : vector<8x1xf32>
    %13 = tpu.matmul %12, %8, %cst_10 {dimension_numbers = #tpu.dot_dimension_numbers<[1], [0], [0], [1], [0, 0, 1, 1], [], []>} : vector<8x8xf32>, vector<8x1xf32>, vector<8x1xf32> -> vector<8x1xf32>
    %c0_11 = arith.constant 0 : index
    %c0_12 = arith.constant 0 : index
    %14 = vector.load %arg6[%c0_11, %c0_12] : memref<8x8xf32, #tpu.memory_space<vmem>>, vector<8x8xf32>
    %cst_13 = arith.constant dense<0.000000e+00> : vector<8x1xf32>
    %15 = tpu.matmul %14, %11, %cst_13 {dimension_numbers = #tpu.dot_dimension_numbers<[1], [0], [0], [1], [0, 0, 1, 1], [], []>} : vector<8x8xf32>, vector<8x1xf32>, vector<8x1xf32> -> vector<8x1xf32>
    %c0_14 = arith.constant 0 : index
    %c0_15 = arith.constant 0 : index
    %16 = vector.load %arg7[%c0_14, %c0_15] : memref<8x8xf32, #tpu.memory_space<vmem>>, vector<8x8xf32>
    %cst_16 = arith.constant dense<0.000000e+00> : vector<8x1xf32>
    %17 = tpu.matmul %16, %13, %cst_16 {dimension_numbers = #tpu.dot_dimension_numbers<[1], [0], [0], [1], [0, 0, 1, 1], [], []>} : vector<8x8xf32>, vector<8x1xf32>, vector<8x1xf32> -> vector<8x1xf32>
    %c0_17 = arith.constant 0 : index
    %c0_18 = arith.constant 0 : index
    %18 = vector.load %arg7[%c0_17, %c0_18] : memref<8x8xf32, #tpu.memory_space<vmem>>, vector<8x8xf32>
    %cst_19 = arith.constant dense<0.000000e+00> : vector<8x1xf32>
    %19 = tpu.matmul %18, %15, %cst_19 {dimension_numbers = #tpu.dot_dimension_numbers<[1], [0], [0], [1], [0, 0, 1, 1], [], []>} : vector<8x8xf32>, vector<8x1xf32>, vector<8x1xf32> -> vector<8x1xf32>
    %20 = arith.mulf %17, %17 : vector<8x1xf32>
    %21 = arith.subf %19, %20 : vector<8x1xf32>
    %cst_20 = arith.constant 0.000000e+00 : f32
    %22 = vector.broadcast %cst_20 : f32 to vector<8x1xf32>
    %23 = arith.maximumf %21, %22 : vector<8x1xf32>
    %24 = vector.broadcast %17 : vector<8x1xf32> to vector<8x512xf32>
    %25 = arith.subf %6, %24 : vector<8x512xf32>
    %cst_21 = arith.constant 9.99999974E-6 : f32
    %26 = vector.broadcast %cst_21 : f32 to vector<8x1xf32>
    %27 = arith.addf %23, %26 : vector<8x1xf32>
    %28 = math.rsqrt %27 : vector<8x1xf32>
    %29 = vector.broadcast %28 : vector<8x1xf32> to vector<8x512xf32>
    %30 = arith.mulf %25, %29 : vector<8x512xf32>
    %c0_22 = arith.constant 0 : index
    %c0_23 = arith.constant 0 : index
    %31 = vector.load %arg4[%c0_22, %c0_23] : memref<8x1xf32, #tpu.memory_space<vmem>>, vector<8x1xf32>
    %32 = vector.broadcast %31 : vector<8x1xf32> to vector<8x512xf32>
    %33 = arith.mulf %30, %32 : vector<8x512xf32>
    %c0_24 = arith.constant 0 : index
    %c0_25 = arith.constant 0 : index
    %34 = vector.load %arg5[%c0_24, %c0_25] : memref<8x1xf32, #tpu.memory_space<vmem>>, vector<8x1xf32>
    %35 = vector.broadcast %34 : vector<8x1xf32> to vector<8x512xf32>
    %36 = arith.addf %33, %35 : vector<8x512xf32>
    %cst_26 = arith.constant 0.000000e+00 : f32
    %37 = vector.broadcast %cst_26 : f32 to vector<8x512xf32>
    %38 = arith.maximumf %36, %37 : vector<8x512xf32>
    %c0_27 = arith.constant 0 : index
    %c0_28 = arith.constant 0 : index
    %c0_29 = arith.constant 0 : index
    %39 = vector.load %arg8[%c0_27, %c0_28, %c0_29] : memref<1x8x512xf32, #tpu.memory_space<vmem>>, vector<1x8x512xf32>
    %40 = vector.shape_cast %39 : vector<1x8x512xf32> to vector<8x512xf32>
    %41 = vector.shape_cast %38 : vector<8x512xf32> to vector<1x8x512xf32>
    tpu.vector_store %arg8[%c0_27, %c0_28, %c0_29], %41 {strides = array<i32>} : memref<1x8x512xf32, #tpu.memory_space<vmem>>, vector<1x8x512xf32>,
    return
  }
  func.func @transform_0(%arg0: i32) -> (i32, i32, i32) {
    %c0_i32 = arith.constant 0 : i32
    %c0_i32_0 = arith.constant 0 : i32
    %c0_i32_1 = arith.constant 0 : i32
    return %arg0, %c0_i32, %c0_i32_0 : i32, i32, i32
  }
  func.func @transform_1(%arg0: i32) -> (i32, i32) {
    %c0_i32 = arith.constant 0 : i32
    %c0_i32_0 = arith.constant 0 : i32
    %c0_i32_1 = arith.constant 0 : i32
    return %c0_i32, %c0_i32_0 : i32, i32
  }
  func.func @transform_2(%arg0: i32) -> (i32, i32) {
    %c0_i32 = arith.constant 0 : i32
    %c0_i32_0 = arith.constant 0 : i32
    %c0_i32_1 = arith.constant 0 : i32
    return %c0_i32, %c0_i32_0 : i32, i32
  }
  func.func @transform_3(%arg0: i32) -> (i32, i32) {
    %c0_i32 = arith.constant 0 : i32
    %c0_i32_0 = arith.constant 0 : i32
    %c0_i32_1 = arith.constant 0 : i32
    return %c0_i32, %c0_i32_0 : i32, i32
  }
  func.func @transform_4(%arg0: i32) -> (i32, i32) {
    %c0_i32 = arith.constant 0 : i32
    %c0_i32_0 = arith.constant 0 : i32
    %c0_i32_1 = arith.constant 0 : i32
    return %c0_i32, %c0_i32_0 : i32, i32
  }
  func.func @transform_5(%arg0: i32) -> (i32, i32) {
    %c0_i32 = arith.constant 0 : i32
    %c0_i32_0 = arith.constant 0 : i32
    %c0_i32_1 = arith.constant 0 : i32
    return %c0_i32, %c0_i32_0 : i32, i32
  }
  func.func @transform_6(%arg0: i32) -> (i32, i32) {
    %c0_i32 = arith.constant 0 : i32
    %c0_i32_0 = arith.constant 0 : i32
    %c0_i32_1 = arith.constant 0 : i32
    return %c0_i32, %c0_i32_0 : i32, i32
  }
  func.func @transform_7(%arg0: i32) -> (i32, i32, i32) {
    %c0_i32 = arith.constant 0 : i32
    %c0_i32_0 = arith.constant 0 : i32
    %c0_i32_1 = arith.constant 0 : i32
    return %arg0, %c0_i32, %c0_i32_0 : i32, i32, i32
  }
}

module attributes {stable_mosaic.version = 11 : i64} {
  func.func @_matmul_gn_relu_kernel(%arg0: i32, %arg1: memref<1x216x64xbf16, #tpu.memory_space<vmem>>, %arg2: memref<16x216xbf16, #tpu.memory_space<vmem>>, %arg3: memref<16x1xf32, #tpu.memory_space<vmem>>, %arg4: memref<16x1xf32, #tpu.memory_space<vmem>>, %arg5: memref<16x1xf32, #tpu.memory_space<vmem>>, %arg6: memref<8x16xf32, #tpu.memory_space<vmem>>, %arg7: memref<16x8xf32, #tpu.memory_space<vmem>>, %arg8: memref<1x16x64xf32, #tpu.memory_space<vmem>>) attributes {dimension_semantics = [#tpu.dimension_semantics<parallel>], iteration_bounds = array<i64: 2>, scalar_prefetch = 0 : i64, scratch_operands = 0 : i64, tpu.core_type = #tpu.core_type<tc>, window_params = [{transform_indices = @transform_0, window_bounds = array<i64: 1, 216, 64>}, {pipeline_mode = #tpu.pipeline_mode<synchronous>, transform_indices = @transform_1, window_bounds = array<i64: 16, 216>}, {pipeline_mode = #tpu.pipeline_mode<synchronous>, transform_indices = @transform_2, window_bounds = array<i64: 16, 1>}, {pipeline_mode = #tpu.pipeline_mode<synchronous>, transform_indices = @transform_3, window_bounds = array<i64: 16, 1>}, {pipeline_mode = #tpu.pipeline_mode<synchronous>, transform_indices = @transform_4, window_bounds = array<i64: 16, 1>}, {pipeline_mode = #tpu.pipeline_mode<synchronous>, transform_indices = @transform_5, window_bounds = array<i64: 8, 16>}, {pipeline_mode = #tpu.pipeline_mode<synchronous>, transform_indices = @transform_6, window_bounds = array<i64: 16, 8>}, {transform_indices = @transform_7, window_bounds = array<i64: 1, 16, 64>}]} {
    %c0 = arith.constant 0 : index
    %c0_0 = arith.constant 0 : index
    %0 = vector.load %arg2[%c0, %c0_0] : memref<16x216xbf16, #tpu.memory_space<vmem>>, vector<16x216xbf16>
    %c0_1 = arith.constant 0 : index
    %c0_2 = arith.constant 0 : index
    %c0_3 = arith.constant 0 : index
    %1 = vector.load %arg1[%c0_1, %c0_2, %c0_3] : memref<1x216x64xbf16, #tpu.memory_space<vmem>>, vector<1x216x64xbf16>
    %2 = vector.shape_cast %1 : vector<1x216x64xbf16> to vector<216x64xbf16>
    %cst = arith.constant dense<0.000000e+00> : vector<16x64xf32>
    %3 = tpu.matmul %0, %2, %cst {dimension_numbers = #tpu.dot_dimension_numbers<[1], [0], [0], [1], [0, 0, 1, 1], [], []>} : vector<16x216xbf16>, vector<216x64xbf16>, vector<16x64xf32> -> vector<16x64xf32>
    %c0_4 = arith.constant 0 : index
    %c0_5 = arith.constant 0 : index
    %4 = vector.load %arg3[%c0_4, %c0_5] : memref<16x1xf32, #tpu.memory_space<vmem>>, vector<16x1xf32>
    %5 = vector.broadcast %4 : vector<16x1xf32> to vector<16x64xf32>
    %6 = arith.addf %3, %5 : vector<16x64xf32>
    %cst_6 = arith.constant dense<0.000000e+00> : vector<16xf32>
    %7 = vector.multi_reduction <add>, %6, %cst_6 [1] : vector<16x64xf32> to vector<16xf32>
    %8 = vector.shape_cast %7 : vector<16xf32> to vector<16x1xf32>
    %9 = arith.mulf %6, %6 : vector<16x64xf32>
    %cst_7 = arith.constant dense<0.000000e+00> : vector<16xf32>
    %10 = vector.multi_reduction <add>, %9, %cst_7 [1] : vector<16x64xf32> to vector<16xf32>
    %11 = vector.shape_cast %10 : vector<16xf32> to vector<16x1xf32>
    %c0_8 = arith.constant 0 : index
    %c0_9 = arith.constant 0 : index
    %12 = vector.load %arg6[%c0_8, %c0_9] : memref<8x16xf32, #tpu.memory_space<vmem>>, vector<8x16xf32>
    %cst_10 = arith.constant dense<0.000000e+00> : vector<8x1xf32>
    %13 = tpu.matmul %12, %8, %cst_10 {dimension_numbers = #tpu.dot_dimension_numbers<[1], [0], [0], [1], [0, 0, 1, 1], [], []>} : vector<8x16xf32>, vector<16x1xf32>, vector<8x1xf32> -> vector<8x1xf32>
    %c0_11 = arith.constant 0 : index
    %c0_12 = arith.constant 0 : index
    %14 = vector.load %arg6[%c0_11, %c0_12] : memref<8x16xf32, #tpu.memory_space<vmem>>, vector<8x16xf32>
    %cst_13 = arith.constant dense<0.000000e+00> : vector<8x1xf32>
    %15 = tpu.matmul %14, %11, %cst_13 {dimension_numbers = #tpu.dot_dimension_numbers<[1], [0], [0], [1], [0, 0, 1, 1], [], []>} : vector<8x16xf32>, vector<16x1xf32>, vector<8x1xf32> -> vector<8x1xf32>
    %c0_14 = arith.constant 0 : index
    %c0_15 = arith.constant 0 : index
    %16 = vector.load %arg7[%c0_14, %c0_15] : memref<16x8xf32, #tpu.memory_space<vmem>>, vector<16x8xf32>
    %cst_16 = arith.constant dense<0.000000e+00> : vector<16x1xf32>
    %17 = tpu.matmul %16, %13, %cst_16 {dimension_numbers = #tpu.dot_dimension_numbers<[1], [0], [0], [1], [0, 0, 1, 1], [], []>} : vector<16x8xf32>, vector<8x1xf32>, vector<16x1xf32> -> vector<16x1xf32>
    %c0_17 = arith.constant 0 : index
    %c0_18 = arith.constant 0 : index
    %18 = vector.load %arg7[%c0_17, %c0_18] : memref<16x8xf32, #tpu.memory_space<vmem>>, vector<16x8xf32>
    %cst_19 = arith.constant dense<0.000000e+00> : vector<16x1xf32>
    %19 = tpu.matmul %18, %15, %cst_19 {dimension_numbers = #tpu.dot_dimension_numbers<[1], [0], [0], [1], [0, 0, 1, 1], [], []>} : vector<16x8xf32>, vector<8x1xf32>, vector<16x1xf32> -> vector<16x1xf32>
    %20 = arith.mulf %17, %17 : vector<16x1xf32>
    %21 = arith.subf %19, %20 : vector<16x1xf32>
    %cst_20 = arith.constant 0.000000e+00 : f32
    %22 = vector.broadcast %cst_20 : f32 to vector<16x1xf32>
    %23 = arith.maximumf %21, %22 : vector<16x1xf32>
    %24 = vector.broadcast %17 : vector<16x1xf32> to vector<16x64xf32>
    %25 = arith.subf %6, %24 : vector<16x64xf32>
    %cst_21 = arith.constant 9.99999974E-6 : f32
    %26 = vector.broadcast %cst_21 : f32 to vector<16x1xf32>
    %27 = arith.addf %23, %26 : vector<16x1xf32>
    %28 = math.rsqrt %27 : vector<16x1xf32>
    %29 = vector.broadcast %28 : vector<16x1xf32> to vector<16x64xf32>
    %30 = arith.mulf %25, %29 : vector<16x64xf32>
    %c0_22 = arith.constant 0 : index
    %c0_23 = arith.constant 0 : index
    %31 = vector.load %arg4[%c0_22, %c0_23] : memref<16x1xf32, #tpu.memory_space<vmem>>, vector<16x1xf32>
    %32 = vector.broadcast %31 : vector<16x1xf32> to vector<16x64xf32>
    %33 = arith.mulf %30, %32 : vector<16x64xf32>
    %c0_24 = arith.constant 0 : index
    %c0_25 = arith.constant 0 : index
    %34 = vector.load %arg5[%c0_24, %c0_25] : memref<16x1xf32, #tpu.memory_space<vmem>>, vector<16x1xf32>
    %35 = vector.broadcast %34 : vector<16x1xf32> to vector<16x64xf32>
    %36 = arith.addf %33, %35 : vector<16x64xf32>
    %cst_26 = arith.constant 0.000000e+00 : f32
    %37 = vector.broadcast %cst_26 : f32 to vector<16x64xf32>
    %38 = arith.maximumf %36, %37 : vector<16x64xf32>
    %c0_27 = arith.constant 0 : index
    %c0_28 = arith.constant 0 : index
    %c0_29 = arith.constant 0 : index
    %39 = vector.load %arg8[%c0_27, %c0_28, %c0_29] : memref<1x16x64xf32, #tpu.memory_space<vmem>>, vector<1x16x64xf32>
    %40 = vector.shape_cast %39 : vector<1x16x64xf32> to vector<16x64xf32>
    %41 = vector.shape_cast %38 : vector<16x64xf32> to vector<1x16x64xf32>
    tpu.vector_store %arg8[%c0_27, %c0_28, %c0_29], %41 {strides = array<i32>} : memref<1x16x64xf32, #tpu.memory_space<vmem>>, vector<1x16x64xf32>,
    return
  }
  func.func @transform_0(%arg0: i32) -> (i32, i32, i32) {
    %c0_i32 = arith.constant 0 : i32
    %c0_i32_0 = arith.constant 0 : i32
    %c0_i32_1 = arith.constant 0 : i32
    return %arg0, %c0_i32, %c0_i32_0 : i32, i32, i32
  }
  func.func @transform_1(%arg0: i32) -> (i32, i32) {
    %c0_i32 = arith.constant 0 : i32
    %c0_i32_0 = arith.constant 0 : i32
    %c0_i32_1 = arith.constant 0 : i32
    return %c0_i32, %c0_i32_0 : i32, i32
  }
  func.func @transform_2(%arg0: i32) -> (i32, i32) {
    %c0_i32 = arith.constant 0 : i32
    %c0_i32_0 = arith.constant 0 : i32
    %c0_i32_1 = arith.constant 0 : i32
    return %c0_i32, %c0_i32_0 : i32, i32
  }
  func.func @transform_3(%arg0: i32) -> (i32, i32) {
    %c0_i32 = arith.constant 0 : i32
    %c0_i32_0 = arith.constant 0 : i32
    %c0_i32_1 = arith.constant 0 : i32
    return %c0_i32, %c0_i32_0 : i32, i32
  }
  func.func @transform_4(%arg0: i32) -> (i32, i32) {
    %c0_i32 = arith.constant 0 : i32
    %c0_i32_0 = arith.constant 0 : i32
    %c0_i32_1 = arith.constant 0 : i32
    return %c0_i32, %c0_i32_0 : i32, i32
  }
  func.func @transform_5(%arg0: i32) -> (i32, i32) {
    %c0_i32 = arith.constant 0 : i32
    %c0_i32_0 = arith.constant 0 : i32
    %c0_i32_1 = arith.constant 0 : i32
    return %c0_i32, %c0_i32_0 : i32, i32
  }
  func.func @transform_6(%arg0: i32) -> (i32, i32) {
    %c0_i32 = arith.constant 0 : i32
    %c0_i32_0 = arith.constant 0 : i32
    %c0_i32_1 = arith.constant 0 : i32
    return %c0_i32, %c0_i32_0 : i32, i32
  }
  func.func @transform_7(%arg0: i32) -> (i32, i32, i32) {
    %c0_i32 = arith.constant 0 : i32
    %c0_i32_0 = arith.constant 0 : i32
    %c0_i32_1 = arith.constant 0 : i32
    return %arg0, %c0_i32, %c0_i32_0 : i32, i32, i32
  }
}

module attributes {stable_mosaic.version = 11 : i64} {
  func.func @_matmul_gn_relu_kernel(%arg0: i32, %arg1: memref<1x432x64xbf16, #tpu.memory_space<vmem>>, %arg2: memref<16x432xbf16, #tpu.memory_space<vmem>>, %arg3: memref<16x1xf32, #tpu.memory_space<vmem>>, %arg4: memref<16x1xf32, #tpu.memory_space<vmem>>, %arg5: memref<16x1xf32, #tpu.memory_space<vmem>>, %arg6: memref<8x16xf32, #tpu.memory_space<vmem>>, %arg7: memref<16x8xf32, #tpu.memory_space<vmem>>, %arg8: memref<1x16x64xf32, #tpu.memory_space<vmem>>) attributes {dimension_semantics = [#tpu.dimension_semantics<parallel>], iteration_bounds = array<i64: 2>, scalar_prefetch = 0 : i64, scratch_operands = 0 : i64, tpu.core_type = #tpu.core_type<tc>, window_params = [{transform_indices = @transform_0, window_bounds = array<i64: 1, 432, 64>}, {pipeline_mode = #tpu.pipeline_mode<synchronous>, transform_indices = @transform_1, window_bounds = array<i64: 16, 432>}, {pipeline_mode = #tpu.pipeline_mode<synchronous>, transform_indices = @transform_2, window_bounds = array<i64: 16, 1>}, {pipeline_mode = #tpu.pipeline_mode<synchronous>, transform_indices = @transform_3, window_bounds = array<i64: 16, 1>}, {pipeline_mode = #tpu.pipeline_mode<synchronous>, transform_indices = @transform_4, window_bounds = array<i64: 16, 1>}, {pipeline_mode = #tpu.pipeline_mode<synchronous>, transform_indices = @transform_5, window_bounds = array<i64: 8, 16>}, {pipeline_mode = #tpu.pipeline_mode<synchronous>, transform_indices = @transform_6, window_bounds = array<i64: 16, 8>}, {transform_indices = @transform_7, window_bounds = array<i64: 1, 16, 64>}]} {
    %c0 = arith.constant 0 : index
    %c0_0 = arith.constant 0 : index
    %0 = vector.load %arg2[%c0, %c0_0] : memref<16x432xbf16, #tpu.memory_space<vmem>>, vector<16x432xbf16>
    %c0_1 = arith.constant 0 : index
    %c0_2 = arith.constant 0 : index
    %c0_3 = arith.constant 0 : index
    %1 = vector.load %arg1[%c0_1, %c0_2, %c0_3] : memref<1x432x64xbf16, #tpu.memory_space<vmem>>, vector<1x432x64xbf16>
    %2 = vector.shape_cast %1 : vector<1x432x64xbf16> to vector<432x64xbf16>
    %cst = arith.constant dense<0.000000e+00> : vector<16x64xf32>
    %3 = tpu.matmul %0, %2, %cst {dimension_numbers = #tpu.dot_dimension_numbers<[1], [0], [0], [1], [0, 0, 1, 1], [], []>} : vector<16x432xbf16>, vector<432x64xbf16>, vector<16x64xf32> -> vector<16x64xf32>
    %c0_4 = arith.constant 0 : index
    %c0_5 = arith.constant 0 : index
    %4 = vector.load %arg3[%c0_4, %c0_5] : memref<16x1xf32, #tpu.memory_space<vmem>>, vector<16x1xf32>
    %5 = vector.broadcast %4 : vector<16x1xf32> to vector<16x64xf32>
    %6 = arith.addf %3, %5 : vector<16x64xf32>
    %cst_6 = arith.constant dense<0.000000e+00> : vector<16xf32>
    %7 = vector.multi_reduction <add>, %6, %cst_6 [1] : vector<16x64xf32> to vector<16xf32>
    %8 = vector.shape_cast %7 : vector<16xf32> to vector<16x1xf32>
    %9 = arith.mulf %6, %6 : vector<16x64xf32>
    %cst_7 = arith.constant dense<0.000000e+00> : vector<16xf32>
    %10 = vector.multi_reduction <add>, %9, %cst_7 [1] : vector<16x64xf32> to vector<16xf32>
    %11 = vector.shape_cast %10 : vector<16xf32> to vector<16x1xf32>
    %c0_8 = arith.constant 0 : index
    %c0_9 = arith.constant 0 : index
    %12 = vector.load %arg6[%c0_8, %c0_9] : memref<8x16xf32, #tpu.memory_space<vmem>>, vector<8x16xf32>
    %cst_10 = arith.constant dense<0.000000e+00> : vector<8x1xf32>
    %13 = tpu.matmul %12, %8, %cst_10 {dimension_numbers = #tpu.dot_dimension_numbers<[1], [0], [0], [1], [0, 0, 1, 1], [], []>} : vector<8x16xf32>, vector<16x1xf32>, vector<8x1xf32> -> vector<8x1xf32>
    %c0_11 = arith.constant 0 : index
    %c0_12 = arith.constant 0 : index
    %14 = vector.load %arg6[%c0_11, %c0_12] : memref<8x16xf32, #tpu.memory_space<vmem>>, vector<8x16xf32>
    %cst_13 = arith.constant dense<0.000000e+00> : vector<8x1xf32>
    %15 = tpu.matmul %14, %11, %cst_13 {dimension_numbers = #tpu.dot_dimension_numbers<[1], [0], [0], [1], [0, 0, 1, 1], [], []>} : vector<8x16xf32>, vector<16x1xf32>, vector<8x1xf32> -> vector<8x1xf32>
    %c0_14 = arith.constant 0 : index
    %c0_15 = arith.constant 0 : index
    %16 = vector.load %arg7[%c0_14, %c0_15] : memref<16x8xf32, #tpu.memory_space<vmem>>, vector<16x8xf32>
    %cst_16 = arith.constant dense<0.000000e+00> : vector<16x1xf32>
    %17 = tpu.matmul %16, %13, %cst_16 {dimension_numbers = #tpu.dot_dimension_numbers<[1], [0], [0], [1], [0, 0, 1, 1], [], []>} : vector<16x8xf32>, vector<8x1xf32>, vector<16x1xf32> -> vector<16x1xf32>
    %c0_17 = arith.constant 0 : index
    %c0_18 = arith.constant 0 : index
    %18 = vector.load %arg7[%c0_17, %c0_18] : memref<16x8xf32, #tpu.memory_space<vmem>>, vector<16x8xf32>
    %cst_19 = arith.constant dense<0.000000e+00> : vector<16x1xf32>
    %19 = tpu.matmul %18, %15, %cst_19 {dimension_numbers = #tpu.dot_dimension_numbers<[1], [0], [0], [1], [0, 0, 1, 1], [], []>} : vector<16x8xf32>, vector<8x1xf32>, vector<16x1xf32> -> vector<16x1xf32>
    %20 = arith.mulf %17, %17 : vector<16x1xf32>
    %21 = arith.subf %19, %20 : vector<16x1xf32>
    %cst_20 = arith.constant 0.000000e+00 : f32
    %22 = vector.broadcast %cst_20 : f32 to vector<16x1xf32>
    %23 = arith.maximumf %21, %22 : vector<16x1xf32>
    %24 = vector.broadcast %17 : vector<16x1xf32> to vector<16x64xf32>
    %25 = arith.subf %6, %24 : vector<16x64xf32>
    %cst_21 = arith.constant 9.99999974E-6 : f32
    %26 = vector.broadcast %cst_21 : f32 to vector<16x1xf32>
    %27 = arith.addf %23, %26 : vector<16x1xf32>
    %28 = math.rsqrt %27 : vector<16x1xf32>
    %29 = vector.broadcast %28 : vector<16x1xf32> to vector<16x64xf32>
    %30 = arith.mulf %25, %29 : vector<16x64xf32>
    %c0_22 = arith.constant 0 : index
    %c0_23 = arith.constant 0 : index
    %31 = vector.load %arg4[%c0_22, %c0_23] : memref<16x1xf32, #tpu.memory_space<vmem>>, vector<16x1xf32>
    %32 = vector.broadcast %31 : vector<16x1xf32> to vector<16x64xf32>
    %33 = arith.mulf %30, %32 : vector<16x64xf32>
    %c0_24 = arith.constant 0 : index
    %c0_25 = arith.constant 0 : index
    %34 = vector.load %arg5[%c0_24, %c0_25] : memref<16x1xf32, #tpu.memory_space<vmem>>, vector<16x1xf32>
    %35 = vector.broadcast %34 : vector<16x1xf32> to vector<16x64xf32>
    %36 = arith.addf %33, %35 : vector<16x64xf32>
    %cst_26 = arith.constant 0.000000e+00 : f32
    %37 = vector.broadcast %cst_26 : f32 to vector<16x64xf32>
    %38 = arith.maximumf %36, %37 : vector<16x64xf32>
    %c0_27 = arith.constant 0 : index
    %c0_28 = arith.constant 0 : index
    %c0_29 = arith.constant 0 : index
    %39 = vector.load %arg8[%c0_27, %c0_28, %c0_29] : memref<1x16x64xf32, #tpu.memory_space<vmem>>, vector<1x16x64xf32>
    %40 = vector.shape_cast %39 : vector<1x16x64xf32> to vector<16x64xf32>
    %41 = vector.shape_cast %38 : vector<16x64xf32> to vector<1x16x64xf32>
    tpu.vector_store %arg8[%c0_27, %c0_28, %c0_29], %41 {strides = array<i32>} : memref<1x16x64xf32, #tpu.memory_space<vmem>>, vector<1x16x64xf32>,
    return
  }
  func.func @transform_0(%arg0: i32) -> (i32, i32, i32) {
    %c0_i32 = arith.constant 0 : i32
    %c0_i32_0 = arith.constant 0 : i32
    %c0_i32_1 = arith.constant 0 : i32
    return %arg0, %c0_i32, %c0_i32_0 : i32, i32, i32
  }
  func.func @transform_1(%arg0: i32) -> (i32, i32) {
    %c0_i32 = arith.constant 0 : i32
    %c0_i32_0 = arith.constant 0 : i32
    %c0_i32_1 = arith.constant 0 : i32
    return %c0_i32, %c0_i32_0 : i32, i32
  }
  func.func @transform_2(%arg0: i32) -> (i32, i32) {
    %c0_i32 = arith.constant 0 : i32
    %c0_i32_0 = arith.constant 0 : i32
    %c0_i32_1 = arith.constant 0 : i32
    return %c0_i32, %c0_i32_0 : i32, i32
  }
  func.func @transform_3(%arg0: i32) -> (i32, i32) {
    %c0_i32 = arith.constant 0 : i32
    %c0_i32_0 = arith.constant 0 : i32
    %c0_i32_1 = arith.constant 0 : i32
    return %c0_i32, %c0_i32_0 : i32, i32
  }
  func.func @transform_4(%arg0: i32) -> (i32, i32) {
    %c0_i32 = arith.constant 0 : i32
    %c0_i32_0 = arith.constant 0 : i32
    %c0_i32_1 = arith.constant 0 : i32
    return %c0_i32, %c0_i32_0 : i32, i32
  }
  func.func @transform_5(%arg0: i32) -> (i32, i32) {
    %c0_i32 = arith.constant 0 : i32
    %c0_i32_0 = arith.constant 0 : i32
    %c0_i32_1 = arith.constant 0 : i32
    return %c0_i32, %c0_i32_0 : i32, i32
  }
  func.func @transform_6(%arg0: i32) -> (i32, i32) {
    %c0_i32 = arith.constant 0 : i32
    %c0_i32_0 = arith.constant 0 : i32
    %c0_i32_1 = arith.constant 0 : i32
    return %c0_i32, %c0_i32_0 : i32, i32
  }
  func.func @transform_7(%arg0: i32) -> (i32, i32, i32) {
    %c0_i32 = arith.constant 0 : i32
    %c0_i32_0 = arith.constant 0 : i32
    %c0_i32_1 = arith.constant 0 : i32
    return %arg0, %c0_i32, %c0_i32_0 : i32, i32, i32
  }
}

module attributes {stable_mosaic.version = 11 : i64} {
  func.func @_matmul_gn_relu_kernel(%arg0: i32, %arg1: memref<1x432x8xbf16, #tpu.memory_space<vmem>>, %arg2: memref<32x432xbf16, #tpu.memory_space<vmem>>, %arg3: memref<32x1xf32, #tpu.memory_space<vmem>>, %arg4: memref<32x1xf32, #tpu.memory_space<vmem>>, %arg5: memref<32x1xf32, #tpu.memory_space<vmem>>, %arg6: memref<8x32xf32, #tpu.memory_space<vmem>>, %arg7: memref<32x8xf32, #tpu.memory_space<vmem>>, %arg8: memref<1x32x8xf32, #tpu.memory_space<vmem>>) attributes {dimension_semantics = [#tpu.dimension_semantics<parallel>], iteration_bounds = array<i64: 2>, scalar_prefetch = 0 : i64, scratch_operands = 0 : i64, tpu.core_type = #tpu.core_type<tc>, window_params = [{transform_indices = @transform_0, window_bounds = array<i64: 1, 432, 8>}, {pipeline_mode = #tpu.pipeline_mode<synchronous>, transform_indices = @transform_1, window_bounds = array<i64: 32, 432>}, {pipeline_mode = #tpu.pipeline_mode<synchronous>, transform_indices = @transform_2, window_bounds = array<i64: 32, 1>}, {pipeline_mode = #tpu.pipeline_mode<synchronous>, transform_indices = @transform_3, window_bounds = array<i64: 32, 1>}, {pipeline_mode = #tpu.pipeline_mode<synchronous>, transform_indices = @transform_4, window_bounds = array<i64: 32, 1>}, {pipeline_mode = #tpu.pipeline_mode<synchronous>, transform_indices = @transform_5, window_bounds = array<i64: 8, 32>}, {pipeline_mode = #tpu.pipeline_mode<synchronous>, transform_indices = @transform_6, window_bounds = array<i64: 32, 8>}, {transform_indices = @transform_7, window_bounds = array<i64: 1, 32, 8>}]} {
    %c0 = arith.constant 0 : index
    %c0_0 = arith.constant 0 : index
    %0 = vector.load %arg2[%c0, %c0_0] : memref<32x432xbf16, #tpu.memory_space<vmem>>, vector<32x432xbf16>
    %c0_1 = arith.constant 0 : index
    %c0_2 = arith.constant 0 : index
    %c0_3 = arith.constant 0 : index
    %1 = vector.load %arg1[%c0_1, %c0_2, %c0_3] : memref<1x432x8xbf16, #tpu.memory_space<vmem>>, vector<1x432x8xbf16>
    %2 = vector.shape_cast %1 : vector<1x432x8xbf16> to vector<432x8xbf16>
    %cst = arith.constant dense<0.000000e+00> : vector<32x8xf32>
    %3 = tpu.matmul %0, %2, %cst {dimension_numbers = #tpu.dot_dimension_numbers<[1], [0], [0], [1], [0, 0, 1, 1], [], []>} : vector<32x432xbf16>, vector<432x8xbf16>, vector<32x8xf32> -> vector<32x8xf32>
    %c0_4 = arith.constant 0 : index
    %c0_5 = arith.constant 0 : index
    %4 = vector.load %arg3[%c0_4, %c0_5] : memref<32x1xf32, #tpu.memory_space<vmem>>, vector<32x1xf32>
    %5 = vector.broadcast %4 : vector<32x1xf32> to vector<32x8xf32>
    %6 = arith.addf %3, %5 : vector<32x8xf32>
    %cst_6 = arith.constant dense<0.000000e+00> : vector<32xf32>
    %7 = vector.multi_reduction <add>, %6, %cst_6 [1] : vector<32x8xf32> to vector<32xf32>
    %8 = vector.shape_cast %7 : vector<32xf32> to vector<32x1xf32>
    %9 = arith.mulf %6, %6 : vector<32x8xf32>
    %cst_7 = arith.constant dense<0.000000e+00> : vector<32xf32>
    %10 = vector.multi_reduction <add>, %9, %cst_7 [1] : vector<32x8xf32> to vector<32xf32>
    %11 = vector.shape_cast %10 : vector<32xf32> to vector<32x1xf32>
    %c0_8 = arith.constant 0 : index
    %c0_9 = arith.constant 0 : index
    %12 = vector.load %arg6[%c0_8, %c0_9] : memref<8x32xf32, #tpu.memory_space<vmem>>, vector<8x32xf32>
    %cst_10 = arith.constant dense<0.000000e+00> : vector<8x1xf32>
    %13 = tpu.matmul %12, %8, %cst_10 {dimension_numbers = #tpu.dot_dimension_numbers<[1], [0], [0], [1], [0, 0, 1, 1], [], []>} : vector<8x32xf32>, vector<32x1xf32>, vector<8x1xf32> -> vector<8x1xf32>
    %c0_11 = arith.constant 0 : index
    %c0_12 = arith.constant 0 : index
    %14 = vector.load %arg6[%c0_11, %c0_12] : memref<8x32xf32, #tpu.memory_space<vmem>>, vector<8x32xf32>
    %cst_13 = arith.constant dense<0.000000e+00> : vector<8x1xf32>
    %15 = tpu.matmul %14, %11, %cst_13 {dimension_numbers = #tpu.dot_dimension_numbers<[1], [0], [0], [1], [0, 0, 1, 1], [], []>} : vector<8x32xf32>, vector<32x1xf32>, vector<8x1xf32> -> vector<8x1xf32>
    %c0_14 = arith.constant 0 : index
    %c0_15 = arith.constant 0 : index
    %16 = vector.load %arg7[%c0_14, %c0_15] : memref<32x8xf32, #tpu.memory_space<vmem>>, vector<32x8xf32>
    %cst_16 = arith.constant dense<0.000000e+00> : vector<32x1xf32>
    %17 = tpu.matmul %16, %13, %cst_16 {dimension_numbers = #tpu.dot_dimension_numbers<[1], [0], [0], [1], [0, 0, 1, 1], [], []>} : vector<32x8xf32>, vector<8x1xf32>, vector<32x1xf32> -> vector<32x1xf32>
    %c0_17 = arith.constant 0 : index
    %c0_18 = arith.constant 0 : index
    %18 = vector.load %arg7[%c0_17, %c0_18] : memref<32x8xf32, #tpu.memory_space<vmem>>, vector<32x8xf32>
    %cst_19 = arith.constant dense<0.000000e+00> : vector<32x1xf32>
    %19 = tpu.matmul %18, %15, %cst_19 {dimension_numbers = #tpu.dot_dimension_numbers<[1], [0], [0], [1], [0, 0, 1, 1], [], []>} : vector<32x8xf32>, vector<8x1xf32>, vector<32x1xf32> -> vector<32x1xf32>
    %20 = arith.mulf %17, %17 : vector<32x1xf32>
    %21 = arith.subf %19, %20 : vector<32x1xf32>
    %cst_20 = arith.constant 0.000000e+00 : f32
    %22 = vector.broadcast %cst_20 : f32 to vector<32x1xf32>
    %23 = arith.maximumf %21, %22 : vector<32x1xf32>
    %24 = vector.broadcast %17 : vector<32x1xf32> to vector<32x8xf32>
    %25 = arith.subf %6, %24 : vector<32x8xf32>
    %cst_21 = arith.constant 9.99999974E-6 : f32
    %26 = vector.broadcast %cst_21 : f32 to vector<32x1xf32>
    %27 = arith.addf %23, %26 : vector<32x1xf32>
    %28 = math.rsqrt %27 : vector<32x1xf32>
    %29 = vector.broadcast %28 : vector<32x1xf32> to vector<32x8xf32>
    %30 = arith.mulf %25, %29 : vector<32x8xf32>
    %c0_22 = arith.constant 0 : index
    %c0_23 = arith.constant 0 : index
    %31 = vector.load %arg4[%c0_22, %c0_23] : memref<32x1xf32, #tpu.memory_space<vmem>>, vector<32x1xf32>
    %32 = vector.broadcast %31 : vector<32x1xf32> to vector<32x8xf32>
    %33 = arith.mulf %30, %32 : vector<32x8xf32>
    %c0_24 = arith.constant 0 : index
    %c0_25 = arith.constant 0 : index
    %34 = vector.load %arg5[%c0_24, %c0_25] : memref<32x1xf32, #tpu.memory_space<vmem>>, vector<32x1xf32>
    %35 = vector.broadcast %34 : vector<32x1xf32> to vector<32x8xf32>
    %36 = arith.addf %33, %35 : vector<32x8xf32>
    %cst_26 = arith.constant 0.000000e+00 : f32
    %37 = vector.broadcast %cst_26 : f32 to vector<32x8xf32>
    %38 = arith.maximumf %36, %37 : vector<32x8xf32>
    %c0_27 = arith.constant 0 : index
    %c0_28 = arith.constant 0 : index
    %c0_29 = arith.constant 0 : index
    %39 = vector.load %arg8[%c0_27, %c0_28, %c0_29] : memref<1x32x8xf32, #tpu.memory_space<vmem>>, vector<1x32x8xf32>
    %40 = vector.shape_cast %39 : vector<1x32x8xf32> to vector<32x8xf32>
    %41 = vector.shape_cast %38 : vector<32x8xf32> to vector<1x32x8xf32>
    tpu.vector_store %arg8[%c0_27, %c0_28, %c0_29], %41 {strides = array<i32>} : memref<1x32x8xf32, #tpu.memory_space<vmem>>, vector<1x32x8xf32>,
    return
  }
  func.func @transform_0(%arg0: i32) -> (i32, i32, i32) {
    %c0_i32 = arith.constant 0 : i32
    %c0_i32_0 = arith.constant 0 : i32
    %c0_i32_1 = arith.constant 0 : i32
    return %arg0, %c0_i32, %c0_i32_0 : i32, i32, i32
  }
  func.func @transform_1(%arg0: i32) -> (i32, i32) {
    %c0_i32 = arith.constant 0 : i32
    %c0_i32_0 = arith.constant 0 : i32
    %c0_i32_1 = arith.constant 0 : i32
    return %c0_i32, %c0_i32_0 : i32, i32
  }
  func.func @transform_2(%arg0: i32) -> (i32, i32) {
    %c0_i32 = arith.constant 0 : i32
    %c0_i32_0 = arith.constant 0 : i32
    %c0_i32_1 = arith.constant 0 : i32
    return %c0_i32, %c0_i32_0 : i32, i32
  }
  func.func @transform_3(%arg0: i32) -> (i32, i32) {
    %c0_i32 = arith.constant 0 : i32
    %c0_i32_0 = arith.constant 0 : i32
    %c0_i32_1 = arith.constant 0 : i32
    return %c0_i32, %c0_i32_0 : i32, i32
  }
  func.func @transform_4(%arg0: i32) -> (i32, i32) {
    %c0_i32 = arith.constant 0 : i32
    %c0_i32_0 = arith.constant 0 : i32
    %c0_i32_1 = arith.constant 0 : i32
    return %c0_i32, %c0_i32_0 : i32, i32
  }
  func.func @transform_5(%arg0: i32) -> (i32, i32) {
    %c0_i32 = arith.constant 0 : i32
    %c0_i32_0 = arith.constant 0 : i32
    %c0_i32_1 = arith.constant 0 : i32
    return %c0_i32, %c0_i32_0 : i32, i32
  }
  func.func @transform_6(%arg0: i32) -> (i32, i32) {
    %c0_i32 = arith.constant 0 : i32
    %c0_i32_0 = arith.constant 0 : i32
    %c0_i32_1 = arith.constant 0 : i32
    return %c0_i32, %c0_i32_0 : i32, i32
  }
  func.func @transform_7(%arg0: i32) -> (i32, i32, i32) {
    %c0_i32 = arith.constant 0 : i32
    %c0_i32_0 = arith.constant 0 : i32
    %c0_i32_1 = arith.constant 0 : i32
    return %arg0, %c0_i32, %c0_i32_0 : i32, i32, i32
  }
}

module attributes {stable_mosaic.version = 11 : i64} {
  func.func @_matmul_gn_relu_kernel(%arg0: i32, %arg1: memref<1x864x8xbf16, #tpu.memory_space<vmem>>, %arg2: memref<32x864xbf16, #tpu.memory_space<vmem>>, %arg3: memref<32x1xf32, #tpu.memory_space<vmem>>, %arg4: memref<32x1xf32, #tpu.memory_space<vmem>>, %arg5: memref<32x1xf32, #tpu.memory_space<vmem>>, %arg6: memref<8x32xf32, #tpu.memory_space<vmem>>, %arg7: memref<32x8xf32, #tpu.memory_space<vmem>>, %arg8: memref<1x32x8xf32, #tpu.memory_space<vmem>>) attributes {dimension_semantics = [#tpu.dimension_semantics<parallel>], iteration_bounds = array<i64: 2>, scalar_prefetch = 0 : i64, scratch_operands = 0 : i64, tpu.core_type = #tpu.core_type<tc>, window_params = [{transform_indices = @transform_0, window_bounds = array<i64: 1, 864, 8>}, {pipeline_mode = #tpu.pipeline_mode<synchronous>, transform_indices = @transform_1, window_bounds = array<i64: 32, 864>}, {pipeline_mode = #tpu.pipeline_mode<synchronous>, transform_indices = @transform_2, window_bounds = array<i64: 32, 1>}, {pipeline_mode = #tpu.pipeline_mode<synchronous>, transform_indices = @transform_3, window_bounds = array<i64: 32, 1>}, {pipeline_mode = #tpu.pipeline_mode<synchronous>, transform_indices = @transform_4, window_bounds = array<i64: 32, 1>}, {pipeline_mode = #tpu.pipeline_mode<synchronous>, transform_indices = @transform_5, window_bounds = array<i64: 8, 32>}, {pipeline_mode = #tpu.pipeline_mode<synchronous>, transform_indices = @transform_6, window_bounds = array<i64: 32, 8>}, {transform_indices = @transform_7, window_bounds = array<i64: 1, 32, 8>}]} {
    %c0 = arith.constant 0 : index
    %c0_0 = arith.constant 0 : index
    %0 = vector.load %arg2[%c0, %c0_0] : memref<32x864xbf16, #tpu.memory_space<vmem>>, vector<32x864xbf16>
    %c0_1 = arith.constant 0 : index
    %c0_2 = arith.constant 0 : index
    %c0_3 = arith.constant 0 : index
    %1 = vector.load %arg1[%c0_1, %c0_2, %c0_3] : memref<1x864x8xbf16, #tpu.memory_space<vmem>>, vector<1x864x8xbf16>
    %2 = vector.shape_cast %1 : vector<1x864x8xbf16> to vector<864x8xbf16>
    %cst = arith.constant dense<0.000000e+00> : vector<32x8xf32>
    %3 = tpu.matmul %0, %2, %cst {dimension_numbers = #tpu.dot_dimension_numbers<[1], [0], [0], [1], [0, 0, 1, 1], [], []>} : vector<32x864xbf16>, vector<864x8xbf16>, vector<32x8xf32> -> vector<32x8xf32>
    %c0_4 = arith.constant 0 : index
    %c0_5 = arith.constant 0 : index
    %4 = vector.load %arg3[%c0_4, %c0_5] : memref<32x1xf32, #tpu.memory_space<vmem>>, vector<32x1xf32>
    %5 = vector.broadcast %4 : vector<32x1xf32> to vector<32x8xf32>
    %6 = arith.addf %3, %5 : vector<32x8xf32>
    %cst_6 = arith.constant dense<0.000000e+00> : vector<32xf32>
    %7 = vector.multi_reduction <add>, %6, %cst_6 [1] : vector<32x8xf32> to vector<32xf32>
    %8 = vector.shape_cast %7 : vector<32xf32> to vector<32x1xf32>
    %9 = arith.mulf %6, %6 : vector<32x8xf32>
    %cst_7 = arith.constant dense<0.000000e+00> : vector<32xf32>
    %10 = vector.multi_reduction <add>, %9, %cst_7 [1] : vector<32x8xf32> to vector<32xf32>
    %11 = vector.shape_cast %10 : vector<32xf32> to vector<32x1xf32>
    %c0_8 = arith.constant 0 : index
    %c0_9 = arith.constant 0 : index
    %12 = vector.load %arg6[%c0_8, %c0_9] : memref<8x32xf32, #tpu.memory_space<vmem>>, vector<8x32xf32>
    %cst_10 = arith.constant dense<0.000000e+00> : vector<8x1xf32>
    %13 = tpu.matmul %12, %8, %cst_10 {dimension_numbers = #tpu.dot_dimension_numbers<[1], [0], [0], [1], [0, 0, 1, 1], [], []>} : vector<8x32xf32>, vector<32x1xf32>, vector<8x1xf32> -> vector<8x1xf32>
    %c0_11 = arith.constant 0 : index
    %c0_12 = arith.constant 0 : index
    %14 = vector.load %arg6[%c0_11, %c0_12] : memref<8x32xf32, #tpu.memory_space<vmem>>, vector<8x32xf32>
    %cst_13 = arith.constant dense<0.000000e+00> : vector<8x1xf32>
    %15 = tpu.matmul %14, %11, %cst_13 {dimension_numbers = #tpu.dot_dimension_numbers<[1], [0], [0], [1], [0, 0, 1, 1], [], []>} : vector<8x32xf32>, vector<32x1xf32>, vector<8x1xf32> -> vector<8x1xf32>
    %c0_14 = arith.constant 0 : index
    %c0_15 = arith.constant 0 : index
    %16 = vector.load %arg7[%c0_14, %c0_15] : memref<32x8xf32, #tpu.memory_space<vmem>>, vector<32x8xf32>
    %cst_16 = arith.constant dense<0.000000e+00> : vector<32x1xf32>
    %17 = tpu.matmul %16, %13, %cst_16 {dimension_numbers = #tpu.dot_dimension_numbers<[1], [0], [0], [1], [0, 0, 1, 1], [], []>} : vector<32x8xf32>, vector<8x1xf32>, vector<32x1xf32> -> vector<32x1xf32>
    %c0_17 = arith.constant 0 : index
    %c0_18 = arith.constant 0 : index
    %18 = vector.load %arg7[%c0_17, %c0_18] : memref<32x8xf32, #tpu.memory_space<vmem>>, vector<32x8xf32>
    %cst_19 = arith.constant dense<0.000000e+00> : vector<32x1xf32>
    %19 = tpu.matmul %18, %15, %cst_19 {dimension_numbers = #tpu.dot_dimension_numbers<[1], [0], [0], [1], [0, 0, 1, 1], [], []>} : vector<32x8xf32>, vector<8x1xf32>, vector<32x1xf32> -> vector<32x1xf32>
    %20 = arith.mulf %17, %17 : vector<32x1xf32>
    %21 = arith.subf %19, %20 : vector<32x1xf32>
    %cst_20 = arith.constant 0.000000e+00 : f32
    %22 = vector.broadcast %cst_20 : f32 to vector<32x1xf32>
    %23 = arith.maximumf %21, %22 : vector<32x1xf32>
    %24 = vector.broadcast %17 : vector<32x1xf32> to vector<32x8xf32>
    %25 = arith.subf %6, %24 : vector<32x8xf32>
    %cst_21 = arith.constant 9.99999974E-6 : f32
    %26 = vector.broadcast %cst_21 : f32 to vector<32x1xf32>
    %27 = arith.addf %23, %26 : vector<32x1xf32>
    %28 = math.rsqrt %27 : vector<32x1xf32>
    %29 = vector.broadcast %28 : vector<32x1xf32> to vector<32x8xf32>
    %30 = arith.mulf %25, %29 : vector<32x8xf32>
    %c0_22 = arith.constant 0 : index
    %c0_23 = arith.constant 0 : index
    %31 = vector.load %arg4[%c0_22, %c0_23] : memref<32x1xf32, #tpu.memory_space<vmem>>, vector<32x1xf32>
    %32 = vector.broadcast %31 : vector<32x1xf32> to vector<32x8xf32>
    %33 = arith.mulf %30, %32 : vector<32x8xf32>
    %c0_24 = arith.constant 0 : index
    %c0_25 = arith.constant 0 : index
    %34 = vector.load %arg5[%c0_24, %c0_25] : memref<32x1xf32, #tpu.memory_space<vmem>>, vector<32x1xf32>
    %35 = vector.broadcast %34 : vector<32x1xf32> to vector<32x8xf32>
    %36 = arith.addf %33, %35 : vector<32x8xf32>
    %cst_26 = arith.constant 0.000000e+00 : f32
    %37 = vector.broadcast %cst_26 : f32 to vector<32x8xf32>
    %38 = arith.maximumf %36, %37 : vector<32x8xf32>
    %c0_27 = arith.constant 0 : index
    %c0_28 = arith.constant 0 : index
    %c0_29 = arith.constant 0 : index
    %39 = vector.load %arg8[%c0_27, %c0_28, %c0_29] : memref<1x32x8xf32, #tpu.memory_space<vmem>>, vector<1x32x8xf32>
    %40 = vector.shape_cast %39 : vector<1x32x8xf32> to vector<32x8xf32>
    %41 = vector.shape_cast %38 : vector<32x8xf32> to vector<1x32x8xf32>
    tpu.vector_store %arg8[%c0_27, %c0_28, %c0_29], %41 {strides = array<i32>} : memref<1x32x8xf32, #tpu.memory_space<vmem>>, vector<1x32x8xf32>,
    return
  }
  func.func @transform_0(%arg0: i32) -> (i32, i32, i32) {
    %c0_i32 = arith.constant 0 : i32
    %c0_i32_0 = arith.constant 0 : i32
    %c0_i32_1 = arith.constant 0 : i32
    return %arg0, %c0_i32, %c0_i32_0 : i32, i32, i32
  }
  func.func @transform_1(%arg0: i32) -> (i32, i32) {
    %c0_i32 = arith.constant 0 : i32
    %c0_i32_0 = arith.constant 0 : i32
    %c0_i32_1 = arith.constant 0 : i32
    return %c0_i32, %c0_i32_0 : i32, i32
  }
  func.func @transform_2(%arg0: i32) -> (i32, i32) {
    %c0_i32 = arith.constant 0 : i32
    %c0_i32_0 = arith.constant 0 : i32
    %c0_i32_1 = arith.constant 0 : i32
    return %c0_i32, %c0_i32_0 : i32, i32
  }
  func.func @transform_3(%arg0: i32) -> (i32, i32) {
    %c0_i32 = arith.constant 0 : i32
    %c0_i32_0 = arith.constant 0 : i32
    %c0_i32_1 = arith.constant 0 : i32
    return %c0_i32, %c0_i32_0 : i32, i32
  }
  func.func @transform_4(%arg0: i32) -> (i32, i32) {
    %c0_i32 = arith.constant 0 : i32
    %c0_i32_0 = arith.constant 0 : i32
    %c0_i32_1 = arith.constant 0 : i32
    return %c0_i32, %c0_i32_0 : i32, i32
  }
  func.func @transform_5(%arg0: i32) -> (i32, i32) {
    %c0_i32 = arith.constant 0 : i32
    %c0_i32_0 = arith.constant 0 : i32
    %c0_i32_1 = arith.constant 0 : i32
    return %c0_i32, %c0_i32_0 : i32, i32
  }
  func.func @transform_6(%arg0: i32) -> (i32, i32) {
    %c0_i32 = arith.constant 0 : i32
    %c0_i32_0 = arith.constant 0 : i32
    %c0_i32_1 = arith.constant 0 : i32
    return %c0_i32, %c0_i32_0 : i32, i32
  }
  func.func @transform_7(%arg0: i32) -> (i32, i32, i32) {
    %c0_i32 = arith.constant 0 : i32
    %c0_i32_0 = arith.constant 0 : i32
    %c0_i32_1 = arith.constant 0 : i32
    return %arg0, %c0_i32, %c0_i32_0 : i32, i32, i32
  }
}

module attributes {stable_mosaic.version = 11 : i64} {
  func.func @_matmul_gn_relu_kernel(%arg0: i32, %arg1: memref<1x256x8xbf16, #tpu.memory_space<vmem>>, %arg2: memref<128x256xbf16, #tpu.memory_space<vmem>>, %arg3: memref<128x1xf32, #tpu.memory_space<vmem>>, %arg4: memref<128x1xf32, #tpu.memory_space<vmem>>, %arg5: memref<128x1xf32, #tpu.memory_space<vmem>>, %arg6: memref<8x128xf32, #tpu.memory_space<vmem>>, %arg7: memref<128x8xf32, #tpu.memory_space<vmem>>, %arg8: memref<1x128x8xf32, #tpu.memory_space<vmem>>) attributes {dimension_semantics = [#tpu.dimension_semantics<parallel>], iteration_bounds = array<i64: 2>, scalar_prefetch = 0 : i64, scratch_operands = 0 : i64, tpu.core_type = #tpu.core_type<tc>, window_params = [{transform_indices = @transform_0, window_bounds = array<i64: 1, 256, 8>}, {pipeline_mode = #tpu.pipeline_mode<synchronous>, transform_indices = @transform_1, window_bounds = array<i64: 128, 256>}, {pipeline_mode = #tpu.pipeline_mode<synchronous>, transform_indices = @transform_2, window_bounds = array<i64: 128, 1>}, {pipeline_mode = #tpu.pipeline_mode<synchronous>, transform_indices = @transform_3, window_bounds = array<i64: 128, 1>}, {pipeline_mode = #tpu.pipeline_mode<synchronous>, transform_indices = @transform_4, window_bounds = array<i64: 128, 1>}, {pipeline_mode = #tpu.pipeline_mode<synchronous>, transform_indices = @transform_5, window_bounds = array<i64: 8, 128>}, {pipeline_mode = #tpu.pipeline_mode<synchronous>, transform_indices = @transform_6, window_bounds = array<i64: 128, 8>}, {transform_indices = @transform_7, window_bounds = array<i64: 1, 128, 8>}]} {
    %c0 = arith.constant 0 : index
    %c0_0 = arith.constant 0 : index
    %0 = vector.load %arg2[%c0, %c0_0] : memref<128x256xbf16, #tpu.memory_space<vmem>>, vector<128x256xbf16>
    %c0_1 = arith.constant 0 : index
    %c0_2 = arith.constant 0 : index
    %c0_3 = arith.constant 0 : index
    %1 = vector.load %arg1[%c0_1, %c0_2, %c0_3] : memref<1x256x8xbf16, #tpu.memory_space<vmem>>, vector<1x256x8xbf16>
    %2 = vector.shape_cast %1 : vector<1x256x8xbf16> to vector<256x8xbf16>
    %cst = arith.constant dense<0.000000e+00> : vector<128x8xf32>
    %3 = tpu.matmul %0, %2, %cst {dimension_numbers = #tpu.dot_dimension_numbers<[1], [0], [0], [1], [0, 0, 1, 1], [], []>} : vector<128x256xbf16>, vector<256x8xbf16>, vector<128x8xf32> -> vector<128x8xf32>
    %c0_4 = arith.constant 0 : index
    %c0_5 = arith.constant 0 : index
    %4 = vector.load %arg3[%c0_4, %c0_5] : memref<128x1xf32, #tpu.memory_space<vmem>>, vector<128x1xf32>
    %5 = vector.broadcast %4 : vector<128x1xf32> to vector<128x8xf32>
    %6 = arith.addf %3, %5 : vector<128x8xf32>
    %cst_6 = arith.constant dense<0.000000e+00> : vector<128xf32>
    %7 = vector.multi_reduction <add>, %6, %cst_6 [1] : vector<128x8xf32> to vector<128xf32>
    %8 = vector.shape_cast %7 : vector<128xf32> to vector<128x1xf32>
    %9 = arith.mulf %6, %6 : vector<128x8xf32>
    %cst_7 = arith.constant dense<0.000000e+00> : vector<128xf32>
    %10 = vector.multi_reduction <add>, %9, %cst_7 [1] : vector<128x8xf32> to vector<128xf32>
    %11 = vector.shape_cast %10 : vector<128xf32> to vector<128x1xf32>
    %c0_8 = arith.constant 0 : index
    %c0_9 = arith.constant 0 : index
    %12 = vector.load %arg6[%c0_8, %c0_9] : memref<8x128xf32, #tpu.memory_space<vmem>>, vector<8x128xf32>
    %cst_10 = arith.constant dense<0.000000e+00> : vector<8x1xf32>
    %13 = tpu.matmul %12, %8, %cst_10 {dimension_numbers = #tpu.dot_dimension_numbers<[1], [0], [0], [1], [0, 0, 1, 1], [], []>} : vector<8x128xf32>, vector<128x1xf32>, vector<8x1xf32> -> vector<8x1xf32>
    %c0_11 = arith.constant 0 : index
    %c0_12 = arith.constant 0 : index
    %14 = vector.load %arg6[%c0_11, %c0_12] : memref<8x128xf32, #tpu.memory_space<vmem>>, vector<8x128xf32>
    %cst_13 = arith.constant dense<0.000000e+00> : vector<8x1xf32>
    %15 = tpu.matmul %14, %11, %cst_13 {dimension_numbers = #tpu.dot_dimension_numbers<[1], [0], [0], [1], [0, 0, 1, 1], [], []>} : vector<8x128xf32>, vector<128x1xf32>, vector<8x1xf32> -> vector<8x1xf32>
    %c0_14 = arith.constant 0 : index
    %c0_15 = arith.constant 0 : index
    %16 = vector.load %arg7[%c0_14, %c0_15] : memref<128x8xf32, #tpu.memory_space<vmem>>, vector<128x8xf32>
    %cst_16 = arith.constant dense<0.000000e+00> : vector<128x1xf32>
    %17 = tpu.matmul %16, %13, %cst_16 {dimension_numbers = #tpu.dot_dimension_numbers<[1], [0], [0], [1], [0, 0, 1, 1], [], []>} : vector<128x8xf32>, vector<8x1xf32>, vector<128x1xf32> -> vector<128x1xf32>
    %c0_17 = arith.constant 0 : index
    %c0_18 = arith.constant 0 : index
    %18 = vector.load %arg7[%c0_17, %c0_18] : memref<128x8xf32, #tpu.memory_space<vmem>>, vector<128x8xf32>
    %cst_19 = arith.constant dense<0.000000e+00> : vector<128x1xf32>
    %19 = tpu.matmul %18, %15, %cst_19 {dimension_numbers = #tpu.dot_dimension_numbers<[1], [0], [0], [1], [0, 0, 1, 1], [], []>} : vector<128x8xf32>, vector<8x1xf32>, vector<128x1xf32> -> vector<128x1xf32>
    %20 = arith.mulf %17, %17 : vector<128x1xf32>
    %21 = arith.subf %19, %20 : vector<128x1xf32>
    %cst_20 = arith.constant 0.000000e+00 : f32
    %22 = vector.broadcast %cst_20 : f32 to vector<128x1xf32>
    %23 = arith.maximumf %21, %22 : vector<128x1xf32>
    %24 = vector.broadcast %17 : vector<128x1xf32> to vector<128x8xf32>
    %25 = arith.subf %6, %24 : vector<128x8xf32>
    %cst_21 = arith.constant 9.99999974E-6 : f32
    %26 = vector.broadcast %cst_21 : f32 to vector<128x1xf32>
    %27 = arith.addf %23, %26 : vector<128x1xf32>
    %28 = math.rsqrt %27 : vector<128x1xf32>
    %29 = vector.broadcast %28 : vector<128x1xf32> to vector<128x8xf32>
    %30 = arith.mulf %25, %29 : vector<128x8xf32>
    %c0_22 = arith.constant 0 : index
    %c0_23 = arith.constant 0 : index
    %31 = vector.load %arg4[%c0_22, %c0_23] : memref<128x1xf32, #tpu.memory_space<vmem>>, vector<128x1xf32>
    %32 = vector.broadcast %31 : vector<128x1xf32> to vector<128x8xf32>
    %33 = arith.mulf %30, %32 : vector<128x8xf32>
    %c0_24 = arith.constant 0 : index
    %c0_25 = arith.constant 0 : index
    %34 = vector.load %arg5[%c0_24, %c0_25] : memref<128x1xf32, #tpu.memory_space<vmem>>, vector<128x1xf32>
    %35 = vector.broadcast %34 : vector<128x1xf32> to vector<128x8xf32>
    %36 = arith.addf %33, %35 : vector<128x8xf32>
    %cst_26 = arith.constant 0.000000e+00 : f32
    %37 = vector.broadcast %cst_26 : f32 to vector<128x8xf32>
    %38 = arith.maximumf %36, %37 : vector<128x8xf32>
    %c0_27 = arith.constant 0 : index
    %c0_28 = arith.constant 0 : index
    %c0_29 = arith.constant 0 : index
    %39 = vector.load %arg8[%c0_27, %c0_28, %c0_29] : memref<1x128x8xf32, #tpu.memory_space<vmem>>, vector<1x128x8xf32>
    %40 = vector.shape_cast %39 : vector<1x128x8xf32> to vector<128x8xf32>
    %41 = vector.shape_cast %38 : vector<128x8xf32> to vector<1x128x8xf32>
    tpu.vector_store %arg8[%c0_27, %c0_28, %c0_29], %41 {strides = array<i32>} : memref<1x128x8xf32, #tpu.memory_space<vmem>>, vector<1x128x8xf32>,
    return
  }
  func.func @transform_0(%arg0: i32) -> (i32, i32, i32) {
    %c0_i32 = arith.constant 0 : i32
    %c0_i32_0 = arith.constant 0 : i32
    %c0_i32_1 = arith.constant 0 : i32
    return %arg0, %c0_i32, %c0_i32_0 : i32, i32, i32
  }
  func.func @transform_1(%arg0: i32) -> (i32, i32) {
    %c0_i32 = arith.constant 0 : i32
    %c0_i32_0 = arith.constant 0 : i32
    %c0_i32_1 = arith.constant 0 : i32
    return %c0_i32, %c0_i32_0 : i32, i32
  }
  func.func @transform_2(%arg0: i32) -> (i32, i32) {
    %c0_i32 = arith.constant 0 : i32
    %c0_i32_0 = arith.constant 0 : i32
    %c0_i32_1 = arith.constant 0 : i32
    return %c0_i32, %c0_i32_0 : i32, i32
  }
  func.func @transform_3(%arg0: i32) -> (i32, i32) {
    %c0_i32 = arith.constant 0 : i32
    %c0_i32_0 = arith.constant 0 : i32
    %c0_i32_1 = arith.constant 0 : i32
    return %c0_i32, %c0_i32_0 : i32, i32
  }
  func.func @transform_4(%arg0: i32) -> (i32, i32) {
    %c0_i32 = arith.constant 0 : i32
    %c0_i32_0 = arith.constant 0 : i32
    %c0_i32_1 = arith.constant 0 : i32
    return %c0_i32, %c0_i32_0 : i32, i32
  }
  func.func @transform_5(%arg0: i32) -> (i32, i32) {
    %c0_i32 = arith.constant 0 : i32
    %c0_i32_0 = arith.constant 0 : i32
    %c0_i32_1 = arith.constant 0 : i32
    return %c0_i32, %c0_i32_0 : i32, i32
  }
  func.func @transform_6(%arg0: i32) -> (i32, i32) {
    %c0_i32 = arith.constant 0 : i32
    %c0_i32_0 = arith.constant 0 : i32
    %c0_i32_1 = arith.constant 0 : i32
    return %c0_i32, %c0_i32_0 : i32, i32
  }
  func.func @transform_7(%arg0: i32) -> (i32, i32, i32) {
    %c0_i32 = arith.constant 0 : i32
    %c0_i32_0 = arith.constant 0 : i32
    %c0_i32_1 = arith.constant 0 : i32
    return %arg0, %c0_i32, %c0_i32_0 : i32, i32, i32
  }
}

module attributes {stable_mosaic.version = 11 : i64} {
  func.func @_matmul_gn_relu_kernel(%arg0: i32, %arg1: memref<1x128x64xbf16, #tpu.memory_space<vmem>>, %arg2: memref<64x128xbf16, #tpu.memory_space<vmem>>, %arg3: memref<64x1xf32, #tpu.memory_space<vmem>>, %arg4: memref<64x1xf32, #tpu.memory_space<vmem>>, %arg5: memref<64x1xf32, #tpu.memory_space<vmem>>, %arg6: memref<8x64xf32, #tpu.memory_space<vmem>>, %arg7: memref<64x8xf32, #tpu.memory_space<vmem>>, %arg8: memref<1x64x64xf32, #tpu.memory_space<vmem>>) attributes {dimension_semantics = [#tpu.dimension_semantics<parallel>], iteration_bounds = array<i64: 2>, scalar_prefetch = 0 : i64, scratch_operands = 0 : i64, tpu.core_type = #tpu.core_type<tc>, window_params = [{transform_indices = @transform_0, window_bounds = array<i64: 1, 128, 64>}, {pipeline_mode = #tpu.pipeline_mode<synchronous>, transform_indices = @transform_1, window_bounds = array<i64: 64, 128>}, {pipeline_mode = #tpu.pipeline_mode<synchronous>, transform_indices = @transform_2, window_bounds = array<i64: 64, 1>}, {pipeline_mode = #tpu.pipeline_mode<synchronous>, transform_indices = @transform_3, window_bounds = array<i64: 64, 1>}, {pipeline_mode = #tpu.pipeline_mode<synchronous>, transform_indices = @transform_4, window_bounds = array<i64: 64, 1>}, {pipeline_mode = #tpu.pipeline_mode<synchronous>, transform_indices = @transform_5, window_bounds = array<i64: 8, 64>}, {pipeline_mode = #tpu.pipeline_mode<synchronous>, transform_indices = @transform_6, window_bounds = array<i64: 64, 8>}, {transform_indices = @transform_7, window_bounds = array<i64: 1, 64, 64>}]} {
    %c0 = arith.constant 0 : index
    %c0_0 = arith.constant 0 : index
    %0 = vector.load %arg2[%c0, %c0_0] : memref<64x128xbf16, #tpu.memory_space<vmem>>, vector<64x128xbf16>
    %c0_1 = arith.constant 0 : index
    %c0_2 = arith.constant 0 : index
    %c0_3 = arith.constant 0 : index
    %1 = vector.load %arg1[%c0_1, %c0_2, %c0_3] : memref<1x128x64xbf16, #tpu.memory_space<vmem>>, vector<1x128x64xbf16>
    %2 = vector.shape_cast %1 : vector<1x128x64xbf16> to vector<128x64xbf16>
    %cst = arith.constant dense<0.000000e+00> : vector<64x64xf32>
    %3 = tpu.matmul %0, %2, %cst {dimension_numbers = #tpu.dot_dimension_numbers<[1], [0], [0], [1], [0, 0, 1, 1], [], []>} : vector<64x128xbf16>, vector<128x64xbf16>, vector<64x64xf32> -> vector<64x64xf32>
    %c0_4 = arith.constant 0 : index
    %c0_5 = arith.constant 0 : index
    %4 = vector.load %arg3[%c0_4, %c0_5] : memref<64x1xf32, #tpu.memory_space<vmem>>, vector<64x1xf32>
    %5 = vector.broadcast %4 : vector<64x1xf32> to vector<64x64xf32>
    %6 = arith.addf %3, %5 : vector<64x64xf32>
    %cst_6 = arith.constant dense<0.000000e+00> : vector<64xf32>
    %7 = vector.multi_reduction <add>, %6, %cst_6 [1] : vector<64x64xf32> to vector<64xf32>
    %8 = vector.shape_cast %7 : vector<64xf32> to vector<64x1xf32>
    %9 = arith.mulf %6, %6 : vector<64x64xf32>
    %cst_7 = arith.constant dense<0.000000e+00> : vector<64xf32>
    %10 = vector.multi_reduction <add>, %9, %cst_7 [1] : vector<64x64xf32> to vector<64xf32>
    %11 = vector.shape_cast %10 : vector<64xf32> to vector<64x1xf32>
    %c0_8 = arith.constant 0 : index
    %c0_9 = arith.constant 0 : index
    %12 = vector.load %arg6[%c0_8, %c0_9] : memref<8x64xf32, #tpu.memory_space<vmem>>, vector<8x64xf32>
    %cst_10 = arith.constant dense<0.000000e+00> : vector<8x1xf32>
    %13 = tpu.matmul %12, %8, %cst_10 {dimension_numbers = #tpu.dot_dimension_numbers<[1], [0], [0], [1], [0, 0, 1, 1], [], []>} : vector<8x64xf32>, vector<64x1xf32>, vector<8x1xf32> -> vector<8x1xf32>
    %c0_11 = arith.constant 0 : index
    %c0_12 = arith.constant 0 : index
    %14 = vector.load %arg6[%c0_11, %c0_12] : memref<8x64xf32, #tpu.memory_space<vmem>>, vector<8x64xf32>
    %cst_13 = arith.constant dense<0.000000e+00> : vector<8x1xf32>
    %15 = tpu.matmul %14, %11, %cst_13 {dimension_numbers = #tpu.dot_dimension_numbers<[1], [0], [0], [1], [0, 0, 1, 1], [], []>} : vector<8x64xf32>, vector<64x1xf32>, vector<8x1xf32> -> vector<8x1xf32>
    %c0_14 = arith.constant 0 : index
    %c0_15 = arith.constant 0 : index
    %16 = vector.load %arg7[%c0_14, %c0_15] : memref<64x8xf32, #tpu.memory_space<vmem>>, vector<64x8xf32>
    %cst_16 = arith.constant dense<0.000000e+00> : vector<64x1xf32>
    %17 = tpu.matmul %16, %13, %cst_16 {dimension_numbers = #tpu.dot_dimension_numbers<[1], [0], [0], [1], [0, 0, 1, 1], [], []>} : vector<64x8xf32>, vector<8x1xf32>, vector<64x1xf32> -> vector<64x1xf32>
    %c0_17 = arith.constant 0 : index
    %c0_18 = arith.constant 0 : index
    %18 = vector.load %arg7[%c0_17, %c0_18] : memref<64x8xf32, #tpu.memory_space<vmem>>, vector<64x8xf32>
    %cst_19 = arith.constant dense<0.000000e+00> : vector<64x1xf32>
    %19 = tpu.matmul %18, %15, %cst_19 {dimension_numbers = #tpu.dot_dimension_numbers<[1], [0], [0], [1], [0, 0, 1, 1], [], []>} : vector<64x8xf32>, vector<8x1xf32>, vector<64x1xf32> -> vector<64x1xf32>
    %20 = arith.mulf %17, %17 : vector<64x1xf32>
    %21 = arith.subf %19, %20 : vector<64x1xf32>
    %cst_20 = arith.constant 0.000000e+00 : f32
    %22 = vector.broadcast %cst_20 : f32 to vector<64x1xf32>
    %23 = arith.maximumf %21, %22 : vector<64x1xf32>
    %24 = vector.broadcast %17 : vector<64x1xf32> to vector<64x64xf32>
    %25 = arith.subf %6, %24 : vector<64x64xf32>
    %cst_21 = arith.constant 9.99999974E-6 : f32
    %26 = vector.broadcast %cst_21 : f32 to vector<64x1xf32>
    %27 = arith.addf %23, %26 : vector<64x1xf32>
    %28 = math.rsqrt %27 : vector<64x1xf32>
    %29 = vector.broadcast %28 : vector<64x1xf32> to vector<64x64xf32>
    %30 = arith.mulf %25, %29 : vector<64x64xf32>
    %c0_22 = arith.constant 0 : index
    %c0_23 = arith.constant 0 : index
    %31 = vector.load %arg4[%c0_22, %c0_23] : memref<64x1xf32, #tpu.memory_space<vmem>>, vector<64x1xf32>
    %32 = vector.broadcast %31 : vector<64x1xf32> to vector<64x64xf32>
    %33 = arith.mulf %30, %32 : vector<64x64xf32>
    %c0_24 = arith.constant 0 : index
    %c0_25 = arith.constant 0 : index
    %34 = vector.load %arg5[%c0_24, %c0_25] : memref<64x1xf32, #tpu.memory_space<vmem>>, vector<64x1xf32>
    %35 = vector.broadcast %34 : vector<64x1xf32> to vector<64x64xf32>
    %36 = arith.addf %33, %35 : vector<64x64xf32>
    %cst_26 = arith.constant 0.000000e+00 : f32
    %37 = vector.broadcast %cst_26 : f32 to vector<64x64xf32>
    %38 = arith.maximumf %36, %37 : vector<64x64xf32>
    %c0_27 = arith.constant 0 : index
    %c0_28 = arith.constant 0 : index
    %c0_29 = arith.constant 0 : index
    %39 = vector.load %arg8[%c0_27, %c0_28, %c0_29] : memref<1x64x64xf32, #tpu.memory_space<vmem>>, vector<1x64x64xf32>
    %40 = vector.shape_cast %39 : vector<1x64x64xf32> to vector<64x64xf32>
    %41 = vector.shape_cast %38 : vector<64x64xf32> to vector<1x64x64xf32>
    tpu.vector_store %arg8[%c0_27, %c0_28, %c0_29], %41 {strides = array<i32>} : memref<1x64x64xf32, #tpu.memory_space<vmem>>, vector<1x64x64xf32>,
    return
  }
  func.func @transform_0(%arg0: i32) -> (i32, i32, i32) {
    %c0_i32 = arith.constant 0 : i32
    %c0_i32_0 = arith.constant 0 : i32
    %c0_i32_1 = arith.constant 0 : i32
    return %arg0, %c0_i32, %c0_i32_0 : i32, i32, i32
  }
  func.func @transform_1(%arg0: i32) -> (i32, i32) {
    %c0_i32 = arith.constant 0 : i32
    %c0_i32_0 = arith.constant 0 : i32
    %c0_i32_1 = arith.constant 0 : i32
    return %c0_i32, %c0_i32_0 : i32, i32
  }
  func.func @transform_2(%arg0: i32) -> (i32, i32) {
    %c0_i32 = arith.constant 0 : i32
    %c0_i32_0 = arith.constant 0 : i32
    %c0_i32_1 = arith.constant 0 : i32
    return %c0_i32, %c0_i32_0 : i32, i32
  }
  func.func @transform_3(%arg0: i32) -> (i32, i32) {
    %c0_i32 = arith.constant 0 : i32
    %c0_i32_0 = arith.constant 0 : i32
    %c0_i32_1 = arith.constant 0 : i32
    return %c0_i32, %c0_i32_0 : i32, i32
  }
  func.func @transform_4(%arg0: i32) -> (i32, i32) {
    %c0_i32 = arith.constant 0 : i32
    %c0_i32_0 = arith.constant 0 : i32
    %c0_i32_1 = arith.constant 0 : i32
    return %c0_i32, %c0_i32_0 : i32, i32
  }
  func.func @transform_5(%arg0: i32) -> (i32, i32) {
    %c0_i32 = arith.constant 0 : i32
    %c0_i32_0 = arith.constant 0 : i32
    %c0_i32_1 = arith.constant 0 : i32
    return %c0_i32, %c0_i32_0 : i32, i32
  }
  func.func @transform_6(%arg0: i32) -> (i32, i32) {
    %c0_i32 = arith.constant 0 : i32
    %c0_i32_0 = arith.constant 0 : i32
    %c0_i32_1 = arith.constant 0 : i32
    return %c0_i32, %c0_i32_0 : i32, i32
  }
  func.func @transform_7(%arg0: i32) -> (i32, i32, i32) {
    %c0_i32 = arith.constant 0 : i32
    %c0_i32_0 = arith.constant 0 : i32
    %c0_i32_1 = arith.constant 0 : i32
    return %arg0, %c0_i32, %c0_i32_0 : i32, i32, i32
  }
}

module attributes {stable_mosaic.version = 11 : i64} {
  func.func @_matmul_bias_kernel(%arg0: i32, %arg1: memref<1x216x512xbf16, #tpu.memory_space<vmem>>, %arg2: memref<8x216xbf16, #tpu.memory_space<vmem>>, %arg3: memref<8x1xf32, #tpu.memory_space<vmem>>, %arg4: memref<1x8x512xf32, #tpu.memory_space<vmem>>) attributes {dimension_semantics = [#tpu.dimension_semantics<parallel>], iteration_bounds = array<i64: 2>, scalar_prefetch = 0 : i64, scratch_operands = 0 : i64, tpu.core_type = #tpu.core_type<tc>, window_params = [{transform_indices = @transform_0, window_bounds = array<i64: 1, 216, 512>}, {pipeline_mode = #tpu.pipeline_mode<synchronous>, transform_indices = @transform_1, window_bounds = array<i64: 8, 216>}, {pipeline_mode = #tpu.pipeline_mode<synchronous>, transform_indices = @transform_2, window_bounds = array<i64: 8, 1>}, {transform_indices = @transform_3, window_bounds = array<i64: 1, 8, 512>}]} {
    %c0 = arith.constant 0 : index
    %c0_0 = arith.constant 0 : index
    %0 = vector.load %arg2[%c0, %c0_0] : memref<8x216xbf16, #tpu.memory_space<vmem>>, vector<8x216xbf16>
    %c0_1 = arith.constant 0 : index
    %c0_2 = arith.constant 0 : index
    %c0_3 = arith.constant 0 : index
    %1 = vector.load %arg1[%c0_1, %c0_2, %c0_3] : memref<1x216x512xbf16, #tpu.memory_space<vmem>>, vector<1x216x512xbf16>
    %2 = vector.shape_cast %1 : vector<1x216x512xbf16> to vector<216x512xbf16>
    %cst = arith.constant dense<0.000000e+00> : vector<8x512xf32>
    %3 = tpu.matmul %0, %2, %cst {dimension_numbers = #tpu.dot_dimension_numbers<[1], [0], [0], [1], [0, 0, 1, 1], [], []>} : vector<8x216xbf16>, vector<216x512xbf16>, vector<8x512xf32> -> vector<8x512xf32>
    %c0_4 = arith.constant 0 : index
    %c0_5 = arith.constant 0 : index
    %4 = vector.load %arg3[%c0_4, %c0_5] : memref<8x1xf32, #tpu.memory_space<vmem>>, vector<8x1xf32>
    %5 = vector.broadcast %4 : vector<8x1xf32> to vector<8x512xf32>
    %6 = arith.addf %3, %5 : vector<8x512xf32>
    %c0_6 = arith.constant 0 : index
    %c0_7 = arith.constant 0 : index
    %c0_8 = arith.constant 0 : index
    %7 = vector.load %arg4[%c0_6, %c0_7, %c0_8] : memref<1x8x512xf32, #tpu.memory_space<vmem>>, vector<1x8x512xf32>
    %8 = vector.shape_cast %7 : vector<1x8x512xf32> to vector<8x512xf32>
    %9 = vector.shape_cast %6 : vector<8x512xf32> to vector<1x8x512xf32>
    tpu.vector_store %arg4[%c0_6, %c0_7, %c0_8], %9 {strides = array<i32>} : memref<1x8x512xf32, #tpu.memory_space<vmem>>, vector<1x8x512xf32>,
    return
  }
  func.func @transform_0(%arg0: i32) -> (i32, i32, i32) {
    %c0_i32 = arith.constant 0 : i32
    %c0_i32_0 = arith.constant 0 : i32
    %c0_i32_1 = arith.constant 0 : i32
    return %arg0, %c0_i32, %c0_i32_0 : i32, i32, i32
  }
  func.func @transform_1(%arg0: i32) -> (i32, i32) {
    %c0_i32 = arith.constant 0 : i32
    %c0_i32_0 = arith.constant 0 : i32
    %c0_i32_1 = arith.constant 0 : i32
    return %c0_i32, %c0_i32_0 : i32, i32
  }
  func.func @transform_2(%arg0: i32) -> (i32, i32) {
    %c0_i32 = arith.constant 0 : i32
    %c0_i32_0 = arith.constant 0 : i32
    %c0_i32_1 = arith.constant 0 : i32
    return %c0_i32, %c0_i32_0 : i32, i32
  }
  func.func @transform_3(%arg0: i32) -> (i32, i32, i32) {
    %c0_i32 = arith.constant 0 : i32
    %c0_i32_0 = arith.constant 0 : i32
    %c0_i32_1 = arith.constant 0 : i32
    return %arg0, %c0_i32, %c0_i32_0 : i32, i32, i32
  }
}

module attributes {stable_mosaic.version = 11 : i64} {
  func.func @_softmax_reg_kernel(%arg0: i32, %arg1: memref<2x8x64xf32, #tpu.memory_space<vmem>>, %arg2: memref<2x8x8xf32, #tpu.memory_space<vmem>>, %arg3: memref<2x8x64xf32, #tpu.memory_space<vmem>>) attributes {dimension_semantics = [#tpu.dimension_semantics<arbitrary>], iteration_bounds = array<i64: 1>, scalar_prefetch = 0 : i64, scratch_operands = 0 : i64, tpu.core_type = #tpu.core_type<tc>, window_params = [{pipeline_mode = #tpu.pipeline_mode<synchronous>, transform_indices = @transform_0, window_bounds = array<i64: 2, 8, 64>}, {pipeline_mode = #tpu.pipeline_mode<synchronous>, transform_indices = @transform_1, window_bounds = array<i64: 2, 8, 8>}, {pipeline_mode = #tpu.pipeline_mode<synchronous>, transform_indices = @transform_2, window_bounds = array<i64: 2, 8, 64>}]} {
    %c0 = arith.constant 0 : index
    %c0_0 = arith.constant 0 : index
    %c0_1 = arith.constant 0 : index
    %0 = vector.load %arg1[%c0, %c0_0, %c0_1] : memref<2x8x64xf32, #tpu.memory_space<vmem>>, vector<2x8x64xf32>
    %cst = arith.constant dense<0xFF800000> : vector<2x64xf32>
    %1 = vector.multi_reduction <maximumf>, %0, %cst [1] : vector<2x8x64xf32> to vector<2x64xf32>
    %2 = vector.shape_cast %1 : vector<2x64xf32> to vector<2x1x64xf32>
    %3 = vector.broadcast %2 : vector<2x1x64xf32> to vector<2x8x64xf32>
    %4 = arith.subf %0, %3 : vector<2x8x64xf32>
    %5 = math.exp %4 : vector<2x8x64xf32>
    %cst_2 = arith.constant dense<0.000000e+00> : vector<2x64xf32>
    %6 = vector.multi_reduction <add>, %5, %cst_2 [1] : vector<2x8x64xf32> to vector<2x64xf32>
    %7 = vector.shape_cast %6 : vector<2x64xf32> to vector<2x1x64xf32>
    %8 = vector.broadcast %7 : vector<2x1x64xf32> to vector<2x8x64xf32>
    %9 = arith.divf %5, %8 : vector<2x8x64xf32>
    %c0_3 = arith.constant 0 : index
    %c0_4 = arith.constant 0 : index
    %c0_5 = arith.constant 0 : index
    %10 = vector.load %arg2[%c0_3, %c0_4, %c0_5] : memref<2x8x8xf32, #tpu.memory_space<vmem>>, vector<2x8x8xf32>
    "tpu.trace_start"() <{level = 10 : i32, message = "bkn,bnj->bkj"}> : () -> ()
    %cst_6 = arith.constant dense<0.000000e+00> : vector<2x8x64xf32>
    %11 = tpu.matmul %10, %9, %cst_6 {dimension_numbers = #tpu.dot_dimension_numbers<[2], [1], [1], [2], [0, 0, 0, 1, 1, 2], [0], [0]>} : vector<2x8x8xf32>, vector<2x8x64xf32>, vector<2x8x64xf32> -> vector<2x8x64xf32>
    "tpu.trace_stop"() : () -> ()
    %c0_7 = arith.constant 0 : index
    %c0_8 = arith.constant 0 : index
    %c0_9 = arith.constant 0 : index
    %12 = vector.load %arg3[%c0_7, %c0_8, %c0_9] : memref<2x8x64xf32, #tpu.memory_space<vmem>>, vector<2x8x64xf32>
    tpu.vector_store %arg3[%c0_7, %c0_8, %c0_9], %11 {strides = array<i32>} : memref<2x8x64xf32, #tpu.memory_space<vmem>>, vector<2x8x64xf32>,
    return
  }
  func.func @transform_0(%arg0: i32) -> (i32, i32, i32) {
    %c0_i32 = arith.constant 0 : i32
    %c0_i32_0 = arith.constant 0 : i32
    %c0_i32_1 = arith.constant 0 : i32
    %c0_i32_2 = arith.constant 0 : i32
    return %c0_i32, %c0_i32_0, %c0_i32_1 : i32, i32, i32
  }
  func.func @transform_1(%arg0: i32) -> (i32, i32, i32) {
    %c0_i32 = arith.constant 0 : i32
    %c0_i32_0 = arith.constant 0 : i32
    %c0_i32_1 = arith.constant 0 : i32
    %c0_i32_2 = arith.constant 0 : i32
    return %c0_i32, %c0_i32_0, %c0_i32_1 : i32, i32, i32
  }
  func.func @transform_2(%arg0: i32) -> (i32, i32, i32) {
    %c0_i32 = arith.constant 0 : i32
    %c0_i32_0 = arith.constant 0 : i32
    %c0_i32_1 = arith.constant 0 : i32
    %c0_i32_2 = arith.constant 0 : i32
    return %c0_i32, %c0_i32_0, %c0_i32_1 : i32, i32, i32
  }
}

</mosaic_0001>

<llo_original>
// kernel: squeeze.60
$region0: #{squeeze.60}
  %s0 = inlined_call_operand.vmem [shape: f32[1,2,8,8,8], index: 0, kind: input, shape index: {}]
  %s1 = inlined_call_operand.vmem [shape: f32[2,8,64], index: 1, kind: output, shape index: {}]
  %v2 = vld [vmem:[%s0] ss:$8 sm:$0xf]
  %v3 = vld [vmem:[%s0] ss:$8 sm:$0xf0]
  %vm4 = vcmask 1047556
  %v5 = vsel %vm4, %v3, %v2
  %vm6 = vcmask 64512
  %7 = vst.msk [vmem:[%s1] sm:$0xff] %vm6, %v5
  %s8 = scalar_lea.vmem %s0, 64
  %v9 = vld [vmem:[%s8] ss:$8 sm:$0xf]
  %s10 = scalar_lea.vmem %s0, 64
  %v11 = vld [vmem:[%s10] ss:$8 sm:$0xf0]
  %vm12 = vcmask 1047556
  %v13 = vsel %vm12, %v11, %v9
  %vm14 = vcmask 64512
  %s15 = scalar_lea.vmem %s1, 8
  %16 = vst.msk [vmem:[%s15] sm:$0xff] %vm14, %v13
  %s17 = scalar_lea.vmem %s0, 7
  %v18 = vld [vmem:[%s17] ss:$8 sm:$0xf]
  %s19 = scalar_lea.vmem %s0, 7
  %v20 = vld [vmem:[%s19] ss:$8 sm:$0xf0]
  %vm21 = vcmask 1047556
  %v22 = vsel %vm21, %v20, %v18
  %23 = vrot.lane.b32.xlu0 %v22, 56
  %v24 = vpop.permute.xlu0 %23
  %vm25 = vcmask 523712
  %26 = vst.msk [vmem:[%s1] sm:$0xff] %vm25, %v24
  %s27 = scalar_lea.vmem %s0, 71
  %v28 = vld [vmem:[%s27] ss:$8 sm:$0xf]
  %s29 = scalar_lea.vmem %s0, 71
  %v30 = vld [vmem:[%s29] ss:$8 sm:$0xf0]
  %vm31 = vcmask 1047556
  %v32 = vsel %vm31, %v30, %v28
  %33 = vrot.lane.b32.xlu0 %v32, 56
  %v34 = vpop.permute.xlu0 %33
  %vm35 = vcmask 523712
  %s36 = scalar_lea.vmem %s1, 8
  %37 = vst.msk [vmem:[%s36] sm:$0xff] %vm35, %v34
  %s38 = scalar_lea.vmem %s0, 6
  %v39 = vld [vmem:[%s38] ss:$8 sm:$0xf]
  %s40 = scalar_lea.vmem %s0, 6
  %v41 = vld [vmem:[%s40] ss:$8 sm:$0xf0]
  %vm42 = vcmask 1047556
  %v43 = vsel %vm42, %v41, %v39
  %44 = vrot.lane.b32.xlu0 %v43, 48
  %v45 = vpop.permute.xlu0 %44
  %vm46 = vcmask 458112
  %47 = vst.msk [vmem:[%s1] sm:$0xff] %vm46, %v45
  %s48 = scalar_lea.vmem %s0, 70
  %v49 = vld [vmem:[%s48] ss:$8 sm:$0xf]
  %s50 = scalar_lea.vmem %s0, 70
  %v51 = vld [vmem:[%s50] ss:$8 sm:$0xf0]
  %vm52 = vcmask 1047556
  %v53 = vsel %vm52, %v51, %v49
  %54 = vrot.lane.b32.xlu0 %v53, 48
  %v55 = vpop.permute.xlu0 %54
  %vm56 = vcmask 458112
  %s57 = scalar_lea.vmem %s1, 8
  %58 = vst.msk [vmem:[%s57] sm:$0xff] %vm56, %v55
  %s59 = scalar_lea.vmem %s0, 5
  %v60 = vld [vmem:[%s59] ss:$8 sm:$0xf]
  %s61 = scalar_lea.vmem %s0, 5
  %v62 = vld [vmem:[%s61] ss:$8 sm:$0xf0]
  %vm63 = vcmask 1047556
  %v64 = vsel %vm63, %v62, %v60
  %65 = vrot.lane.b32.xlu0 %v64, 40
  %v66 = vpop.permute.xlu0 %65
  %vm67 = vcmask 392512
  %68 = vst.msk [vmem:[%s1] sm:$0xff] %vm67, %v66
  %s69 = scalar_lea.vmem %s0, 69
  %v70 = vld [vmem:[%s69] ss:$8 sm:$0xf]
  %s71 = scalar_lea.vmem %s0, 69
  %v72 = vld [vmem:[%s71] ss:$8 sm:$0xf0]
  %vm73 = vcmask 1047556
  %v74 = vsel %vm73, %v72, %v70
  %75 = vrot.lane.b32.xlu0 %v74, 40
  %v76 = vpop.permute.xlu0 %75
  %vm77 = vcmask 392512
  %s78 = scalar_lea.vmem %s1, 8
  %79 = vst.msk [vmem:[%s78] sm:$0xff] %vm77, %v76
  %s80 = scalar_lea.vmem %s0, 4
  %v81 = vld [vmem:[%s80] ss:$8 sm:$0xf]
  %s82 = scalar_lea.vmem %s0, 4
  %v83 = vld [vmem:[%s82] ss:$8 sm:$0xf0]
  %vm84 = vcmask 1047556
  %v85 = vsel %vm84, %v83, %v81
  %86 = vrot.lane.b32.xlu0 %v85, 32
  %v87 = vpop.permute.xlu0 %86
  %vm88 = vcmask 326912
  %89 = vst.msk [vmem:[%s1] sm:$0xff] %vm88, %v87
  %s90 = scalar_lea.vmem %s0, 68
  %v91 = vld [vmem:[%s90] ss:$8 sm:$0xf]
  %s92 = scalar_lea.vmem %s0, 68
  %v93 = vld [vmem:[%s92] ss:$8 sm:$0xf0]
  %vm94 = vcmask 1047556
  %v95 = vsel %vm94, %v93, %v91
  %96 = vrot.lane.b32.xlu0 %v95, 32
  %v97 = vpop.permute.xlu0 %96
  %vm98 = vcmask 326912
  %s99 = scalar_lea.vmem %s1, 8
  %100 = vst.msk [vmem:[%s99] sm:$0xff] %vm98, %v97
  %s101 = scalar_lea.vmem %s0, 3
  %v102 = vld [vmem:[%s101] ss:$8 sm:$0xf]
  %s103 = scalar_lea.vmem %s0, 3
  %v104 = vld [vmem:[%s103] ss:$8 sm:$0xf0]
  %vm105 = vcmask 1047556
  %v106 = vsel %vm105, %v104, %v102
  %107 = vrot.lane.b32.xlu0 %v106, 24
  %v108 = vpop.permute.xlu0 %107
  %vm109 = vcmask 261312
  %110 = vst.msk [vmem:[%s1] sm:$0xff] %vm109, %v108
  %s111 = scalar_lea.vmem %s0, 67
  %v112 = vld [vmem:[%s111] ss:$8 sm:$0xf]
  %s113 = scalar_lea.vmem %s0, 67
  %v114 = vld [vmem:[%s113] ss:$8 sm:$0xf0]
  %vm115 = vcmask 1047556
  %v116 = vsel %vm115, %v114, %v112
  %117 = vrot.lane.b32.xlu0 %v116, 24
  %v118 = vpop.permute.xlu0 %117
  %vm119 = vcmask 261312
  %s120 = scalar_lea.vmem %s1, 8
  %121 = vst.msk [vmem:[%s120] sm:$0xff] %vm119, %v118
  %s122 = scalar_lea.vmem %s0, 2
  %v123 = vld [vmem:[%s122] ss:$8 sm:$0xf]
  %s124 = scalar_lea.vmem %s0, 2
  %v125 = vld [vmem:[%s124] ss:$8 sm:$0xf0]
  %vm126 = vcmask 1047556
  %v127 = vsel %vm126, %v125, %v123
  %128 = vrot.lane.b32.xlu0 %v127, 16
  %v129 = vpop.permute.xlu0 %128
  %vm130 = vcmask 195712
  %131 = vst.msk [vmem:[%s1] sm:$0xff] %vm130, %v129
  %s132 = scalar_lea.vmem %s0, 66
  %v133 = vld [vmem:[%s132] ss:$8 sm:$0xf]
  %s134 = scalar_lea.vmem %s0, 66
  %v135 = vld [vmem:[%s134] ss:$8 sm:$0xf0]
  %vm136 = vcmask 1047556
  %v137 = vsel %vm136, %v135, %v133
  %138 = vrot.lane.b32.xlu0 %v137, 16
  %v139 = vpop.permute.xlu0 %138
  %vm140 = vcmask 195712
  %s141 = scalar_lea.vmem %s1, 8
  %142 = vst.msk [vmem:[%s141] sm:$0xff] %vm140, %v139
  %s143 = scalar_lea.vmem %s0, 1
  %v144 = vld [vmem:[%s143] ss:$8 sm:$0xf]
  %s145 = scalar_lea.vmem %s0, 1
  %v146 = vld [vmem:[%s145] ss:$8 sm:$0xf0]
  %vm147 = vcmask 1047556
  %v148 = vsel %vm147, %v146, %v144
  %149 = vrot.lane.b32.xlu0 %v148, 8
  %v150 = vpop.permute.xlu0 %149
  %vm151 = vcmask 130112
  %152 = vst.msk [vmem:[%s1] sm:$0xff] %vm151, %v150
  %s153 = scalar_lea.vmem %s0, 65
  %v154 = vld [vmem:[%s153] ss:$8 sm:$0xf]
  %s155 = scalar_lea.vmem %s0, 65
  %v156 = vld [vmem:[%s155] ss:$8 sm:$0xf0]
  %vm157 = vcmask 1047556
  %v158 = vsel %vm157, %v156, %v154
  %159 = vrot.lane.b32.xlu0 %v158, 8
  %v160 = vpop.permute.xlu0 %159
  %vm161 = vcmask 130112
  %s162 = scalar_lea.vmem %s1, 8
  %163 = vst.msk [vmem:[%s162] sm:$0xff] %vm161, %v160

// kernel: stereonet_forward.11
$region0: #{stereonet_forward.11}
  #allocation0 [shape = 'u32[]', space=smem, size = 0x4, offset = 0x4, fixed_abs, tag = 'smem constant byte address 0x4 - core index']
  #allocation1 [shape = 'u32[144,128]{1,0:T(1,128)}', space=vmem, size = 0x12000, scoped, tag = 'internal scratch']
  %s0 = inlined_call_operand.vmem [shape: bf16[4,32,64], index: 0, kind: input, shape index: {}]
  %s1 = inlined_call_operand.vmem [shape: bf16[8,32], index: 1, kind: input, shape index: {}]
  %s2 = inlined_call_operand.vmem [shape: f32[8,1], index: 2, kind: input, shape index: {}]
  %s3 = inlined_call_operand.vmem [shape: f32[4,8,64], index: 3, kind: output, shape index: {}]
  %s4 = sld [smem:[#allocation0]]
  $region45: #{stereonet_forward.11} parent=0
    _
  %s6 = ssub.s32 1, %s4
  %s7 = scalar_select 0, %s6, %s4
  loop: start=0, step=1, limit=6
  $region2: #{stereonet_forward.11} parent=0 // loop_pre_header
    _
  $region3: #{stereonet_forward.11} parent=0 // loop_header
    %s9 = sphi 0, %s13
    %p10 = scmp.ge.s32.totalorder %s9, 6
    %s19 = sphi 0, %s21
    %s22 = sphi 0, %s19
    %s23 = sphi 0, %s22
    %s39 = sphi 0, %s23
    %s43 = sphi 0, %s43
    %s45 = sphi 0, %s43
    %s46 = sphi 0, %s45
    %s60 = sphi 0, %s46
    %s64 = sphi 0, %s64
    %s66 = sphi 0, %s64
    %s67 = sphi 0, %s66
    %s81 = sphi 0, %s67
    %s87 = sphi 0, %s89
    %s90 = sphi 0, %s87
    %s91 = sphi 0, %s90
    %s107 = sphi 0, %s91
  $region4: #{stereonet_forward.11} parent=0 // loop_header_branch
    %12 = sbr.rel (%p10) target = $region8
  $region5: #{stereonet_forward.11} parent=0 // loop_body
    %s14 = ssub.s32 %s9, 1
    %s15 = ssub.s32 %s9, 2
    %s16 = sadd.s32 %s9, 1
    %s17 = ssub.s32 %s9, %s16
    %p18 = scmp.eq.s32.totalorder %s17, 0
    %s20 = sadd.s32 %s19, 1
    %s21 = scalar_select %p18, %s19, %s20
    %p24 = pneg %p18
    %p25 = scmp.eq.s32.totalorder %s9, 3
    %p26 = por %p24, %p25
    %p27 = scmp.ne.s32.totalorder %s19, %s22
    %p28 = scmp.eq.s32.totalorder %s9, 0
    %p29 = por %p27, %p28
    %p30 = scmp.ne.s32.totalorder %s19, %s22
    %p31 = scmp.eq.s32.totalorder %s14, 3
    %p32 = por %p30, %p31
    %p33 = scmp.ne.s32.totalorder %s22, %s23
    %p34 = scmp.eq.s32.totalorder %s14, 0
    %p35 = por %p33, %p34
    %p36 = scmp.ne.s32.totalorder %s22, %s23
    %p37 = scmp.eq.s32.totalorder %s15, 3
    %p38 = por %p36, %p37
    %p40 = scmp.ne.s32.totalorder %s23, %s39
    %p41 = scmp.eq.s32.totalorder %s15, 0
    %p42 = por %p40, %p41
    %s44 = sadd.s32 %s43, 1
    %p47 = scmp.eq.s32.totalorder %s9, 3
    %p48 = scmp.ne.s32.totalorder %s43, %s45
    %p49 = scmp.eq.s32.totalorder %s9, 0
    %p50 = por %p48, %p49
    %p51 = scmp.ne.s32.totalorder %s43, %s45
    %p52 = scmp.eq.s32.totalorder %s14, 3
    %p53 = por %p51, %p52
    %p54 = scmp.ne.s32.totalorder %s45, %s46
    %p55 = scmp.eq.s32.totalorder %s14, 0
    %p56 = por %p54, %p55
    %p57 = scmp.ne.s32.totalorder %s45, %s46
    %p58 = scmp.eq.s32.totalorder %s15, 3
    %p59 = por %p57, %p58
    %p61 = scmp.ne.s32.totalorder %s46, %s60
    %p62 = scmp.eq.s32.totalorder %s15, 0
    %p63 = por %p61, %p62
    %s65 = sadd.s32 %s64, 1
    %p68 = scmp.eq.s32.totalorder %s9, 3
    %p69 = scmp.ne.s32.totalorder %s64, %s66
    %p70 = scmp.eq.s32.totalorder %s9, 0
    %p71 = por %p69, %p70
    %p72 = scmp.ne.s32.totalorder %s64, %s66
    %p73 = scmp.eq.s32.totalorder %s14, 3
    %p74 = por %p72, %p73
    %p75 = scmp.ne.s32.totalorder %s66, %s67
    %p76 = scmp.eq.s32.totalorder %s14, 0
    %p77 = por %p75, %p76
    %p78 = scmp.ne.s32.totalorder %s66, %s67
    %p79 = scmp.eq.s32.totalorder %s15, 3
    %p80 = por %p78, %p79
    %p82 = scmp.ne.s32.totalorder %s67, %s81
    %p83 = scmp.eq.s32.totalorder %s15, 0
    %p84 = por %p82, %p83
    %s85 = ssub.s32 %s9, %s16
    %p86 = scmp.eq.s32.totalorder %s85, 0
    %s88 = sadd.s32 %s87, 1
    %s89 = scalar_select %p86, %s87, %s88
    %p92 = pneg %p86
    %p93 = scmp.eq.s32.totalorder %s9, 3
    %p94 = por %p92, %p93
    %p95 = scmp.ne.s32.totalorder %s87, %s90
    %p96 = scmp.eq.s32.totalorder %s9, 0
    %p97 = por %p95, %p96
    %p98 = scmp.ne.s32.totalorder %s87, %s90
    %p99 = scmp.eq.s32.totalorder %s14, 3
    %p100 = por %p98, %p99
    %p101 = scmp.ne.s32.totalorder %s90, %s91
    %p102 = scmp.eq.s32.totalorder %s14, 0
    %p103 = por %p101, %p102
    %p104 = scmp.ne.s32.totalorder %s90, %s91
    %p105 = scmp.eq.s32.totalorder %s15, 3
    %p106 = por %p104, %p105
    %p108 = scmp.ne.s32.totalorder %s91, %s107
    %p109 = scmp.eq.s32.totalorder %s15, 0
    %p110 = por %p108, %p109
    %p111 = scmp.le.s32.totalorder 1, %s9
    %p112 = scmp.lt.s32.totalorder %s9, 5
    %p113 = pnand %p111, %p112
    %p114 = pneg %p113
    // Predicated region
    $region9: #{stereonet_forward.11} parent=5 // pred_check
      _
    $region10: #{stereonet_forward.11} parent=5 // pred_check_branch
      %116 = sbr.rel (%p113) target = $region12
    $region11: #{stereonet_forward.11} parent=5 // pred_region
      %s117 = ssub.s32 %s9, 1
      // Predicated region
      $region13: #{stereonet_forward.11} parent=11 // pred_check
        %p118 = pneg %p56
      $region14: #{stereonet_forward.11} parent=11 // pred_check_branch
        %120 = sbr.rel (%p118) target = $region16
      $region15: #{stereonet_forward.11} parent=11 // pred_region
        _
      $region16: #{stereonet_forward.11} parent=11 // pred_fallthru
        _
      // Predicated region
      $region17: #{stereonet_forward.11} parent=11 // pred_check
        %p121 = pneg %p77
      $region18: #{stereonet_forward.11} parent=11 // pred_check_branch
        %123 = sbr.rel (%p121) target = $region20
      $region19: #{stereonet_forward.11} parent=11 // pred_region
        _
      $region20: #{stereonet_forward.11} parent=11 // pred_fallthru
        _
    $region12: #{stereonet_forward.11} parent=5 // pred_fallthru
      _
    %p124 = scmp.lt.s32.totalorder %s9, 4
    // Predicated region
    $region21: #{stereonet_forward.11} parent=5 // pred_check
      %p125 = pneg %p124
    $region22: #{stereonet_forward.11} parent=5 // pred_check_branch
      %127 = sbr.rel (%p125) target = $region24
    $region23: #{stereonet_forward.11} parent=5 // pred_region
      // Predicated region
      $region25: #{stereonet_forward.11} parent=23 // pred_check
        %p128 = pneg %p29
      $region26: #{stereonet_forward.11} parent=23 // pred_check_branch
        %130 = sbr.rel (%p128) target = $region28
      $region27: #{stereonet_forward.11} parent=23 // pred_region
        %p131 = scmp.lt.s32.totalorder %s9, 3
        %s132 = scalar_select %p131, %s9, 3
        %s133 = smul.addr %s132, 4
        %s134 = smul.addr %s133, 4
        %s135 = scalar_lea.vmem %s0, %s134
      $region28: #{stereonet_forward.11} parent=23 // pred_fallthru
        _
    $region24: #{stereonet_forward.11} parent=5 // pred_fallthru
      _
    %p136 = scmp.le.s32.totalorder 1, %s9
    %p137 = scmp.lt.s32.totalorder %s9, 5
    %p138 = pnand %p136, %p137
    %p139 = pneg %p138
    // Predicated region
    $region29: #{stereonet_forward.11} parent=5 // pred_check
      _
    $region30: #{stereonet_forward.11} parent=5 // pred_check_branch
      %141 = sbr.rel (%p138) target = $region32
    $region31: #{stereonet_forward.11} parent=5 // pred_region
      %s142 = ssub.s32 %s9, 1
      %p143 = scmp.lt.s32.totalorder %s14, 3
      %s144 = scalar_select %p143, %s14, 3
      %s145 = smul.addr %s144, 4
      %s146 = smul.addr %s145, 4
      %s147 = scalar_lea.vmem %s0, %s146
      %p148 = pneg %p35
      %p149 = pneg %p32
      %p150 = pneg %p56
      %p151 = pneg %p53
      %p152 = pneg %p77
      %p153 = pneg %p74
      %p154 = pneg %p103
      %p155 = pneg %p100
      %p156 = scmp.lt.s32.totalorder %s14, 3
      %s157 = scalar_select %p156, %s14, 3
      %s158 = smul.addr %s157, 8
      %s159 = scalar_lea.vmem %s3, %s158
      %p160 = scmp.lt.s32.totalorder %s14, 3
      %s161 = scalar_select %p160, %s14, 3
      %s162 = smul.addr %s161, 4
      %s163 = smul.addr %s162, 4
      %s164 = scalar_lea.vmem %s0, %s163
      %p165 = scmp.lt.s32.totalorder %s14, 3
      %s166 = scalar_select %p165, %s14, 3
      %s167 = smul.addr %s166, 8
      %s168 = scalar_lea.vmem %s3, %s167
      %v170 = vld [vmem:[%s1] sm:$0xf]
      %v171 = vld [vmem:[%s164] sm:$0xf]
      %v172 = vld [vmem:[%s164 + $0x4] sm:$0xf]
      %v173 = vld [vmem:[%s164 + $0x8] sm:$0xf]
      %v174 = vld [vmem:[%s164 + $0xc] sm:$0xf]
      %v175 = vld [vmem:[%s2] sm:$0xff]
      %177 = vset.pattern.permute.xlu0 0
      %178 = vperm.xlu0 %177, %v175
      %v179 = vpop.permute.xlu0 %178
      %v185 = vunpack.c.l.b16 %v171
      %v186 = vunpack.c.l.b16 %v172
      %v187 = vunpack.c.l.b16 %v173
      %v188 = vunpack.c.l.b16 %v174
      %v189 = vpack.c.b16 %v186, %v185
      %v190 = vpack.c.b16 %v188, %v187
      %vm193 = vcmask 261120
      %v195 = vsel %vm193, %v170, 0
      %197 = vmatprep.subr.bf16.mxu0 0
      %198 = vmatpush1.bf16.msra.mxu0 %v189
      %199 = vmatprep.subr.bf16.mxu0 0
      %200 = vmatpush1.bf16.msra.mxu0 %v190
      %201 = vmatprep.subr.bf16.mxu0 0
      %202 = vmatpush1.bf16.msra.mxu0 0
      %203 = vmatprep.subr.bf16.mxu0 0
      %204 = vmatpush1.bf16.msra.mxu0 0
      %205 = vmatprep.subr.bf16.mxu0 0
      %206 = vmatpush1.bf16.msra.mxu0 0
      %207 = vmatprep.subr.bf16.mxu0 0
      %208 = vmatpush1.bf16.msra.mxu0 0
      %209 = vmatprep.subr.bf16.mxu0 0
      %210 = vmatpush1.bf16.msra.mxu0 0
      %211 = vmatprep.subr.bf16.mxu0 0
      %212 = vmatpush1.bf16.msra.mxu0 0
      %213 = vmatprep.subr.bf16.mxu0 0
      %214 = vmatpush1.bf16.msra.mxu0 0
      %215 = vmatprep.subr.bf16.mxu0 0
      %216 = vmatpush1.bf16.msra.mxu0 0
      %217 = vmatprep.subr.bf16.mxu0 0
      %218 = vmatpush1.bf16.msra.mxu0 0
      %219 = vmatprep.subr.bf16.mxu0 0
      %220 = vmatpush1.bf16.msra.mxu0 0
      %221 = vmatprep.subr.bf16.mxu0 0
      %222 = vmatpush1.bf16.msra.mxu0 0
      %223 = vmatprep.subr.bf16.mxu0 0
      %224 = vmatpush1.bf16.msra.mxu0 0
      %225 = vmatprep.subr.bf16.mxu0 0
      %226 = vmatpush1.bf16.msra.mxu0 0
      %227 = vmatprep.subr.bf16.mxu0 0
      %228 = vmatpush1.bf16.msra.mxu0 0
      %229 = vmatprep.mubr.bf16.mxu0 0
      %230 = vmatmul.mubr.bf16.gmra.mrb[0].mxu0 %v195
      %v231 = vpop.f32.mrb[0].mxu0
      %v232 = vadd.f32 %v179, %v231
      %v233 = vpop.f32.mrb[0].mxu0
      %v234 = vpop.f32.mrb[0].mxu0
      %v235 = vpop.f32.mrb[0].mxu0
      %236 = vdwg.mxu0
      %vm237 = vcmask 523264
      %238 = vst.msk [vmem:[%s168] sm:$0xff] %vm237, %v232
      %p239 = scmp.lt.s32.totalorder %s14, 3
      %s240 = scalar_select %p239, %s14, 3
      %s241 = smul.addr %s240, 8
      %s242 = scalar_lea.vmem %s3, %s241
      // Predicated region
      $region33: #{stereonet_forward.11} parent=31 // pred_check
        %p243 = pneg %p100
      $region34: #{stereonet_forward.11} parent=31 // pred_check_branch
        %245 = sbr.rel (%p243) target = $region36
      $region35: #{stereonet_forward.11} parent=31 // pred_region
        _
      $region36: #{stereonet_forward.11} parent=31 // pred_fallthru
        _
    $region32: #{stereonet_forward.11} parent=5 // pred_fallthru
      _
    %p246 = scmp.le.s32.totalorder 2, %s9
    // Predicated region
    $region37: #{stereonet_forward.11} parent=5 // pred_check
      %p247 = pneg %p246
    $region38: #{stereonet_forward.11} parent=5 // pred_check_branch
      %249 = sbr.rel (%p247) target = $region40
    $region39: #{stereonet_forward.11} parent=5 // pred_region
      %s250 = ssub.s32 %s9, 2
      // Predicated region
      $region41: #{stereonet_forward.11} parent=39 // pred_check
        %p251 = pneg %p106
      $region42: #{stereonet_forward.11} parent=39 // pred_check_branch
        %253 = sbr.rel (%p251) target = $region44
      $region43: #{stereonet_forward.11} parent=39 // pred_region
        %p254 = scmp.lt.s32.totalorder %s15, 3
        %s255 = scalar_select %p254, %s15, 3
        %s256 = smul.addr %s255, 8
        %s257 = scalar_lea.vmem %s3, %s256
      $region44: #{stereonet_forward.11} parent=39 // pred_fallthru
        _
    $region40: #{stereonet_forward.11} parent=5 // pred_fallthru
      _
  $region6: #{stereonet_forward.11} parent=0 // loop_footer
    %s13 = sadd.s32 1, %s9
  $region7: #{stereonet_forward.11} parent=0 // loop_footer_branch
    %8 = sbr.rel target = $region3
  $region8: #{stereonet_forward.11} parent=0 // loop_exit
    _

// kernel: integer_pow.0
$region0: #{integer_pow.0}
  #allocation0 [shape = 's32[1]{0}', space=sflag, size = 0x4, scoped, tag = 'scoped memory for integer_pow.0']
  %s0 = inlined_call_operand.vmem [shape: f32[2,8,8,8], index: 0, kind: input, shape index: {}, may-alias: {0,1}]
  %s1 = inlined_call_operand.vmem [shape: f32[2,8,8,8], index: 1, kind: input, shape index: {}, may-alias: {0,1}]
  %s2 = inlined_call_operand.vmem [shape: f32[2,8,8,8], index: 2, kind: output, shape index: {}]
  %v3 = vld [vmem:[%s0] sm:$0xff]
  %v4 = vld [vmem:[%s1] sm:$0xff]
  %5 = xla_tuple %v3, %v4
  %6 = xla_tuple %5
  %v7 = vmul.f32 %v3, %v4
  %8 = xla_tuple %v7
  %9 = vst [vmem:[%s2] sm:$0xff] %v7
  %s10 = scalar_lea.vmem %s0, 64
  %v11 = vld [vmem:[%s10] sm:$0xff]
  %s12 = scalar_lea.vmem %s1, 64
  %v13 = vld [vmem:[%s12] sm:$0xff]
  %14 = xla_tuple %v11, %v13
  %15 = xla_tuple %14
  %v16 = vmul.f32 %v11, %v13
  %17 = xla_tuple %v16
  %s18 = scalar_lea.vmem %s2, 64
  %19 = vst [vmem:[%s18] sm:$0xff] %v16
  %s20 = scalar_lea.vmem %s0, 8
  %v21 = vld [vmem:[%s20] sm:$0xff]
  %s22 = scalar_lea.vmem %s1, 8
  %v23 = vld [vmem:[%s22] sm:$0xff]
  %24 = xla_tuple %v21, %v23
  %25 = xla_tuple %24
  %v26 = vmul.f32 %v21, %v23
  %27 = xla_tuple %v26
  %s28 = scalar_lea.vmem %s2, 8
  %29 = vst [vmem:[%s28] sm:$0xff] %v26
  %s30 = scalar_lea.vmem %s0, 72
  %v31 = vld [vmem:[%s30] sm:$0xff]
  %s32 = scalar_lea.vmem %s1, 72
  %v33 = vld [vmem:[%s32] sm:$0xff]
  %34 = xla_tuple %v31, %v33
  %35 = xla_tuple %34
  %v36 = vmul.f32 %v31, %v33
  %37 = xla_tuple %v36
  %s38 = scalar_lea.vmem %s2, 72
  %39 = vst [vmem:[%s38] sm:$0xff] %v36
  %s40 = scalar_lea.vmem %s0, 16
  %v41 = vld [vmem:[%s40] sm:$0xff]
  %s42 = scalar_lea.vmem %s1, 16
  %v43 = vld [vmem:[%s42] sm:$0xff]
  %44 = xla_tuple %v41, %v43
  %45 = xla_tuple %44
  %v46 = vmul.f32 %v41, %v43
  %47 = xla_tuple %v46
  %s48 = scalar_lea.vmem %s2, 16
  %49 = vst [vmem:[%s48] sm:$0xff] %v46
  %s50 = scalar_lea.vmem %s0, 80
  %v51 = vld [vmem:[%s50] sm:$0xff]
  %s52 = scalar_lea.vmem %s1, 80
  %v53 = vld [vmem:[%s52] sm:$0xff]
  %54 = xla_tuple %v51, %v53
  %55 = xla_tuple %54
  %v56 = vmul.f32 %v51, %v53
  %57 = xla_tuple %v56
  %s58 = scalar_lea.vmem %s2, 80
  %59 = vst [vmem:[%s58] sm:$0xff] %v56
  %s60 = scalar_lea.vmem %s0, 24
  %v61 = vld [vmem:[%s60] sm:$0xff]
  %s62 = scalar_lea.vmem %s1, 24
  %v63 = vld [vmem:[%s62] sm:$0xff]
  %64 = xla_tuple %v61, %v63
  %65 = xla_tuple %64
  %v66 = vmul.f32 %v61, %v63
  %67 = xla_tuple %v66
  %s68 = scalar_lea.vmem %s2, 24
  %69 = vst [vmem:[%s68] sm:$0xff] %v66
  %s70 = scalar_lea.vmem %s0, 88
  %v71 = vld [vmem:[%s70] sm:$0xff]
  %s72 = scalar_lea.vmem %s1, 88
  %v73 = vld [vmem:[%s72] sm:$0xff]
  %74 = xla_tuple %v71, %v73
  %75 = xla_tuple %74
  %v76 = vmul.f32 %v71, %v73
  %77 = xla_tuple %v76
  %s78 = scalar_lea.vmem %s2, 88
  %79 = vst [vmem:[%s78] sm:$0xff] %v76
  %s80 = scalar_lea.vmem %s0, 32
  %v81 = vld [vmem:[%s80] sm:$0xff]
  %s82 = scalar_lea.vmem %s1, 32
  %v83 = vld [vmem:[%s82] sm:$0xff]
  %84 = xla_tuple %v81, %v83
  %85 = xla_tuple %84
  %v86 = vmul.f32 %v81, %v83
  %87 = xla_tuple %v86
  %s88 = scalar_lea.vmem %s2, 32
  %89 = vst [vmem:[%s88] sm:$0xff] %v86
  %s90 = scalar_lea.vmem %s0, 96
  %v91 = vld [vmem:[%s90] sm:$0xff]
  %s92 = scalar_lea.vmem %s1, 96
  %v93 = vld [vmem:[%s92] sm:$0xff]
  %94 = xla_tuple %v91, %v93
  %95 = xla_tuple %94
  %v96 = vmul.f32 %v91, %v93
  %97 = xla_tuple %v96
  %s98 = scalar_lea.vmem %s2, 96
  %99 = vst [vmem:[%s98] sm:$0xff] %v96
  %s100 = scalar_lea.vmem %s0, 40
  %v101 = vld [vmem:[%s100] sm:$0xff]
  %s102 = scalar_lea.vmem %s1, 40
  %v103 = vld [vmem:[%s102] sm:$0xff]
  %104 = xla_tuple %v101, %v103
  %105 = xla_tuple %104
  %v106 = vmul.f32 %v101, %v103
  %107 = xla_tuple %v106
  %s108 = scalar_lea.vmem %s2, 40
  %109 = vst [vmem:[%s108] sm:$0xff] %v106
  %s110 = scalar_lea.vmem %s0, 104
  %v111 = vld [vmem:[%s110] sm:$0xff]
  %s112 = scalar_lea.vmem %s1, 104
  %v113 = vld [vmem:[%s112] sm:$0xff]
  %114 = xla_tuple %v111, %v113
  %115 = xla_tuple %114
  %v116 = vmul.f32 %v111, %v113
  %117 = xla_tuple %v116
  %s118 = scalar_lea.vmem %s2, 104
  %119 = vst [vmem:[%s118] sm:$0xff] %v116
  %s120 = scalar_lea.vmem %s0, 48
  %v121 = vld [vmem:[%s120] sm:$0xff]
  %s122 = scalar_lea.vmem %s1, 48
  %v123 = vld [vmem:[%s122] sm:$0xff]
  %124 = xla_tuple %v121, %v123
  %125 = xla_tuple %124
  %v126 = vmul.f32 %v121, %v123
  %127 = xla_tuple %v126
  %s128 = scalar_lea.vmem %s2, 48
  %129 = vst [vmem:[%s128] sm:$0xff] %v126
  %s130 = scalar_lea.vmem %s0, 112
  %v131 = vld [vmem:[%s130] sm:$0xff]
  %s132 = scalar_lea.vmem %s1, 112
  %v133 = vld [vmem:[%s132] sm:$0xff]
  %134 = xla_tuple %v131, %v133
  %135 = xla_tuple %134
  %v136 = vmul.f32 %v131, %v133
  %137 = xla_tuple %v136
  %s138 = scalar_lea.vmem %s2, 112
  %139 = vst [vmem:[%s138] sm:$0xff] %v136
  %s140 = scalar_lea.vmem %s0, 56
  %v141 = vld [vmem:[%s140] sm:$0xff]
  %s142 = scalar_lea.vmem %s1, 56
  %v143 = vld [vmem:[%s142] sm:$0xff]
  %144 = xla_tuple %v141, %v143
  %145 = xla_tuple %144
  %v146 = vmul.f32 %v141, %v143
  %147 = xla_tuple %v146
  %s148 = scalar_lea.vmem %s2, 56
  %149 = vst [vmem:[%s148] sm:$0xff] %v146
  %s150 = scalar_lea.vmem %s0, 120
  %v151 = vld [vmem:[%s150] sm:$0xff]
  %s152 = scalar_lea.vmem %s1, 120
  %v153 = vld [vmem:[%s152] sm:$0xff]
  %154 = xla_tuple %v151, %v153
  %155 = xla_tuple %154
  %v156 = vmul.f32 %v151, %v153
  %157 = xla_tuple %v156
  %s158 = scalar_lea.vmem %s2, 120
  %159 = vst [vmem:[%s158] sm:$0xff] %v156

// kernel: stereonet_forward.12
$region0: #{stereonet_forward.12}
  #allocation0 [shape = 'u32[]', space=smem, size = 0x4, offset = 0x4, fixed_abs, tag = 'smem constant byte address 0x4 - core index']
  #allocation1 [shape = 'u32[144,128]{1,0:T(1,128)}', space=vmem, size = 0x12000, scoped, tag = 'internal scratch']
  %s0 = inlined_call_operand.vmem [shape: bf16[2,216,512], index: 0, kind: input, shape index: {}]
  %s1 = inlined_call_operand.vmem [shape: bf16[8,216], index: 1, kind: input, shape index: {}]
  %s2 = inlined_call_operand.vmem [shape: f32[8,1], index: 2, kind: input, shape index: {}]
  %s3 = inlined_call_operand.vmem [shape: f32[8,1], index: 3, kind: input, shape index: {}]
  %s4 = inlined_call_operand.vmem [shape: f32[8,1], index: 4, kind: input, shape index: {}]
  %s5 = inlined_call_operand.vmem [shape: f32[8,8], index: 5, kind: input, shape index: {}]
  %s6 = inlined_call_operand.vmem [shape: f32[8,8], index: 6, kind: input, shape index: {}]
  %s7 = inlined_call_operand.vmem [shape: f32[2,8,512], index: 7, kind: output, shape index: {}]
  %s8 = sld [smem:[#allocation0]]
  $region61: #{stereonet_forward.12} parent=0
    _
  %s10 = ssub.s32 1, %s8
  %s11 = scalar_select 0, %s10, %s8
  loop: start=0, step=1, limit=4
  $region2: #{stereonet_forward.12} parent=0 // loop_pre_header
    _
  $region3: #{stereonet_forward.12} parent=0 // loop_header
    %s13 = sphi 0, %s17
    %p14 = scmp.ge.s32.totalorder %s13, 4
    %s23 = sphi 0, %s25
    %s26 = sphi 0, %s23
    %s27 = sphi 0, %s26
    %s43 = sphi 0, %s27
    %s47 = sphi 0, %s47
    %s49 = sphi 0, %s47
    %s50 = sphi 0, %s49
    %s64 = sphi 0, %s50
    %s68 = sphi 0, %s68
    %s70 = sphi 0, %s68
    %s71 = sphi 0, %s70
    %s85 = sphi 0, %s71
    %s89 = sphi 0, %s89
    %s91 = sphi 0, %s89
    %s92 = sphi 0, %s91
    %s106 = sphi 0, %s92
    %s110 = sphi 0, %s110
    %s112 = sphi 0, %s110
    %s113 = sphi 0, %s112
    %s127 = sphi 0, %s113
    %s131 = sphi 0, %s131
    %s133 = sphi 0, %s131
    %s134 = sphi 0, %s133
    %s148 = sphi 0, %s134
    %s152 = sphi 0, %s152
    %s154 = sphi 0, %s152
    %s155 = sphi 0, %s154
    %s169 = sphi 0, %s155
    %s175 = sphi 0, %s177
    %s178 = sphi 0, %s175
    %s179 = sphi 0, %s178
    %s195 = sphi 0, %s179
  $region4: #{stereonet_forward.12} parent=0 // loop_header_branch
    %16 = sbr.rel (%p14) target = $region8
  $region5: #{stereonet_forward.12} parent=0 // loop_body
    %s18 = ssub.s32 %s13, 1
    %s19 = ssub.s32 %s13, 2
    %s20 = sadd.s32 %s13, 1
    %s21 = ssub.s32 %s13, %s20
    %p22 = scmp.eq.s32.totalorder %s21, 0
    %s24 = sadd.s32 %s23, 1
    %s25 = scalar_select %p22, %s23, %s24
    %p28 = pneg %p22
    %p29 = scmp.eq.s32.totalorder %s13, 1
    %p30 = por %p28, %p29
    %p31 = scmp.ne.s32.totalorder %s23, %s26
    %p32 = scmp.eq.s32.totalorder %s13, 0
    %p33 = por %p31, %p32
    %p34 = scmp.ne.s32.totalorder %s23, %s26
    %p35 = scmp.eq.s32.totalorder %s18, 1
    %p36 = por %p34, %p35
    %p37 = scmp.ne.s32.totalorder %s26, %s27
    %p38 = scmp.eq.s32.totalorder %s18, 0
    %p39 = por %p37, %p38
    %p40 = scmp.ne.s32.totalorder %s26, %s27
    %p41 = scmp.eq.s32.totalorder %s19, 1
    %p42 = por %p40, %p41
    %p44 = scmp.ne.s32.totalorder %s27, %s43
    %p45 = scmp.eq.s32.totalorder %s19, 0
    %p46 = por %p44, %p45
    %s48 = sadd.s32 %s47, 1
    %p51 = scmp.eq.s32.totalorder %s13, 1
    %p52 = scmp.ne.s32.totalorder %s47, %s49
    %p53 = scmp.eq.s32.totalorder %s13, 0
    %p54 = por %p52, %p53
    %p55 = scmp.ne.s32.totalorder %s47, %s49
    %p56 = scmp.eq.s32.totalorder %s18, 1
    %p57 = por %p55, %p56
    %p58 = scmp.ne.s32.totalorder %s49, %s50
    %p59 = scmp.eq.s32.totalorder %s18, 0
    %p60 = por %p58, %p59
    %p61 = scmp.ne.s32.totalorder %s49, %s50
    %p62 = scmp.eq.s32.totalorder %s19, 1
    %p63 = por %p61, %p62
    %p65 = scmp.ne.s32.totalorder %s50, %s64
    %p66 = scmp.eq.s32.totalorder %s19, 0
    %p67 = por %p65, %p66
    %s69 = sadd.s32 %s68, 1
    %p72 = scmp.eq.s32.totalorder %s13, 1
    %p73 = scmp.ne.s32.totalorder %s68, %s70
    %p74 = scmp.eq.s32.totalorder %s13, 0
    %p75 = por %p73, %p74
    %p76 = scmp.ne.s32.totalorder %s68, %s70
    %p77 = scmp.eq.s32.totalorder %s18, 1
    %p78 = por %p76, %p77
    %p79 = scmp.ne.s32.totalorder %s70, %s71
    %p80 = scmp.eq.s32.totalorder %s18, 0
    %p81 = por %p79, %p80
    %p82 = scmp.ne.s32.totalorder %s70, %s71
    %p83 = scmp.eq.s32.totalorder %s19, 1
    %p84 = por %p82, %p83
    %p86 = scmp.ne.s32.totalorder %s71, %s85
    %p87 = scmp.eq.s32.totalorder %s19, 0
    %p88 = por %p86, %p87
    %s90 = sadd.s32 %s89, 1
    %p93 = scmp.eq.s32.totalorder %s13, 1
    %p94 = scmp.ne.s32.totalorder %s89, %s91
    %p95 = scmp.eq.s32.totalorder %s13, 0
    %p96 = por %p94, %p95
    %p97 = scmp.ne.s32.totalorder %s89, %s91
    %p98 = scmp.eq.s32.totalorder %s18, 1
    %p99 = por %p97, %p98
    %p100 = scmp.ne.s32.totalorder %s91, %s92
    %p101 = scmp.eq.s32.totalorder %s18, 0
    %p102 = por %p100, %p101
    %p103 = scmp.ne.s32.totalorder %s91, %s92
    %p104 = scmp.eq.s32.totalorder %s19, 1
    %p105 = por %p103, %p104
    %p107 = scmp.ne.s32.totalorder %s92, %s106
    %p108 = scmp.eq.s32.totalorder %s19, 0
    %p109 = por %p107, %p108
    %s111 = sadd.s32 %s110, 1
    %p114 = scmp.eq.s32.totalorder %s13, 1
    %p115 = scmp.ne.s32.totalorder %s110, %s112
    %p116 = scmp.eq.s32.totalorder %s13, 0
    %p117 = por %p115, %p116
    %p118 = scmp.ne.s32.totalorder %s110, %s112
    %p119 = scmp.eq.s32.totalorder %s18, 1
    %p120 = por %p118, %p119
    %p121 = scmp.ne.s32.totalorder %s112, %s113
    %p122 = scmp.eq.s32.totalorder %s18, 0
    %p123 = por %p121, %p122
    %p124 = scmp.ne.s32.totalorder %s112, %s113
    %p125 = scmp.eq.s32.totalorder %s19, 1
    %p126 = por %p124, %p125
    %p128 = scmp.ne.s32.totalorder %s113, %s127
    %p129 = scmp.eq.s32.totalorder %s19, 0
    %p130 = por %p128, %p129
    %s132 = sadd.s32 %s131, 1
    %p135 = scmp.eq.s32.totalorder %s13, 1
    %p136 = scmp.ne.s32.totalorder %s131, %s133
    %p137 = scmp.eq.s32.totalorder %s13, 0
    %p138 = por %p136, %p137
    %p139 = scmp.ne.s32.totalorder %s131, %s133
    %p140 = scmp.eq.s32.totalorder %s18, 1
    %p141 = por %p139, %p140
    %p142 = scmp.ne.s32.totalorder %s133, %s134
    %p143 = scmp.eq.s32.totalorder %s18, 0
    %p144 = por %p142, %p143
    %p145 = scmp.ne.s32.totalorder %s133, %s134
    %p146 = scmp.eq.s32.totalorder %s19, 1
    %p147 = por %p145, %p146
    %p149 = scmp.ne.s32.totalorder %s134, %s148
    %p150 = scmp.eq.s32.totalorder %s19, 0
    %p151 = por %p149, %p150
    %s153 = sadd.s32 %s152, 1
    %p156 = scmp.eq.s32.totalorder %s13, 1
    %p157 = scmp.ne.s32.totalorder %s152, %s154
    %p158 = scmp.eq.s32.totalorder %s13, 0
    %p159 = por %p157, %p158
    %p160 = scmp.ne.s32.totalorder %s152, %s154
    %p161 = scmp.eq.s32.totalorder %s18, 1
    %p162 = por %p160, %p161
    %p163 = scmp.ne.s32.totalorder %s154, %s155
    %p164 = scmp.eq.s32.totalorder %s18, 0
    %p165 = por %p163, %p164
    %p166 = scmp.ne.s32.totalorder %s154, %s155
    %p167 = scmp.eq.s32.totalorder %s19, 1
    %p168 = por %p166, %p167
    %p170 = scmp.ne.s32.totalorder %s155, %s169
    %p171 = scmp.eq.s32.totalorder %s19, 0
    %p172 = por %p170, %p171
    %s173 = ssub.s32 %s13, %s20
    %p174 = scmp.eq.s32.totalorder %s173, 0
    %s176 = sadd.s32 %s175, 1
    %s177 = scalar_select %p174, %s175, %s176
    %p180 = pneg %p174
    %p181 = scmp.eq.s32.totalorder %s13, 1
    %p182 = por %p180, %p181
    %p183 = scmp.ne.s32.totalorder %s175, %s178
    %p184 = scmp.eq.s32.totalorder %s13, 0
    %p185 = por %p183, %p184
    %p186 = scmp.ne.s32.totalorder %s175, %s178
    %p187 = scmp.eq.s32.totalorder %s18, 1
    %p188 = por %p186, %p187
    %p189 = scmp.ne.s32.totalorder %s178, %s179
    %p190 = scmp.eq.s32.totalorder %s18, 0
    %p191 = por %p189, %p190
    %p192 = scmp.ne.s32.totalorder %s178, %s179
    %p193 = scmp.eq.s32.totalorder %s19, 1
    %p194 = por %p192, %p193
    %p196 = scmp.ne.s32.totalorder %s179, %s195
    %p197 = scmp.eq.s32.totalorder %s19, 0
    %p198 = por %p196, %p197
    %p199 = scmp.le.s32.totalorder 1, %s13
    %p200 = scmp.lt.s32.totalorder %s13, 3
    %p201 = pnand %p199, %p200
    %p202 = pneg %p201
    // Predicated region
    $region9: #{stereonet_forward.12} parent=5 // pred_check
      _
    $region10: #{stereonet_forward.12} parent=5 // pred_check_branch
      %204 = sbr.rel (%p201) target = $region12
    $region11: #{stereonet_forward.12} parent=5 // pred_region
      %s205 = ssub.s32 %s13, 1
      // Predicated region
      $region13: #{stereonet_forward.12} parent=11 // pred_check
        %p206 = pneg %p60
      $region14: #{stereonet_forward.12} parent=11 // pred_check_branch
        %208 = sbr.rel (%p206) target = $region16
      $region15: #{stereonet_forward.12} parent=11 // pred_region
        _
      $region16: #{stereonet_forward.12} parent=11 // pred_fallthru
        _
      // Predicated region
      $region17: #{stereonet_forward.12} parent=11 // pred_check
        %p209 = pneg %p81
      $region18: #{stereonet_forward.12} parent=11 // pred_check_branch
        %211 = sbr.rel (%p209) target = $region20
      $region19: #{stereonet_forward.12} parent=11 // pred_region
        _
      $region20: #{stereonet_forward.12} parent=11 // pred_fallthru
        _
      // Predicated region
      $region21: #{stereonet_forward.12} parent=11 // pred_check
        %p212 = pneg %p102
      $region22: #{stereonet_forward.12} parent=11 // pred_check_branch
        %214 = sbr.rel (%p212) target = $region24
      $region23: #{stereonet_forward.12} parent=11 // pred_region
        _
      $region24: #{stereonet_forward.12} parent=11 // pred_fallthru
        _
      // Predicated region
      $region25: #{stereonet_forward.12} parent=11 // pred_check
        %p215 = pneg %p123
      $region26: #{stereonet_forward.12} parent=11 // pred_check_branch
        %217 = sbr.rel (%p215) target = $region28
      $region27: #{stereonet_forward.12} parent=11 // pred_region
        _
      $region28: #{stereonet_forward.12} parent=11 // pred_fallthru
        _
      // Predicated region
      $region29: #{stereonet_forward.12} parent=11 // pred_check
        %p218 = pneg %p144
      $region30: #{stereonet_forward.12} parent=11 // pred_check_branch
        %220 = sbr.rel (%p218) target = $region32
      $region31: #{stereonet_forward.12} parent=11 // pred_region
        _
      $region32: #{stereonet_forward.12} parent=11 // pred_fallthru
        _
      // Predicated region
      $region33: #{stereonet_forward.12} parent=11 // pred_check
        %p221 = pneg %p165
      $region34: #{stereonet_forward.12} parent=11 // pred_check_branch
        %223 = sbr.rel (%p221) target = $region36
      $region35: #{stereonet_forward.12} parent=11 // pred_region
        _
      $region36: #{stereonet_forward.12} parent=11 // pred_fallthru
        _
    $region12: #{stereonet_forward.12} parent=5 // pred_fallthru
      _
    %p224 = scmp.lt.s32.totalorder %s13, 2
    // Predicated region
    $region37: #{stereonet_forward.12} parent=5 // pred_check
      %p225 = pneg %p224
    $region38: #{stereonet_forward.12} parent=5 // pred_check_branch
      %227 = sbr.rel (%p225) target = $region40
    $region39: #{stereonet_forward.12} parent=5 // pred_region
      // Predicated region
      $region41: #{stereonet_forward.12} parent=39 // pred_check
        %p228 = pneg %p33
      $region42: #{stereonet_forward.12} parent=39 // pred_check_branch
        %230 = sbr.rel (%p228) target = $region44
      $region43: #{stereonet_forward.12} parent=39 // pred_region
        %p231 = scmp.lt.s32.totalorder %s13, 1
        %s232 = scalar_select %p231, %s13, 1
        %s233 = smul.addr %s232, 108
        %s234 = smul.addr %s233, 4
        %s235 = scalar_lea.vmem %s0, %s234
      $region44: #{stereonet_forward.12} parent=39 // pred_fallthru
        _
    $region40: #{stereonet_forward.12} parent=5 // pred_fallthru
      _
    %p236 = scmp.le.s32.totalorder 1, %s13
    %p237 = scmp.lt.s32.totalorder %s13, 3
    %p238 = pnand %p236, %p237
    %p239 = pneg %p238
    // Predicated region
    $region45: #{stereonet_forward.12} parent=5 // pred_check
      _
    $region46: #{stereonet_forward.12} parent=5 // pred_check_branch
      %241 = sbr.rel (%p238) target = $region48
    $region47: #{stereonet_forward.12} parent=5 // pred_region
      %s242 = ssub.s32 %s13, 1
      %p243 = scmp.lt.s32.totalorder %s18, 1
      %s244 = scalar_select %p243, %s18, 1
      %s245 = smul.addr %s244, 108
      %s246 = smul.addr %s245, 4
      %s247 = scalar_lea.vmem %s0, %s246
      %p248 = pneg %p39
      %p249 = pneg %p36
      %p250 = pneg %p60
      %p251 = pneg %p57
      %p252 = pneg %p81
      %p253 = pneg %p78
      %p254 = pneg %p102
      %p255 = pneg %p99
      %p256 = pneg %p123
      %p257 = pneg %p120
      %p258 = pneg %p144
      %p259 = pneg %p141
      %p260 = pneg %p165
      %p261 = pneg %p162
      %p262 = pneg %p191
      %p263 = pneg %p188
      %p264 = scmp.lt.s32.totalorder %s18, 1
      %s265 = scalar_select %p264, %s18, 1
      %s266 = smul.addr %s265, 4
      %s267 = smul.addr %s266, 8
      %s268 = scalar_lea.vmem %s7, %s267
      %p269 = scmp.lt.s32.totalorder %s18, 1
      %s270 = scalar_select %p269, %s18, 1
      %s271 = smul.addr %s270, 108
      %s272 = smul.addr %s271, 4
      %s273 = scalar_lea.vmem %s0, %s272
      %p274 = scmp.lt.s32.totalorder %s18, 1
      %s275 = scalar_select %p274, %s18, 1
      %s276 = smul.addr %s275, 4
      %s277 = smul.addr %s276, 8
      %s278 = scalar_lea.vmem %s7, %s277
      %v280 = vld [vmem:[%s1] sm:$0xff]
      %v281 = vld [vmem:[%s273] sm:$0xff]
      %v282 = vld [vmem:[%s273 + $0x8] sm:$0xff]
      %v283 = vld [vmem:[%s273 + $0x10] sm:$0xff]
      %v284 = vld [vmem:[%s273 + $0x18] sm:$0xff]
      %v285 = vld [vmem:[%s273 + $0x20] sm:$0xff]
      %v286 = vld [vmem:[%s273 + $0x28] sm:$0xff]
      %v287 = vld [vmem:[%s273 + $0x30] sm:$0xff]
      %v288 = vld [vmem:[%s273 + $0x38] sm:$0xff]
      %v289 = vld [vmem:[%s273 + $0x40] sm:$0xff]
      %v290 = vld [vmem:[%s273 + $0x48] sm:$0xff]
      %v291 = vld [vmem:[%s273 + $0x50] sm:$0xff]
      %v292 = vld [vmem:[%s273 + $0x58] sm:$0xff]
      %v293 = vld [vmem:[%s273 + $0x60] sm:$0xff]
      %v294 = vld [vmem:[%s273 + $0x68] sm:$0xff]
      %v295 = vld [vmem:[%s273 + $0x70] sm:$0xff]
      %v296 = vld [vmem:[%s273 + $0x78] sm:$0xff]
      %v297 = vld [vmem:[%s273 + $0x80] sm:$0xff]
      %v298 = vld [vmem:[%s273 + $0x88] sm:$0xff]
      %v299 = vld [vmem:[%s273 + $0x90] sm:$0xff]
      %v300 = vld [vmem:[%s273 + $0x98] sm:$0xff]
      %v301 = vld [vmem:[%s273 + $0xa0] sm:$0xff]
      %v302 = vld [vmem:[%s273 + $0xa8] sm:$0xff]
      %v303 = vld [vmem:[%s273 + $0xb0] sm:$0xff]
      %v304 = vld [vmem:[%s273 + $0xb8] sm:$0xff]
      %v305 = vld [vmem:[%s273 + $0xc0] sm:$0xff]
      %v306 = vld [vmem:[%s273 + $0xc8] sm:$0xff]
      %v307 = vld [vmem:[%s273 + $0xd0] sm:$0xff]
      %v308 = vld [vmem:[%s273 + $0xd8] sm:$0xff]
      %v309 = vld [vmem:[%s273 + $0xe0] sm:$0xff]
      %v310 = vld [vmem:[%s273 + $0xe8] sm:$0xff]
      %v311 = vld [vmem:[%s273 + $0xf0] sm:$0xff]
      %v312 = vld [vmem:[%s273 + $0xf8] sm:$0xff]
      %v313 = vld [vmem:[%s273 + $0x100] sm:$0xff]
      %v314 = vld [vmem:[%s273 + $0x108] sm:$0xff]
      %v315 = vld [vmem:[%s273 + $0x110] sm:$0xff]
      %v316 = vld [vmem:[%s273 + $0x118] sm:$0xff]
      %v317 = vld [vmem:[%s273 + $0x120] sm:$0xff]
      %v318 = vld [vmem:[%s273 + $0x128] sm:$0xff]
      %v319 = vld [vmem:[%s273 + $0x130] sm:$0xff]
      %v320 = vld [vmem:[%s273 + $0x138] sm:$0xff]
      %v321 = vld [vmem:[%s273 + $0x140] sm:$0xff]
      %v322 = vld [vmem:[%s273 + $0x148] sm:$0xff]
      %v323 = vld [vmem:[%s273 + $0x150] sm:$0xff]
      %v324 = vld [vmem:[%s273 + $0x158] sm:$0xff]
      %v325 = vld [vmem:[%s273 + $0x160] sm:$0xff]
      %v326 = vld [vmem:[%s273 + $0x168] sm:$0xff]
      %v327 = vld [vmem:[%s273 + $0x170] sm:$0xff]
      %v328 = vld [vmem:[%s273 + $0x178] sm:$0xff]
      %v329 = vld [vmem:[%s273 + $0x180] sm:$0xff]
      %v330 = vld [vmem:[%s273 + $0x188] sm:$0xff]
      %v331 = vld [vmem:[%s273 + $0x190] sm:$0xff]
      %v332 = vld [vmem:[%s273 + $0x198] sm:$0xff]
      %v333 = vld [vmem:[%s273 + $0x1a0] sm:$0xff]
      %v334 = vld [vmem:[%s273 + $0x1a8] sm:$0xff]
      %v335 = vld [vmem:[%s2] sm:$0xff]
      %337 = vset.pattern.permute.xlu0 0
      %338 = vperm.xlu0 %337, %v335
      %v339 = vpop.permute.xlu0 %338
      %v342 = vunpack.c.l.b16 %v280
      %v343 = vunpack.c.h.b16 %v280
      %v344 = vpack.c.b16 %v342, %v342
      %v345 = vpack.c.b16 %v343, %v343
      %v401 = vunpack.c.l.b16 %v281
      %v402 = vunpack.c.h.b16 %v281
      %v403 = vunpack.c.l.b16 %v282
      %v404 = vunpack.c.h.b16 %v282
      %v405 = vunpack.c.l.b16 %v283
      %v406 = vunpack.c.h.b16 %v283
      %v407 = vunpack.c.l.b16 %v284
      %v408 = vunpack.c.h.b16 %v284
      %v409 = vunpack.c.l.b16 %v285
      %v410 = vunpack.c.h.b16 %v285
      %v411 = vunpack.c.l.b16 %v286
      %v412 = vunpack.c.h.b16 %v286
      %v413 = vunpack.c.l.b16 %v287
      %v414 = vunpack.c.h.b16 %v287
      %v415 = vunpack.c.l.b16 %v288
      %v416 = vunpack.c.h.b16 %v288
      %v417 = vunpack.c.l.b16 %v289
      %v418 = vunpack.c.h.b16 %v289
      %v419 = vunpack.c.l.b16 %v290
      %v420 = vunpack.c.h.b16 %v290
      %v421 = vunpack.c.l.b16 %v291
      %v422 = vunpack.c.h.b16 %v291
      %v423 = vunpack.c.l.b16 %v292
      %v424 = vunpack.c.h.b16 %v292
      %v425 = vunpack.c.l.b16 %v293
      %v426 = vunpack.c.h.b16 %v293
      %v427 = vunpack.c.l.b16 %v294
      %v428 = vunpack.c.h.b16 %v294
      %v429 = vunpack.c.l.b16 %v295
      %v430 = vunpack.c.h.b16 %v295
      %v431 = vunpack.c.l.b16 %v296
      %v432 = vunpack.c.h.b16 %v296
      %v433 = vunpack.c.l.b16 %v297
      %v434 = vunpack.c.h.b16 %v297
      %v435 = vunpack.c.l.b16 %v298
      %v436 = vunpack.c.h.b16 %v298
      %v437 = vunpack.c.l.b16 %v299
      %v438 = vunpack.c.h.b16 %v299
      %v439 = vunpack.c.l.b16 %v300
      %v440 = vunpack.c.h.b16 %v300
      %v441 = vunpack.c.l.b16 %v301
      %v442 = vunpack.c.h.b16 %v301
      %v443 = vunpack.c.l.b16 %v302
      %v444 = vunpack.c.h.b16 %v302
      %v445 = vunpack.c.l.b16 %v303
      %v446 = vunpack.c.h.b16 %v303
      %v447 = vunpack.c.l.b16 %v304
      %v448 = vunpack.c.h.b16 %v304
      %v449 = vunpack.c.l.b16 %v305
      %v450 = vunpack.c.h.b16 %v305
      %v451 = vunpack.c.l.b16 %v306
      %v452 = vunpack.c.h.b16 %v306
      %v453 = vunpack.c.l.b16 %v307
      %v454 = vunpack.c.h.b16 %v307
      %v455 = vunpack.c.l.b16 %v308
      %v456 = vunpack.c.h.b16 %v308
      %v457 = vunpack.c.l.b16 %v309
      %v458 = vunpack.c.h.b16 %v309
      %v459 = vunpack.c.l.b16 %v310
      %v460 = vunpack.c.h.b16 %v310
      %v461 = vunpack.c.l.b16 %v311
      %v462 = vunpack.c.h.b16 %v311
      %v463 = vunpack.c.l.b16 %v312
      %v464 = vunpack.c.h.b16 %v312
      %v465 = vunpack.c.l.b16 %v313
      %v466 = vunpack.c.h.b16 %v313
      %v467 = vunpack.c.l.b16 %v314
      %v468 = vunpack.c.h.b16 %v314
      %v469 = vunpack.c.l.b16 %v315
      %v470 = vunpack.c.h.b16 %v315
      %v471 = vunpack.c.l.b16 %v316
      %v472 = vunpack.c.h.b16 %v316
      %v473 = vunpack.c.l.b16 %v317
      %v474 = vunpack.c.h.b16 %v317
      %v475 = vunpack.c.l.b16 %v318
      %v476 = vunpack.c.h.b16 %v318
      %v477 = vunpack.c.l.b16 %v319
      %v478 = vunpack.c.h.b16 %v319
      %v479 = vunpack.c.l.b16 %v320
      %v480 = vunpack.c.h.b16 %v320
      %v481 = vunpack.c.l.b16 %v321
      %v482 = vunpack.c.h.b16 %v321
      %v483 = vunpack.c.l.b16 %v322
      %v484 = vunpack.c.h.b16 %v322
      %v485 = vunpack.c.l.b16 %v323
      %v486 = vunpack.c.h.b16 %v323
      %v487 = vunpack.c.l.b16 %v324
      %v488 = vunpack.c.h.b16 %v324
      %v489 = vunpack.c.l.b16 %v325
      %v490 = vunpack.c.h.b16 %v325
      %v491 = vunpack.c.l.b16 %v326
      %v492 = vunpack.c.h.b16 %v326
      %v493 = vunpack.c.l.b16 %v327
      %v494 = vunpack.c.h.b16 %v327
      %v495 = vunpack.c.l.b16 %v328
      %v496 = vunpack.c.h.b16 %v328
      %v497 = vunpack.c.l.b16 %v329
      %v498 = vunpack.c.h.b16 %v329
      %v499 = vunpack.c.l.b16 %v330
      %v500 = vunpack.c.h.b16 %v330
      %v501 = vunpack.c.l.b16 %v331
      %v502 = vunpack.c.h.b16 %v331
      %v503 = vunpack.c.l.b16 %v332
      %v504 = vunpack.c.h.b16 %v332
      %v505 = vunpack.c.l.b16 %v333
      %v506 = vunpack.c.h.b16 %v333
      %v507 = vunpack.c.l.b16 %v334
      %v508 = vunpack.c.h.b16 %v334
      %v509 = vpack.c.b16 %v405, %v401
      %v510 = vpack.c.b16 %v406, %v402
      %v511 = vpack.c.b16 %v407, %v403
      %v512 = vpack.c.b16 %v408, %v404
      %v513 = vpack.c.b16 %v413, %v409
      %v514 = vpack.c.b16 %v414, %v410
      %v515 = vpack.c.b16 %v415, %v411
      %v516 = vpack.c.b16 %v416, %v412
      %v517 = vpack.c.b16 %v421, %v417
      %v518 = vpack.c.b16 %v422, %v418
      %v519 = vpack.c.b16 %v423, %v419
      %v520 = vpack.c.b16 %v424, %v420
      %v521 = vpack.c.b16 %v429, %v425
      %v522 = vpack.c.b16 %v430, %v426
      %v523 = vpack.c.b16 %v431, %v427
      %v524 = vpack.c.b16 %v432, %v428
      %v525 = vpack.c.b16 %v437, %v433
      %v526 = vpack.c.b16 %v438, %v434
      %v527 = vpack.c.b16 %v439, %v435
      %v528 = vpack.c.b16 %v440, %v436
      %v529 = vpack.c.b16 %v445, %v441
      %v530 = vpack.c.b16 %v446, %v442
      %v531 = vpack.c.b16 %v447, %v443
      %v532 = vpack.c.b16 %v448, %v444
      %v533 = vpack.c.b16 %v453, %v449
      %v534 = vpack.c.b16 %v454, %v450
      %v535 = vpack.c.b16 %v455, %v451
      %v536 = vpack.c.b16 %v456, %v452
      %v537 = vpack.c.b16 %v461, %v457
      %v538 = vpack.c.b16 %v462, %v458
      %v539 = vpack.c.b16 %v463, %v459
      %v540 = vpack.c.b16 %v464, %v460
      %v541 = vpack.c.b16 %v469, %v465
      %v542 = vpack.c.b16 %v470, %v466
      %v543 = vpack.c.b16 %v471, %v467
      %v544 = vpack.c.b16 %v472, %v468
      %v545 = vpack.c.b16 %v477, %v473
      %v546 = vpack.c.b16 %v478, %v474
      %v547 = vpack.c.b16 %v479, %v475
      %v548 = vpack.c.b16 %v480, %v476
      %v549 = vpack.c.b16 %v485, %v481
      %v550 = vpack.c.b16 %v486, %v482
      %v551 = vpack.c.b16 %v487, %v483
      %v552 = vpack.c.b16 %v488, %v484
      %v553 = vpack.c.b16 %v493, %v489
      %v554 = vpack.c.b16 %v494, %v490
      %v555 = vpack.c.b16 %v495, %v491
      %v556 = vpack.c.b16 %v496, %v492
      %v557 = vpack.c.b16 %v501, %v497
      %v558 = vpack.c.b16 %v502, %v498
      %v559 = vpack.c.b16 %v503, %v499
      %v560 = vpack.c.b16 %v504, %v500
      %v561 = vpack.c.b16 %v505, %v505
      %v562 = vpack.c.b16 %v506, %v506
      %v563 = vpack.c.b16 %v507, %v507
      %v564 = vpack.c.b16 %v508, %v508
      %vm617 = vcmask 719872
      %v619 = vsel %vm617, %v345, 0
      %vm621 = vcmask 1043456
      %v623 = vsel %vm621, %v561, 0
      %v626 = vsel %vm621, %v562, 0
      %v629 = vsel %vm621, %v563, 0
      %v632 = vsel %vm621, %v564, 0
      %634 = vmatprep.subr.bf16.mxu0 %v510
      %635 = vmatpush1.bf16.msra.mxu0 %v509
      %636 = vmatprep.subr.bf16.mxu0 %v514
      %637 = vmatpush1.bf16.msra.mxu0 %v513
      %638 = vmatprep.subr.bf16.mxu0 %v518
      %639 = vmatpush1.bf16.msra.mxu0 %v517
      %640 = vmatprep.subr.bf16.mxu0 %v522
      %641 = vmatpush1.bf16.msra.mxu0 %v521
      %642 = vmatprep.subr.bf16.mxu0 %v526
      %643 = vmatpush1.bf16.msra.mxu0 %v525
      %644 = vmatprep.subr.bf16.mxu0 %v530
      %645 = vmatpush1.bf16.msra.mxu0 %v529
      %646 = vmatprep.subr.bf16.mxu0 %v534
      %647 = vmatpush1.bf16.msra.mxu0 %v533
      %648 = vmatprep.subr.bf16.mxu0 %v538
      %649 = vmatpush1.bf16.msra.mxu0 %v537
      %650 = vmatprep.subr.bf16.mxu0 %v542
      %651 = vmatpush1.bf16.msra.mxu0 %v541
      %652 = vmatprep.subr.bf16.mxu0 %v546
      %653 = vmatpush1.bf16.msra.mxu0 %v545
      %654 = vmatprep.subr.bf16.mxu0 %v550
      %655 = vmatpush1.bf16.msra.mxu0 %v549
      %656 = vmatprep.subr.bf16.mxu0 %v554
      %657 = vmatpush1.bf16.msra.mxu0 %v553
      %658 = vmatprep.subr.bf16.mxu0 %v558
      %659 = vmatpush1.bf16.msra.mxu0 %v557
      %660 = vmatprep.subr.bf16.mxu0 %v626
      %661 = vmatpush1.bf16.msra.mxu0 %v623
      %662 = vmatprep.subr.bf16.mxu0 0
      %663 = vmatpush1.bf16.msra.mxu0 0
      %664 = vmatprep.subr.bf16.mxu0 0
      %665 = vmatpush1.bf16.msra.mxu0 0
      %666 = vmatprep.mubr.bf16.mxu0 %v619
      %667 = vmatmul.mubr.bf16.gmra.mrb[0].mxu0 %v344
      %v668 = vpop.f32.mrb[0].mxu0
      %v669 = vadd.f32 %v339, %v668
      %v670 = vpop.f32.mrb[0].mxu0
      %v671 = vadd.f32 %v339, %v670
      %v672 = vpop.f32.mrb[0].mxu0
      %v673 = vpop.f32.mrb[0].mxu0
      %674 = vdwg.mxu0
      %675 = vmatprep.subr.bf16.mxu0 %v512
      %676 = vmatpush1.bf16.msra.mxu0 %v511
      %677 = vmatprep.subr.bf16.mxu0 %v516
      %678 = vmatpush1.bf16.msra.mxu0 %v515
      %679 = vmatprep.subr.bf16.mxu0 %v520
      %680 = vmatpush1.bf16.msra.mxu0 %v519
      %681 = vmatprep.subr.bf16.mxu0 %v524
      %682 = vmatpush1.bf16.msra.mxu0 %v523
      %683 = vmatprep.subr.bf16.mxu0 %v528
      %684 = vmatpush1.bf16.msra.mxu0 %v527
      %685 = vmatprep.subr.bf16.mxu0 %v532
      %686 = vmatpush1.bf16.msra.mxu0 %v531
      %687 = vmatprep.subr.bf16.mxu0 %v536
      %688 = vmatpush1.bf16.msra.mxu0 %v535
      %689 = vmatprep.subr.bf16.mxu0 %v540
      %690 = vmatpush1.bf16.msra.mxu0 %v539
      %691 = vmatprep.subr.bf16.mxu0 %v544
      %692 = vmatpush1.bf16.msra.mxu0 %v543
      %693 = vmatprep.subr.bf16.mxu0 %v548
      %694 = vmatpush1.bf16.msra.mxu0 %v547
      %695 = vmatprep.subr.bf16.mxu0 %v552
      %696 = vmatpush1.bf16.msra.mxu0 %v551
      %697 = vmatprep.subr.bf16.mxu0 %v556
      %698 = vmatpush1.bf16.msra.mxu0 %v555
      %699 = vmatprep.subr.bf16.mxu0 %v560
      %700 = vmatpush1.bf16.msra.mxu0 %v559
      %701 = vmatprep.subr.bf16.mxu0 %v632
      %702 = vmatpush1.bf16.msra.mxu0 %v629
      %703 = vmatprep.subr.bf16.mxu0 0
      %704 = vmatpush1.bf16.msra.mxu0 0
      %705 = vmatprep.subr.bf16.mxu0 0
      %706 = vmatpush1.bf16.msra.mxu0 0
      %707 = vmatprep.mubr.bf16.mxu0 %v619
      %708 = vmatmul.mubr.bf16.gmra.mrb[0].mxu0 %v344
      %v709 = vpop.f32.mrb[0].mxu0
      %v710 = vadd.f32 %v339, %v709
      %v711 = vpop.f32.mrb[0].mxu0
      %v712 = vadd.f32 %v339, %v711
      %v713 = vpop.f32.mrb[0].mxu0
      %v714 = vpop.f32.mrb[0].mxu0
      %715 = vdwg.mxu0
      %v716 = vadd.f32 %v669, %v671
      %v717 = vadd.f32 %v716, %v710
      %v718 = vadd.f32 %v717, %v712
      %719 = vadd.xlane.f32.xlu0 %v718
      %v720 = vpop.xlane.xlu0 %719
      %v721 = vmul.f32 %v669, %v669
      %v722 = vmul.f32 %v671, %v671
      %v723 = vmul.f32 %v710, %v710
      %v724 = vmul.f32 %v712, %v712
      %v725 = vadd.f32 %v721, %v722
      %v726 = vadd.f32 %v725, %v723
      %v727 = vadd.f32 %v726, %v724
      %728 = vadd.xlane.f32.xlu0 %v727
      %v729 = vpop.xlane.xlu0 %728
      %v730 = vld [vmem:[%s5] sm:$0xff]
      %vm731 = vcmask 64512
      %v733 = vsel %vm731, %v730, 0
      %735 = vmatprep.subr.mxu0 0.0
      %736 = vmatpush1.msra.mxu0 %v720
      %737 = vmatprep.subr.mxu0 0.0
      %738 = vmatpush1.msra.mxu0 0.0
      %739 = vmatprep.subr.mxu0 0.0
      %740 = vmatpush1.msra.mxu0 0.0
      %741 = vmatprep.subr.mxu0 0.0
      %742 = vmatpush1.msra.mxu0 0.0
      %743 = vmatprep.subr.mxu0 0.0
      %744 = vmatpush1.msra.mxu0 0.0
      %745 = vmatprep.subr.mxu0 0.0
      %746 = vmatpush1.msra.mxu0 0.0
      %747 = vmatprep.subr.mxu0 0.0
      %748 = vmatpush1.msra.mxu0 0.0
      %749 = vmatprep.subr.mxu0 0.0
      %750 = vmatpush1.msra.mxu0 0.0
      %751 = vmatprep.subr.mxu0 0.0
      %752 = vmatpush1.msra.mxu0 0.0
      %753 = vmatprep.subr.mxu0 0.0
      %754 = vmatpush1.msra.mxu0 0.0
      %755 = vmatprep.subr.mxu0 0.0
      %756 = vmatpush1.msra.mxu0 0.0
      %757 = vmatprep.subr.mxu0 0.0
      %758 = vmatpush1.msra.mxu0 0.0
      %759 = vmatprep.subr.mxu0 0.0
      %760 = vmatpush1.msra.mxu0 0.0
      %761 = vmatprep.subr.mxu0 0.0
      %762 = vmatpush1.msra.mxu0 0.0
      %763 = vmatprep.subr.mxu0 0.0
      %764 = vmatpush1.msra.mxu0 0.0
      %765 = vmatprep.subr.mxu0 0.0
      %766 = vmatpush1.msra.mxu0 0.0
      %767 = vmatprep.subr.mxu0 0.0
      %768 = vmatpush1.msra.mxu0 0.0
      %769 = vmatprep.subr.mxu0 0.0
      %770 = vmatpush1.msra.mxu0 0.0
      %771 = vmatprep.subr.mxu0 0.0
      %772 = vmatpush1.msra.mxu0 0.0
      %773 = vmatprep.subr.mxu0 0.0
      %774 = vmatpush1.msra.mxu0 0.0
      %775 = vmatprep.subr.mxu0 0.0
      %776 = vmatpush1.msra.mxu0 0.0
      %777 = vmatprep.subr.mxu0 0.0
      %778 = vmatpush1.msra.mxu0 0.0
      %779 = vmatprep.subr.mxu0 0.0
      %780 = vmatpush1.msra.mxu0 0.0
      %781 = vmatprep.subr.mxu0 0.0
      %782 = vmatpush1.msra.mxu0 0.0
      %783 = vmatprep.subr.mxu0 0.0
      %784 = vmatpush1.msra.mxu0 0.0
      %785 = vmatprep.subr.mxu0 0.0
      %786 = vmatpush1.msra.mxu0 0.0
      %787 = vmatprep.subr.mxu0 0.0
      %788 = vmatpush1.msra.mxu0 0.0
      %789 = vmatprep.subr.mxu0 0.0
      %790 = vmatpush1.msra.mxu0 0.0
      %791 = vmatprep.subr.mxu0 0.0
      %792 = vmatpush1.msra.mxu0 0.0
      %793 = vmatprep.subr.mxu0 0.0
      %794 = vmatpush1.msra.mxu0 0.0
      %795 = vmatprep.subr.mxu0 0.0
      %796 = vmatpush1.msra.mxu0 0.0
      %797 = vmatprep.subr.mxu0 0.0
      %798 = vmatpush1.msra.mxu0 0.0
      %799 = vmatprep.mubr.f32.mxu0 0.0
      %800 = vmatmul.mubr.f32.gmra.mrb[0].mxu0 %v733
      %v801 = vpop.f32.mrb[0].mxu0
      %v802 = vadd.f32 0.0, %v801
      %v803 = vpop.f32.mrb[0].mxu0
      %804 = vdwg.mxu0
      %805 = vmatprep.subr.mxu0 0.0
      %806 = vmatpush1.msra.mxu0 %v729
      %807 = vmatprep.subr.mxu0 0.0
      %808 = vmatpush1.msra.mxu0 0.0
      %809 = vmatprep.subr.mxu0 0.0
      %810 = vmatpush1.msra.mxu0 0.0
      %811 = vmatprep.subr.mxu0 0.0
      %812 = vmatpush1.msra.mxu0 0.0
      %813 = vmatprep.subr.mxu0 0.0
      %814 = vmatpush1.msra.mxu0 0.0
      %815 = vmatprep.subr.mxu0 0.0
      %816 = vmatpush1.msra.mxu0 0.0
      %817 = vmatprep.subr.mxu0 0.0
      %818 = vmatpush1.msra.mxu0 0.0
      %819 = vmatprep.subr.mxu0 0.0
      %820 = vmatpush1.msra.mxu0 0.0
      %821 = vmatprep.subr.mxu0 0.0
      %822 = vmatpush1.msra.mxu0 0.0
      %823 = vmatprep.subr.mxu0 0.0
      %824 = vmatpush1.msra.mxu0 0.0
      %825 = vmatprep.subr.mxu0 0.0
      %826 = vmatpush1.msra.mxu0 0.0
      %827 = vmatprep.subr.mxu0 0.0
      %828 = vmatpush1.msra.mxu0 0.0
      %829 = vmatprep.subr.mxu0 0.0
      %830 = vmatpush1.msra.mxu0 0.0
      %831 = vmatprep.subr.mxu0 0.0
      %832 = vmatpush1.msra.mxu0 0.0
      %833 = vmatprep.subr.mxu0 0.0
      %834 = vmatpush1.msra.mxu0 0.0
      %835 = vmatprep.subr.mxu0 0.0
      %836 = vmatpush1.msra.mxu0 0.0
      %837 = vmatprep.subr.mxu0 0.0
      %838 = vmatpush1.msra.mxu0 0.0
      %839 = vmatprep.subr.mxu0 0.0
      %840 = vmatpush1.msra.mxu0 0.0
      %841 = vmatprep.subr.mxu0 0.0
      %842 = vmatpush1.msra.mxu0 0.0
      %843 = vmatprep.subr.mxu0 0.0
      %844 = vmatpush1.msra.mxu0 0.0
      %845 = vmatprep.subr.mxu0 0.0
      %846 = vmatpush1.msra.mxu0 0.0
      %847 = vmatprep.subr.mxu0 0.0
      %848 = vmatpush1.msra.mxu0 0.0
      %849 = vmatprep.subr.mxu0 0.0
      %850 = vmatpush1.msra.mxu0 0.0
      %851 = vmatprep.subr.mxu0 0.0
      %852 = vmatpush1.msra.mxu0 0.0
      %853 = vmatprep.subr.mxu0 0.0
      %854 = vmatpush1.msra.mxu0 0.0
      %855 = vmatprep.subr.mxu0 0.0
      %856 = vmatpush1.msra.mxu0 0.0
      %857 = vmatprep.subr.mxu0 0.0
      %858 = vmatpush1.msra.mxu0 0.0
      %859 = vmatprep.subr.mxu0 0.0
      %860 = vmatpush1.msra.mxu0 0.0
      %861 = vmatprep.subr.mxu0 0.0
      %862 = vmatpush1.msra.mxu0 0.0
      %863 = vmatprep.subr.mxu0 0.0
      %864 = vmatpush1.msra.mxu0 0.0
      %865 = vmatprep.subr.mxu0 0.0
      %866 = vmatpush1.msra.mxu0 0.0
      %867 = vmatprep.subr.mxu0 0.0
      %868 = vmatpush1.msra.mxu0 0.0
      %869 = vmatprep.mubr.f32.mxu0 0.0
      %870 = vmatmul.mubr.f32.gmra.mrb[0].mxu0 %v733
      %v871 = vpop.f32.mrb[0].mxu0
      %v872 = vadd.f32 0.0, %v871
      %v873 = vpop.f32.mrb[0].mxu0
      %874 = vdwg.mxu0
      %v875 = vld [vmem:[%s6] sm:$0xff]
      %v877 = vsel %vm731, %v875, 0
      %879 = vmatprep.subr.mxu0 0.0
      %880 = vmatpush1.msra.mxu0 %v802
      %881 = vmatprep.subr.mxu0 0.0
      %882 = vmatpush1.msra.mxu0 0.0
      %883 = vmatprep.subr.mxu0 0.0
      %884 = vmatpush1.msra.mxu0 0.0
      %885 = vmatprep.subr.mxu0 0.0
      %886 = vmatpush1.msra.mxu0 0.0
      %887 = vmatprep.subr.mxu0 0.0
      %888 = vmatpush1.msra.mxu0 0.0
      %889 = vmatprep.subr.mxu0 0.0
      %890 = vmatpush1.msra.mxu0 0.0
      %891 = vmatprep.subr.mxu0 0.0
      %892 = vmatpush1.msra.mxu0 0.0
      %893 = vmatprep.subr.mxu0 0.0
      %894 = vmatpush1.msra.mxu0 0.0
      %895 = vmatprep.subr.mxu0 0.0
      %896 = vmatpush1.msra.mxu0 0.0
      %897 = vmatprep.subr.mxu0 0.0
      %898 = vmatpush1.msra.mxu0 0.0
      %899 = vmatprep.subr.mxu0 0.0
      %900 = vmatpush1.msra.mxu0 0.0
      %901 = vmatprep.subr.mxu0 0.0
      %902 = vmatpush1.msra.mxu0 0.0
      %903 = vmatprep.subr.mxu0 0.0
      %904 = vmatpush1.msra.mxu0 0.0
      %905 = vmatprep.subr.mxu0 0.0
      %906 = vmatpush1.msra.mxu0 0.0
      %907 = vmatprep.subr.mxu0 0.0
      %908 = vmatpush1.msra.mxu0 0.0
      %909 = vmatprep.subr.mxu0 0.0
      %910 = vmatpush1.msra.mxu0 0.0
      %911 = vmatprep.subr.mxu0 0.0
      %912 = vmatpush1.msra.mxu0 0.0
      %913 = vmatprep.subr.mxu0 0.0
      %914 = vmatpush1.msra.mxu0 0.0
      %915 = vmatprep.subr.mxu0 0.0
      %916 = vmatpush1.msra.mxu0 0.0
      %917 = vmatprep.subr.mxu0 0.0
      %918 = vmatpush1.msra.mxu0 0.0
      %919 = vmatprep.subr.mxu0 0.0
      %920 = vmatpush1.msra.mxu0 0.0
      %921 = vmatprep.subr.mxu0 0.0
      %922 = vmatpush1.msra.mxu0 0.0
      %923 = vmatprep.subr.mxu0 0.0
      %924 = vmatpush1.msra.mxu0 0.0
      %925 = vmatprep.subr.mxu0 0.0
      %926 = vmatpush1.msra.mxu0 0.0
      %927 = vmatprep.subr.mxu0 0.0
      %928 = vmatpush1.msra.mxu0 0.0
      %929 = vmatprep.subr.mxu0 0.0
      %930 = vmatpush1.msra.mxu0 0.0
      %931 = vmatprep.subr.mxu0 0.0
      %932 = vmatpush1.msra.mxu0 0.0
      %933 = vmatprep.subr.mxu0 0.0
      %934 = vmatpush1.msra.mxu0 0.0
      %935 = vmatprep.subr.mxu0 0.0
      %936 = vmatpush1.msra.mxu0 0.0
      %937 = vmatprep.subr.mxu0 0.0
      %938 = vmatpush1.msra.mxu0 0.0
      %939 = vmatprep.subr.mxu0 0.0
      %940 = vmatpush1.msra.mxu0 0.0
      %941 = vmatprep.subr.mxu0 0.0
      %942 = vmatpush1.msra.mxu0 0.0
      %943 = vmatprep.mubr.f32.mxu0 0.0
      %944 = vmatmul.mubr.f32.gmra.mrb[0].mxu0 %v877
      %v945 = vpop.f32.mrb[0].mxu0
      %v946 = vadd.f32 0.0, %v945
      %v947 = vpop.f32.mrb[0].mxu0
      %948 = vdwg.mxu0
      %949 = vmatprep.subr.mxu0 0.0
      %950 = vmatpush1.msra.mxu0 %v872
      %951 = vmatprep.subr.mxu0 0.0
      %952 = vmatpush1.msra.mxu0 0.0
      %953 = vmatprep.subr.mxu0 0.0
      %954 = vmatpush1.msra.mxu0 0.0
      %955 = vmatprep.subr.mxu0 0.0
      %956 = vmatpush1.msra.mxu0 0.0
      %957 = vmatprep.subr.mxu0 0.0
      %958 = vmatpush1.msra.mxu0 0.0
      %959 = vmatprep.subr.mxu0 0.0
      %960 = vmatpush1.msra.mxu0 0.0
      %961 = vmatprep.subr.mxu0 0.0
      %962 = vmatpush1.msra.mxu0 0.0
      %963 = vmatprep.subr.mxu0 0.0
      %964 = vmatpush1.msra.mxu0 0.0
      %965 = vmatprep.subr.mxu0 0.0
      %966 = vmatpush1.msra.mxu0 0.0
      %967 = vmatprep.subr.mxu0 0.0
      %968 = vmatpush1.msra.mxu0 0.0
      %969 = vmatprep.subr.mxu0 0.0
      %970 = vmatpush1.msra.mxu0 0.0
      %971 = vmatprep.subr.mxu0 0.0
      %972 = vmatpush1.msra.mxu0 0.0
      %973 = vmatprep.subr.mxu0 0.0
      %974 = vmatpush1.msra.mxu0 0.0
      %975 = vmatprep.subr.mxu0 0.0
      %976 = vmatpush1.msra.mxu0 0.0
      %977 = vmatprep.subr.mxu0 0.0
      %978 = vmatpush1.msra.mxu0 0.0
      %979 = vmatprep.subr.mxu0 0.0
      %980 = vmatpush1.msra.mxu0 0.0
      %981 = vmatprep.subr.mxu0 0.0
      %982 = vmatpush1.msra.mxu0 0.0
      %983 = vmatprep.subr.mxu0 0.0
      %984 = vmatpush1.msra.mxu0 0.0
      %985 = vmatprep.subr.mxu0 0.0
      %986 = vmatpush1.msra.mxu0 0.0
      %987 = vmatprep.subr.mxu0 0.0
      %988 = vmatpush1.msra.mxu0 0.0
      %989 = vmatprep.subr.mxu0 0.0
      %990 = vmatpush1.msra.mxu0 0.0
      %991 = vmatprep.subr.mxu0 0.0
      %992 = vmatpush1.msra.mxu0 0.0
      %993 = vmatprep.subr.mxu0 0.0
      %994 = vmatpush1.msra.mxu0 0.0
      %995 = vmatprep.subr.mxu0 0.0
      %996 = vmatpush1.msra.mxu0 0.0
      %997 = vmatprep.subr.mxu0 0.0
      %998 = vmatpush1.msra.mxu0 0.0
      %999 = vmatprep.subr.mxu0 0.0
      %1000 = vmatpush1.msra.mxu0 0.0
      %1001 = vmatprep.subr.mxu0 0.0
      %1002 = vmatpush1.msra.mxu0 0.0
      %1003 = vmatprep.subr.mxu0 0.0
      %1004 = vmatpush1.msra.mxu0 0.0
      %1005 = vmatprep.subr.mxu0 0.0
      %1006 = vmatpush1.msra.mxu0 0.0
      %1007 = vmatprep.subr.mxu0 0.0
      %1008 = vmatpush1.msra.mxu0 0.0
      %1009 = vmatprep.subr.mxu0 0.0
      %1010 = vmatpush1.msra.mxu0 0.0
      %1011 = vmatprep.subr.mxu0 0.0
      %1012 = vmatpush1.msra.mxu0 0.0
      %1013 = vmatprep.mubr.f32.mxu0 0.0
      %1014 = vmatmul.mubr.f32.gmra.mrb[0].mxu0 %v877
      %v1015 = vpop.f32.mrb[0].mxu0
      %v1016 = vadd.f32 0.0, %v1015
      %v1017 = vpop.f32.mrb[0].mxu0
      %1018 = vdwg.mxu0
      %v1019 = vmul.f32 %v946, %v946
      %v1020 = vsub.f32 %v1016, %v1019
      %v1021 = vmax.f32 %v1020, 0.0
      %1023 = vset.pattern.permute.xlu0 0
      %1024 = vperm.xlu0 %1023, %v946
      %v1025 = vpop.permute.xlu0 %1024
      %v1027 = vsub.f32 %v669, %v1025
      %v1028 = vsub.f32 %v671, %v1025
      %v1029 = vsub.f32 %v710, %v1025
      %v1030 = vsub.f32 %v712, %v1025
      %v1031 = vadd.f32 %v1021, 1e-05
      %v1032 = vrsqrt.pop %v1031
      %1034 = vset.pattern.permute.xlu0 0
      %1035 = vperm.xlu0 %1034, %v1032
      %v1036 = vpop.permute.xlu0 %1035
      %v1038 = vmul.f32 %v1027, %v1036
      %v1039 = vmul.f32 %v1028, %v1036
      %v1040 = vmul.f32 %v1029, %v1036
      %v1041 = vmul.f32 %v1030, %v1036
      %v1042 = vld [vmem:[%s3] sm:$0xff]
      %1044 = vset.pattern.permute.xlu0 0
      %1045 = vperm.xlu0 %1044, %v1042
      %v1046 = vpop.permute.xlu0 %1045
      %v1048 = vmul.f32 %v1038, %v1046
      %v1049 = vmul.f32 %v1039, %v1046
      %v1050 = vmul.f32 %v1040, %v1046
      %v1051 = vmul.f32 %v1041, %v1046
      %v1052 = vld [vmem:[%s4] sm:$0xff]
      %1054 = vset.pattern.permute.xlu0 0
      %1055 = vperm.xlu0 %1054, %v1052
      %v1056 = vpop.permute.xlu0 %1055
      %v1058 = vadd.f32 %v1048, %v1056
      %v1059 = vadd.f32 %v1049, %v1056
      %v1060 = vadd.f32 %v1050, %v1056
      %v1061 = vadd.f32 %v1051, %v1056
      %v1062 = vmax.f32 %v1058, 0.0
      %v1063 = vmax.f32 %v1059, 0.0
      %v1064 = vmax.f32 %v1060, 0.0
      %v1065 = vmax.f32 %v1061, 0.0
      %1066 = vst [vmem:[%s278] sm:$0xff] %v1062
      %1067 = vst [vmem:[%s278 + $0x8] sm:$0xff] %v1063
      %1068 = vst [vmem:[%s278 + $0x10] sm:$0xff] %v1064
      %1069 = vst [vmem:[%s278 + $0x18] sm:$0xff] %v1065
      %p1070 = scmp.lt.s32.totalorder %s18, 1
      %s1071 = scalar_select %p1070, %s18, 1
      %s1072 = smul.addr %s1071, 4
      %s1073 = smul.addr %s1072, 8
      %s1074 = scalar_lea.vmem %s7, %s1073
      // Predicated region
      $region49: #{stereonet_forward.12} parent=47 // pred_check
        %p1075 = pneg %p188
      $region50: #{stereonet_forward.12} parent=47 // pred_check_branch
        %1077 = sbr.rel (%p1075) target = $region52
      $region51: #{stereonet_forward.12} parent=47 // pred_region
        _
      $region52: #{stereonet_forward.12} parent=47 // pred_fallthru
        _
    $region48: #{stereonet_forward.12} parent=5 // pred_fallthru
      _
    %p1078 = scmp.le.s32.totalorder 2, %s13
    // Predicated region
    $region53: #{stereonet_forward.12} parent=5 // pred_check
      %p1079 = pneg %p1078
    $region54: #{stereonet_forward.12} parent=5 // pred_check_branch
      %1081 = sbr.rel (%p1079) target = $region56
    $region55: #{stereonet_forward.12} parent=5 // pred_region
      %s1082 = ssub.s32 %s13, 2
      // Predicated region
      $region57: #{stereonet_forward.12} parent=55 // pred_check
        %p1083 = pneg %p194
      $region58: #{stereonet_forward.12} parent=55 // pred_check_branch
        %1085 = sbr.rel (%p1083) target = $region60
      $region59: #{stereonet_forward.12} parent=55 // pred_region
        %p1086 = scmp.lt.s32.totalorder %s19, 1
        %s1087 = scalar_select %p1086, %s19, 1
        %s1088 = smul.addr %s1087, 4
        %s1089 = smul.addr %s1088, 8
        %s1090 = scalar_lea.vmem %s7, %s1089
      $region60: #{stereonet_forward.12} parent=55 // pred_fallthru
        _
    $region56: #{stereonet_forward.12} parent=5 // pred_fallthru
      _
  $region6: #{stereonet_forward.12} parent=0 // loop_footer
    %s17 = sadd.s32 1, %s13
  $region7: #{stereonet_forward.12} parent=0 // loop_footer_branch
    %12 = sbr.rel target = $region3
  $region8: #{stereonet_forward.12} parent=0 // loop_exit
    _

// kernel: stereonet_forward.13
$region0: #{stereonet_forward.13}
  #allocation0 [shape = 'u32[]', space=smem, size = 0x4, offset = 0x4, fixed_abs, tag = 'smem constant byte address 0x4 - core index']
  #allocation1 [shape = 'u32[144,128]{1,0:T(1,128)}', space=vmem, size = 0x12000, scoped, tag = 'internal scratch']
  %s0 = inlined_call_operand.vmem [shape: bf16[2,216,64], index: 0, kind: input, shape index: {}]
  %s1 = inlined_call_operand.vmem [shape: bf16[16,216], index: 1, kind: input, shape index: {}]
  %s2 = inlined_call_operand.vmem [shape: f32[16,1], index: 2, kind: input, shape index: {}]
  %s3 = inlined_call_operand.vmem [shape: f32[16,1], index: 3, kind: input, shape index: {}]
  %s4 = inlined_call_operand.vmem [shape: f32[16,1], index: 4, kind: input, shape index: {}]
  %s5 = inlined_call_operand.vmem [shape: f32[8,16], index: 5, kind: input, shape index: {}]
  %s6 = inlined_call_operand.vmem [shape: f32[16,8], index: 6, kind: input, shape index: {}]
  %s7 = inlined_call_operand.vmem [shape: f32[2,16,64], index: 7, kind: output, shape index: {}]
  %s8 = sld [smem:[#allocation0]]
  $region61: #{stereonet_forward.13} parent=0
    _
  %s10 = ssub.s32 1, %s8
  %s11 = scalar_select 0, %s10, %s8
  loop: start=0, step=1, limit=4
  $region2: #{stereonet_forward.13} parent=0 // loop_pre_header
    _
  $region3: #{stereonet_forward.13} parent=0 // loop_header
    %s13 = sphi 0, %s17
    %p14 = scmp.ge.s32.totalorder %s13, 4
    %s23 = sphi 0, %s25
    %s26 = sphi 0, %s23
    %s27 = sphi 0, %s26
    %s43 = sphi 0, %s27
    %s47 = sphi 0, %s47
    %s49 = sphi 0, %s47
    %s50 = sphi 0, %s49
    %s64 = sphi 0, %s50
    %s68 = sphi 0, %s68
    %s70 = sphi 0, %s68
    %s71 = sphi 0, %s70
    %s85 = sphi 0, %s71
    %s89 = sphi 0, %s89
    %s91 = sphi 0, %s89
    %s92 = sphi 0, %s91
    %s106 = sphi 0, %s92
    %s110 = sphi 0, %s110
    %s112 = sphi 0, %s110
    %s113 = sphi 0, %s112
    %s127 = sphi 0, %s113
    %s131 = sphi 0, %s131
    %s133 = sphi 0, %s131
    %s134 = sphi 0, %s133
    %s148 = sphi 0, %s134
    %s152 = sphi 0, %s152
    %s154 = sphi 0, %s152
    %s155 = sphi 0, %s154
    %s169 = sphi 0, %s155
    %s175 = sphi 0, %s177
    %s178 = sphi 0, %s175
    %s179 = sphi 0, %s178
    %s195 = sphi 0, %s179
  $region4: #{stereonet_forward.13} parent=0 // loop_header_branch
    %16 = sbr.rel (%p14) target = $region8
  $region5: #{stereonet_forward.13} parent=0 // loop_body
    %s18 = ssub.s32 %s13, 1
    %s19 = ssub.s32 %s13, 2
    %s20 = sadd.s32 %s13, 1
    %s21 = ssub.s32 %s13, %s20
    %p22 = scmp.eq.s32.totalorder %s21, 0
    %s24 = sadd.s32 %s23, 1
    %s25 = scalar_select %p22, %s23, %s24
    %p28 = pneg %p22
    %p29 = scmp.eq.s32.totalorder %s13, 1
    %p30 = por %p28, %p29
    %p31 = scmp.ne.s32.totalorder %s23, %s26
    %p32 = scmp.eq.s32.totalorder %s13, 0
    %p33 = por %p31, %p32
    %p34 = scmp.ne.s32.totalorder %s23, %s26
    %p35 = scmp.eq.s32.totalorder %s18, 1
    %p36 = por %p34, %p35
    %p37 = scmp.ne.s32.totalorder %s26, %s27
    %p38 = scmp.eq.s32.totalorder %s18, 0
    %p39 = por %p37, %p38
    %p40 = scmp.ne.s32.totalorder %s26, %s27
    %p41 = scmp.eq.s32.totalorder %s19, 1
    %p42 = por %p40, %p41
    %p44 = scmp.ne.s32.totalorder %s27, %s43
    %p45 = scmp.eq.s32.totalorder %s19, 0
    %p46 = por %p44, %p45
    %s48 = sadd.s32 %s47, 1
    %p51 = scmp.eq.s32.totalorder %s13, 1
    %p52 = scmp.ne.s32.totalorder %s47, %s49
    %p53 = scmp.eq.s32.totalorder %s13, 0
    %p54 = por %p52, %p53
    %p55 = scmp.ne.s32.totalorder %s47, %s49
    %p56 = scmp.eq.s32.totalorder %s18, 1
    %p57 = por %p55, %p56
    %p58 = scmp.ne.s32.totalorder %s49, %s50
    %p59 = scmp.eq.s32.totalorder %s18, 0
    %p60 = por %p58, %p59
    %p61 = scmp.ne.s32.totalorder %s49, %s50
    %p62 = scmp.eq.s32.totalorder %s19, 1
    %p63 = por %p61, %p62
    %p65 = scmp.ne.s32.totalorder %s50, %s64
    %p66 = scmp.eq.s32.totalorder %s19, 0
    %p67 = por %p65, %p66
    %s69 = sadd.s32 %s68, 1
    %p72 = scmp.eq.s32.totalorder %s13, 1
    %p73 = scmp.ne.s32.totalorder %s68, %s70
    %p74 = scmp.eq.s32.totalorder %s13, 0
    %p75 = por %p73, %p74
    %p76 = scmp.ne.s32.totalorder %s68, %s70
    %p77 = scmp.eq.s32.totalorder %s18, 1
    %p78 = por %p76, %p77
    %p79 = scmp.ne.s32.totalorder %s70, %s71
    %p80 = scmp.eq.s32.totalorder %s18, 0
    %p81 = por %p79, %p80
    %p82 = scmp.ne.s32.totalorder %s70, %s71
    %p83 = scmp.eq.s32.totalorder %s19, 1
    %p84 = por %p82, %p83
    %p86 = scmp.ne.s32.totalorder %s71, %s85
    %p87 = scmp.eq.s32.totalorder %s19, 0
    %p88 = por %p86, %p87
    %s90 = sadd.s32 %s89, 1
    %p93 = scmp.eq.s32.totalorder %s13, 1
    %p94 = scmp.ne.s32.totalorder %s89, %s91
    %p95 = scmp.eq.s32.totalorder %s13, 0
    %p96 = por %p94, %p95
    %p97 = scmp.ne.s32.totalorder %s89, %s91
    %p98 = scmp.eq.s32.totalorder %s18, 1
    %p99 = por %p97, %p98
    %p100 = scmp.ne.s32.totalorder %s91, %s92
    %p101 = scmp.eq.s32.totalorder %s18, 0
    %p102 = por %p100, %p101
    %p103 = scmp.ne.s32.totalorder %s91, %s92
    %p104 = scmp.eq.s32.totalorder %s19, 1
    %p105 = por %p103, %p104
    %p107 = scmp.ne.s32.totalorder %s92, %s106
    %p108 = scmp.eq.s32.totalorder %s19, 0
    %p109 = por %p107, %p108
    %s111 = sadd.s32 %s110, 1
    %p114 = scmp.eq.s32.totalorder %s13, 1
    %p115 = scmp.ne.s32.totalorder %s110, %s112
    %p116 = scmp.eq.s32.totalorder %s13, 0
    %p117 = por %p115, %p116
    %p118 = scmp.ne.s32.totalorder %s110, %s112
    %p119 = scmp.eq.s32.totalorder %s18, 1
    %p120 = por %p118, %p119
    %p121 = scmp.ne.s32.totalorder %s112, %s113
    %p122 = scmp.eq.s32.totalorder %s18, 0
    %p123 = por %p121, %p122
    %p124 = scmp.ne.s32.totalorder %s112, %s113
    %p125 = scmp.eq.s32.totalorder %s19, 1
    %p126 = por %p124, %p125
    %p128 = scmp.ne.s32.totalorder %s113, %s127
    %p129 = scmp.eq.s32.totalorder %s19, 0
    %p130 = por %p128, %p129
    %s132 = sadd.s32 %s131, 1
    %p135 = scmp.eq.s32.totalorder %s13, 1
    %p136 = scmp.ne.s32.totalorder %s131, %s133
    %p137 = scmp.eq.s32.totalorder %s13, 0
    %p138 = por %p136, %p137
    %p139 = scmp.ne.s32.totalorder %s131, %s133
    %p140 = scmp.eq.s32.totalorder %s18, 1
    %p141 = por %p139, %p140
    %p142 = scmp.ne.s32.totalorder %s133, %s134
    %p143 = scmp.eq.s32.totalorder %s18, 0
    %p144 = por %p142, %p143
    %p145 = scmp.ne.s32.totalorder %s133, %s134
    %p146 = scmp.eq.s32.totalorder %s19, 1
    %p147 = por %p145, %p146
    %p149 = scmp.ne.s32.totalorder %s134, %s148
    %p150 = scmp.eq.s32.totalorder %s19, 0
    %p151 = por %p149, %p150
    %s153 = sadd.s32 %s152, 1
    %p156 = scmp.eq.s32.totalorder %s13, 1
    %p157 = scmp.ne.s32.totalorder %s152, %s154
    %p158 = scmp.eq.s32.totalorder %s13, 0
    %p159 = por %p157, %p158
    %p160 = scmp.ne.s32.totalorder %s152, %s154
    %p161 = scmp.eq.s32.totalorder %s18, 1
    %p162 = por %p160, %p161
    %p163 = scmp.ne.s32.totalorder %s154, %s155
    %p164 = scmp.eq.s32.totalorder %s18, 0
    %p165 = por %p163, %p164
    %p166 = scmp.ne.s32.totalorder %s154, %s155
    %p167 = scmp.eq.s32.totalorder %s19, 1
    %p168 = por %p166, %p167
    %p170 = scmp.ne.s32.totalorder %s155, %s169
    %p171 = scmp.eq.s32.totalorder %s19, 0
    %p172 = por %p170, %p171
    %s173 = ssub.s32 %s13, %s20
    %p174 = scmp.eq.s32.totalorder %s173, 0
    %s176 = sadd.s32 %s175, 1
    %s177 = scalar_select %p174, %s175, %s176
    %p180 = pneg %p174
    %p181 = scmp.eq.s32.totalorder %s13, 1
    %p182 = por %p180, %p181
    %p183 = scmp.ne.s32.totalorder %s175, %s178
    %p184 = scmp.eq.s32.totalorder %s13, 0
    %p185 = por %p183, %p184
    %p186 = scmp.ne.s32.totalorder %s175, %s178
    %p187 = scmp.eq.s32.totalorder %s18, 1
    %p188 = por %p186, %p187
    %p189 = scmp.ne.s32.totalorder %s178, %s179
    %p190 = scmp.eq.s32.totalorder %s18, 0
    %p191 = por %p189, %p190
    %p192 = scmp.ne.s32.totalorder %s178, %s179
    %p193 = scmp.eq.s32.totalorder %s19, 1
    %p194 = por %p192, %p193
    %p196 = scmp.ne.s32.totalorder %s179, %s195
    %p197 = scmp.eq.s32.totalorder %s19, 0
    %p198 = por %p196, %p197
    %p199 = scmp.le.s32.totalorder 1, %s13
    %p200 = scmp.lt.s32.totalorder %s13, 3
    %p201 = pnand %p199, %p200
    %p202 = pneg %p201
    // Predicated region
    $region9: #{stereonet_forward.13} parent=5 // pred_check
      _
    $region10: #{stereonet_forward.13} parent=5 // pred_check_branch
      %204 = sbr.rel (%p201) target = $region12
    $region11: #{stereonet_forward.13} parent=5 // pred_region
      %s205 = ssub.s32 %s13, 1
      // Predicated region
      $region13: #{stereonet_forward.13} parent=11 // pred_check
        %p206 = pneg %p60
      $region14: #{stereonet_forward.13} parent=11 // pred_check_branch
        %208 = sbr.rel (%p206) target = $region16
      $region15: #{stereonet_forward.13} parent=11 // pred_region
        _
      $region16: #{stereonet_forward.13} parent=11 // pred_fallthru
        _
      // Predicated region
      $region17: #{stereonet_forward.13} parent=11 // pred_check
        %p209 = pneg %p81
      $region18: #{stereonet_forward.13} parent=11 // pred_check_branch
        %211 = sbr.rel (%p209) target = $region20
      $region19: #{stereonet_forward.13} parent=11 // pred_region
        _
      $region20: #{stereonet_forward.13} parent=11 // pred_fallthru
        _
      // Predicated region
      $region21: #{stereonet_forward.13} parent=11 // pred_check
        %p212 = pneg %p102
      $region22: #{stereonet_forward.13} parent=11 // pred_check_branch
        %214 = sbr.rel (%p212) target = $region24
      $region23: #{stereonet_forward.13} parent=11 // pred_region
        _
      $region24: #{stereonet_forward.13} parent=11 // pred_fallthru
        _
      // Predicated region
      $region25: #{stereonet_forward.13} parent=11 // pred_check
        %p215 = pneg %p123
      $region26: #{stereonet_forward.13} parent=11 // pred_check_branch
        %217 = sbr.rel (%p215) target = $region28
      $region27: #{stereonet_forward.13} parent=11 // pred_region
        _
      $region28: #{stereonet_forward.13} parent=11 // pred_fallthru
        _
      // Predicated region
      $region29: #{stereonet_forward.13} parent=11 // pred_check
        %p218 = pneg %p144
      $region30: #{stereonet_forward.13} parent=11 // pred_check_branch
        %220 = sbr.rel (%p218) target = $region32
      $region31: #{stereonet_forward.13} parent=11 // pred_region
        _
      $region32: #{stereonet_forward.13} parent=11 // pred_fallthru
        _
      // Predicated region
      $region33: #{stereonet_forward.13} parent=11 // pred_check
        %p221 = pneg %p165
      $region34: #{stereonet_forward.13} parent=11 // pred_check_branch
        %223 = sbr.rel (%p221) target = $region36
      $region35: #{stereonet_forward.13} parent=11 // pred_region
        _
      $region36: #{stereonet_forward.13} parent=11 // pred_fallthru
        _
    $region12: #{stereonet_forward.13} parent=5 // pred_fallthru
      _
    %p224 = scmp.lt.s32.totalorder %s13, 2
    // Predicated region
    $region37: #{stereonet_forward.13} parent=5 // pred_check
      %p225 = pneg %p224
    $region38: #{stereonet_forward.13} parent=5 // pred_check_branch
      %227 = sbr.rel (%p225) target = $region40
    $region39: #{stereonet_forward.13} parent=5 // pred_region
      // Predicated region
      $region41: #{stereonet_forward.13} parent=39 // pred_check
        %p228 = pneg %p33
      $region42: #{stereonet_forward.13} parent=39 // pred_check_branch
        %230 = sbr.rel (%p228) target = $region44
      $region43: #{stereonet_forward.13} parent=39 // pred_region
        %p231 = scmp.lt.s32.totalorder %s13, 1
        %s232 = scalar_select %p231, %s13, 1
        %s233 = smul.addr %s232, 27
        %s234 = smul.addr %s233, 4
        %s235 = scalar_lea.vmem %s0, %s234
      $region44: #{stereonet_forward.13} parent=39 // pred_fallthru
        _
    $region40: #{stereonet_forward.13} parent=5 // pred_fallthru
      _
    %p236 = scmp.le.s32.totalorder 1, %s13
    %p237 = scmp.lt.s32.totalorder %s13, 3
    %p238 = pnand %p236, %p237
    %p239 = pneg %p238
    // Predicated region
    $region45: #{stereonet_forward.13} parent=5 // pred_check
      _
    $region46: #{stereonet_forward.13} parent=5 // pred_check_branch
      %241 = sbr.rel (%p238) target = $region48
    $region47: #{stereonet_forward.13} parent=5 // pred_region
      %s242 = ssub.s32 %s13, 1
      %p243 = scmp.lt.s32.totalorder %s18, 1
      %s244 = scalar_select %p243, %s18, 1
      %s245 = smul.addr %s244, 27
      %s246 = smul.addr %s245, 4
      %s247 = scalar_lea.vmem %s0, %s246
      %p248 = pneg %p39
      %p249 = pneg %p36
      %p250 = pneg %p60
      %p251 = pneg %p57
      %p252 = pneg %p81
      %p253 = pneg %p78
      %p254 = pneg %p102
      %p255 = pneg %p99
      %p256 = pneg %p123
      %p257 = pneg %p120
      %p258 = pneg %p144
      %p259 = pneg %p141
      %p260 = pneg %p165
      %p261 = pneg %p162
      %p262 = pneg %p191
      %p263 = pneg %p188
      %p264 = scmp.lt.s32.totalorder %s18, 1
      %s265 = scalar_select %p264, %s18, 1
      %s266 = smul.addr %s265, 2
      %s267 = smul.addr %s266, 8
      %s268 = scalar_lea.vmem %s7, %s267
      %p269 = scmp.lt.s32.totalorder %s18, 1
      %s270 = scalar_select %p269, %s18, 1
      %s271 = smul.addr %s270, 27
      %s272 = smul.addr %s271, 4
      %s273 = scalar_lea.vmem %s0, %s272
      %p274 = scmp.lt.s32.totalorder %s18, 1
      %s275 = scalar_select %p274, %s18, 1
      %s276 = smul.addr %s275, 2
      %s277 = smul.addr %s276, 8
      %s278 = scalar_lea.vmem %s7, %s277
      %v280 = vld [vmem:[%s1] sm:$0xff]
      %v281 = vld [vmem:[%s1 + $0x8] sm:$0xff]
      %v282 = vld [vmem:[%s273] sm:$0xf]
      %v283 = vld [vmem:[%s273 + $0x4] sm:$0xf]
      %v284 = vld [vmem:[%s273 + $0x8] sm:$0xf]
      %v285 = vld [vmem:[%s273 + $0xc] sm:$0xf]
      %v286 = vld [vmem:[%s273 + $0x10] sm:$0xf]
      %v287 = vld [vmem:[%s273 + $0x14] sm:$0xf]
      %v288 = vld [vmem:[%s273 + $0x18] sm:$0xf]
      %v289 = vld [vmem:[%s273 + $0x1c] sm:$0xf]
      %v290 = vld [vmem:[%s273 + $0x20] sm:$0xf]
      %v291 = vld [vmem:[%s273 + $0x24] sm:$0xf]
      %v292 = vld [vmem:[%s273 + $0x28] sm:$0xf]
      %v293 = vld [vmem:[%s273 + $0x2c] sm:$0xf]
      %v294 = vld [vmem:[%s273 + $0x30] sm:$0xf]
      %v295 = vld [vmem:[%s273 + $0x34] sm:$0xf]
      %v296 = vld [vmem:[%s273 + $0x38] sm:$0xf]
      %v297 = vld [vmem:[%s273 + $0x3c] sm:$0xf]
      %v298 = vld [vmem:[%s273 + $0x40] sm:$0xf]
      %v299 = vld [vmem:[%s273 + $0x44] sm:$0xf]
      %v300 = vld [vmem:[%s273 + $0x48] sm:$0xf]
      %v301 = vld [vmem:[%s273 + $0x4c] sm:$0xf]
      %v302 = vld [vmem:[%s273 + $0x50] sm:$0xf]
      %v303 = vld [vmem:[%s273 + $0x54] sm:$0xf]
      %v304 = vld [vmem:[%s273 + $0x58] sm:$0xf]
      %v305 = vld [vmem:[%s273 + $0x5c] sm:$0xf]
      %v306 = vld [vmem:[%s273 + $0x60] sm:$0xf]
      %v307 = vld [vmem:[%s273 + $0x64] sm:$0xf]
      %v308 = vld [vmem:[%s273 + $0x68] sm:$0xf]
      %v309 = vld [vmem:[%s2] sm:$0xff]
      %v310 = vld [vmem:[%s2 + $0x8] sm:$0xff]
      %312 = vset.pattern.permute.xlu0 0
      %313 = vperm.xlu0 %312, %v309
      %v314 = vpop.permute.xlu0 %313
      %317 = vset.pattern.permute.xlu0 0
      %318 = vperm.xlu0 %317, %v310
      %v319 = vpop.permute.xlu0 %318
      %v323 = vunpack.c.l.b16 %v280
      %v324 = vunpack.c.h.b16 %v280
      %v325 = vunpack.c.l.b16 %v281
      %v326 = vunpack.c.h.b16 %v281
      %v327 = vpack.c.b16 %v325, %v323
      %v328 = vpack.c.b16 %v326, %v324
      %v357 = vunpack.c.l.b16 %v282
      %v358 = vunpack.c.l.b16 %v283
      %v359 = vunpack.c.l.b16 %v284
      %v360 = vunpack.c.l.b16 %v285
      %v361 = vunpack.c.l.b16 %v286
      %v362 = vunpack.c.l.b16 %v287
      %v363 = vunpack.c.l.b16 %v288
      %v364 = vunpack.c.l.b16 %v289
      %v365 = vunpack.c.l.b16 %v290
      %v366 = vunpack.c.l.b16 %v291
      %v367 = vunpack.c.l.b16 %v292
      %v368 = vunpack.c.l.b16 %v293
      %v369 = vunpack.c.l.b16 %v294
      %v370 = vunpack.c.l.b16 %v295
      %v371 = vunpack.c.l.b16 %v296
      %v372 = vunpack.c.l.b16 %v297
      %v373 = vunpack.c.l.b16 %v298
      %v374 = vunpack.c.l.b16 %v299
      %v375 = vunpack.c.l.b16 %v300
      %v376 = vunpack.c.l.b16 %v301
      %v377 = vunpack.c.l.b16 %v302
      %v378 = vunpack.c.l.b16 %v303
      %v379 = vunpack.c.l.b16 %v304
      %v380 = vunpack.c.l.b16 %v305
      %v381 = vunpack.c.l.b16 %v306
      %v382 = vunpack.c.l.b16 %v307
      %v383 = vunpack.c.l.b16 %v308
      %v384 = vpack.c.b16 %v358, %v357
      %v385 = vpack.c.b16 %v360, %v359
      %v386 = vpack.c.b16 %v362, %v361
      %v387 = vpack.c.b16 %v364, %v363
      %v388 = vpack.c.b16 %v366, %v365
      %v389 = vpack.c.b16 %v368, %v367
      %v390 = vpack.c.b16 %v370, %v369
      %v391 = vpack.c.b16 %v372, %v371
      %v392 = vpack.c.b16 %v374, %v373
      %v393 = vpack.c.b16 %v376, %v375
      %v394 = vpack.c.b16 %v378, %v377
      %v395 = vpack.c.b16 %v380, %v379
      %v396 = vpack.c.b16 %v382, %v381
      %v397 = vpack.c.b16 %v383, %v383
      %vm411 = vcmask 719872
      %v413 = vsel %vm411, %v328, 0
      %vm415 = vcmask 1043456
      %v417 = vsel %vm415, %v397, 0
      %419 = vmatprep.subr.bf16.mxu0 0
      %420 = vmatpush1.bf16.msra.mxu0 %v384
      %421 = vmatprep.subr.bf16.mxu0 0
      %422 = vmatpush1.bf16.msra.mxu0 %v385
      %423 = vmatprep.subr.bf16.mxu0 0
      %424 = vmatpush1.bf16.msra.mxu0 %v386
      %425 = vmatprep.subr.bf16.mxu0 0
      %426 = vmatpush1.bf16.msra.mxu0 %v387
      %427 = vmatprep.subr.bf16.mxu0 0
      %428 = vmatpush1.bf16.msra.mxu0 %v388
      %429 = vmatprep.subr.bf16.mxu0 0
      %430 = vmatpush1.bf16.msra.mxu0 %v389
      %431 = vmatprep.subr.bf16.mxu0 0
      %432 = vmatpush1.bf16.msra.mxu0 %v390
      %433 = vmatprep.subr.bf16.mxu0 0
      %434 = vmatpush1.bf16.msra.mxu0 %v391
      %435 = vmatprep.subr.bf16.mxu0 0
      %436 = vmatpush1.bf16.msra.mxu0 %v392
      %437 = vmatprep.subr.bf16.mxu0 0
      %438 = vmatpush1.bf16.msra.mxu0 %v393
      %439 = vmatprep.subr.bf16.mxu0 0
      %440 = vmatpush1.bf16.msra.mxu0 %v394
      %441 = vmatprep.subr.bf16.mxu0 0
      %442 = vmatpush1.bf16.msra.mxu0 %v395
      %443 = vmatprep.subr.bf16.mxu0 0
      %444 = vmatpush1.bf16.msra.mxu0 %v396
      %445 = vmatprep.subr.bf16.mxu0 0
      %446 = vmatpush1.bf16.msra.mxu0 %v417
      %447 = vmatprep.subr.bf16.mxu0 0
      %448 = vmatpush1.bf16.msra.mxu0 0
      %449 = vmatprep.subr.bf16.mxu0 0
      %450 = vmatpush1.bf16.msra.mxu0 0
      %451 = vmatprep.mubr.bf16.mxu0 %v413
      %452 = vmatmul.mubr.bf16.gmra.mrb[0].mxu0 %v327
      %v453 = vpop.f32.mrb[0].mxu0
      %v454 = vadd.f32 %v314, %v453
      %v455 = vpop.f32.mrb[0].mxu0
      %v456 = vpop.f32.mrb[0].mxu0
      %v457 = vadd.f32 %v319, %v456
      %v458 = vpop.f32.mrb[0].mxu0
      %459 = vdwg.mxu0
      %vm460 = vcmask 523264
      %v461 = vsel %vm460, %v454, 0.0
      %462 = vadd.xlane.f32.xlu0 %v461
      %v463 = vpop.xlane.xlu0 %462
      %v464 = vsel %vm460, %v457, 0.0
      %465 = vadd.xlane.f32.xlu0 %v464
      %v466 = vpop.xlane.xlu0 %465
      %v467 = vmul.f32 %v454, %v454
      %v468 = vmul.f32 %v457, %v457
      %v469 = vsel %vm460, %v467, 0.0
      %470 = vadd.xlane.f32.xlu0 %v469
      %v471 = vpop.xlane.xlu0 %470
      %v472 = vsel %vm460, %v468, 0.0
      %473 = vadd.xlane.f32.xlu0 %v472
      %v474 = vpop.xlane.xlu0 %473
      %v475 = vld [vmem:[%s5] sm:$0xff]
      %vm476 = vcmask 130048
      %v478 = vsel %vm476, %v475, 0
      %480 = vmatprep.subr.mxu0 0.0
      %481 = vmatpush1.msra.mxu0 %v463
      %482 = vmatprep.subr.mxu0 0.0
      %483 = vmatpush1.msra.mxu0 %v466
      %484 = vmatprep.subr.mxu0 0.0
      %485 = vmatpush1.msra.mxu0 0.0
      %486 = vmatprep.subr.mxu0 0.0
      %487 = vmatpush1.msra.mxu0 0.0
      %488 = vmatprep.subr.mxu0 0.0
      %489 = vmatpush1.msra.mxu0 0.0
      %490 = vmatprep.subr.mxu0 0.0
      %491 = vmatpush1.msra.mxu0 0.0
      %492 = vmatprep.subr.mxu0 0.0
      %493 = vmatpush1.msra.mxu0 0.0
      %494 = vmatprep.subr.mxu0 0.0
      %495 = vmatpush1.msra.mxu0 0.0
      %496 = vmatprep.subr.mxu0 0.0
      %497 = vmatpush1.msra.mxu0 0.0
      %498 = vmatprep.subr.mxu0 0.0
      %499 = vmatpush1.msra.mxu0 0.0
      %500 = vmatprep.subr.mxu0 0.0
      %501 = vmatpush1.msra.mxu0 0.0
      %502 = vmatprep.subr.mxu0 0.0
      %503 = vmatpush1.msra.mxu0 0.0
      %504 = vmatprep.subr.mxu0 0.0
      %505 = vmatpush1.msra.mxu0 0.0
      %506 = vmatprep.subr.mxu0 0.0
      %507 = vmatpush1.msra.mxu0 0.0
      %508 = vmatprep.subr.mxu0 0.0
      %509 = vmatpush1.msra.mxu0 0.0
      %510 = vmatprep.subr.mxu0 0.0
      %511 = vmatpush1.msra.mxu0 0.0
      %512 = vmatprep.subr.mxu0 0.0
      %513 = vmatpush1.msra.mxu0 0.0
      %514 = vmatprep.subr.mxu0 0.0
      %515 = vmatpush1.msra.mxu0 0.0
      %516 = vmatprep.subr.mxu0 0.0
      %517 = vmatpush1.msra.mxu0 0.0
      %518 = vmatprep.subr.mxu0 0.0
      %519 = vmatpush1.msra.mxu0 0.0
      %520 = vmatprep.subr.mxu0 0.0
      %521 = vmatpush1.msra.mxu0 0.0
      %522 = vmatprep.subr.mxu0 0.0
      %523 = vmatpush1.msra.mxu0 0.0
      %524 = vmatprep.subr.mxu0 0.0
      %525 = vmatpush1.msra.mxu0 0.0
      %526 = vmatprep.subr.mxu0 0.0
      %527 = vmatpush1.msra.mxu0 0.0
      %528 = vmatprep.subr.mxu0 0.0
      %529 = vmatpush1.msra.mxu0 0.0
      %530 = vmatprep.subr.mxu0 0.0
      %531 = vmatpush1.msra.mxu0 0.0
      %532 = vmatprep.subr.mxu0 0.0
      %533 = vmatpush1.msra.mxu0 0.0
      %534 = vmatprep.subr.mxu0 0.0
      %535 = vmatpush1.msra.mxu0 0.0
      %536 = vmatprep.subr.mxu0 0.0
      %537 = vmatpush1.msra.mxu0 0.0
      %538 = vmatprep.subr.mxu0 0.0
      %539 = vmatpush1.msra.mxu0 0.0
      %540 = vmatprep.subr.mxu0 0.0
      %541 = vmatpush1.msra.mxu0 0.0
      %542 = vmatprep.subr.mxu0 0.0
      %543 = vmatpush1.msra.mxu0 0.0
      %544 = vmatprep.mubr.f32.mxu0 0.0
      %545 = vmatmul.mubr.f32.gmra.mrb[0].mxu0 %v478
      %v546 = vpop.f32.mrb[0].mxu0
      %v547 = vadd.f32 0.0, %v546
      %v548 = vpop.f32.mrb[0].mxu0
      %549 = vdwg.mxu0
      %550 = vmatprep.subr.mxu0 0.0
      %551 = vmatpush1.msra.mxu0 %v471
      %552 = vmatprep.subr.mxu0 0.0
      %553 = vmatpush1.msra.mxu0 %v474
      %554 = vmatprep.subr.mxu0 0.0
      %555 = vmatpush1.msra.mxu0 0.0
      %556 = vmatprep.subr.mxu0 0.0
      %557 = vmatpush1.msra.mxu0 0.0
      %558 = vmatprep.subr.mxu0 0.0
      %559 = vmatpush1.msra.mxu0 0.0
      %560 = vmatprep.subr.mxu0 0.0
      %561 = vmatpush1.msra.mxu0 0.0
      %562 = vmatprep.subr.mxu0 0.0
      %563 = vmatpush1.msra.mxu0 0.0
      %564 = vmatprep.subr.mxu0 0.0
      %565 = vmatpush1.msra.mxu0 0.0
      %566 = vmatprep.subr.mxu0 0.0
      %567 = vmatpush1.msra.mxu0 0.0
      %568 = vmatprep.subr.mxu0 0.0
      %569 = vmatpush1.msra.mxu0 0.0
      %570 = vmatprep.subr.mxu0 0.0
      %571 = vmatpush1.msra.mxu0 0.0
      %572 = vmatprep.subr.mxu0 0.0
      %573 = vmatpush1.msra.mxu0 0.0
      %574 = vmatprep.subr.mxu0 0.0
      %575 = vmatpush1.msra.mxu0 0.0
      %576 = vmatprep.subr.mxu0 0.0
      %577 = vmatpush1.msra.mxu0 0.0
      %578 = vmatprep.subr.mxu0 0.0
      %579 = vmatpush1.msra.mxu0 0.0
      %580 = vmatprep.subr.mxu0 0.0
      %581 = vmatpush1.msra.mxu0 0.0
      %582 = vmatprep.subr.mxu0 0.0
      %583 = vmatpush1.msra.mxu0 0.0
      %584 = vmatprep.subr.mxu0 0.0
      %585 = vmatpush1.msra.mxu0 0.0
      %586 = vmatprep.subr.mxu0 0.0
      %587 = vmatpush1.msra.mxu0 0.0
      %588 = vmatprep.subr.mxu0 0.0
      %589 = vmatpush1.msra.mxu0 0.0
      %590 = vmatprep.subr.mxu0 0.0
      %591 = vmatpush1.msra.mxu0 0.0
      %592 = vmatprep.subr.mxu0 0.0
      %593 = vmatpush1.msra.mxu0 0.0
      %594 = vmatprep.subr.mxu0 0.0
      %595 = vmatpush1.msra.mxu0 0.0
      %596 = vmatprep.subr.mxu0 0.0
      %597 = vmatpush1.msra.mxu0 0.0
      %598 = vmatprep.subr.mxu0 0.0
      %599 = vmatpush1.msra.mxu0 0.0
      %600 = vmatprep.subr.mxu0 0.0
      %601 = vmatpush1.msra.mxu0 0.0
      %602 = vmatprep.subr.mxu0 0.0
      %603 = vmatpush1.msra.mxu0 0.0
      %604 = vmatprep.subr.mxu0 0.0
      %605 = vmatpush1.msra.mxu0 0.0
      %606 = vmatprep.subr.mxu0 0.0
      %607 = vmatpush1.msra.mxu0 0.0
      %608 = vmatprep.subr.mxu0 0.0
      %609 = vmatpush1.msra.mxu0 0.0
      %610 = vmatprep.subr.mxu0 0.0
      %611 = vmatpush1.msra.mxu0 0.0
      %612 = vmatprep.subr.mxu0 0.0
      %613 = vmatpush1.msra.mxu0 0.0
      %614 = vmatprep.mubr.f32.mxu0 0.0
      %615 = vmatmul.mubr.f32.gmra.mrb[0].mxu0 %v478
      %v616 = vpop.f32.mrb[0].mxu0
      %v617 = vadd.f32 0.0, %v616
      %v618 = vpop.f32.mrb[0].mxu0
      %619 = vdwg.mxu0
      %v620 = vld [vmem:[%s6] sm:$0xff]
      %v621 = vld [vmem:[%s6 + $0x8] sm:$0xff]
      %vm622 = vcmask 64512
      %v624 = vsel %vm622, %v620, 0
      %v627 = vsel %vm622, %v621, 0
      %629 = vmatprep.subr.mxu0 0.0
      %630 = vmatpush1.msra.mxu0 %v547
      %631 = vmatprep.subr.mxu0 0.0
      %632 = vmatpush1.msra.mxu0 0.0
      %633 = vmatprep.subr.mxu0 0.0
      %634 = vmatpush1.msra.mxu0 0.0
      %635 = vmatprep.subr.mxu0 0.0
      %636 = vmatpush1.msra.mxu0 0.0
      %637 = vmatprep.subr.mxu0 0.0
      %638 = vmatpush1.msra.mxu0 0.0
      %639 = vmatprep.subr.mxu0 0.0
      %640 = vmatpush1.msra.mxu0 0.0
      %641 = vmatprep.subr.mxu0 0.0
      %642 = vmatpush1.msra.mxu0 0.0
      %643 = vmatprep.subr.mxu0 0.0
      %644 = vmatpush1.msra.mxu0 0.0
      %645 = vmatprep.subr.mxu0 0.0
      %646 = vmatpush1.msra.mxu0 0.0
      %647 = vmatprep.subr.mxu0 0.0
      %648 = vmatpush1.msra.mxu0 0.0
      %649 = vmatprep.subr.mxu0 0.0
      %650 = vmatpush1.msra.mxu0 0.0
      %651 = vmatprep.subr.mxu0 0.0
      %652 = vmatpush1.msra.mxu0 0.0
      %653 = vmatprep.subr.mxu0 0.0
      %654 = vmatpush1.msra.mxu0 0.0
      %655 = vmatprep.subr.mxu0 0.0
      %656 = vmatpush1.msra.mxu0 0.0
      %657 = vmatprep.subr.mxu0 0.0
      %658 = vmatpush1.msra.mxu0 0.0
      %659 = vmatprep.subr.mxu0 0.0
      %660 = vmatpush1.msra.mxu0 0.0
      %661 = vmatprep.subr.mxu0 0.0
      %662 = vmatpush1.msra.mxu0 0.0
      %663 = vmatprep.subr.mxu0 0.0
      %664 = vmatpush1.msra.mxu0 0.0
      %665 = vmatprep.subr.mxu0 0.0
      %666 = vmatpush1.msra.mxu0 0.0
      %667 = vmatprep.subr.mxu0 0.0
      %668 = vmatpush1.msra.mxu0 0.0
      %669 = vmatprep.subr.mxu0 0.0
      %670 = vmatpush1.msra.mxu0 0.0
      %671 = vmatprep.subr.mxu0 0.0
      %672 = vmatpush1.msra.mxu0 0.0
      %673 = vmatprep.subr.mxu0 0.0
      %674 = vmatpush1.msra.mxu0 0.0
      %675 = vmatprep.subr.mxu0 0.0
      %676 = vmatpush1.msra.mxu0 0.0
      %677 = vmatprep.subr.mxu0 0.0
      %678 = vmatpush1.msra.mxu0 0.0
      %679 = vmatprep.subr.mxu0 0.0
      %680 = vmatpush1.msra.mxu0 0.0
      %681 = vmatprep.subr.mxu0 0.0
      %682 = vmatpush1.msra.mxu0 0.0
      %683 = vmatprep.subr.mxu0 0.0
      %684 = vmatpush1.msra.mxu0 0.0
      %685 = vmatprep.subr.mxu0 0.0
      %686 = vmatpush1.msra.mxu0 0.0
      %687 = vmatprep.subr.mxu0 0.0
      %688 = vmatpush1.msra.mxu0 0.0
      %689 = vmatprep.subr.mxu0 0.0
      %690 = vmatpush1.msra.mxu0 0.0
      %691 = vmatprep.subr.mxu0 0.0
      %692 = vmatpush1.msra.mxu0 0.0
      %693 = vmatprep.mubr.f32.mxu0 0.0
      %694 = vmatmul.mubr.f32.gmra.mrb[0].mxu0 %v624
      %v695 = vpop.f32.mrb[0].mxu0
      %v696 = vadd.f32 0.0, %v695
      %v697 = vpop.f32.mrb[0].mxu0
      %698 = vmatprep.mubr.f32.mxu0 0.0
      %699 = vmatmul.mubr.f32.gmra.mrb[0].mxu0 %v627
      %v700 = vpop.f32.mrb[0].mxu0
      %v701 = vadd.f32 0.0, %v700
      %v702 = vpop.f32.mrb[0].mxu0
      %703 = vdwg.mxu0
      %704 = vmatprep.subr.mxu0 0.0
      %705 = vmatpush1.msra.mxu0 %v617
      %706 = vmatprep.subr.mxu0 0.0
      %707 = vmatpush1.msra.mxu0 0.0
      %708 = vmatprep.subr.mxu0 0.0
      %709 = vmatpush1.msra.mxu0 0.0
      %710 = vmatprep.subr.mxu0 0.0
      %711 = vmatpush1.msra.mxu0 0.0
      %712 = vmatprep.subr.mxu0 0.0
      %713 = vmatpush1.msra.mxu0 0.0
      %714 = vmatprep.subr.mxu0 0.0
      %715 = vmatpush1.msra.mxu0 0.0
      %716 = vmatprep.subr.mxu0 0.0
      %717 = vmatpush1.msra.mxu0 0.0
      %718 = vmatprep.subr.mxu0 0.0
      %719 = vmatpush1.msra.mxu0 0.0
      %720 = vmatprep.subr.mxu0 0.0
      %721 = vmatpush1.msra.mxu0 0.0
      %722 = vmatprep.subr.mxu0 0.0
      %723 = vmatpush1.msra.mxu0 0.0
      %724 = vmatprep.subr.mxu0 0.0
      %725 = vmatpush1.msra.mxu0 0.0
      %726 = vmatprep.subr.mxu0 0.0
      %727 = vmatpush1.msra.mxu0 0.0
      %728 = vmatprep.subr.mxu0 0.0
      %729 = vmatpush1.msra.mxu0 0.0
      %730 = vmatprep.subr.mxu0 0.0
      %731 = vmatpush1.msra.mxu0 0.0
      %732 = vmatprep.subr.mxu0 0.0
      %733 = vmatpush1.msra.mxu0 0.0
      %734 = vmatprep.subr.mxu0 0.0
      %735 = vmatpush1.msra.mxu0 0.0
      %736 = vmatprep.subr.mxu0 0.0
      %737 = vmatpush1.msra.mxu0 0.0
      %738 = vmatprep.subr.mxu0 0.0
      %739 = vmatpush1.msra.mxu0 0.0
      %740 = vmatprep.subr.mxu0 0.0
      %741 = vmatpush1.msra.mxu0 0.0
      %742 = vmatprep.subr.mxu0 0.0
      %743 = vmatpush1.msra.mxu0 0.0
      %744 = vmatprep.subr.mxu0 0.0
      %745 = vmatpush1.msra.mxu0 0.0
      %746 = vmatprep.subr.mxu0 0.0
      %747 = vmatpush1.msra.mxu0 0.0
      %748 = vmatprep.subr.mxu0 0.0
      %749 = vmatpush1.msra.mxu0 0.0
      %750 = vmatprep.subr.mxu0 0.0
      %751 = vmatpush1.msra.mxu0 0.0
      %752 = vmatprep.subr.mxu0 0.0
      %753 = vmatpush1.msra.mxu0 0.0
      %754 = vmatprep.subr.mxu0 0.0
      %755 = vmatpush1.msra.mxu0 0.0
      %756 = vmatprep.subr.mxu0 0.0
      %757 = vmatpush1.msra.mxu0 0.0
      %758 = vmatprep.subr.mxu0 0.0
      %759 = vmatpush1.msra.mxu0 0.0
      %760 = vmatprep.subr.mxu0 0.0
      %761 = vmatpush1.msra.mxu0 0.0
      %762 = vmatprep.subr.mxu0 0.0
      %763 = vmatpush1.msra.mxu0 0.0
      %764 = vmatprep.subr.mxu0 0.0
      %765 = vmatpush1.msra.mxu0 0.0
      %766 = vmatprep.subr.mxu0 0.0
      %767 = vmatpush1.msra.mxu0 0.0
      %768 = vmatprep.mubr.f32.mxu0 0.0
      %769 = vmatmul.mubr.f32.gmra.mrb[0].mxu0 %v624
      %v770 = vpop.f32.mrb[0].mxu0
      %v771 = vadd.f32 0.0, %v770
      %v772 = vpop.f32.mrb[0].mxu0
      %773 = vmatprep.mubr.f32.mxu0 0.0
      %774 = vmatmul.mubr.f32.gmra.mrb[0].mxu0 %v627
      %v775 = vpop.f32.mrb[0].mxu0
      %v776 = vadd.f32 0.0, %v775
      %v777 = vpop.f32.mrb[0].mxu0
      %778 = vdwg.mxu0
      %v779 = vmul.f32 %v696, %v696
      %v780 = vmul.f32 %v701, %v701
      %v781 = vsub.f32 %v771, %v779
      %v782 = vsub.f32 %v776, %v780
      %v783 = vmax.f32 %v781, 0.0
      %v784 = vmax.f32 %v782, 0.0
      %786 = vset.pattern.permute.xlu0 0
      %787 = vperm.xlu0 %786, %v696
      %v788 = vpop.permute.xlu0 %787
      %791 = vset.pattern.permute.xlu0 0
      %792 = vperm.xlu0 %791, %v701
      %v793 = vpop.permute.xlu0 %792
      %v795 = vsub.f32 %v454, %v788
      %v796 = vsub.f32 %v457, %v793
      %v797 = vadd.f32 %v783, 1e-05
      %v798 = vadd.f32 %v784, 1e-05
      %v799 = vrsqrt.pop %v797
      %v800 = vrsqrt.pop %v798
      %802 = vset.pattern.permute.xlu0 0
      %803 = vperm.xlu0 %802, %v799
      %v804 = vpop.permute.xlu0 %803
      %807 = vset.pattern.permute.xlu0 0
      %808 = vperm.xlu0 %807, %v800
      %v809 = vpop.permute.xlu0 %808
      %v811 = vmul.f32 %v795, %v804
      %v812 = vmul.f32 %v796, %v809
      %v813 = vld [vmem:[%s3] sm:$0xff]
      %v814 = vld [vmem:[%s3 + $0x8] sm:$0xff]
      %816 = vset.pattern.permute.xlu0 0
      %817 = vperm.xlu0 %816, %v813
      %v818 = vpop.permute.xlu0 %817
      %821 = vset.pattern.permute.xlu0 0
      %822 = vperm.xlu0 %821, %v814
      %v823 = vpop.permute.xlu0 %822
      %v825 = vmul.f32 %v811, %v818
      %v826 = vmul.f32 %v812, %v823
      %v827 = vld [vmem:[%s4] sm:$0xff]
      %v828 = vld [vmem:[%s4 + $0x8] sm:$0xff]
      %830 = vset.pattern.permute.xlu0 0
      %831 = vperm.xlu0 %830, %v827
      %v832 = vpop.permute.xlu0 %831
      %835 = vset.pattern.permute.xlu0 0
      %836 = vperm.xlu0 %835, %v828
      %v837 = vpop.permute.xlu0 %836
      %v839 = vadd.f32 %v825, %v832
      %v840 = vadd.f32 %v826, %v837
      %v841 = vmax.f32 %v839, 0.0
      %v842 = vmax.f32 %v840, 0.0
      %843 = vst.msk [vmem:[%s278] sm:$0xff] %vm460, %v841
      %844 = vst.msk [vmem:[%s278 + $0x8] sm:$0xff] %vm460, %v842
      %p845 = scmp.lt.s32.totalorder %s18, 1
      %s846 = scalar_select %p845, %s18, 1
      %s847 = smul.addr %s846, 2
      %s848 = smul.addr %s847, 8
      %s849 = scalar_lea.vmem %s7, %s848
      // Predicated region
      $region49: #{stereonet_forward.13} parent=47 // pred_check
        %p850 = pneg %p188
      $region50: #{stereonet_forward.13} parent=47 // pred_check_branch
        %852 = sbr.rel (%p850) target = $region52
      $region51: #{stereonet_forward.13} parent=47 // pred_region
        _
      $region52: #{stereonet_forward.13} parent=47 // pred_fallthru
        _
    $region48: #{stereonet_forward.13} parent=5 // pred_fallthru
      _
    %p853 = scmp.le.s32.totalorder 2, %s13
    // Predicated region
    $region53: #{stereonet_forward.13} parent=5 // pred_check
      %p854 = pneg %p853
    $region54: #{stereonet_forward.13} parent=5 // pred_check_branch
      %856 = sbr.rel (%p854) target = $region56
    $region55: #{stereonet_forward.13} parent=5 // pred_region
      %s857 = ssub.s32 %s13, 2
      // Predicated region
      $region57: #{stereonet_forward.13} parent=55 // pred_check
        %p858 = pneg %p194
      $region58: #{stereonet_forward.13} parent=55 // pred_check_branch
        %860 = sbr.rel (%p858) target = $region60
      $region59: #{stereonet_forward.13} parent=55 // pred_region
        %p861 = scmp.lt.s32.totalorder %s19, 1
        %s862 = scalar_select %p861, %s19, 1
        %s863 = smul.addr %s862, 2
        %s864 = smul.addr %s863, 8
        %s865 = scalar_lea.vmem %s7, %s864
      $region60: #{stereonet_forward.13} parent=55 // pred_fallthru
        _
    $region56: #{stereonet_forward.13} parent=5 // pred_fallthru
      _
  $region6: #{stereonet_forward.13} parent=0 // loop_footer
    %s17 = sadd.s32 1, %s13
  $region7: #{stereonet_forward.13} parent=0 // loop_footer_branch
    %12 = sbr.rel target = $region3
  $region8: #{stereonet_forward.13} parent=0 // loop_exit
    _

// kernel: stereonet_forward.14
$region0: #{stereonet_forward.14}
  #allocation0 [shape = 'u32[]', space=smem, size = 0x4, offset = 0x4, fixed_abs, tag = 'smem constant byte address 0x4 - core index']
  #allocation1 [shape = 'u32[144,128]{1,0:T(1,128)}', space=vmem, size = 0x12000, scoped, tag = 'internal scratch']
  %s0 = inlined_call_operand.vmem [shape: bf16[2,432,64], index: 0, kind: input, shape index: {}]
  %s1 = inlined_call_operand.vmem [shape: bf16[16,432], index: 1, kind: input, shape index: {}]
  %s2 = inlined_call_operand.vmem [shape: f32[16,1], index: 2, kind: input, shape index: {}]
  %s3 = inlined_call_operand.vmem [shape: f32[16,1], index: 3, kind: input, shape index: {}]
  %s4 = inlined_call_operand.vmem [shape: f32[16,1], index: 4, kind: input, shape index: {}]
  %s5 = inlined_call_operand.vmem [shape: f32[8,16], index: 5, kind: input, shape index: {}]
  %s6 = inlined_call_operand.vmem [shape: f32[16,8], index: 6, kind: input, shape index: {}]
  %s7 = inlined_call_operand.vmem [shape: f32[2,16,64], index: 7, kind: output, shape index: {}]
  %s8 = sld [smem:[#allocation0]]
  $region61: #{stereonet_forward.14} parent=0
    _
  %s10 = ssub.s32 1, %s8
  %s11 = scalar_select 0, %s10, %s8
  loop: start=0, step=1, limit=4
  $region2: #{stereonet_forward.14} parent=0 // loop_pre_header
    _
  $region3: #{stereonet_forward.14} parent=0 // loop_header
    %s13 = sphi 0, %s17
    %p14 = scmp.ge.s32.totalorder %s13, 4
    %s23 = sphi 0, %s25
    %s26 = sphi 0, %s23
    %s27 = sphi 0, %s26
    %s43 = sphi 0, %s27
    %s47 = sphi 0, %s47
    %s49 = sphi 0, %s47
    %s50 = sphi 0, %s49
    %s64 = sphi 0, %s50
    %s68 = sphi 0, %s68
    %s70 = sphi 0, %s68
    %s71 = sphi 0, %s70
    %s85 = sphi 0, %s71
    %s89 = sphi 0, %s89
    %s91 = sphi 0, %s89
    %s92 = sphi 0, %s91
    %s106 = sphi 0, %s92
    %s110 = sphi 0, %s110
    %s112 = sphi 0, %s110
    %s113 = sphi 0, %s112
    %s127 = sphi 0, %s113
    %s131 = sphi 0, %s131
    %s133 = sphi 0, %s131
    %s134 = sphi 0, %s133
    %s148 = sphi 0, %s134
    %s152 = sphi 0, %s152
    %s154 = sphi 0, %s152
    %s155 = sphi 0, %s154
    %s169 = sphi 0, %s155
    %s175 = sphi 0, %s177
    %s178 = sphi 0, %s175
    %s179 = sphi 0, %s178
    %s195 = sphi 0, %s179
  $region4: #{stereonet_forward.14} parent=0 // loop_header_branch
    %16 = sbr.rel (%p14) target = $region8
  $region5: #{stereonet_forward.14} parent=0 // loop_body
    %s18 = ssub.s32 %s13, 1
    %s19 = ssub.s32 %s13, 2
    %s20 = sadd.s32 %s13, 1
    %s21 = ssub.s32 %s13, %s20
    %p22 = scmp.eq.s32.totalorder %s21, 0
    %s24 = sadd.s32 %s23, 1
    %s25 = scalar_select %p22, %s23, %s24
    %p28 = pneg %p22
    %p29 = scmp.eq.s32.totalorder %s13, 1
    %p30 = por %p28, %p29
    %p31 = scmp.ne.s32.totalorder %s23, %s26
    %p32 = scmp.eq.s32.totalorder %s13, 0
    %p33 = por %p31, %p32
    %p34 = scmp.ne.s32.totalorder %s23, %s26
    %p35 = scmp.eq.s32.totalorder %s18, 1
    %p36 = por %p34, %p35
    %p37 = scmp.ne.s32.totalorder %s26, %s27
    %p38 = scmp.eq.s32.totalorder %s18, 0
    %p39 = por %p37, %p38
    %p40 = scmp.ne.s32.totalorder %s26, %s27
    %p41 = scmp.eq.s32.totalorder %s19, 1
    %p42 = por %p40, %p41
    %p44 = scmp.ne.s32.totalorder %s27, %s43
    %p45 = scmp.eq.s32.totalorder %s19, 0
    %p46 = por %p44, %p45
    %s48 = sadd.s32 %s47, 1
    %p51 = scmp.eq.s32.totalorder %s13, 1
    %p52 = scmp.ne.s32.totalorder %s47, %s49
    %p53 = scmp.eq.s32.totalorder %s13, 0
    %p54 = por %p52, %p53
    %p55 = scmp.ne.s32.totalorder %s47, %s49
    %p56 = scmp.eq.s32.totalorder %s18, 1
    %p57 = por %p55, %p56
    %p58 = scmp.ne.s32.totalorder %s49, %s50
    %p59 = scmp.eq.s32.totalorder %s18, 0
    %p60 = por %p58, %p59
    %p61 = scmp.ne.s32.totalorder %s49, %s50
    %p62 = scmp.eq.s32.totalorder %s19, 1
    %p63 = por %p61, %p62
    %p65 = scmp.ne.s32.totalorder %s50, %s64
    %p66 = scmp.eq.s32.totalorder %s19, 0
    %p67 = por %p65, %p66
    %s69 = sadd.s32 %s68, 1
    %p72 = scmp.eq.s32.totalorder %s13, 1
    %p73 = scmp.ne.s32.totalorder %s68, %s70
    %p74 = scmp.eq.s32.totalorder %s13, 0
    %p75 = por %p73, %p74
    %p76 = scmp.ne.s32.totalorder %s68, %s70
    %p77 = scmp.eq.s32.totalorder %s18, 1
    %p78 = por %p76, %p77
    %p79 = scmp.ne.s32.totalorder %s70, %s71
    %p80 = scmp.eq.s32.totalorder %s18, 0
    %p81 = por %p79, %p80
    %p82 = scmp.ne.s32.totalorder %s70, %s71
    %p83 = scmp.eq.s32.totalorder %s19, 1
    %p84 = por %p82, %p83
    %p86 = scmp.ne.s32.totalorder %s71, %s85
    %p87 = scmp.eq.s32.totalorder %s19, 0
    %p88 = por %p86, %p87
    %s90 = sadd.s32 %s89, 1
    %p93 = scmp.eq.s32.totalorder %s13, 1
    %p94 = scmp.ne.s32.totalorder %s89, %s91
    %p95 = scmp.eq.s32.totalorder %s13, 0
    %p96 = por %p94, %p95
    %p97 = scmp.ne.s32.totalorder %s89, %s91
    %p98 = scmp.eq.s32.totalorder %s18, 1
    %p99 = por %p97, %p98
    %p100 = scmp.ne.s32.totalorder %s91, %s92
    %p101 = scmp.eq.s32.totalorder %s18, 0
    %p102 = por %p100, %p101
    %p103 = scmp.ne.s32.totalorder %s91, %s92
    %p104 = scmp.eq.s32.totalorder %s19, 1
    %p105 = por %p103, %p104
    %p107 = scmp.ne.s32.totalorder %s92, %s106
    %p108 = scmp.eq.s32.totalorder %s19, 0
    %p109 = por %p107, %p108
    %s111 = sadd.s32 %s110, 1
    %p114 = scmp.eq.s32.totalorder %s13, 1
    %p115 = scmp.ne.s32.totalorder %s110, %s112
    %p116 = scmp.eq.s32.totalorder %s13, 0
    %p117 = por %p115, %p116
    %p118 = scmp.ne.s32.totalorder %s110, %s112
    %p119 = scmp.eq.s32.totalorder %s18, 1
    %p120 = por %p118, %p119
    %p121 = scmp.ne.s32.totalorder %s112, %s113
    %p122 = scmp.eq.s32.totalorder %s18, 0
    %p123 = por %p121, %p122
    %p124 = scmp.ne.s32.totalorder %s112, %s113
    %p125 = scmp.eq.s32.totalorder %s19, 1
    %p126 = por %p124, %p125
    %p128 = scmp.ne.s32.totalorder %s113, %s127
    %p129 = scmp.eq.s32.totalorder %s19, 0
    %p130 = por %p128, %p129
    %s132 = sadd.s32 %s131, 1
    %p135 = scmp.eq.s32.totalorder %s13, 1
    %p136 = scmp.ne.s32.totalorder %s131, %s133
    %p137 = scmp.eq.s32.totalorder %s13, 0
    %p138 = por %p136, %p137
    %p139 = scmp.ne.s32.totalorder %s131, %s133
    %p140 = scmp.eq.s32.totalorder %s18, 1
    %p141 = por %p139, %p140
    %p142 = scmp.ne.s32.totalorder %s133, %s134
    %p143 = scmp.eq.s32.totalorder %s18, 0
    %p144 = por %p142, %p143
    %p145 = scmp.ne.s32.totalorder %s133, %s134
    %p146 = scmp.eq.s32.totalorder %s19, 1
    %p147 = por %p145, %p146
    %p149 = scmp.ne.s32.totalorder %s134, %s148
    %p150 = scmp.eq.s32.totalorder %s19, 0
    %p151 = por %p149, %p150
    %s153 = sadd.s32 %s152, 1
    %p156 = scmp.eq.s32.totalorder %s13, 1
    %p157 = scmp.ne.s32.totalorder %s152, %s154
    %p158 = scmp.eq.s32.totalorder %s13, 0
    %p159 = por %p157, %p158
    %p160 = scmp.ne.s32.totalorder %s152, %s154
    %p161 = scmp.eq.s32.totalorder %s18, 1
    %p162 = por %p160, %p161
    %p163 = scmp.ne.s32.totalorder %s154, %s155
    %p164 = scmp.eq.s32.totalorder %s18, 0
    %p165 = por %p163, %p164
    %p166 = scmp.ne.s32.totalorder %s154, %s155
    %p167 = scmp.eq.s32.totalorder %s19, 1
    %p168 = por %p166, %p167
    %p170 = scmp.ne.s32.totalorder %s155, %s169
    %p171 = scmp.eq.s32.totalorder %s19, 0
    %p172 = por %p170, %p171
    %s173 = ssub.s32 %s13, %s20
    %p174 = scmp.eq.s32.totalorder %s173, 0
    %s176 = sadd.s32 %s175, 1
    %s177 = scalar_select %p174, %s175, %s176
    %p180 = pneg %p174
    %p181 = scmp.eq.s32.totalorder %s13, 1
    %p182 = por %p180, %p181
    %p183 = scmp.ne.s32.totalorder %s175, %s178
    %p184 = scmp.eq.s32.totalorder %s13, 0
    %p185 = por %p183, %p184
    %p186 = scmp.ne.s32.totalorder %s175, %s178
    %p187 = scmp.eq.s32.totalorder %s18, 1
    %p188 = por %p186, %p187
    %p189 = scmp.ne.s32.totalorder %s178, %s179
    %p190 = scmp.eq.s32.totalorder %s18, 0
    %p191 = por %p189, %p190
    %p192 = scmp.ne.s32.totalorder %s178, %s179
    %p193 = scmp.eq.s32.totalorder %s19, 1
    %p194 = por %p192, %p193
    %p196 = scmp.ne.s32.totalorder %s179, %s195
    %p197 = scmp.eq.s32.totalorder %s19, 0
    %p198 = por %p196, %p197
    %p199 = scmp.le.s32.totalorder 1, %s13
    %p200 = scmp.lt.s32.totalorder %s13, 3
    %p201 = pnand %p199, %p200
    %p202 = pneg %p201
    // Predicated region
    $region9: #{stereonet_forward.14} parent=5 // pred_check
      _
    $region10: #{stereonet_forward.14} parent=5 // pred_check_branch
      %204 = sbr.rel (%p201) target = $region12
    $region11: #{stereonet_forward.14} parent=5 // pred_region
      %s205 = ssub.s32 %s13, 1
      // Predicated region
      $region13: #{stereonet_forward.14} parent=11 // pred_check
        %p206 = pneg %p60
      $region14: #{stereonet_forward.14} parent=11 // pred_check_branch
        %208 = sbr.rel (%p206) target = $region16
      $region15: #{stereonet_forward.14} parent=11 // pred_region
        _
      $region16: #{stereonet_forward.14} parent=11 // pred_fallthru
        _
      // Predicated region
      $region17: #{stereonet_forward.14} parent=11 // pred_check
        %p209 = pneg %p81
      $region18: #{stereonet_forward.14} parent=11 // pred_check_branch
        %211 = sbr.rel (%p209) target = $region20
      $region19: #{stereonet_forward.14} parent=11 // pred_region
        _
      $region20: #{stereonet_forward.14} parent=11 // pred_fallthru
        _
      // Predicated region
      $region21: #{stereonet_forward.14} parent=11 // pred_check
        %p212 = pneg %p102
      $region22: #{stereonet_forward.14} parent=11 // pred_check_branch
        %214 = sbr.rel (%p212) target = $region24
      $region23: #{stereonet_forward.14} parent=11 // pred_region
        _
      $region24: #{stereonet_forward.14} parent=11 // pred_fallthru
        _
      // Predicated region
      $region25: #{stereonet_forward.14} parent=11 // pred_check
        %p215 = pneg %p123
      $region26: #{stereonet_forward.14} parent=11 // pred_check_branch
        %217 = sbr.rel (%p215) target = $region28
      $region27: #{stereonet_forward.14} parent=11 // pred_region
        _
      $region28: #{stereonet_forward.14} parent=11 // pred_fallthru
        _
      // Predicated region
      $region29: #{stereonet_forward.14} parent=11 // pred_check
        %p218 = pneg %p144
      $region30: #{stereonet_forward.14} parent=11 // pred_check_branch
        %220 = sbr.rel (%p218) target = $region32
      $region31: #{stereonet_forward.14} parent=11 // pred_region
        _
      $region32: #{stereonet_forward.14} parent=11 // pred_fallthru
        _
      // Predicated region
      $region33: #{stereonet_forward.14} parent=11 // pred_check
        %p221 = pneg %p165
      $region34: #{stereonet_forward.14} parent=11 // pred_check_branch
        %223 = sbr.rel (%p221) target = $region36
      $region35: #{stereonet_forward.14} parent=11 // pred_region
        _
      $region36: #{stereonet_forward.14} parent=11 // pred_fallthru
        _
    $region12: #{stereonet_forward.14} parent=5 // pred_fallthru
      _
    %p224 = scmp.lt.s32.totalorder %s13, 2
    // Predicated region
    $region37: #{stereonet_forward.14} parent=5 // pred_check
      %p225 = pneg %p224
    $region38: #{stereonet_forward.14} parent=5 // pred_check_branch
      %227 = sbr.rel (%p225) target = $region40
    $region39: #{stereonet_forward.14} parent=5 // pred_region
      // Predicated region
      $region41: #{stereonet_forward.14} parent=39 // pred_check
        %p228 = pneg %p33
      $region42: #{stereonet_forward.14} parent=39 // pred_check_branch
        %230 = sbr.rel (%p228) target = $region44
      $region43: #{stereonet_forward.14} parent=39 // pred_region
        %p231 = scmp.lt.s32.totalorder %s13, 1
        %s232 = scalar_select %p231, %s13, 1
        %s233 = smul.addr %s232, 54
        %s234 = smul.addr %s233, 4
        %s235 = scalar_lea.vmem %s0, %s234
      $region44: #{stereonet_forward.14} parent=39 // pred_fallthru
        _
    $region40: #{stereonet_forward.14} parent=5 // pred_fallthru
      _
    %p236 = scmp.le.s32.totalorder 1, %s13
    %p237 = scmp.lt.s32.totalorder %s13, 3
    %p238 = pnand %p236, %p237
    %p239 = pneg %p238
    // Predicated region
    $region45: #{stereonet_forward.14} parent=5 // pred_check
      _
    $region46: #{stereonet_forward.14} parent=5 // pred_check_branch
      %241 = sbr.rel (%p238) target = $region48
    $region47: #{stereonet_forward.14} parent=5 // pred_region
      %s242 = ssub.s32 %s13, 1
      %p243 = scmp.lt.s32.totalorder %s18, 1
      %s244 = scalar_select %p243, %s18, 1
      %s245 = smul.addr %s244, 54
      %s246 = smul.addr %s245, 4
      %s247 = scalar_lea.vmem %s0, %s246
      %p248 = pneg %p39
      %p249 = pneg %p36
      %p250 = pneg %p60
      %p251 = pneg %p57
      %p252 = pneg %p81
      %p253 = pneg %p78
      %p254 = pneg %p102
      %p255 = pneg %p99
      %p256 = pneg %p123
      %p257 = pneg %p120
      %p258 = pneg %p144
      %p259 = pneg %p141
      %p260 = pneg %p165
      %p261 = pneg %p162
      %p262 = pneg %p191
      %p263 = pneg %p188
      %p264 = scmp.lt.s32.totalorder %s18, 1
      %s265 = scalar_select %p264, %s18, 1
      %s266 = smul.addr %s265, 2
      %s267 = smul.addr %s266, 8
      %s268 = scalar_lea.vmem %s7, %s267
      %p269 = scmp.lt.s32.totalorder %s18, 1
      %s270 = scalar_select %p269, %s18, 1
      %s271 = smul.addr %s270, 54
      %s272 = smul.addr %s271, 4
      %s273 = scalar_lea.vmem %s0, %s272
      %p274 = scmp.lt.s32.totalorder %s18, 1
      %s275 = scalar_select %p274, %s18, 1
      %s276 = smul.addr %s275, 2
      %s277 = smul.addr %s276, 8
      %s278 = scalar_lea.vmem %s7, %s277
      %v280 = vld [vmem:[%s1] sm:$0xff]
      %v281 = vld [vmem:[%s1 + $0x8] sm:$0xff]
      %v282 = vld [vmem:[%s1 + $0x10] sm:$0xff]
      %v283 = vld [vmem:[%s1 + $0x18] sm:$0xff]
      %v284 = vld [vmem:[%s273] sm:$0xf]
      %v285 = vld [vmem:[%s273 + $0x4] sm:$0xf]
      %v286 = vld [vmem:[%s273 + $0x8] sm:$0xf]
      %v287 = vld [vmem:[%s273 + $0xc] sm:$0xf]
      %v288 = vld [vmem:[%s273 + $0x10] sm:$0xf]
      %v289 = vld [vmem:[%s273 + $0x14] sm:$0xf]
      %v290 = vld [vmem:[%s273 + $0x18] sm:$0xf]
      %v291 = vld [vmem:[%s273 + $0x1c] sm:$0xf]
      %v292 = vld [vmem:[%s273 + $0x20] sm:$0xf]
      %v293 = vld [vmem:[%s273 + $0x24] sm:$0xf]
      %v294 = vld [vmem:[%s273 + $0x28] sm:$0xf]
      %v295 = vld [vmem:[%s273 + $0x2c] sm:$0xf]
      %v296 = vld [vmem:[%s273 + $0x30] sm:$0xf]
      %v297 = vld [vmem:[%s273 + $0x34] sm:$0xf]
      %v298 = vld [vmem:[%s273 + $0x38] sm:$0xf]
      %v299 = vld [vmem:[%s273 + $0x3c] sm:$0xf]
      %v300 = vld [vmem:[%s273 + $0x40] sm:$0xf]
      %v301 = vld [vmem:[%s273 + $0x44] sm:$0xf]
      %v302 = vld [vmem:[%s273 + $0x48] sm:$0xf]
      %v303 = vld [vmem:[%s273 + $0x4c] sm:$0xf]
      %v304 = vld [vmem:[%s273 + $0x50] sm:$0xf]
      %v305 = vld [vmem:[%s273 + $0x54] sm:$0xf]
      %v306 = vld [vmem:[%s273 + $0x58] sm:$0xf]
      %v307 = vld [vmem:[%s273 + $0x5c] sm:$0xf]
      %v308 = vld [vmem:[%s273 + $0x60] sm:$0xf]
      %v309 = vld [vmem:[%s273 + $0x64] sm:$0xf]
      %v310 = vld [vmem:[%s273 + $0x68] sm:$0xf]
      %v311 = vld [vmem:[%s273 + $0x6c] sm:$0xf]
      %v312 = vld [vmem:[%s273 + $0x70] sm:$0xf]
      %v313 = vld [vmem:[%s273 + $0x74] sm:$0xf]
      %v314 = vld [vmem:[%s273 + $0x78] sm:$0xf]
      %v315 = vld [vmem:[%s273 + $0x7c] sm:$0xf]
      %v316 = vld [vmem:[%s273 + $0x80] sm:$0xf]
      %v317 = vld [vmem:[%s273 + $0x84] sm:$0xf]
      %v318 = vld [vmem:[%s273 + $0x88] sm:$0xf]
      %v319 = vld [vmem:[%s273 + $0x8c] sm:$0xf]
      %v320 = vld [vmem:[%s273 + $0x90] sm:$0xf]
      %v321 = vld [vmem:[%s273 + $0x94] sm:$0xf]
      %v322 = vld [vmem:[%s273 + $0x98] sm:$0xf]
      %v323 = vld [vmem:[%s273 + $0x9c] sm:$0xf]
      %v324 = vld [vmem:[%s273 + $0xa0] sm:$0xf]
      %v325 = vld [vmem:[%s273 + $0xa4] sm:$0xf]
      %v326 = vld [vmem:[%s273 + $0xa8] sm:$0xf]
      %v327 = vld [vmem:[%s273 + $0xac] sm:$0xf]
      %v328 = vld [vmem:[%s273 + $0xb0] sm:$0xf]
      %v329 = vld [vmem:[%s273 + $0xb4] sm:$0xf]
      %v330 = vld [vmem:[%s273 + $0xb8] sm:$0xf]
      %v331 = vld [vmem:[%s273 + $0xbc] sm:$0xf]
      %v332 = vld [vmem:[%s273 + $0xc0] sm:$0xf]
      %v333 = vld [vmem:[%s273 + $0xc4] sm:$0xf]
      %v334 = vld [vmem:[%s273 + $0xc8] sm:$0xf]
      %v335 = vld [vmem:[%s273 + $0xcc] sm:$0xf]
      %v336 = vld [vmem:[%s273 + $0xd0] sm:$0xf]
      %v337 = vld [vmem:[%s273 + $0xd4] sm:$0xf]
      %v338 = vld [vmem:[%s2] sm:$0xff]
      %v339 = vld [vmem:[%s2 + $0x8] sm:$0xff]
      %341 = vset.pattern.permute.xlu0 0
      %342 = vperm.xlu0 %341, %v338
      %v343 = vpop.permute.xlu0 %342
      %346 = vset.pattern.permute.xlu0 0
      %347 = vperm.xlu0 %346, %v339
      %v348 = vpop.permute.xlu0 %347
      %v354 = vunpack.c.l.b16 %v280
      %v355 = vunpack.c.h.b16 %v280
      %v356 = vunpack.c.l.b16 %v281
      %v357 = vunpack.c.h.b16 %v281
      %v358 = vunpack.c.l.b16 %v282
      %v359 = vunpack.c.h.b16 %v282
      %v360 = vunpack.c.l.b16 %v283
      %v361 = vunpack.c.h.b16 %v283
      %v362 = vpack.c.b16 %v358, %v354
      %v363 = vpack.c.b16 %v359, %v355
      %v364 = vpack.c.b16 %v360, %v356
      %v365 = vpack.c.b16 %v361, %v357
      %v423 = vunpack.c.l.b16 %v284
      %v424 = vunpack.c.l.b16 %v285
      %v425 = vunpack.c.l.b16 %v286
      %v426 = vunpack.c.l.b16 %v287
      %v427 = vunpack.c.l.b16 %v288
      %v428 = vunpack.c.l.b16 %v289
      %v429 = vunpack.c.l.b16 %v290
      %v430 = vunpack.c.l.b16 %v291
      %v431 = vunpack.c.l.b16 %v292
      %v432 = vunpack.c.l.b16 %v293
      %v433 = vunpack.c.l.b16 %v294
      %v434 = vunpack.c.l.b16 %v295
      %v435 = vunpack.c.l.b16 %v296
      %v436 = vunpack.c.l.b16 %v297
      %v437 = vunpack.c.l.b16 %v298
      %v438 = vunpack.c.l.b16 %v299
      %v439 = vunpack.c.l.b16 %v300
      %v440 = vunpack.c.l.b16 %v301
      %v441 = vunpack.c.l.b16 %v302
      %v442 = vunpack.c.l.b16 %v303
      %v443 = vunpack.c.l.b16 %v304
      %v444 = vunpack.c.l.b16 %v305
      %v445 = vunpack.c.l.b16 %v306
      %v446 = vunpack.c.l.b16 %v307
      %v447 = vunpack.c.l.b16 %v308
      %v448 = vunpack.c.l.b16 %v309
      %v449 = vunpack.c.l.b16 %v310
      %v450 = vunpack.c.l.b16 %v311
      %v451 = vunpack.c.l.b16 %v312
      %v452 = vunpack.c.l.b16 %v313
      %v453 = vunpack.c.l.b16 %v314
      %v454 = vunpack.c.l.b16 %v315
      %v455 = vunpack.c.l.b16 %v316
      %v456 = vunpack.c.l.b16 %v317
      %v457 = vunpack.c.l.b16 %v318
      %v458 = vunpack.c.l.b16 %v319
      %v459 = vunpack.c.l.b16 %v320
      %v460 = vunpack.c.l.b16 %v321
      %v461 = vunpack.c.l.b16 %v322
      %v462 = vunpack.c.l.b16 %v323
      %v463 = vunpack.c.l.b16 %v324
      %v464 = vunpack.c.l.b16 %v325
      %v465 = vunpack.c.l.b16 %v326
      %v466 = vunpack.c.l.b16 %v327
      %v467 = vunpack.c.l.b16 %v328
      %v468 = vunpack.c.l.b16 %v329
      %v469 = vunpack.c.l.b16 %v330
      %v470 = vunpack.c.l.b16 %v331
      %v471 = vunpack.c.l.b16 %v332
      %v472 = vunpack.c.l.b16 %v333
      %v473 = vunpack.c.l.b16 %v334
      %v474 = vunpack.c.l.b16 %v335
      %v475 = vunpack.c.l.b16 %v336
      %v476 = vunpack.c.l.b16 %v337
      %v477 = vpack.c.b16 %v424, %v423
      %v478 = vpack.c.b16 %v426, %v425
      %v479 = vpack.c.b16 %v428, %v427
      %v480 = vpack.c.b16 %v430, %v429
      %v481 = vpack.c.b16 %v432, %v431
      %v482 = vpack.c.b16 %v434, %v433
      %v483 = vpack.c.b16 %v436, %v435
      %v484 = vpack.c.b16 %v438, %v437
      %v485 = vpack.c.b16 %v440, %v439
      %v486 = vpack.c.b16 %v442, %v441
      %v487 = vpack.c.b16 %v444, %v443
      %v488 = vpack.c.b16 %v446, %v445
      %v489 = vpack.c.b16 %v448, %v447
      %v490 = vpack.c.b16 %v450, %v449
      %v491 = vpack.c.b16 %v452, %v451
      %v492 = vpack.c.b16 %v454, %v453
      %v493 = vpack.c.b16 %v456, %v455
      %v494 = vpack.c.b16 %v458, %v457
      %v495 = vpack.c.b16 %v460, %v459
      %v496 = vpack.c.b16 %v462, %v461
      %v497 = vpack.c.b16 %v464, %v463
      %v498 = vpack.c.b16 %v466, %v465
      %v499 = vpack.c.b16 %v468, %v467
      %v500 = vpack.c.b16 %v470, %v469
      %v501 = vpack.c.b16 %v472, %v471
      %v502 = vpack.c.b16 %v474, %v473
      %v503 = vpack.c.b16 %v476, %v475
      %vm531 = vcmask 392192
      %v533 = vsel %vm531, %v365, 0
      %535 = vmatprep.subr.bf16.mxu0 0
      %536 = vmatpush1.bf16.msra.mxu0 %v477
      %537 = vmatprep.subr.bf16.mxu0 0
      %538 = vmatpush1.bf16.msra.mxu0 %v478
      %539 = vmatprep.subr.bf16.mxu0 0
      %540 = vmatpush1.bf16.msra.mxu0 %v479
      %541 = vmatprep.subr.bf16.mxu0 0
      %542 = vmatpush1.bf16.msra.mxu0 %v480
      %543 = vmatprep.subr.bf16.mxu0 0
      %544 = vmatpush1.bf16.msra.mxu0 %v481
      %545 = vmatprep.subr.bf16.mxu0 0
      %546 = vmatpush1.bf16.msra.mxu0 %v482
      %547 = vmatprep.subr.bf16.mxu0 0
      %548 = vmatpush1.bf16.msra.mxu0 %v483
      %549 = vmatprep.subr.bf16.mxu0 0
      %550 = vmatpush1.bf16.msra.mxu0 %v484
      %551 = vmatprep.subr.bf16.mxu0 0
      %552 = vmatpush1.bf16.msra.mxu0 %v485
      %553 = vmatprep.subr.bf16.mxu0 0
      %554 = vmatpush1.bf16.msra.mxu0 %v486
      %555 = vmatprep.subr.bf16.mxu0 0
      %556 = vmatpush1.bf16.msra.mxu0 %v487
      %557 = vmatprep.subr.bf16.mxu0 0
      %558 = vmatpush1.bf16.msra.mxu0 %v488
      %559 = vmatprep.subr.bf16.mxu0 0
      %560 = vmatpush1.bf16.msra.mxu0 %v489
      %561 = vmatprep.subr.bf16.mxu0 0
      %562 = vmatpush1.bf16.msra.mxu0 %v490
      %563 = vmatprep.subr.bf16.mxu0 0
      %564 = vmatpush1.bf16.msra.mxu0 %v491
      %565 = vmatprep.subr.bf16.mxu0 0
      %566 = vmatpush1.bf16.msra.mxu0 %v492
      %567 = vmatprep.mubr.bf16.mxu0 %v363
      %568 = vmatmul.mubr.bf16.gmra.mrb[0].mxu0 %v362
      %v569 = vpop.f32.mrb[0].mxu0
      %v570 = vadd.f32 %v343, %v569
      %v571 = vpop.f32.mrb[0].mxu0
      %v572 = vpop.f32.mrb[0].mxu0
      %v573 = vadd.f32 %v348, %v572
      %v574 = vpop.f32.mrb[0].mxu0
      %575 = vdwg.mxu0
      %576 = vmatprep.subr.bf16.mxu0 0
      %577 = vmatpush1.bf16.msra.mxu0 %v493
      %578 = vmatprep.subr.bf16.mxu0 0
      %579 = vmatpush1.bf16.msra.mxu0 %v494
      %580 = vmatprep.subr.bf16.mxu0 0
      %581 = vmatpush1.bf16.msra.mxu0 %v495
      %582 = vmatprep.subr.bf16.mxu0 0
      %583 = vmatpush1.bf16.msra.mxu0 %v496
      %584 = vmatprep.subr.bf16.mxu0 0
      %585 = vmatpush1.bf16.msra.mxu0 %v497
      %586 = vmatprep.subr.bf16.mxu0 0
      %587 = vmatpush1.bf16.msra.mxu0 %v498
      %588 = vmatprep.subr.bf16.mxu0 0
      %589 = vmatpush1.bf16.msra.mxu0 %v499
      %590 = vmatprep.subr.bf16.mxu0 0
      %591 = vmatpush1.bf16.msra.mxu0 %v500
      %592 = vmatprep.subr.bf16.mxu0 0
      %593 = vmatpush1.bf16.msra.mxu0 %v501
      %594 = vmatprep.subr.bf16.mxu0 0
      %595 = vmatpush1.bf16.msra.mxu0 %v502
      %596 = vmatprep.subr.bf16.mxu0 0
      %597 = vmatpush1.bf16.msra.mxu0 %v503
      %598 = vmatprep.subr.bf16.mxu0 0
      %599 = vmatpush1.bf16.msra.mxu0 0
      %600 = vmatprep.subr.bf16.mxu0 0
      %601 = vmatpush1.bf16.msra.mxu0 0
      %602 = vmatprep.subr.bf16.mxu0 0
      %603 = vmatpush1.bf16.msra.mxu0 0
      %604 = vmatprep.subr.bf16.mxu0 0
      %605 = vmatpush1.bf16.msra.mxu0 0
      %606 = vmatprep.subr.bf16.mxu0 0
      %607 = vmatpush1.bf16.msra.mxu0 0
      %608 = vmatprep.mubr.bf16.mxu0 %v533
      %609 = vmatmul.mubr.bf16.gmra.mrb[0].mxu0 %v364
      %v610 = vpop.f32.mrb[0].mxu0
      %v611 = vadd.f32 %v570, %v610
      %v612 = vpop.f32.mrb[0].mxu0
      %v613 = vpop.f32.mrb[0].mxu0
      %v614 = vadd.f32 %v573, %v613
      %v615 = vpop.f32.mrb[0].mxu0
      %616 = vdwg.mxu0
      %vm617 = vcmask 523264
      %v618 = vsel %vm617, %v611, 0.0
      %619 = vadd.xlane.f32.xlu0 %v618
      %v620 = vpop.xlane.xlu0 %619
      %v621 = vsel %vm617, %v614, 0.0
      %622 = vadd.xlane.f32.xlu0 %v621
      %v623 = vpop.xlane.xlu0 %622
      %v624 = vmul.f32 %v611, %v611
      %v625 = vmul.f32 %v614, %v614
      %v626 = vsel %vm617, %v624, 0.0
      %627 = vadd.xlane.f32.xlu0 %v626
      %v628 = vpop.xlane.xlu0 %627
      %v629 = vsel %vm617, %v625, 0.0
      %630 = vadd.xlane.f32.xlu0 %v629
      %v631 = vpop.xlane.xlu0 %630
      %v632 = vld [vmem:[%s5] sm:$0xff]
      %vm633 = vcmask 130048
      %v635 = vsel %vm633, %v632, 0
      %637 = vmatprep.subr.mxu0 0.0
      %638 = vmatpush1.msra.mxu0 %v620
      %639 = vmatprep.subr.mxu0 0.0
      %640 = vmatpush1.msra.mxu0 %v623
      %641 = vmatprep.subr.mxu0 0.0
      %642 = vmatpush1.msra.mxu0 0.0
      %643 = vmatprep.subr.mxu0 0.0
      %644 = vmatpush1.msra.mxu0 0.0
      %645 = vmatprep.subr.mxu0 0.0
      %646 = vmatpush1.msra.mxu0 0.0
      %647 = vmatprep.subr.mxu0 0.0
      %648 = vmatpush1.msra.mxu0 0.0
      %649 = vmatprep.subr.mxu0 0.0
      %650 = vmatpush1.msra.mxu0 0.0
      %651 = vmatprep.subr.mxu0 0.0
      %652 = vmatpush1.msra.mxu0 0.0
      %653 = vmatprep.subr.mxu0 0.0
      %654 = vmatpush1.msra.mxu0 0.0
      %655 = vmatprep.subr.mxu0 0.0
      %656 = vmatpush1.msra.mxu0 0.0
      %657 = vmatprep.subr.mxu0 0.0
      %658 = vmatpush1.msra.mxu0 0.0
      %659 = vmatprep.subr.mxu0 0.0
      %660 = vmatpush1.msra.mxu0 0.0
      %661 = vmatprep.subr.mxu0 0.0
      %662 = vmatpush1.msra.mxu0 0.0
      %663 = vmatprep.subr.mxu0 0.0
      %664 = vmatpush1.msra.mxu0 0.0
      %665 = vmatprep.subr.mxu0 0.0
      %666 = vmatpush1.msra.mxu0 0.0
      %667 = vmatprep.subr.mxu0 0.0
      %668 = vmatpush1.msra.mxu0 0.0
      %669 = vmatprep.subr.mxu0 0.0
      %670 = vmatpush1.msra.mxu0 0.0
      %671 = vmatprep.subr.mxu0 0.0
      %672 = vmatpush1.msra.mxu0 0.0
      %673 = vmatprep.subr.mxu0 0.0
      %674 = vmatpush1.msra.mxu0 0.0
      %675 = vmatprep.subr.mxu0 0.0
      %676 = vmatpush1.msra.mxu0 0.0
      %677 = vmatprep.subr.mxu0 0.0
      %678 = vmatpush1.msra.mxu0 0.0
      %679 = vmatprep.subr.mxu0 0.0
      %680 = vmatpush1.msra.mxu0 0.0
      %681 = vmatprep.subr.mxu0 0.0
      %682 = vmatpush1.msra.mxu0 0.0
      %683 = vmatprep.subr.mxu0 0.0
      %684 = vmatpush1.msra.mxu0 0.0
      %685 = vmatprep.subr.mxu0 0.0
      %686 = vmatpush1.msra.mxu0 0.0
      %687 = vmatprep.subr.mxu0 0.0
      %688 = vmatpush1.msra.mxu0 0.0
      %689 = vmatprep.subr.mxu0 0.0
      %690 = vmatpush1.msra.mxu0 0.0
      %691 = vmatprep.subr.mxu0 0.0
      %692 = vmatpush1.msra.mxu0 0.0
      %693 = vmatprep.subr.mxu0 0.0
      %694 = vmatpush1.msra.mxu0 0.0
      %695 = vmatprep.subr.mxu0 0.0
      %696 = vmatpush1.msra.mxu0 0.0
      %697 = vmatprep.subr.mxu0 0.0
      %698 = vmatpush1.msra.mxu0 0.0
      %699 = vmatprep.subr.mxu0 0.0
      %700 = vmatpush1.msra.mxu0 0.0
      %701 = vmatprep.mubr.f32.mxu0 0.0
      %702 = vmatmul.mubr.f32.gmra.mrb[0].mxu0 %v635
      %v703 = vpop.f32.mrb[0].mxu0
      %v704 = vadd.f32 0.0, %v703
      %v705 = vpop.f32.mrb[0].mxu0
      %706 = vdwg.mxu0
      %707 = vmatprep.subr.mxu0 0.0
      %708 = vmatpush1.msra.mxu0 %v628
      %709 = vmatprep.subr.mxu0 0.0
      %710 = vmatpush1.msra.mxu0 %v631
      %711 = vmatprep.subr.mxu0 0.0
      %712 = vmatpush1.msra.mxu0 0.0
      %713 = vmatprep.subr.mxu0 0.0
      %714 = vmatpush1.msra.mxu0 0.0
      %715 = vmatprep.subr.mxu0 0.0
      %716 = vmatpush1.msra.mxu0 0.0
      %717 = vmatprep.subr.mxu0 0.0
      %718 = vmatpush1.msra.mxu0 0.0
      %719 = vmatprep.subr.mxu0 0.0
      %720 = vmatpush1.msra.mxu0 0.0
      %721 = vmatprep.subr.mxu0 0.0
      %722 = vmatpush1.msra.mxu0 0.0
      %723 = vmatprep.subr.mxu0 0.0
      %724 = vmatpush1.msra.mxu0 0.0
      %725 = vmatprep.subr.mxu0 0.0
      %726 = vmatpush1.msra.mxu0 0.0
      %727 = vmatprep.subr.mxu0 0.0
      %728 = vmatpush1.msra.mxu0 0.0
      %729 = vmatprep.subr.mxu0 0.0
      %730 = vmatpush1.msra.mxu0 0.0
      %731 = vmatprep.subr.mxu0 0.0
      %732 = vmatpush1.msra.mxu0 0.0
      %733 = vmatprep.subr.mxu0 0.0
      %734 = vmatpush1.msra.mxu0 0.0
      %735 = vmatprep.subr.mxu0 0.0
      %736 = vmatpush1.msra.mxu0 0.0
      %737 = vmatprep.subr.mxu0 0.0
      %738 = vmatpush1.msra.mxu0 0.0
      %739 = vmatprep.subr.mxu0 0.0
      %740 = vmatpush1.msra.mxu0 0.0
      %741 = vmatprep.subr.mxu0 0.0
      %742 = vmatpush1.msra.mxu0 0.0
      %743 = vmatprep.subr.mxu0 0.0
      %744 = vmatpush1.msra.mxu0 0.0
      %745 = vmatprep.subr.mxu0 0.0
      %746 = vmatpush1.msra.mxu0 0.0
      %747 = vmatprep.subr.mxu0 0.0
      %748 = vmatpush1.msra.mxu0 0.0
      %749 = vmatprep.subr.mxu0 0.0
      %750 = vmatpush1.msra.mxu0 0.0
      %751 = vmatprep.subr.mxu0 0.0
      %752 = vmatpush1.msra.mxu0 0.0
      %753 = vmatprep.subr.mxu0 0.0
      %754 = vmatpush1.msra.mxu0 0.0
      %755 = vmatprep.subr.mxu0 0.0
      %756 = vmatpush1.msra.mxu0 0.0
      %757 = vmatprep.subr.mxu0 0.0
      %758 = vmatpush1.msra.mxu0 0.0
      %759 = vmatprep.subr.mxu0 0.0
      %760 = vmatpush1.msra.mxu0 0.0
      %761 = vmatprep.subr.mxu0 0.0
      %762 = vmatpush1.msra.mxu0 0.0
      %763 = vmatprep.subr.mxu0 0.0
      %764 = vmatpush1.msra.mxu0 0.0
      %765 = vmatprep.subr.mxu0 0.0
      %766 = vmatpush1.msra.mxu0 0.0
      %767 = vmatprep.subr.mxu0 0.0
      %768 = vmatpush1.msra.mxu0 0.0
      %769 = vmatprep.subr.mxu0 0.0
      %770 = vmatpush1.msra.mxu0 0.0
      %771 = vmatprep.mubr.f32.mxu0 0.0
      %772 = vmatmul.mubr.f32.gmra.mrb[0].mxu0 %v635
      %v773 = vpop.f32.mrb[0].mxu0
      %v774 = vadd.f32 0.0, %v773
      %v775 = vpop.f32.mrb[0].mxu0
      %776 = vdwg.mxu0
      %v777 = vld [vmem:[%s6] sm:$0xff]
      %v778 = vld [vmem:[%s6 + $0x8] sm:$0xff]
      %vm779 = vcmask 64512
      %v781 = vsel %vm779, %v777, 0
      %v784 = vsel %vm779, %v778, 0
      %786 = vmatprep.subr.mxu0 0.0
      %787 = vmatpush1.msra.mxu0 %v704
      %788 = vmatprep.subr.mxu0 0.0
      %789 = vmatpush1.msra.mxu0 0.0
      %790 = vmatprep.subr.mxu0 0.0
      %791 = vmatpush1.msra.mxu0 0.0
      %792 = vmatprep.subr.mxu0 0.0
      %793 = vmatpush1.msra.mxu0 0.0
      %794 = vmatprep.subr.mxu0 0.0
      %795 = vmatpush1.msra.mxu0 0.0
      %796 = vmatprep.subr.mxu0 0.0
      %797 = vmatpush1.msra.mxu0 0.0
      %798 = vmatprep.subr.mxu0 0.0
      %799 = vmatpush1.msra.mxu0 0.0
      %800 = vmatprep.subr.mxu0 0.0
      %801 = vmatpush1.msra.mxu0 0.0
      %802 = vmatprep.subr.mxu0 0.0
      %803 = vmatpush1.msra.mxu0 0.0
      %804 = vmatprep.subr.mxu0 0.0
      %805 = vmatpush1.msra.mxu0 0.0
      %806 = vmatprep.subr.mxu0 0.0
      %807 = vmatpush1.msra.mxu0 0.0
      %808 = vmatprep.subr.mxu0 0.0
      %809 = vmatpush1.msra.mxu0 0.0
      %810 = vmatprep.subr.mxu0 0.0
      %811 = vmatpush1.msra.mxu0 0.0
      %812 = vmatprep.subr.mxu0 0.0
      %813 = vmatpush1.msra.mxu0 0.0
      %814 = vmatprep.subr.mxu0 0.0
      %815 = vmatpush1.msra.mxu0 0.0
      %816 = vmatprep.subr.mxu0 0.0
      %817 = vmatpush1.msra.mxu0 0.0
      %818 = vmatprep.subr.mxu0 0.0
      %819 = vmatpush1.msra.mxu0 0.0
      %820 = vmatprep.subr.mxu0 0.0
      %821 = vmatpush1.msra.mxu0 0.0
      %822 = vmatprep.subr.mxu0 0.0
      %823 = vmatpush1.msra.mxu0 0.0
      %824 = vmatprep.subr.mxu0 0.0
      %825 = vmatpush1.msra.mxu0 0.0
      %826 = vmatprep.subr.mxu0 0.0
      %827 = vmatpush1.msra.mxu0 0.0
      %828 = vmatprep.subr.mxu0 0.0
      %829 = vmatpush1.msra.mxu0 0.0
      %830 = vmatprep.subr.mxu0 0.0
      %831 = vmatpush1.msra.mxu0 0.0
      %832 = vmatprep.subr.mxu0 0.0
      %833 = vmatpush1.msra.mxu0 0.0
      %834 = vmatprep.subr.mxu0 0.0
      %835 = vmatpush1.msra.mxu0 0.0
      %836 = vmatprep.subr.mxu0 0.0
      %837 = vmatpush1.msra.mxu0 0.0
      %838 = vmatprep.subr.mxu0 0.0
      %839 = vmatpush1.msra.mxu0 0.0
      %840 = vmatprep.subr.mxu0 0.0
      %841 = vmatpush1.msra.mxu0 0.0
      %842 = vmatprep.subr.mxu0 0.0
      %843 = vmatpush1.msra.mxu0 0.0
      %844 = vmatprep.subr.mxu0 0.0
      %845 = vmatpush1.msra.mxu0 0.0
      %846 = vmatprep.subr.mxu0 0.0
      %847 = vmatpush1.msra.mxu0 0.0
      %848 = vmatprep.subr.mxu0 0.0
      %849 = vmatpush1.msra.mxu0 0.0
      %850 = vmatprep.mubr.f32.mxu0 0.0
      %851 = vmatmul.mubr.f32.gmra.mrb[0].mxu0 %v781
      %v852 = vpop.f32.mrb[0].mxu0
      %v853 = vadd.f32 0.0, %v852
      %v854 = vpop.f32.mrb[0].mxu0
      %855 = vmatprep.mubr.f32.mxu0 0.0
      %856 = vmatmul.mubr.f32.gmra.mrb[0].mxu0 %v784
      %v857 = vpop.f32.mrb[0].mxu0
      %v858 = vadd.f32 0.0, %v857
      %v859 = vpop.f32.mrb[0].mxu0
      %860 = vdwg.mxu0
      %861 = vmatprep.subr.mxu0 0.0
      %862 = vmatpush1.msra.mxu0 %v774
      %863 = vmatprep.subr.mxu0 0.0
      %864 = vmatpush1.msra.mxu0 0.0
      %865 = vmatprep.subr.mxu0 0.0
      %866 = vmatpush1.msra.mxu0 0.0
      %867 = vmatprep.subr.mxu0 0.0
      %868 = vmatpush1.msra.mxu0 0.0
      %869 = vmatprep.subr.mxu0 0.0
      %870 = vmatpush1.msra.mxu0 0.0
      %871 = vmatprep.subr.mxu0 0.0
      %872 = vmatpush1.msra.mxu0 0.0
      %873 = vmatprep.subr.mxu0 0.0
      %874 = vmatpush1.msra.mxu0 0.0
      %875 = vmatprep.subr.mxu0 0.0
      %876 = vmatpush1.msra.mxu0 0.0
      %877 = vmatprep.subr.mxu0 0.0
      %878 = vmatpush1.msra.mxu0 0.0
      %879 = vmatprep.subr.mxu0 0.0
      %880 = vmatpush1.msra.mxu0 0.0
      %881 = vmatprep.subr.mxu0 0.0
      %882 = vmatpush1.msra.mxu0 0.0
      %883 = vmatprep.subr.mxu0 0.0
      %884 = vmatpush1.msra.mxu0 0.0
      %885 = vmatprep.subr.mxu0 0.0
      %886 = vmatpush1.msra.mxu0 0.0
      %887 = vmatprep.subr.mxu0 0.0
      %888 = vmatpush1.msra.mxu0 0.0
      %889 = vmatprep.subr.mxu0 0.0
      %890 = vmatpush1.msra.mxu0 0.0
      %891 = vmatprep.subr.mxu0 0.0
      %892 = vmatpush1.msra.mxu0 0.0
      %893 = vmatprep.subr.mxu0 0.0
      %894 = vmatpush1.msra.mxu0 0.0
      %895 = vmatprep.subr.mxu0 0.0
      %896 = vmatpush1.msra.mxu0 0.0
      %897 = vmatprep.subr.mxu0 0.0
      %898 = vmatpush1.msra.mxu0 0.0
      %899 = vmatprep.subr.mxu0 0.0
      %900 = vmatpush1.msra.mxu0 0.0
      %901 = vmatprep.subr.mxu0 0.0
      %902 = vmatpush1.msra.mxu0 0.0
      %903 = vmatprep.subr.mxu0 0.0
      %904 = vmatpush1.msra.mxu0 0.0
      %905 = vmatprep.subr.mxu0 0.0
      %906 = vmatpush1.msra.mxu0 0.0
      %907 = vmatprep.subr.mxu0 0.0
      %908 = vmatpush1.msra.mxu0 0.0
      %909 = vmatprep.subr.mxu0 0.0
      %910 = vmatpush1.msra.mxu0 0.0
      %911 = vmatprep.subr.mxu0 0.0
      %912 = vmatpush1.msra.mxu0 0.0
      %913 = vmatprep.subr.mxu0 0.0
      %914 = vmatpush1.msra.mxu0 0.0
      %915 = vmatprep.subr.mxu0 0.0
      %916 = vmatpush1.msra.mxu0 0.0
      %917 = vmatprep.subr.mxu0 0.0
      %918 = vmatpush1.msra.mxu0 0.0
      %919 = vmatprep.subr.mxu0 0.0
      %920 = vmatpush1.msra.mxu0 0.0
      %921 = vmatprep.subr.mxu0 0.0
      %922 = vmatpush1.msra.mxu0 0.0
      %923 = vmatprep.subr.mxu0 0.0
      %924 = vmatpush1.msra.mxu0 0.0
      %925 = vmatprep.mubr.f32.mxu0 0.0
      %926 = vmatmul.mubr.f32.gmra.mrb[0].mxu0 %v781
      %v927 = vpop.f32.mrb[0].mxu0
      %v928 = vadd.f32 0.0, %v927
      %v929 = vpop.f32.mrb[0].mxu0
      %930 = vmatprep.mubr.f32.mxu0 0.0
      %931 = vmatmul.mubr.f32.gmra.mrb[0].mxu0 %v784
      %v932 = vpop.f32.mrb[0].mxu0
      %v933 = vadd.f32 0.0, %v932
      %v934 = vpop.f32.mrb[0].mxu0
      %935 = vdwg.mxu0
      %v936 = vmul.f32 %v853, %v853
      %v937 = vmul.f32 %v858, %v858
      %v938 = vsub.f32 %v928, %v936
      %v939 = vsub.f32 %v933, %v937
      %v940 = vmax.f32 %v938, 0.0
      %v941 = vmax.f32 %v939, 0.0
      %943 = vset.pattern.permute.xlu0 0
      %944 = vperm.xlu0 %943, %v853
      %v945 = vpop.permute.xlu0 %944
      %948 = vset.pattern.permute.xlu0 0
      %949 = vperm.xlu0 %948, %v858
      %v950 = vpop.permute.xlu0 %949
      %v952 = vsub.f32 %v611, %v945
      %v953 = vsub.f32 %v614, %v950
      %v954 = vadd.f32 %v940, 1e-05
      %v955 = vadd.f32 %v941, 1e-05
      %v956 = vrsqrt.pop %v954
      %v957 = vrsqrt.pop %v955
      %959 = vset.pattern.permute.xlu0 0
      %960 = vperm.xlu0 %959, %v956
      %v961 = vpop.permute.xlu0 %960
      %964 = vset.pattern.permute.xlu0 0
      %965 = vperm.xlu0 %964, %v957
      %v966 = vpop.permute.xlu0 %965
      %v968 = vmul.f32 %v952, %v961
      %v969 = vmul.f32 %v953, %v966
      %v970 = vld [vmem:[%s3] sm:$0xff]
      %v971 = vld [vmem:[%s3 + $0x8] sm:$0xff]
      %973 = vset.pattern.permute.xlu0 0
      %974 = vperm.xlu0 %973, %v970
      %v975 = vpop.permute.xlu0 %974
      %978 = vset.pattern.permute.xlu0 0
      %979 = vperm.xlu0 %978, %v971
      %v980 = vpop.permute.xlu0 %979
      %v982 = vmul.f32 %v968, %v975
      %v983 = vmul.f32 %v969, %v980
      %v984 = vld [vmem:[%s4] sm:$0xff]
      %v985 = vld [vmem:[%s4 + $0x8] sm:$0xff]
      %987 = vset.pattern.permute.xlu0 0
      %988 = vperm.xlu0 %987, %v984
      %v989 = vpop.permute.xlu0 %988
      %992 = vset.pattern.permute.xlu0 0
      %993 = vperm.xlu0 %992, %v985
      %v994 = vpop.permute.xlu0 %993
      %v996 = vadd.f32 %v982, %v989
      %v997 = vadd.f32 %v983, %v994
      %v998 = vmax.f32 %v996, 0.0
      %v999 = vmax.f32 %v997, 0.0
      %1000 = vst.msk [vmem:[%s278] sm:$0xff] %vm617, %v998
      %1001 = vst.msk [vmem:[%s278 + $0x8] sm:$0xff] %vm617, %v999
      %p1002 = scmp.lt.s32.totalorder %s18, 1
      %s1003 = scalar_select %p1002, %s18, 1
      %s1004 = smul.addr %s1003, 2
      %s1005 = smul.addr %s1004, 8
      %s1006 = scalar_lea.vmem %s7, %s1005
      // Predicated region
      $region49: #{stereonet_forward.14} parent=47 // pred_check
        %p1007 = pneg %p188
      $region50: #{stereonet_forward.14} parent=47 // pred_check_branch
        %1009 = sbr.rel (%p1007) target = $region52
      $region51: #{stereonet_forward.14} parent=47 // pred_region
        _
      $region52: #{stereonet_forward.14} parent=47 // pred_fallthru
        _
    $region48: #{stereonet_forward.14} parent=5 // pred_fallthru
      _
    %p1010 = scmp.le.s32.totalorder 2, %s13
    // Predicated region
    $region53: #{stereonet_forward.14} parent=5 // pred_check
      %p1011 = pneg %p1010
    $region54: #{stereonet_forward.14} parent=5 // pred_check_branch
      %1013 = sbr.rel (%p1011) target = $region56
    $region55: #{stereonet_forward.14} parent=5 // pred_region
      %s1014 = ssub.s32 %s13, 2
      // Predicated region
      $region57: #{stereonet_forward.14} parent=55 // pred_check
        %p1015 = pneg %p194
      $region58: #{stereonet_forward.14} parent=55 // pred_check_branch
        %1017 = sbr.rel (%p1015) target = $region60
      $region59: #{stereonet_forward.14} parent=55 // pred_region
        %p1018 = scmp.lt.s32.totalorder %s19, 1
        %s1019 = scalar_select %p1018, %s19, 1
        %s1020 = smul.addr %s1019, 2
        %s1021 = smul.addr %s1020, 8
        %s1022 = scalar_lea.vmem %s7, %s1021
      $region60: #{stereonet_forward.14} parent=55 // pred_fallthru
        _
    $region56: #{stereonet_forward.14} parent=5 // pred_fallthru
      _
  $region6: #{stereonet_forward.14} parent=0 // loop_footer
    %s17 = sadd.s32 1, %s13
  $region7: #{stereonet_forward.14} parent=0 // loop_footer_branch
    %12 = sbr.rel target = $region3
  $region8: #{stereonet_forward.14} parent=0 // loop_exit
    _

// kernel: stereonet_forward.15
$region0: #{stereonet_forward.15}
  #allocation0 [shape = 'u32[]', space=smem, size = 0x4, offset = 0x4, fixed_abs, tag = 'smem constant byte address 0x4 - core index']
  #allocation1 [shape = 'u32[144,128]{1,0:T(1,128)}', space=vmem, size = 0x12000, scoped, tag = 'internal scratch']
  %s0 = inlined_call_operand.vmem [shape: bf16[2,432,8], index: 0, kind: input, shape index: {}]
  %s1 = inlined_call_operand.vmem [shape: bf16[32,432], index: 1, kind: input, shape index: {}]
  %s2 = inlined_call_operand.vmem [shape: f32[32,1], index: 2, kind: input, shape index: {}]
  %s3 = inlined_call_operand.vmem [shape: f32[32,1], index: 3, kind: input, shape index: {}]
  %s4 = inlined_call_operand.vmem [shape: f32[32,1], index: 4, kind: input, shape index: {}]
  %s5 = inlined_call_operand.vmem [shape: f32[8,32], index: 5, kind: input, shape index: {}]
  %s6 = inlined_call_operand.vmem [shape: f32[32,8], index: 6, kind: input, shape index: {}]
  %s7 = inlined_call_operand.vmem [shape: f32[2,32,8], index: 7, kind: output, shape index: {}]
  %s8 = sld [smem:[#allocation0]]
  $region61: #{stereonet_forward.15} parent=0
    _
  %s10 = ssub.s32 1, %s8
  %s11 = scalar_select 0, %s10, %s8
  loop: start=0, step=1, limit=4
  $region2: #{stereonet_forward.15} parent=0 // loop_pre_header
    _
  $region3: #{stereonet_forward.15} parent=0 // loop_header
    %s13 = sphi 0, %s17
    %p14 = scmp.ge.s32.totalorder %s13, 4
    %s23 = sphi 0, %s25
    %s26 = sphi 0, %s23
    %s27 = sphi 0, %s26
    %s43 = sphi 0, %s27
    %s47 = sphi 0, %s47
    %s49 = sphi 0, %s47
    %s50 = sphi 0, %s49
    %s64 = sphi 0, %s50
    %s68 = sphi 0, %s68
    %s70 = sphi 0, %s68
    %s71 = sphi 0, %s70
    %s85 = sphi 0, %s71
    %s89 = sphi 0, %s89
    %s91 = sphi 0, %s89
    %s92 = sphi 0, %s91
    %s106 = sphi 0, %s92
    %s110 = sphi 0, %s110
    %s112 = sphi 0, %s110
    %s113 = sphi 0, %s112
    %s127 = sphi 0, %s113
    %s131 = sphi 0, %s131
    %s133 = sphi 0, %s131
    %s134 = sphi 0, %s133
    %s148 = sphi 0, %s134
    %s152 = sphi 0, %s152
    %s154 = sphi 0, %s152
    %s155 = sphi 0, %s154
    %s169 = sphi 0, %s155
    %s175 = sphi 0, %s177
    %s178 = sphi 0, %s175
    %s179 = sphi 0, %s178
    %s195 = sphi 0, %s179
  $region4: #{stereonet_forward.15} parent=0 // loop_header_branch
    %16 = sbr.rel (%p14) target = $region8
  $region5: #{stereonet_forward.15} parent=0 // loop_body
    %s18 = ssub.s32 %s13, 1
    %s19 = ssub.s32 %s13, 2
    %s20 = sadd.s32 %s13, 1
    %s21 = ssub.s32 %s13, %s20
    %p22 = scmp.eq.s32.totalorder %s21, 0
    %s24 = sadd.s32 %s23, 1
    %s25 = scalar_select %p22, %s23, %s24
    %p28 = pneg %p22
    %p29 = scmp.eq.s32.totalorder %s13, 1
    %p30 = por %p28, %p29
    %p31 = scmp.ne.s32.totalorder %s23, %s26
    %p32 = scmp.eq.s32.totalorder %s13, 0
    %p33 = por %p31, %p32
    %p34 = scmp.ne.s32.totalorder %s23, %s26
    %p35 = scmp.eq.s32.totalorder %s18, 1
    %p36 = por %p34, %p35
    %p37 = scmp.ne.s32.totalorder %s26, %s27
    %p38 = scmp.eq.s32.totalorder %s18, 0
    %p39 = por %p37, %p38
    %p40 = scmp.ne.s32.totalorder %s26, %s27
    %p41 = scmp.eq.s32.totalorder %s19, 1
    %p42 = por %p40, %p41
    %p44 = scmp.ne.s32.totalorder %s27, %s43
    %p45 = scmp.eq.s32.totalorder %s19, 0
    %p46 = por %p44, %p45
    %s48 = sadd.s32 %s47, 1
    %p51 = scmp.eq.s32.totalorder %s13, 1
    %p52 = scmp.ne.s32.totalorder %s47, %s49
    %p53 = scmp.eq.s32.totalorder %s13, 0
    %p54 = por %p52, %p53
    %p55 = scmp.ne.s32.totalorder %s47, %s49
    %p56 = scmp.eq.s32.totalorder %s18, 1
    %p57 = por %p55, %p56
    %p58 = scmp.ne.s32.totalorder %s49, %s50
    %p59 = scmp.eq.s32.totalorder %s18, 0
    %p60 = por %p58, %p59
    %p61 = scmp.ne.s32.totalorder %s49, %s50
    %p62 = scmp.eq.s32.totalorder %s19, 1
    %p63 = por %p61, %p62
    %p65 = scmp.ne.s32.totalorder %s50, %s64
    %p66 = scmp.eq.s32.totalorder %s19, 0
    %p67 = por %p65, %p66
    %s69 = sadd.s32 %s68, 1
    %p72 = scmp.eq.s32.totalorder %s13, 1
    %p73 = scmp.ne.s32.totalorder %s68, %s70
    %p74 = scmp.eq.s32.totalorder %s13, 0
    %p75 = por %p73, %p74
    %p76 = scmp.ne.s32.totalorder %s68, %s70
    %p77 = scmp.eq.s32.totalorder %s18, 1
    %p78 = por %p76, %p77
    %p79 = scmp.ne.s32.totalorder %s70, %s71
    %p80 = scmp.eq.s32.totalorder %s18, 0
    %p81 = por %p79, %p80
    %p82 = scmp.ne.s32.totalorder %s70, %s71
    %p83 = scmp.eq.s32.totalorder %s19, 1
    %p84 = por %p82, %p83
    %p86 = scmp.ne.s32.totalorder %s71, %s85
    %p87 = scmp.eq.s32.totalorder %s19, 0
    %p88 = por %p86, %p87
    %s90 = sadd.s32 %s89, 1
    %p93 = scmp.eq.s32.totalorder %s13, 1
    %p94 = scmp.ne.s32.totalorder %s89, %s91
    %p95 = scmp.eq.s32.totalorder %s13, 0
    %p96 = por %p94, %p95
    %p97 = scmp.ne.s32.totalorder %s89, %s91
    %p98 = scmp.eq.s32.totalorder %s18, 1
    %p99 = por %p97, %p98
    %p100 = scmp.ne.s32.totalorder %s91, %s92
    %p101 = scmp.eq.s32.totalorder %s18, 0
    %p102 = por %p100, %p101
    %p103 = scmp.ne.s32.totalorder %s91, %s92
    %p104 = scmp.eq.s32.totalorder %s19, 1
    %p105 = por %p103, %p104
    %p107 = scmp.ne.s32.totalorder %s92, %s106
    %p108 = scmp.eq.s32.totalorder %s19, 0
    %p109 = por %p107, %p108
    %s111 = sadd.s32 %s110, 1
    %p114 = scmp.eq.s32.totalorder %s13, 1
    %p115 = scmp.ne.s32.totalorder %s110, %s112
    %p116 = scmp.eq.s32.totalorder %s13, 0
    %p117 = por %p115, %p116
    %p118 = scmp.ne.s32.totalorder %s110, %s112
    %p119 = scmp.eq.s32.totalorder %s18, 1
    %p120 = por %p118, %p119
    %p121 = scmp.ne.s32.totalorder %s112, %s113
    %p122 = scmp.eq.s32.totalorder %s18, 0
    %p123 = por %p121, %p122
    %p124 = scmp.ne.s32.totalorder %s112, %s113
    %p125 = scmp.eq.s32.totalorder %s19, 1
    %p126 = por %p124, %p125
    %p128 = scmp.ne.s32.totalorder %s113, %s127
    %p129 = scmp.eq.s32.totalorder %s19, 0
    %p130 = por %p128, %p129
    %s132 = sadd.s32 %s131, 1
    %p135 = scmp.eq.s32.totalorder %s13, 1
    %p136 = scmp.ne.s32.totalorder %s131, %s133
    %p137 = scmp.eq.s32.totalorder %s13, 0
    %p138 = por %p136, %p137
    %p139 = scmp.ne.s32.totalorder %s131, %s133
    %p140 = scmp.eq.s32.totalorder %s18, 1
    %p141 = por %p139, %p140
    %p142 = scmp.ne.s32.totalorder %s133, %s134
    %p143 = scmp.eq.s32.totalorder %s18, 0
    %p144 = por %p142, %p143
    %p145 = scmp.ne.s32.totalorder %s133, %s134
    %p146 = scmp.eq.s32.totalorder %s19, 1
    %p147 = por %p145, %p146
    %p149 = scmp.ne.s32.totalorder %s134, %s148
    %p150 = scmp.eq.s32.totalorder %s19, 0
    %p151 = por %p149, %p150
    %s153 = sadd.s32 %s152, 1
    %p156 = scmp.eq.s32.totalorder %s13, 1
    %p157 = scmp.ne.s32.totalorder %s152, %s154
    %p158 = scmp.eq.s32.totalorder %s13, 0
    %p159 = por %p157, %p158
    %p160 = scmp.ne.s32.totalorder %s152, %s154
    %p161 = scmp.eq.s32.totalorder %s18, 1
    %p162 = por %p160, %p161
    %p163 = scmp.ne.s32.totalorder %s154, %s155
    %p164 = scmp.eq.s32.totalorder %s18, 0
    %p165 = por %p163, %p164
    %p166 = scmp.ne.s32.totalorder %s154, %s155
    %p167 = scmp.eq.s32.totalorder %s19, 1
    %p168 = por %p166, %p167
    %p170 = scmp.ne.s32.totalorder %s155, %s169
    %p171 = scmp.eq.s32.totalorder %s19, 0
    %p172 = por %p170, %p171
    %s173 = ssub.s32 %s13, %s20
    %p174 = scmp.eq.s32.totalorder %s173, 0
    %s176 = sadd.s32 %s175, 1
    %s177 = scalar_select %p174, %s175, %s176
    %p180 = pneg %p174
    %p181 = scmp.eq.s32.totalorder %s13, 1
    %p182 = por %p180, %p181
    %p183 = scmp.ne.s32.totalorder %s175, %s178
    %p184 = scmp.eq.s32.totalorder %s13, 0
    %p185 = por %p183, %p184
    %p186 = scmp.ne.s32.totalorder %s175, %s178
    %p187 = scmp.eq.s32.totalorder %s18, 1
    %p188 = por %p186, %p187
    %p189 = scmp.ne.s32.totalorder %s178, %s179
    %p190 = scmp.eq.s32.totalorder %s18, 0
    %p191 = por %p189, %p190
    %p192 = scmp.ne.s32.totalorder %s178, %s179
    %p193 = scmp.eq.s32.totalorder %s19, 1
    %p194 = por %p192, %p193
    %p196 = scmp.ne.s32.totalorder %s179, %s195
    %p197 = scmp.eq.s32.totalorder %s19, 0
    %p198 = por %p196, %p197
    %p199 = scmp.le.s32.totalorder 1, %s13
    %p200 = scmp.lt.s32.totalorder %s13, 3
    %p201 = pnand %p199, %p200
    %p202 = pneg %p201
    // Predicated region
    $region9: #{stereonet_forward.15} parent=5 // pred_check
      _
    $region10: #{stereonet_forward.15} parent=5 // pred_check_branch
      %204 = sbr.rel (%p201) target = $region12
    $region11: #{stereonet_forward.15} parent=5 // pred_region
      %s205 = ssub.s32 %s13, 1
      // Predicated region
      $region13: #{stereonet_forward.15} parent=11 // pred_check
        %p206 = pneg %p60
      $region14: #{stereonet_forward.15} parent=11 // pred_check_branch
        %208 = sbr.rel (%p206) target = $region16
      $region15: #{stereonet_forward.15} parent=11 // pred_region
        _
      $region16: #{stereonet_forward.15} parent=11 // pred_fallthru
        _
      // Predicated region
      $region17: #{stereonet_forward.15} parent=11 // pred_check
        %p209 = pneg %p81
      $region18: #{stereonet_forward.15} parent=11 // pred_check_branch
        %211 = sbr.rel (%p209) target = $region20
      $region19: #{stereonet_forward.15} parent=11 // pred_region
        _
      $region20: #{stereonet_forward.15} parent=11 // pred_fallthru
        _
      // Predicated region
      $region21: #{stereonet_forward.15} parent=11 // pred_check
        %p212 = pneg %p102
      $region22: #{stereonet_forward.15} parent=11 // pred_check_branch
        %214 = sbr.rel (%p212) target = $region24
      $region23: #{stereonet_forward.15} parent=11 // pred_region
        _
      $region24: #{stereonet_forward.15} parent=11 // pred_fallthru
        _
      // Predicated region
      $region25: #{stereonet_forward.15} parent=11 // pred_check
        %p215 = pneg %p123
      $region26: #{stereonet_forward.15} parent=11 // pred_check_branch
        %217 = sbr.rel (%p215) target = $region28
      $region27: #{stereonet_forward.15} parent=11 // pred_region
        _
      $region28: #{stereonet_forward.15} parent=11 // pred_fallthru
        _
      // Predicated region
      $region29: #{stereonet_forward.15} parent=11 // pred_check
        %p218 = pneg %p144
      $region30: #{stereonet_forward.15} parent=11 // pred_check_branch
        %220 = sbr.rel (%p218) target = $region32
      $region31: #{stereonet_forward.15} parent=11 // pred_region
        _
      $region32: #{stereonet_forward.15} parent=11 // pred_fallthru
        _
      // Predicated region
      $region33: #{stereonet_forward.15} parent=11 // pred_check
        %p221 = pneg %p165
      $region34: #{stereonet_forward.15} parent=11 // pred_check_branch
        %223 = sbr.rel (%p221) target = $region36
      $region35: #{stereonet_forward.15} parent=11 // pred_region
        _
      $region36: #{stereonet_forward.15} parent=11 // pred_fallthru
        _
    $region12: #{stereonet_forward.15} parent=5 // pred_fallthru
      _
    %p224 = scmp.lt.s32.totalorder %s13, 2
    // Predicated region
    $region37: #{stereonet_forward.15} parent=5 // pred_check
      %p225 = pneg %p224
    $region38: #{stereonet_forward.15} parent=5 // pred_check_branch
      %227 = sbr.rel (%p225) target = $region40
    $region39: #{stereonet_forward.15} parent=5 // pred_region
      // Predicated region
      $region41: #{stereonet_forward.15} parent=39 // pred_check
        %p228 = pneg %p33
      $region42: #{stereonet_forward.15} parent=39 // pred_check_branch
        %230 = sbr.rel (%p228) target = $region44
      $region43: #{stereonet_forward.15} parent=39 // pred_region
        %p231 = scmp.lt.s32.totalorder %s13, 1
        %s232 = scalar_select %p231, %s13, 1
        %s233 = smul.addr %s232, 54
        %s234 = smul.addr %s233, 4
        %s235 = scalar_lea.vmem %s0, %s234
      $region44: #{stereonet_forward.15} parent=39 // pred_fallthru
        _
    $region40: #{stereonet_forward.15} parent=5 // pred_fallthru
      _
    %p236 = scmp.le.s32.totalorder 1, %s13
    %p237 = scmp.lt.s32.totalorder %s13, 3
    %p238 = pnand %p236, %p237
    %p239 = pneg %p238
    // Predicated region
    $region45: #{stereonet_forward.15} parent=5 // pred_check
      _
    $region46: #{stereonet_forward.15} parent=5 // pred_check_branch
      %241 = sbr.rel (%p238) target = $region48
    $region47: #{stereonet_forward.15} parent=5 // pred_region
      %s242 = ssub.s32 %s13, 1
      %p243 = scmp.lt.s32.totalorder %s18, 1
      %s244 = scalar_select %p243, %s18, 1
      %s245 = smul.addr %s244, 54
      %s246 = smul.addr %s245, 4
      %s247 = scalar_lea.vmem %s0, %s246
      %p248 = pneg %p39
      %p249 = pneg %p36
      %p250 = pneg %p60
      %p251 = pneg %p57
      %p252 = pneg %p81
      %p253 = pneg %p78
      %p254 = pneg %p102
      %p255 = pneg %p99
      %p256 = pneg %p123
      %p257 = pneg %p120
      %p258 = pneg %p144
      %p259 = pneg %p141
      %p260 = pneg %p165
      %p261 = pneg %p162
      %p262 = pneg %p191
      %p263 = pneg %p188
      %p264 = scmp.lt.s32.totalorder %s18, 1
      %s265 = scalar_select %p264, %s18, 1
      %s266 = smul.addr %s265, 4
      %s267 = smul.addr %s266, 8
      %s268 = scalar_lea.vmem %s7, %s267
      %p269 = scmp.lt.s32.totalorder %s18, 1
      %s270 = scalar_select %p269, %s18, 1
      %s271 = smul.addr %s270, 54
      %s272 = smul.addr %s271, 4
      %s273 = scalar_lea.vmem %s0, %s272
      %p274 = scmp.lt.s32.totalorder %s18, 1
      %s275 = scalar_select %p274, %s18, 1
      %s276 = smul.addr %s275, 4
      %s277 = smul.addr %s276, 8
      %s278 = scalar_lea.vmem %s7, %s277
      %v280 = vld [vmem:[%s1] sm:$0xff]
      %v281 = vld [vmem:[%s1 + $0x8] sm:$0xff]
      %v282 = vld [vmem:[%s1 + $0x10] sm:$0xff]
      %v283 = vld [vmem:[%s1 + $0x18] sm:$0xff]
      %v284 = vld [vmem:[%s1 + $0x20] sm:$0xff]
      %v285 = vld [vmem:[%s1 + $0x28] sm:$0xff]
      %v286 = vld [vmem:[%s1 + $0x30] sm:$0xff]
      %v287 = vld [vmem:[%s1 + $0x38] sm:$0xff]
      %v288 = vld [vmem:[%s273] sm:$0xf]
      %v289 = vld [vmem:[%s273 + $0x4] sm:$0xf]
      %v290 = vld [vmem:[%s273 + $0x8] sm:$0xf]
      %v291 = vld [vmem:[%s273 + $0xc] sm:$0xf]
      %v292 = vld [vmem:[%s273 + $0x10] sm:$0xf]
      %v293 = vld [vmem:[%s273 + $0x14] sm:$0xf]
      %v294 = vld [vmem:[%s273 + $0x18] sm:$0xf]
      %v295 = vld [vmem:[%s273 + $0x1c] sm:$0xf]
      %v296 = vld [vmem:[%s273 + $0x20] sm:$0xf]
      %v297 = vld [vmem:[%s273 + $0x24] sm:$0xf]
      %v298 = vld [vmem:[%s273 + $0x28] sm:$0xf]
      %v299 = vld [vmem:[%s273 + $0x2c] sm:$0xf]
      %v300 = vld [vmem:[%s273 + $0x30] sm:$0xf]
      %v301 = vld [vmem:[%s273 + $0x34] sm:$0xf]
      %v302 = vld [vmem:[%s273 + $0x38] sm:$0xf]
      %v303 = vld [vmem:[%s273 + $0x3c] sm:$0xf]
      %v304 = vld [vmem:[%s273 + $0x40] sm:$0xf]
      %v305 = vld [vmem:[%s273 + $0x44] sm:$0xf]
      %v306 = vld [vmem:[%s273 + $0x48] sm:$0xf]
      %v307 = vld [vmem:[%s273 + $0x4c] sm:$0xf]
      %v308 = vld [vmem:[%s273 + $0x50] sm:$0xf]
      %v309 = vld [vmem:[%s273 + $0x54] sm:$0xf]
      %v310 = vld [vmem:[%s273 + $0x58] sm:$0xf]
      %v311 = vld [vmem:[%s273 + $0x5c] sm:$0xf]
      %v312 = vld [vmem:[%s273 + $0x60] sm:$0xf]
      %v313 = vld [vmem:[%s273 + $0x64] sm:$0xf]
      %v314 = vld [vmem:[%s273 + $0x68] sm:$0xf]
      %v315 = vld [vmem:[%s273 + $0x6c] sm:$0xf]
      %v316 = vld [vmem:[%s273 + $0x70] sm:$0xf]
      %v317 = vld [vmem:[%s273 + $0x74] sm:$0xf]
      %v318 = vld [vmem:[%s273 + $0x78] sm:$0xf]
      %v319 = vld [vmem:[%s273 + $0x7c] sm:$0xf]
      %v320 = vld [vmem:[%s273 + $0x80] sm:$0xf]
      %v321 = vld [vmem:[%s273 + $0x84] sm:$0xf]
      %v322 = vld [vmem:[%s273 + $0x88] sm:$0xf]
      %v323 = vld [vmem:[%s273 + $0x8c] sm:$0xf]
      %v324 = vld [vmem:[%s273 + $0x90] sm:$0xf]
      %v325 = vld [vmem:[%s273 + $0x94] sm:$0xf]
      %v326 = vld [vmem:[%s273 + $0x98] sm:$0xf]
      %v327 = vld [vmem:[%s273 + $0x9c] sm:$0xf]
      %v328 = vld [vmem:[%s273 + $0xa0] sm:$0xf]
      %v329 = vld [vmem:[%s273 + $0xa4] sm:$0xf]
      %v330 = vld [vmem:[%s273 + $0xa8] sm:$0xf]
      %v331 = vld [vmem:[%s273 + $0xac] sm:$0xf]
      %v332 = vld [vmem:[%s273 + $0xb0] sm:$0xf]
      %v333 = vld [vmem:[%s273 + $0xb4] sm:$0xf]
      %v334 = vld [vmem:[%s273 + $0xb8] sm:$0xf]
      %v335 = vld [vmem:[%s273 + $0xbc] sm:$0xf]
      %v336 = vld [vmem:[%s273 + $0xc0] sm:$0xf]
      %v337 = vld [vmem:[%s273 + $0xc4] sm:$0xf]
      %v338 = vld [vmem:[%s273 + $0xc8] sm:$0xf]
      %v339 = vld [vmem:[%s273 + $0xcc] sm:$0xf]
      %v340 = vld [vmem:[%s273 + $0xd0] sm:$0xf]
      %v341 = vld [vmem:[%s273 + $0xd4] sm:$0xf]
      %v342 = vld [vmem:[%s2] sm:$0xff]
      %v343 = vld [vmem:[%s2 + $0x8] sm:$0xff]
      %v344 = vld [vmem:[%s2 + $0x10] sm:$0xff]
      %v345 = vld [vmem:[%s2 + $0x18] sm:$0xff]
      %347 = vset.pattern.permute.xlu0 0
      %348 = vperm.xlu0 %347, %v342
      %v349 = vpop.permute.xlu0 %348
      %352 = vset.pattern.permute.xlu0 0
      %353 = vperm.xlu0 %352, %v343
      %v354 = vpop.permute.xlu0 %353
      %357 = vset.pattern.permute.xlu0 0
      %358 = vperm.xlu0 %357, %v344
      %v359 = vpop.permute.xlu0 %358
      %362 = vset.pattern.permute.xlu0 0
      %363 = vperm.xlu0 %362, %v345
      %v364 = vpop.permute.xlu0 %363
      %v374 = vunpack.c.l.b16 %v280
      %v375 = vunpack.c.h.b16 %v280
      %v376 = vunpack.c.l.b16 %v281
      %v377 = vunpack.c.h.b16 %v281
      %v378 = vunpack.c.l.b16 %v282
      %v379 = vunpack.c.h.b16 %v282
      %v380 = vunpack.c.l.b16 %v283
      %v381 = vunpack.c.h.b16 %v283
      %v382 = vunpack.c.l.b16 %v284
      %v383 = vunpack.c.h.b16 %v284
      %v384 = vunpack.c.l.b16 %v285
      %v385 = vunpack.c.h.b16 %v285
      %v386 = vunpack.c.l.b16 %v286
      %v387 = vunpack.c.h.b16 %v286
      %v388 = vunpack.c.l.b16 %v287
      %v389 = vunpack.c.h.b16 %v287
      %v390 = vpack.c.b16 %v378, %v374
      %v391 = vpack.c.b16 %v379, %v375
      %v392 = vpack.c.b16 %v380, %v376
      %v393 = vpack.c.b16 %v381, %v377
      %v394 = vpack.c.b16 %v386, %v382
      %v395 = vpack.c.b16 %v387, %v383
      %v396 = vpack.c.b16 %v388, %v384
      %v397 = vpack.c.b16 %v389, %v385
      %v458 = vunpack.c.l.b16 %v288
      %v459 = vunpack.c.l.b16 %v289
      %v460 = vunpack.c.l.b16 %v290
      %v461 = vunpack.c.l.b16 %v291
      %v462 = vunpack.c.l.b16 %v292
      %v463 = vunpack.c.l.b16 %v293
      %v464 = vunpack.c.l.b16 %v294
      %v465 = vunpack.c.l.b16 %v295
      %v466 = vunpack.c.l.b16 %v296
      %v467 = vunpack.c.l.b16 %v297
      %v468 = vunpack.c.l.b16 %v298
      %v469 = vunpack.c.l.b16 %v299
      %v470 = vunpack.c.l.b16 %v300
      %v471 = vunpack.c.l.b16 %v301
      %v472 = vunpack.c.l.b16 %v302
      %v473 = vunpack.c.l.b16 %v303
      %v474 = vunpack.c.l.b16 %v304
      %v475 = vunpack.c.l.b16 %v305
      %v476 = vunpack.c.l.b16 %v306
      %v477 = vunpack.c.l.b16 %v307
      %v478 = vunpack.c.l.b16 %v308
      %v479 = vunpack.c.l.b16 %v309
      %v480 = vunpack.c.l.b16 %v310
      %v481 = vunpack.c.l.b16 %v311
      %v482 = vunpack.c.l.b16 %v312
      %v483 = vunpack.c.l.b16 %v313
      %v484 = vunpack.c.l.b16 %v314
      %v485 = vunpack.c.l.b16 %v315
      %v486 = vunpack.c.l.b16 %v316
      %v487 = vunpack.c.l.b16 %v317
      %v488 = vunpack.c.l.b16 %v318
      %v489 = vunpack.c.l.b16 %v319
      %v490 = vunpack.c.l.b16 %v320
      %v491 = vunpack.c.l.b16 %v321
      %v492 = vunpack.c.l.b16 %v322
      %v493 = vunpack.c.l.b16 %v323
      %v494 = vunpack.c.l.b16 %v324
      %v495 = vunpack.c.l.b16 %v325
      %v496 = vunpack.c.l.b16 %v326
      %v497 = vunpack.c.l.b16 %v327
      %v498 = vunpack.c.l.b16 %v328
      %v499 = vunpack.c.l.b16 %v329
      %v500 = vunpack.c.l.b16 %v330
      %v501 = vunpack.c.l.b16 %v331
      %v502 = vunpack.c.l.b16 %v332
      %v503 = vunpack.c.l.b16 %v333
      %v504 = vunpack.c.l.b16 %v334
      %v505 = vunpack.c.l.b16 %v335
      %v506 = vunpack.c.l.b16 %v336
      %v507 = vunpack.c.l.b16 %v337
      %v508 = vunpack.c.l.b16 %v338
      %v509 = vunpack.c.l.b16 %v339
      %v510 = vunpack.c.l.b16 %v340
      %v511 = vunpack.c.l.b16 %v341
      %v512 = vpack.c.b16 %v459, %v458
      %v513 = vpack.c.b16 %v461, %v460
      %v514 = vpack.c.b16 %v463, %v462
      %v515 = vpack.c.b16 %v465, %v464
      %v516 = vpack.c.b16 %v467, %v466
      %v517 = vpack.c.b16 %v469, %v468
      %v518 = vpack.c.b16 %v471, %v470
      %v519 = vpack.c.b16 %v473, %v472
      %v520 = vpack.c.b16 %v475, %v474
      %v521 = vpack.c.b16 %v477, %v476
      %v522 = vpack.c.b16 %v479, %v478
      %v523 = vpack.c.b16 %v481, %v480
      %v524 = vpack.c.b16 %v483, %v482
      %v525 = vpack.c.b16 %v485, %v484
      %v526 = vpack.c.b16 %v487, %v486
      %v527 = vpack.c.b16 %v489, %v488
      %v528 = vpack.c.b16 %v491, %v490
      %v529 = vpack.c.b16 %v493, %v492
      %v530 = vpack.c.b16 %v495, %v494
      %v531 = vpack.c.b16 %v497, %v496
      %v532 = vpack.c.b16 %v499, %v498
      %v533 = vpack.c.b16 %v501, %v500
      %v534 = vpack.c.b16 %v503, %v502
      %v535 = vpack.c.b16 %v505, %v504
      %v536 = vpack.c.b16 %v507, %v506
      %v537 = vpack.c.b16 %v509, %v508
      %v538 = vpack.c.b16 %v511, %v510
      %vm566 = vcmask 392192
      %v568 = vsel %vm566, %v393, 0
      %v571 = vsel %vm566, %v397, 0
      %573 = vmatprep.subr.bf16.mxu0 0
      %574 = vmatpush1.bf16.msra.mxu0 %v512
      %575 = vmatprep.subr.bf16.mxu0 0
      %576 = vmatpush1.bf16.msra.mxu0 %v513
      %577 = vmatprep.subr.bf16.mxu0 0
      %578 = vmatpush1.bf16.msra.mxu0 %v514
      %579 = vmatprep.subr.bf16.mxu0 0
      %580 = vmatpush1.bf16.msra.mxu0 %v515
      %581 = vmatprep.subr.bf16.mxu0 0
      %582 = vmatpush1.bf16.msra.mxu0 %v516
      %583 = vmatprep.subr.bf16.mxu0 0
      %584 = vmatpush1.bf16.msra.mxu0 %v517
      %585 = vmatprep.subr.bf16.mxu0 0
      %586 = vmatpush1.bf16.msra.mxu0 %v518
      %587 = vmatprep.subr.bf16.mxu0 0
      %588 = vmatpush1.bf16.msra.mxu0 %v519
      %589 = vmatprep.subr.bf16.mxu0 0
      %590 = vmatpush1.bf16.msra.mxu0 %v520
      %591 = vmatprep.subr.bf16.mxu0 0
      %592 = vmatpush1.bf16.msra.mxu0 %v521
      %593 = vmatprep.subr.bf16.mxu0 0
      %594 = vmatpush1.bf16.msra.mxu0 %v522
      %595 = vmatprep.subr.bf16.mxu0 0
      %596 = vmatpush1.bf16.msra.mxu0 %v523
      %597 = vmatprep.subr.bf16.mxu0 0
      %598 = vmatpush1.bf16.msra.mxu0 %v524
      %599 = vmatprep.subr.bf16.mxu0 0
      %600 = vmatpush1.bf16.msra.mxu0 %v525
      %601 = vmatprep.subr.bf16.mxu0 0
      %602 = vmatpush1.bf16.msra.mxu0 %v526
      %603 = vmatprep.subr.bf16.mxu0 0
      %604 = vmatpush1.bf16.msra.mxu0 %v527
      %605 = vmatprep.mubr.bf16.mxu0 %v391
      %606 = vmatmul.mubr.bf16.gmra.mrb[0].mxu0 %v390
      %v607 = vpop.f32.mrb[0].mxu0
      %v608 = vadd.f32 %v349, %v607
      %v609 = vpop.f32.mrb[0].mxu0
      %v610 = vpop.f32.mrb[0].mxu0
      %v611 = vadd.f32 %v354, %v610
      %v612 = vpop.f32.mrb[0].mxu0
      %613 = vmatprep.mubr.bf16.mxu0 %v395
      %614 = vmatmul.mubr.bf16.gmra.mrb[0].mxu0 %v394
      %v615 = vpop.f32.mrb[0].mxu0
      %v616 = vadd.f32 %v359, %v615
      %v617 = vpop.f32.mrb[0].mxu0
      %v618 = vpop.f32.mrb[0].mxu0
      %v619 = vadd.f32 %v364, %v618
      %v620 = vpop.f32.mrb[0].mxu0
      %621 = vdwg.mxu0
      %622 = vmatprep.subr.bf16.mxu0 0
      %623 = vmatpush1.bf16.msra.mxu0 %v528
      %624 = vmatprep.subr.bf16.mxu0 0
      %625 = vmatpush1.bf16.msra.mxu0 %v529
      %626 = vmatprep.subr.bf16.mxu0 0
      %627 = vmatpush1.bf16.msra.mxu0 %v530
      %628 = vmatprep.subr.bf16.mxu0 0
      %629 = vmatpush1.bf16.msra.mxu0 %v531
      %630 = vmatprep.subr.bf16.mxu0 0
      %631 = vmatpush1.bf16.msra.mxu0 %v532
      %632 = vmatprep.subr.bf16.mxu0 0
      %633 = vmatpush1.bf16.msra.mxu0 %v533
      %634 = vmatprep.subr.bf16.mxu0 0
      %635 = vmatpush1.bf16.msra.mxu0 %v534
      %636 = vmatprep.subr.bf16.mxu0 0
      %637 = vmatpush1.bf16.msra.mxu0 %v535
      %638 = vmatprep.subr.bf16.mxu0 0
      %639 = vmatpush1.bf16.msra.mxu0 %v536
      %640 = vmatprep.subr.bf16.mxu0 0
      %641 = vmatpush1.bf16.msra.mxu0 %v537
      %642 = vmatprep.subr.bf16.mxu0 0
      %643 = vmatpush1.bf16.msra.mxu0 %v538
      %644 = vmatprep.subr.bf16.mxu0 0
      %645 = vmatpush1.bf16.msra.mxu0 0
      %646 = vmatprep.subr.bf16.mxu0 0
      %647 = vmatpush1.bf16.msra.mxu0 0
      %648 = vmatprep.subr.bf16.mxu0 0
      %649 = vmatpush1.bf16.msra.mxu0 0
      %650 = vmatprep.subr.bf16.mxu0 0
      %651 = vmatpush1.bf16.msra.mxu0 0
      %652 = vmatprep.subr.bf16.mxu0 0
      %653 = vmatpush1.bf16.msra.mxu0 0
      %654 = vmatprep.mubr.bf16.mxu0 %v568
      %655 = vmatmul.mubr.bf16.gmra.mrb[0].mxu0 %v392
      %v656 = vpop.f32.mrb[0].mxu0
      %v657 = vadd.f32 %v608, %v656
      %v658 = vpop.f32.mrb[0].mxu0
      %v659 = vpop.f32.mrb[0].mxu0
      %v660 = vadd.f32 %v611, %v659
      %v661 = vpop.f32.mrb[0].mxu0
      %662 = vmatprep.mubr.bf16.mxu0 %v571
      %663 = vmatmul.mubr.bf16.gmra.mrb[0].mxu0 %v396
      %v664 = vpop.f32.mrb[0].mxu0
      %v665 = vadd.f32 %v616, %v664
      %v666 = vpop.f32.mrb[0].mxu0
      %v667 = vpop.f32.mrb[0].mxu0
      %v668 = vadd.f32 %v619, %v667
      %v669 = vpop.f32.mrb[0].mxu0
      %670 = vdwg.mxu0
      %vm671 = vcmask 64512
      %v672 = vsel %vm671, %v657, 0.0
      %673 = vadd.xlane.f32.xlu0 %v672
      %v674 = vpop.xlane.xlu0 %673
      %v675 = vsel %vm671, %v660, 0.0
      %676 = vadd.xlane.f32.xlu0 %v675
      %v677 = vpop.xlane.xlu0 %676
      %v678 = vsel %vm671, %v665, 0.0
      %679 = vadd.xlane.f32.xlu0 %v678
      %v680 = vpop.xlane.xlu0 %679
      %v681 = vsel %vm671, %v668, 0.0
      %682 = vadd.xlane.f32.xlu0 %v681
      %v683 = vpop.xlane.xlu0 %682
      %v684 = vmul.f32 %v657, %v657
      %v685 = vmul.f32 %v660, %v660
      %v686 = vmul.f32 %v665, %v665
      %v687 = vmul.f32 %v668, %v668
      %v688 = vsel %vm671, %v684, 0.0
      %689 = vadd.xlane.f32.xlu0 %v688
      %v690 = vpop.xlane.xlu0 %689
      %v691 = vsel %vm671, %v685, 0.0
      %692 = vadd.xlane.f32.xlu0 %v691
      %v693 = vpop.xlane.xlu0 %692
      %v694 = vsel %vm671, %v686, 0.0
      %695 = vadd.xlane.f32.xlu0 %v694
      %v696 = vpop.xlane.xlu0 %695
      %v697 = vsel %vm671, %v687, 0.0
      %698 = vadd.xlane.f32.xlu0 %v697
      %v699 = vpop.xlane.xlu0 %698
      %v700 = vld [vmem:[%s5] sm:$0xff]
      %vm701 = vcmask 261120
      %v703 = vsel %vm701, %v700, 0
      %705 = vmatprep.subr.mxu0 0.0
      %706 = vmatpush1.msra.mxu0 %v674
      %707 = vmatprep.subr.mxu0 0.0
      %708 = vmatpush1.msra.mxu0 %v677
      %709 = vmatprep.subr.mxu0 0.0
      %710 = vmatpush1.msra.mxu0 %v680
      %711 = vmatprep.subr.mxu0 0.0
      %712 = vmatpush1.msra.mxu0 %v683
      %713 = vmatprep.subr.mxu0 0.0
      %714 = vmatpush1.msra.mxu0 0.0
      %715 = vmatprep.subr.mxu0 0.0
      %716 = vmatpush1.msra.mxu0 0.0
      %717 = vmatprep.subr.mxu0 0.0
      %718 = vmatpush1.msra.mxu0 0.0
      %719 = vmatprep.subr.mxu0 0.0
      %720 = vmatpush1.msra.mxu0 0.0
      %721 = vmatprep.subr.mxu0 0.0
      %722 = vmatpush1.msra.mxu0 0.0
      %723 = vmatprep.subr.mxu0 0.0
      %724 = vmatpush1.msra.mxu0 0.0
      %725 = vmatprep.subr.mxu0 0.0
      %726 = vmatpush1.msra.mxu0 0.0
      %727 = vmatprep.subr.mxu0 0.0
      %728 = vmatpush1.msra.mxu0 0.0
      %729 = vmatprep.subr.mxu0 0.0
      %730 = vmatpush1.msra.mxu0 0.0
      %731 = vmatprep.subr.mxu0 0.0
      %732 = vmatpush1.msra.mxu0 0.0
      %733 = vmatprep.subr.mxu0 0.0
      %734 = vmatpush1.msra.mxu0 0.0
      %735 = vmatprep.subr.mxu0 0.0
      %736 = vmatpush1.msra.mxu0 0.0
      %737 = vmatprep.subr.mxu0 0.0
      %738 = vmatpush1.msra.mxu0 0.0
      %739 = vmatprep.subr.mxu0 0.0
      %740 = vmatpush1.msra.mxu0 0.0
      %741 = vmatprep.subr.mxu0 0.0
      %742 = vmatpush1.msra.mxu0 0.0
      %743 = vmatprep.subr.mxu0 0.0
      %744 = vmatpush1.msra.mxu0 0.0
      %745 = vmatprep.subr.mxu0 0.0
      %746 = vmatpush1.msra.mxu0 0.0
      %747 = vmatprep.subr.mxu0 0.0
      %748 = vmatpush1.msra.mxu0 0.0
      %749 = vmatprep.subr.mxu0 0.0
      %750 = vmatpush1.msra.mxu0 0.0
      %751 = vmatprep.subr.mxu0 0.0
      %752 = vmatpush1.msra.mxu0 0.0
      %753 = vmatprep.subr.mxu0 0.0
      %754 = vmatpush1.msra.mxu0 0.0
      %755 = vmatprep.subr.mxu0 0.0
      %756 = vmatpush1.msra.mxu0 0.0
      %757 = vmatprep.subr.mxu0 0.0
      %758 = vmatpush1.msra.mxu0 0.0
      %759 = vmatprep.subr.mxu0 0.0
      %760 = vmatpush1.msra.mxu0 0.0
      %761 = vmatprep.subr.mxu0 0.0
      %762 = vmatpush1.msra.mxu0 0.0
      %763 = vmatprep.subr.mxu0 0.0
      %764 = vmatpush1.msra.mxu0 0.0
      %765 = vmatprep.subr.mxu0 0.0
      %766 = vmatpush1.msra.mxu0 0.0
      %767 = vmatprep.subr.mxu0 0.0
      %768 = vmatpush1.msra.mxu0 0.0
      %769 = vmatprep.mubr.f32.mxu0 0.0
      %770 = vmatmul.mubr.f32.gmra.mrb[0].mxu0 %v703
      %v771 = vpop.f32.mrb[0].mxu0
      %v772 = vadd.f32 0.0, %v771
      %v773 = vpop.f32.mrb[0].mxu0
      %774 = vdwg.mxu0
      %775 = vmatprep.subr.mxu0 0.0
      %776 = vmatpush1.msra.mxu0 %v690
      %777 = vmatprep.subr.mxu0 0.0
      %778 = vmatpush1.msra.mxu0 %v693
      %779 = vmatprep.subr.mxu0 0.0
      %780 = vmatpush1.msra.mxu0 %v696
      %781 = vmatprep.subr.mxu0 0.0
      %782 = vmatpush1.msra.mxu0 %v699
      %783 = vmatprep.subr.mxu0 0.0
      %784 = vmatpush1.msra.mxu0 0.0
      %785 = vmatprep.subr.mxu0 0.0
      %786 = vmatpush1.msra.mxu0 0.0
      %787 = vmatprep.subr.mxu0 0.0
      %788 = vmatpush1.msra.mxu0 0.0
      %789 = vmatprep.subr.mxu0 0.0
      %790 = vmatpush1.msra.mxu0 0.0
      %791 = vmatprep.subr.mxu0 0.0
      %792 = vmatpush1.msra.mxu0 0.0
      %793 = vmatprep.subr.mxu0 0.0
      %794 = vmatpush1.msra.mxu0 0.0
      %795 = vmatprep.subr.mxu0 0.0
      %796 = vmatpush1.msra.mxu0 0.0
      %797 = vmatprep.subr.mxu0 0.0
      %798 = vmatpush1.msra.mxu0 0.0
      %799 = vmatprep.subr.mxu0 0.0
      %800 = vmatpush1.msra.mxu0 0.0
      %801 = vmatprep.subr.mxu0 0.0
      %802 = vmatpush1.msra.mxu0 0.0
      %803 = vmatprep.subr.mxu0 0.0
      %804 = vmatpush1.msra.mxu0 0.0
      %805 = vmatprep.subr.mxu0 0.0
      %806 = vmatpush1.msra.mxu0 0.0
      %807 = vmatprep.subr.mxu0 0.0
      %808 = vmatpush1.msra.mxu0 0.0
      %809 = vmatprep.subr.mxu0 0.0
      %810 = vmatpush1.msra.mxu0 0.0
      %811 = vmatprep.subr.mxu0 0.0
      %812 = vmatpush1.msra.mxu0 0.0
      %813 = vmatprep.subr.mxu0 0.0
      %814 = vmatpush1.msra.mxu0 0.0
      %815 = vmatprep.subr.mxu0 0.0
      %816 = vmatpush1.msra.mxu0 0.0
      %817 = vmatprep.subr.mxu0 0.0
      %818 = vmatpush1.msra.mxu0 0.0
      %819 = vmatprep.subr.mxu0 0.0
      %820 = vmatpush1.msra.mxu0 0.0
      %821 = vmatprep.subr.mxu0 0.0
      %822 = vmatpush1.msra.mxu0 0.0
      %823 = vmatprep.subr.mxu0 0.0
      %824 = vmatpush1.msra.mxu0 0.0
      %825 = vmatprep.subr.mxu0 0.0
      %826 = vmatpush1.msra.mxu0 0.0
      %827 = vmatprep.subr.mxu0 0.0
      %828 = vmatpush1.msra.mxu0 0.0
      %829 = vmatprep.subr.mxu0 0.0
      %830 = vmatpush1.msra.mxu0 0.0
      %831 = vmatprep.subr.mxu0 0.0
      %832 = vmatpush1.msra.mxu0 0.0
      %833 = vmatprep.subr.mxu0 0.0
      %834 = vmatpush1.msra.mxu0 0.0
      %835 = vmatprep.subr.mxu0 0.0
      %836 = vmatpush1.msra.mxu0 0.0
      %837 = vmatprep.subr.mxu0 0.0
      %838 = vmatpush1.msra.mxu0 0.0
      %839 = vmatprep.mubr.f32.mxu0 0.0
      %840 = vmatmul.mubr.f32.gmra.mrb[0].mxu0 %v703
      %v841 = vpop.f32.mrb[0].mxu0
      %v842 = vadd.f32 0.0, %v841
      %v843 = vpop.f32.mrb[0].mxu0
      %844 = vdwg.mxu0
      %v845 = vld [vmem:[%s6] sm:$0xff]
      %v846 = vld [vmem:[%s6 + $0x8] sm:$0xff]
      %v847 = vld [vmem:[%s6 + $0x10] sm:$0xff]
      %v848 = vld [vmem:[%s6 + $0x18] sm:$0xff]
      %v850 = vsel %vm671, %v845, 0
      %v853 = vsel %vm671, %v846, 0
      %v856 = vsel %vm671, %v847, 0
      %v859 = vsel %vm671, %v848, 0
      %861 = vmatprep.subr.mxu0 0.0
      %862 = vmatpush1.msra.mxu0 %v772
      %863 = vmatprep.subr.mxu0 0.0
      %864 = vmatpush1.msra.mxu0 0.0
      %865 = vmatprep.subr.mxu0 0.0
      %866 = vmatpush1.msra.mxu0 0.0
      %867 = vmatprep.subr.mxu0 0.0
      %868 = vmatpush1.msra.mxu0 0.0
      %869 = vmatprep.subr.mxu0 0.0
      %870 = vmatpush1.msra.mxu0 0.0
      %871 = vmatprep.subr.mxu0 0.0
      %872 = vmatpush1.msra.mxu0 0.0
      %873 = vmatprep.subr.mxu0 0.0
      %874 = vmatpush1.msra.mxu0 0.0
      %875 = vmatprep.subr.mxu0 0.0
      %876 = vmatpush1.msra.mxu0 0.0
      %877 = vmatprep.subr.mxu0 0.0
      %878 = vmatpush1.msra.mxu0 0.0
      %879 = vmatprep.subr.mxu0 0.0
      %880 = vmatpush1.msra.mxu0 0.0
      %881 = vmatprep.subr.mxu0 0.0
      %882 = vmatpush1.msra.mxu0 0.0
      %883 = vmatprep.subr.mxu0 0.0
      %884 = vmatpush1.msra.mxu0 0.0
      %885 = vmatprep.subr.mxu0 0.0
      %886 = vmatpush1.msra.mxu0 0.0
      %887 = vmatprep.subr.mxu0 0.0
      %888 = vmatpush1.msra.mxu0 0.0
      %889 = vmatprep.subr.mxu0 0.0
      %890 = vmatpush1.msra.mxu0 0.0
      %891 = vmatprep.subr.mxu0 0.0
      %892 = vmatpush1.msra.mxu0 0.0
      %893 = vmatprep.subr.mxu0 0.0
      %894 = vmatpush1.msra.mxu0 0.0
      %895 = vmatprep.subr.mxu0 0.0
      %896 = vmatpush1.msra.mxu0 0.0
      %897 = vmatprep.subr.mxu0 0.0
      %898 = vmatpush1.msra.mxu0 0.0
      %899 = vmatprep.subr.mxu0 0.0
      %900 = vmatpush1.msra.mxu0 0.0
      %901 = vmatprep.subr.mxu0 0.0
      %902 = vmatpush1.msra.mxu0 0.0
      %903 = vmatprep.subr.mxu0 0.0
      %904 = vmatpush1.msra.mxu0 0.0
      %905 = vmatprep.subr.mxu0 0.0
      %906 = vmatpush1.msra.mxu0 0.0
      %907 = vmatprep.subr.mxu0 0.0
      %908 = vmatpush1.msra.mxu0 0.0
      %909 = vmatprep.subr.mxu0 0.0
      %910 = vmatpush1.msra.mxu0 0.0
      %911 = vmatprep.subr.mxu0 0.0
      %912 = vmatpush1.msra.mxu0 0.0
      %913 = vmatprep.subr.mxu0 0.0
      %914 = vmatpush1.msra.mxu0 0.0
      %915 = vmatprep.subr.mxu0 0.0
      %916 = vmatpush1.msra.mxu0 0.0
      %917 = vmatprep.subr.mxu0 0.0
      %918 = vmatpush1.msra.mxu0 0.0
      %919 = vmatprep.subr.mxu0 0.0
      %920 = vmatpush1.msra.mxu0 0.0
      %921 = vmatprep.subr.mxu0 0.0
      %922 = vmatpush1.msra.mxu0 0.0
      %923 = vmatprep.subr.mxu0 0.0
      %924 = vmatpush1.msra.mxu0 0.0
      %925 = vmatprep.mubr.f32.mxu0 0.0
      %926 = vmatmul.mubr.f32.gmra.mrb[0].mxu0 %v850
      %v927 = vpop.f32.mrb[0].mxu0
      %v928 = vadd.f32 0.0, %v927
      %v929 = vpop.f32.mrb[0].mxu0
      %930 = vmatprep.mubr.f32.mxu0 0.0
      %931 = vmatmul.mubr.f32.gmra.mrb[0].mxu0 %v853
      %v932 = vpop.f32.mrb[0].mxu0
      %v933 = vadd.f32 0.0, %v932
      %v934 = vpop.f32.mrb[0].mxu0
      %935 = vmatprep.mubr.f32.mxu0 0.0
      %936 = vmatmul.mubr.f32.gmra.mrb[0].mxu0 %v856
      %v937 = vpop.f32.mrb[0].mxu0
      %v938 = vadd.f32 0.0, %v937
      %v939 = vpop.f32.mrb[0].mxu0
      %940 = vmatprep.mubr.f32.mxu0 0.0
      %941 = vmatmul.mubr.f32.gmra.mrb[0].mxu0 %v859
      %v942 = vpop.f32.mrb[0].mxu0
      %v943 = vadd.f32 0.0, %v942
      %v944 = vpop.f32.mrb[0].mxu0
      %945 = vdwg.mxu0
      %946 = vmatprep.subr.mxu0 0.0
      %947 = vmatpush1.msra.mxu0 %v842
      %948 = vmatprep.subr.mxu0 0.0
      %949 = vmatpush1.msra.mxu0 0.0
      %950 = vmatprep.subr.mxu0 0.0
      %951 = vmatpush1.msra.mxu0 0.0
      %952 = vmatprep.subr.mxu0 0.0
      %953 = vmatpush1.msra.mxu0 0.0
      %954 = vmatprep.subr.mxu0 0.0
      %955 = vmatpush1.msra.mxu0 0.0
      %956 = vmatprep.subr.mxu0 0.0
      %957 = vmatpush1.msra.mxu0 0.0
      %958 = vmatprep.subr.mxu0 0.0
      %959 = vmatpush1.msra.mxu0 0.0
      %960 = vmatprep.subr.mxu0 0.0
      %961 = vmatpush1.msra.mxu0 0.0
      %962 = vmatprep.subr.mxu0 0.0
      %963 = vmatpush1.msra.mxu0 0.0
      %964 = vmatprep.subr.mxu0 0.0
      %965 = vmatpush1.msra.mxu0 0.0
      %966 = vmatprep.subr.mxu0 0.0
      %967 = vmatpush1.msra.mxu0 0.0
      %968 = vmatprep.subr.mxu0 0.0
      %969 = vmatpush1.msra.mxu0 0.0
      %970 = vmatprep.subr.mxu0 0.0
      %971 = vmatpush1.msra.mxu0 0.0
      %972 = vmatprep.subr.mxu0 0.0
      %973 = vmatpush1.msra.mxu0 0.0
      %974 = vmatprep.subr.mxu0 0.0
      %975 = vmatpush1.msra.mxu0 0.0
      %976 = vmatprep.subr.mxu0 0.0
      %977 = vmatpush1.msra.mxu0 0.0
      %978 = vmatprep.subr.mxu0 0.0
      %979 = vmatpush1.msra.mxu0 0.0
      %980 = vmatprep.subr.mxu0 0.0
      %981 = vmatpush1.msra.mxu0 0.0
      %982 = vmatprep.subr.mxu0 0.0
      %983 = vmatpush1.msra.mxu0 0.0
      %984 = vmatprep.subr.mxu0 0.0
      %985 = vmatpush1.msra.mxu0 0.0
      %986 = vmatprep.subr.mxu0 0.0
      %987 = vmatpush1.msra.mxu0 0.0
      %988 = vmatprep.subr.mxu0 0.0
      %989 = vmatpush1.msra.mxu0 0.0
      %990 = vmatprep.subr.mxu0 0.0
      %991 = vmatpush1.msra.mxu0 0.0
      %992 = vmatprep.subr.mxu0 0.0
      %993 = vmatpush1.msra.mxu0 0.0
      %994 = vmatprep.subr.mxu0 0.0
      %995 = vmatpush1.msra.mxu0 0.0
      %996 = vmatprep.subr.mxu0 0.0
      %997 = vmatpush1.msra.mxu0 0.0
      %998 = vmatprep.subr.mxu0 0.0
      %999 = vmatpush1.msra.mxu0 0.0
      %1000 = vmatprep.subr.mxu0 0.0
      %1001 = vmatpush1.msra.mxu0 0.0
      %1002 = vmatprep.subr.mxu0 0.0
      %1003 = vmatpush1.msra.mxu0 0.0
      %1004 = vmatprep.subr.mxu0 0.0
      %1005 = vmatpush1.msra.mxu0 0.0
      %1006 = vmatprep.subr.mxu0 0.0
      %1007 = vmatpush1.msra.mxu0 0.0
      %1008 = vmatprep.subr.mxu0 0.0
      %1009 = vmatpush1.msra.mxu0 0.0
      %1010 = vmatprep.mubr.f32.mxu0 0.0
      %1011 = vmatmul.mubr.f32.gmra.mrb[0].mxu0 %v850
      %v1012 = vpop.f32.mrb[0].mxu0
      %v1013 = vadd.f32 0.0, %v1012
      %v1014 = vpop.f32.mrb[0].mxu0
      %1015 = vmatprep.mubr.f32.mxu0 0.0
      %1016 = vmatmul.mubr.f32.gmra.mrb[0].mxu0 %v853
      %v1017 = vpop.f32.mrb[0].mxu0
      %v1018 = vadd.f32 0.0, %v1017
      %v1019 = vpop.f32.mrb[0].mxu0
      %1020 = vmatprep.mubr.f32.mxu0 0.0
      %1021 = vmatmul.mubr.f32.gmra.mrb[0].mxu0 %v856
      %v1022 = vpop.f32.mrb[0].mxu0
      %v1023 = vadd.f32 0.0, %v1022
      %v1024 = vpop.f32.mrb[0].mxu0
      %1025 = vmatprep.mubr.f32.mxu0 0.0
      %1026 = vmatmul.mubr.f32.gmra.mrb[0].mxu0 %v859
      %v1027 = vpop.f32.mrb[0].mxu0
      %v1028 = vadd.f32 0.0, %v1027
      %v1029 = vpop.f32.mrb[0].mxu0
      %1030 = vdwg.mxu0
      %v1031 = vmul.f32 %v928, %v928
      %v1032 = vmul.f32 %v933, %v933
      %v1033 = vmul.f32 %v938, %v938
      %v1034 = vmul.f32 %v943, %v943
      %v1035 = vsub.f32 %v1013, %v1031
      %v1036 = vsub.f32 %v1018, %v1032
      %v1037 = vsub.f32 %v1023, %v1033
      %v1038 = vsub.f32 %v1028, %v1034
      %v1039 = vmax.f32 %v1035, 0.0
      %v1040 = vmax.f32 %v1036, 0.0
      %v1041 = vmax.f32 %v1037, 0.0
      %v1042 = vmax.f32 %v1038, 0.0
      %1044 = vset.pattern.permute.xlu0 0
      %1045 = vperm.xlu0 %1044, %v928
      %v1046 = vpop.permute.xlu0 %1045
      %1049 = vset.pattern.permute.xlu0 0
      %1050 = vperm.xlu0 %1049, %v933
      %v1051 = vpop.permute.xlu0 %1050
      %1054 = vset.pattern.permute.xlu0 0
      %1055 = vperm.xlu0 %1054, %v938
      %v1056 = vpop.permute.xlu0 %1055
      %1059 = vset.pattern.permute.xlu0 0
      %1060 = vperm.xlu0 %1059, %v943
      %v1061 = vpop.permute.xlu0 %1060
      %v1063 = vsub.f32 %v657, %v1046
      %v1064 = vsub.f32 %v660, %v1051
      %v1065 = vsub.f32 %v665, %v1056
      %v1066 = vsub.f32 %v668, %v1061
      %v1067 = vadd.f32 %v1039, 1e-05
      %v1068 = vadd.f32 %v1040, 1e-05
      %v1069 = vadd.f32 %v1041, 1e-05
      %v1070 = vadd.f32 %v1042, 1e-05
      %v1071 = vrsqrt.pop %v1067
      %v1072 = vrsqrt.pop %v1068
      %v1073 = vrsqrt.pop %v1069
      %v1074 = vrsqrt.pop %v1070
      %1076 = vset.pattern.permute.xlu0 0
      %1077 = vperm.xlu0 %1076, %v1071
      %v1078 = vpop.permute.xlu0 %1077
      %1081 = vset.pattern.permute.xlu0 0
      %1082 = vperm.xlu0 %1081, %v1072
      %v1083 = vpop.permute.xlu0 %1082
      %1086 = vset.pattern.permute.xlu0 0
      %1087 = vperm.xlu0 %1086, %v1073
      %v1088 = vpop.permute.xlu0 %1087
      %1091 = vset.pattern.permute.xlu0 0
      %1092 = vperm.xlu0 %1091, %v1074
      %v1093 = vpop.permute.xlu0 %1092
      %v1095 = vmul.f32 %v1063, %v1078
      %v1096 = vmul.f32 %v1064, %v1083
      %v1097 = vmul.f32 %v1065, %v1088
      %v1098 = vmul.f32 %v1066, %v1093
      %v1099 = vld [vmem:[%s3] sm:$0xff]
      %v1100 = vld [vmem:[%s3 + $0x8] sm:$0xff]
      %v1101 = vld [vmem:[%s3 + $0x10] sm:$0xff]
      %v1102 = vld [vmem:[%s3 + $0x18] sm:$0xff]
      %1104 = vset.pattern.permute.xlu0 0
      %1105 = vperm.xlu0 %1104, %v1099
      %v1106 = vpop.permute.xlu0 %1105
      %1109 = vset.pattern.permute.xlu0 0
      %1110 = vperm.xlu0 %1109, %v1100
      %v1111 = vpop.permute.xlu0 %1110
      %1114 = vset.pattern.permute.xlu0 0
      %1115 = vperm.xlu0 %1114, %v1101
      %v1116 = vpop.permute.xlu0 %1115
      %1119 = vset.pattern.permute.xlu0 0
      %1120 = vperm.xlu0 %1119, %v1102
      %v1121 = vpop.permute.xlu0 %1120
      %v1123 = vmul.f32 %v1095, %v1106
      %v1124 = vmul.f32 %v1096, %v1111
      %v1125 = vmul.f32 %v1097, %v1116
      %v1126 = vmul.f32 %v1098, %v1121
      %v1127 = vld [vmem:[%s4] sm:$0xff]
      %v1128 = vld [vmem:[%s4 + $0x8] sm:$0xff]
      %v1129 = vld [vmem:[%s4 + $0x10] sm:$0xff]
      %v1130 = vld [vmem:[%s4 + $0x18] sm:$0xff]
      %1132 = vset.pattern.permute.xlu0 0
      %1133 = vperm.xlu0 %1132, %v1127
      %v1134 = vpop.permute.xlu0 %1133
      %1137 = vset.pattern.permute.xlu0 0
      %1138 = vperm.xlu0 %1137, %v1128
      %v1139 = vpop.permute.xlu0 %1138
      %1142 = vset.pattern.permute.xlu0 0
      %1143 = vperm.xlu0 %1142, %v1129
      %v1144 = vpop.permute.xlu0 %1143
      %1147 = vset.pattern.permute.xlu0 0
      %1148 = vperm.xlu0 %1147, %v1130
      %v1149 = vpop.permute.xlu0 %1148
      %v1151 = vadd.f32 %v1123, %v1134
      %v1152 = vadd.f32 %v1124, %v1139
      %v1153 = vadd.f32 %v1125, %v1144
      %v1154 = vadd.f32 %v1126, %v1149
      %v1155 = vmax.f32 %v1151, 0.0
      %v1156 = vmax.f32 %v1152, 0.0
      %v1157 = vmax.f32 %v1153, 0.0
      %v1158 = vmax.f32 %v1154, 0.0
      %1159 = vst.msk [vmem:[%s278] sm:$0xff] %vm671, %v1155
      %1160 = vst.msk [vmem:[%s278 + $0x8] sm:$0xff] %vm671, %v1156
      %1161 = vst.msk [vmem:[%s278 + $0x10] sm:$0xff] %vm671, %v1157
      %1162 = vst.msk [vmem:[%s278 + $0x18] sm:$0xff] %vm671, %v1158
      %p1163 = scmp.lt.s32.totalorder %s18, 1
      %s1164 = scalar_select %p1163, %s18, 1
      %s1165 = smul.addr %s1164, 4
      %s1166 = smul.addr %s1165, 8
      %s1167 = scalar_lea.vmem %s7, %s1166
      // Predicated region
      $region49: #{stereonet_forward.15} parent=47 // pred_check
        %p1168 = pneg %p188
      $region50: #{stereonet_forward.15} parent=47 // pred_check_branch
        %1170 = sbr.rel (%p1168) target = $region52
      $region51: #{stereonet_forward.15} parent=47 // pred_region
        _
      $region52: #{stereonet_forward.15} parent=47 // pred_fallthru
        _
    $region48: #{stereonet_forward.15} parent=5 // pred_fallthru
      _
    %p1171 = scmp.le.s32.totalorder 2, %s13
    // Predicated region
    $region53: #{stereonet_forward.15} parent=5 // pred_check
      %p1172 = pneg %p1171
    $region54: #{stereonet_forward.15} parent=5 // pred_check_branch
      %1174 = sbr.rel (%p1172) target = $region56
    $region55: #{stereonet_forward.15} parent=5 // pred_region
      %s1175 = ssub.s32 %s13, 2
      // Predicated region
      $region57: #{stereonet_forward.15} parent=55 // pred_check
        %p1176 = pneg %p194
      $region58: #{stereonet_forward.15} parent=55 // pred_check_branch
        %1178 = sbr.rel (%p1176) target = $region60
      $region59: #{stereonet_forward.15} parent=55 // pred_region
        %p1179 = scmp.lt.s32.totalorder %s19, 1
        %s1180 = scalar_select %p1179, %s19, 1
        %s1181 = smul.addr %s1180, 4
        %s1182 = smul.addr %s1181, 8
        %s1183 = scalar_lea.vmem %s7, %s1182
      $region60: #{stereonet_forward.15} parent=55 // pred_fallthru
        _
    $region56: #{stereonet_forward.15} parent=5 // pred_fallthru
      _
  $region6: #{stereonet_forward.15} parent=0 // loop_footer
    %s17 = sadd.s32 1, %s13
  $region7: #{stereonet_forward.15} parent=0 // loop_footer_branch
    %12 = sbr.rel target = $region3
  $region8: #{stereonet_forward.15} parent=0 // loop_exit
    _

// kernel: stereonet_forward.16
$region0: #{stereonet_forward.16}
  #allocation0 [shape = 'u32[]', space=smem, size = 0x4, offset = 0x4, fixed_abs, tag = 'smem constant byte address 0x4 - core index']
  #allocation1 [shape = 'u32[144,128]{1,0:T(1,128)}', space=vmem, size = 0x12000, scoped, tag = 'internal scratch']
  %s0 = inlined_call_operand.vmem [shape: bf16[2,864,8], index: 0, kind: input, shape index: {}]
  %s1 = inlined_call_operand.vmem [shape: bf16[32,864], index: 1, kind: input, shape index: {}]
  %s2 = inlined_call_operand.vmem [shape: f32[32,1], index: 2, kind: input, shape index: {}]
  %s3 = inlined_call_operand.vmem [shape: f32[32,1], index: 3, kind: input, shape index: {}]
  %s4 = inlined_call_operand.vmem [shape: f32[32,1], index: 4, kind: input, shape index: {}]
  %s5 = inlined_call_operand.vmem [shape: f32[8,32], index: 5, kind: input, shape index: {}]
  %s6 = inlined_call_operand.vmem [shape: f32[32,8], index: 6, kind: input, shape index: {}]
  %s7 = inlined_call_operand.vmem [shape: f32[2,32,8], index: 7, kind: output, shape index: {}]
  %s8 = sld [smem:[#allocation0]]
  $region61: #{stereonet_forward.16} parent=0
    _
  %s10 = ssub.s32 1, %s8
  %s11 = scalar_select 0, %s10, %s8
  loop: start=0, step=1, limit=4
  $region2: #{stereonet_forward.16} parent=0 // loop_pre_header
    _
  $region3: #{stereonet_forward.16} parent=0 // loop_header
    %s13 = sphi 0, %s17
    %p14 = scmp.ge.s32.totalorder %s13, 4
    %s23 = sphi 0, %s25
    %s26 = sphi 0, %s23
    %s27 = sphi 0, %s26
    %s43 = sphi 0, %s27
    %s47 = sphi 0, %s47
    %s49 = sphi 0, %s47
    %s50 = sphi 0, %s49
    %s64 = sphi 0, %s50
    %s68 = sphi 0, %s68
    %s70 = sphi 0, %s68
    %s71 = sphi 0, %s70
    %s85 = sphi 0, %s71
    %s89 = sphi 0, %s89
    %s91 = sphi 0, %s89
    %s92 = sphi 0, %s91
    %s106 = sphi 0, %s92
    %s110 = sphi 0, %s110
    %s112 = sphi 0, %s110
    %s113 = sphi 0, %s112
    %s127 = sphi 0, %s113
    %s131 = sphi 0, %s131
    %s133 = sphi 0, %s131
    %s134 = sphi 0, %s133
    %s148 = sphi 0, %s134
    %s152 = sphi 0, %s152
    %s154 = sphi 0, %s152
    %s155 = sphi 0, %s154
    %s169 = sphi 0, %s155
    %s175 = sphi 0, %s177
    %s178 = sphi 0, %s175
    %s179 = sphi 0, %s178
    %s195 = sphi 0, %s179
  $region4: #{stereonet_forward.16} parent=0 // loop_header_branch
    %16 = sbr.rel (%p14) target = $region8
  $region5: #{stereonet_forward.16} parent=0 // loop_body
    %s18 = ssub.s32 %s13, 1
    %s19 = ssub.s32 %s13, 2
    %s20 = sadd.s32 %s13, 1
    %s21 = ssub.s32 %s13, %s20
    %p22 = scmp.eq.s32.totalorder %s21, 0
    %s24 = sadd.s32 %s23, 1
    %s25 = scalar_select %p22, %s23, %s24
    %p28 = pneg %p22
    %p29 = scmp.eq.s32.totalorder %s13, 1
    %p30 = por %p28, %p29
    %p31 = scmp.ne.s32.totalorder %s23, %s26
    %p32 = scmp.eq.s32.totalorder %s13, 0
    %p33 = por %p31, %p32
    %p34 = scmp.ne.s32.totalorder %s23, %s26
    %p35 = scmp.eq.s32.totalorder %s18, 1
    %p36 = por %p34, %p35
    %p37 = scmp.ne.s32.totalorder %s26, %s27
    %p38 = scmp.eq.s32.totalorder %s18, 0
    %p39 = por %p37, %p38
    %p40 = scmp.ne.s32.totalorder %s26, %s27
    %p41 = scmp.eq.s32.totalorder %s19, 1
    %p42 = por %p40, %p41
    %p44 = scmp.ne.s32.totalorder %s27, %s43
    %p45 = scmp.eq.s32.totalorder %s19, 0
    %p46 = por %p44, %p45
    %s48 = sadd.s32 %s47, 1
    %p51 = scmp.eq.s32.totalorder %s13, 1
    %p52 = scmp.ne.s32.totalorder %s47, %s49
    %p53 = scmp.eq.s32.totalorder %s13, 0
    %p54 = por %p52, %p53
    %p55 = scmp.ne.s32.totalorder %s47, %s49
    %p56 = scmp.eq.s32.totalorder %s18, 1
    %p57 = por %p55, %p56
    %p58 = scmp.ne.s32.totalorder %s49, %s50
    %p59 = scmp.eq.s32.totalorder %s18, 0
    %p60 = por %p58, %p59
    %p61 = scmp.ne.s32.totalorder %s49, %s50
    %p62 = scmp.eq.s32.totalorder %s19, 1
    %p63 = por %p61, %p62
    %p65 = scmp.ne.s32.totalorder %s50, %s64
    %p66 = scmp.eq.s32.totalorder %s19, 0
    %p67 = por %p65, %p66
    %s69 = sadd.s32 %s68, 1
    %p72 = scmp.eq.s32.totalorder %s13, 1
    %p73 = scmp.ne.s32.totalorder %s68, %s70
    %p74 = scmp.eq.s32.totalorder %s13, 0
    %p75 = por %p73, %p74
    %p76 = scmp.ne.s32.totalorder %s68, %s70
    %p77 = scmp.eq.s32.totalorder %s18, 1
    %p78 = por %p76, %p77
    %p79 = scmp.ne.s32.totalorder %s70, %s71
    %p80 = scmp.eq.s32.totalorder %s18, 0
    %p81 = por %p79, %p80
    %p82 = scmp.ne.s32.totalorder %s70, %s71
    %p83 = scmp.eq.s32.totalorder %s19, 1
    %p84 = por %p82, %p83
    %p86 = scmp.ne.s32.totalorder %s71, %s85
    %p87 = scmp.eq.s32.totalorder %s19, 0
    %p88 = por %p86, %p87
    %s90 = sadd.s32 %s89, 1
    %p93 = scmp.eq.s32.totalorder %s13, 1
    %p94 = scmp.ne.s32.totalorder %s89, %s91
    %p95 = scmp.eq.s32.totalorder %s13, 0
    %p96 = por %p94, %p95
    %p97 = scmp.ne.s32.totalorder %s89, %s91
    %p98 = scmp.eq.s32.totalorder %s18, 1
    %p99 = por %p97, %p98
    %p100 = scmp.ne.s32.totalorder %s91, %s92
    %p101 = scmp.eq.s32.totalorder %s18, 0
    %p102 = por %p100, %p101
    %p103 = scmp.ne.s32.totalorder %s91, %s92
    %p104 = scmp.eq.s32.totalorder %s19, 1
    %p105 = por %p103, %p104
    %p107 = scmp.ne.s32.totalorder %s92, %s106
    %p108 = scmp.eq.s32.totalorder %s19, 0
    %p109 = por %p107, %p108
    %s111 = sadd.s32 %s110, 1
    %p114 = scmp.eq.s32.totalorder %s13, 1
    %p115 = scmp.ne.s32.totalorder %s110, %s112
    %p116 = scmp.eq.s32.totalorder %s13, 0
    %p117 = por %p115, %p116
    %p118 = scmp.ne.s32.totalorder %s110, %s112
    %p119 = scmp.eq.s32.totalorder %s18, 1
    %p120 = por %p118, %p119
    %p121 = scmp.ne.s32.totalorder %s112, %s113
    %p122 = scmp.eq.s32.totalorder %s18, 0
    %p123 = por %p121, %p122
    %p124 = scmp.ne.s32.totalorder %s112, %s113
    %p125 = scmp.eq.s32.totalorder %s19, 1
    %p126 = por %p124, %p125
    %p128 = scmp.ne.s32.totalorder %s113, %s127
    %p129 = scmp.eq.s32.totalorder %s19, 0
    %p130 = por %p128, %p129
    %s132 = sadd.s32 %s131, 1
    %p135 = scmp.eq.s32.totalorder %s13, 1
    %p136 = scmp.ne.s32.totalorder %s131, %s133
    %p137 = scmp.eq.s32.totalorder %s13, 0
    %p138 = por %p136, %p137
    %p139 = scmp.ne.s32.totalorder %s131, %s133
    %p140 = scmp.eq.s32.totalorder %s18, 1
    %p141 = por %p139, %p140
    %p142 = scmp.ne.s32.totalorder %s133, %s134
    %p143 = scmp.eq.s32.totalorder %s18, 0
    %p144 = por %p142, %p143
    %p145 = scmp.ne.s32.totalorder %s133, %s134
    %p146 = scmp.eq.s32.totalorder %s19, 1
    %p147 = por %p145, %p146
    %p149 = scmp.ne.s32.totalorder %s134, %s148
    %p150 = scmp.eq.s32.totalorder %s19, 0
    %p151 = por %p149, %p150
    %s153 = sadd.s32 %s152, 1
    %p156 = scmp.eq.s32.totalorder %s13, 1
    %p157 = scmp.ne.s32.totalorder %s152, %s154
    %p158 = scmp.eq.s32.totalorder %s13, 0
    %p159 = por %p157, %p158
    %p160 = scmp.ne.s32.totalorder %s152, %s154
    %p161 = scmp.eq.s32.totalorder %s18, 1
    %p162 = por %p160, %p161
    %p163 = scmp.ne.s32.totalorder %s154, %s155
    %p164 = scmp.eq.s32.totalorder %s18, 0
    %p165 = por %p163, %p164
    %p166 = scmp.ne.s32.totalorder %s154, %s155
    %p167 = scmp.eq.s32.totalorder %s19, 1
    %p168 = por %p166, %p167
    %p170 = scmp.ne.s32.totalorder %s155, %s169
    %p171 = scmp.eq.s32.totalorder %s19, 0
    %p172 = por %p170, %p171
    %s173 = ssub.s32 %s13, %s20
    %p174 = scmp.eq.s32.totalorder %s173, 0
    %s176 = sadd.s32 %s175, 1
    %s177 = scalar_select %p174, %s175, %s176
    %p180 = pneg %p174
    %p181 = scmp.eq.s32.totalorder %s13, 1
    %p182 = por %p180, %p181
    %p183 = scmp.ne.s32.totalorder %s175, %s178
    %p184 = scmp.eq.s32.totalorder %s13, 0
    %p185 = por %p183, %p184
    %p186 = scmp.ne.s32.totalorder %s175, %s178
    %p187 = scmp.eq.s32.totalorder %s18, 1
    %p188 = por %p186, %p187
    %p189 = scmp.ne.s32.totalorder %s178, %s179
    %p190 = scmp.eq.s32.totalorder %s18, 0
    %p191 = por %p189, %p190
    %p192 = scmp.ne.s32.totalorder %s178, %s179
    %p193 = scmp.eq.s32.totalorder %s19, 1
    %p194 = por %p192, %p193
    %p196 = scmp.ne.s32.totalorder %s179, %s195
    %p197 = scmp.eq.s32.totalorder %s19, 0
    %p198 = por %p196, %p197
    %p199 = scmp.le.s32.totalorder 1, %s13
    %p200 = scmp.lt.s32.totalorder %s13, 3
    %p201 = pnand %p199, %p200
    %p202 = pneg %p201
    // Predicated region
    $region9: #{stereonet_forward.16} parent=5 // pred_check
      _
    $region10: #{stereonet_forward.16} parent=5 // pred_check_branch
      %204 = sbr.rel (%p201) target = $region12
    $region11: #{stereonet_forward.16} parent=5 // pred_region
      %s205 = ssub.s32 %s13, 1
      // Predicated region
      $region13: #{stereonet_forward.16} parent=11 // pred_check
        %p206 = pneg %p60
      $region14: #{stereonet_forward.16} parent=11 // pred_check_branch
        %208 = sbr.rel (%p206) target = $region16
      $region15: #{stereonet_forward.16} parent=11 // pred_region
        _
      $region16: #{stereonet_forward.16} parent=11 // pred_fallthru
        _
      // Predicated region
      $region17: #{stereonet_forward.16} parent=11 // pred_check
        %p209 = pneg %p81
      $region18: #{stereonet_forward.16} parent=11 // pred_check_branch
        %211 = sbr.rel (%p209) target = $region20
      $region19: #{stereonet_forward.16} parent=11 // pred_region
        _
      $region20: #{stereonet_forward.16} parent=11 // pred_fallthru
        _
      // Predicated region
      $region21: #{stereonet_forward.16} parent=11 // pred_check
        %p212 = pneg %p102
      $region22: #{stereonet_forward.16} parent=11 // pred_check_branch
        %214 = sbr.rel (%p212) target = $region24
      $region23: #{stereonet_forward.16} parent=11 // pred_region
        _
      $region24: #{stereonet_forward.16} parent=11 // pred_fallthru
        _
      // Predicated region
      $region25: #{stereonet_forward.16} parent=11 // pred_check
        %p215 = pneg %p123
      $region26: #{stereonet_forward.16} parent=11 // pred_check_branch
        %217 = sbr.rel (%p215) target = $region28
      $region27: #{stereonet_forward.16} parent=11 // pred_region
        _
      $region28: #{stereonet_forward.16} parent=11 // pred_fallthru
        _
      // Predicated region
      $region29: #{stereonet_forward.16} parent=11 // pred_check
        %p218 = pneg %p144
      $region30: #{stereonet_forward.16} parent=11 // pred_check_branch
        %220 = sbr.rel (%p218) target = $region32
      $region31: #{stereonet_forward.16} parent=11 // pred_region
        _
      $region32: #{stereonet_forward.16} parent=11 // pred_fallthru
        _
      // Predicated region
      $region33: #{stereonet_forward.16} parent=11 // pred_check
        %p221 = pneg %p165
      $region34: #{stereonet_forward.16} parent=11 // pred_check_branch
        %223 = sbr.rel (%p221) target = $region36
      $region35: #{stereonet_forward.16} parent=11 // pred_region
        _
      $region36: #{stereonet_forward.16} parent=11 // pred_fallthru
        _
    $region12: #{stereonet_forward.16} parent=5 // pred_fallthru
      _
    %p224 = scmp.lt.s32.totalorder %s13, 2
    // Predicated region
    $region37: #{stereonet_forward.16} parent=5 // pred_check
      %p225 = pneg %p224
    $region38: #{stereonet_forward.16} parent=5 // pred_check_branch
      %227 = sbr.rel (%p225) target = $region40
    $region39: #{stereonet_forward.16} parent=5 // pred_region
      // Predicated region
      $region41: #{stereonet_forward.16} parent=39 // pred_check
        %p228 = pneg %p33
      $region42: #{stereonet_forward.16} parent=39 // pred_check_branch
        %230 = sbr.rel (%p228) target = $region44
      $region43: #{stereonet_forward.16} parent=39 // pred_region
        %p231 = scmp.lt.s32.totalorder %s13, 1
        %s232 = scalar_select %p231, %s13, 1
        %s233 = smul.addr %s232, 108
        %s234 = smul.addr %s233, 4
        %s235 = scalar_lea.vmem %s0, %s234
      $region44: #{stereonet_forward.16} parent=39 // pred_fallthru
        _
    $region40: #{stereonet_forward.16} parent=5 // pred_fallthru
      _
    %p236 = scmp.le.s32.totalorder 1, %s13
    %p237 = scmp.lt.s32.totalorder %s13, 3
    %p238 = pnand %p236, %p237
    %p239 = pneg %p238
    // Predicated region
    $region45: #{stereonet_forward.16} parent=5 // pred_check
      _
    $region46: #{stereonet_forward.16} parent=5 // pred_check_branch
      %241 = sbr.rel (%p238) target = $region48
    $region47: #{stereonet_forward.16} parent=5 // pred_region
      %s242 = ssub.s32 %s13, 1
      %p243 = scmp.lt.s32.totalorder %s18, 1
      %s244 = scalar_select %p243, %s18, 1
      %s245 = smul.addr %s244, 108
      %s246 = smul.addr %s245, 4
      %s247 = scalar_lea.vmem %s0, %s246
      %p248 = pneg %p39
      %p249 = pneg %p36
      %p250 = pneg %p60
      %p251 = pneg %p57
      %p252 = pneg %p81
      %p253 = pneg %p78
      %p254 = pneg %p102
      %p255 = pneg %p99
      %p256 = pneg %p123
      %p257 = pneg %p120
      %p258 = pneg %p144
      %p259 = pneg %p141
      %p260 = pneg %p165
      %p261 = pneg %p162
      %p262 = pneg %p191
      %p263 = pneg %p188
      %p264 = scmp.lt.s32.totalorder %s18, 1
      %s265 = scalar_select %p264, %s18, 1
      %s266 = smul.addr %s265, 4
      %s267 = smul.addr %s266, 8
      %s268 = scalar_lea.vmem %s7, %s267
      %p269 = scmp.lt.s32.totalorder %s18, 1
      %s270 = scalar_select %p269, %s18, 1
      %s271 = smul.addr %s270, 108
      %s272 = smul.addr %s271, 4
      %s273 = scalar_lea.vmem %s0, %s272
      %p274 = scmp.lt.s32.totalorder %s18, 1
      %s275 = scalar_select %p274, %s18, 1
      %s276 = smul.addr %s275, 4
      %s277 = smul.addr %s276, 8
      %s278 = scalar_lea.vmem %s7, %s277
      %v280 = vld [vmem:[%s1] sm:$0xff]
      %v281 = vld [vmem:[%s1 + $0x8] sm:$0xff]
      %v282 = vld [vmem:[%s1 + $0x10] sm:$0xff]
      %v283 = vld [vmem:[%s1 + $0x18] sm:$0xf]
      %v284 = vld [vmem:[%s1 + $0x1c] sm:$0xff]
      %v285 = vld [vmem:[%s1 + $0x24] sm:$0xff]
      %v286 = vld [vmem:[%s1 + $0x2c] sm:$0xff]
      %v287 = vld [vmem:[%s1 + $0x34] sm:$0xf]
      %v288 = vld [vmem:[%s1 + $0x38] sm:$0xff]
      %v289 = vld [vmem:[%s1 + $0x40] sm:$0xff]
      %v290 = vld [vmem:[%s1 + $0x48] sm:$0xff]
      %v291 = vld [vmem:[%s1 + $0x50] sm:$0xf]
      %v292 = vld [vmem:[%s1 + $0x54] sm:$0xff]
      %v293 = vld [vmem:[%s1 + $0x5c] sm:$0xff]
      %v294 = vld [vmem:[%s1 + $0x64] sm:$0xff]
      %v295 = vld [vmem:[%s1 + $0x6c] sm:$0xf]
      %v296 = vld [vmem:[%s273] sm:$0xf]
      %v297 = vld [vmem:[%s273 + $0x4] sm:$0xf]
      %v298 = vld [vmem:[%s273 + $0x8] sm:$0xf]
      %v299 = vld [vmem:[%s273 + $0xc] sm:$0xf]
      %v300 = vld [vmem:[%s273 + $0x10] sm:$0xf]
      %v301 = vld [vmem:[%s273 + $0x14] sm:$0xf]
      %v302 = vld [vmem:[%s273 + $0x18] sm:$0xf]
      %v303 = vld [vmem:[%s273 + $0x1c] sm:$0xf]
      %v304 = vld [vmem:[%s273 + $0x20] sm:$0xf]
      %v305 = vld [vmem:[%s273 + $0x24] sm:$0xf]
      %v306 = vld [vmem:[%s273 + $0x28] sm:$0xf]
      %v307 = vld [vmem:[%s273 + $0x2c] sm:$0xf]
      %v308 = vld [vmem:[%s273 + $0x30] sm:$0xf]
      %v309 = vld [vmem:[%s273 + $0x34] sm:$0xf]
      %v310 = vld [vmem:[%s273 + $0x38] sm:$0xf]
      %v311 = vld [vmem:[%s273 + $0x3c] sm:$0xf]
      %v312 = vld [vmem:[%s273 + $0x40] sm:$0xf]
      %v313 = vld [vmem:[%s273 + $0x44] sm:$0xf]
      %v314 = vld [vmem:[%s273 + $0x48] sm:$0xf]
      %v315 = vld [vmem:[%s273 + $0x4c] sm:$0xf]
      %v316 = vld [vmem:[%s273 + $0x50] sm:$0xf]
      %v317 = vld [vmem:[%s273 + $0x54] sm:$0xf]
      %v318 = vld [vmem:[%s273 + $0x58] sm:$0xf]
      %v319 = vld [vmem:[%s273 + $0x5c] sm:$0xf]
      %v320 = vld [vmem:[%s273 + $0x60] sm:$0xf]
      %v321 = vld [vmem:[%s273 + $0x64] sm:$0xf]
      %v322 = vld [vmem:[%s273 + $0x68] sm:$0xf]
      %v323 = vld [vmem:[%s273 + $0x6c] sm:$0xf]
      %v324 = vld [vmem:[%s273 + $0x70] sm:$0xf]
      %v325 = vld [vmem:[%s273 + $0x74] sm:$0xf]
      %v326 = vld [vmem:[%s273 + $0x78] sm:$0xf]
      %v327 = vld [vmem:[%s273 + $0x7c] sm:$0xf]
      %v328 = vld [vmem:[%s273 + $0x80] sm:$0xf]
      %v329 = vld [vmem:[%s273 + $0x84] sm:$0xf]
      %v330 = vld [vmem:[%s273 + $0x88] sm:$0xf]
      %v331 = vld [vmem:[%s273 + $0x8c] sm:$0xf]
      %v332 = vld [vmem:[%s273 + $0x90] sm:$0xf]
      %v333 = vld [vmem:[%s273 + $0x94] sm:$0xf]
      %v334 = vld [vmem:[%s273 + $0x98] sm:$0xf]
      %v335 = vld [vmem:[%s273 + $0x9c] sm:$0xf]
      %v336 = vld [vmem:[%s273 + $0xa0] sm:$0xf]
      %v337 = vld [vmem:[%s273 + $0xa4] sm:$0xf]
      %v338 = vld [vmem:[%s273 + $0xa8] sm:$0xf]
      %v339 = vld [vmem:[%s273 + $0xac] sm:$0xf]
      %v340 = vld [vmem:[%s273 + $0xb0] sm:$0xf]
      %v341 = vld [vmem:[%s273 + $0xb4] sm:$0xf]
      %v342 = vld [vmem:[%s273 + $0xb8] sm:$0xf]
      %v343 = vld [vmem:[%s273 + $0xbc] sm:$0xf]
      %v344 = vld [vmem:[%s273 + $0xc0] sm:$0xf]
      %v345 = vld [vmem:[%s273 + $0xc4] sm:$0xf]
      %v346 = vld [vmem:[%s273 + $0xc8] sm:$0xf]
      %v347 = vld [vmem:[%s273 + $0xcc] sm:$0xf]
      %v348 = vld [vmem:[%s273 + $0xd0] sm:$0xf]
      %v349 = vld [vmem:[%s273 + $0xd4] sm:$0xf]
      %v350 = vld [vmem:[%s273 + $0xd8] sm:$0xf]
      %v351 = vld [vmem:[%s273 + $0xdc] sm:$0xf]
      %v352 = vld [vmem:[%s273 + $0xe0] sm:$0xf]
      %v353 = vld [vmem:[%s273 + $0xe4] sm:$0xf]
      %v354 = vld [vmem:[%s273 + $0xe8] sm:$0xf]
      %v355 = vld [vmem:[%s273 + $0xec] sm:$0xf]
      %v356 = vld [vmem:[%s273 + $0xf0] sm:$0xf]
      %v357 = vld [vmem:[%s273 + $0xf4] sm:$0xf]
      %v358 = vld [vmem:[%s273 + $0xf8] sm:$0xf]
      %v359 = vld [vmem:[%s273 + $0xfc] sm:$0xf]
      %v360 = vld [vmem:[%s273 + $0x100] sm:$0xf]
      %v361 = vld [vmem:[%s273 + $0x104] sm:$0xf]
      %v362 = vld [vmem:[%s273 + $0x108] sm:$0xf]
      %v363 = vld [vmem:[%s273 + $0x10c] sm:$0xf]
      %v364 = vld [vmem:[%s273 + $0x110] sm:$0xf]
      %v365 = vld [vmem:[%s273 + $0x114] sm:$0xf]
      %v366 = vld [vmem:[%s273 + $0x118] sm:$0xf]
      %v367 = vld [vmem:[%s273 + $0x11c] sm:$0xf]
      %v368 = vld [vmem:[%s273 + $0x120] sm:$0xf]
      %v369 = vld [vmem:[%s273 + $0x124] sm:$0xf]
      %v370 = vld [vmem:[%s273 + $0x128] sm:$0xf]
      %v371 = vld [vmem:[%s273 + $0x12c] sm:$0xf]
      %v372 = vld [vmem:[%s273 + $0x130] sm:$0xf]
      %v373 = vld [vmem:[%s273 + $0x134] sm:$0xf]
      %v374 = vld [vmem:[%s273 + $0x138] sm:$0xf]
      %v375 = vld [vmem:[%s273 + $0x13c] sm:$0xf]
      %v376 = vld [vmem:[%s273 + $0x140] sm:$0xf]
      %v377 = vld [vmem:[%s273 + $0x144] sm:$0xf]
      %v378 = vld [vmem:[%s273 + $0x148] sm:$0xf]
      %v379 = vld [vmem:[%s273 + $0x14c] sm:$0xf]
      %v380 = vld [vmem:[%s273 + $0x150] sm:$0xf]
      %v381 = vld [vmem:[%s273 + $0x154] sm:$0xf]
      %v382 = vld [vmem:[%s273 + $0x158] sm:$0xf]
      %v383 = vld [vmem:[%s273 + $0x15c] sm:$0xf]
      %v384 = vld [vmem:[%s273 + $0x160] sm:$0xf]
      %v385 = vld [vmem:[%s273 + $0x164] sm:$0xf]
      %v386 = vld [vmem:[%s273 + $0x168] sm:$0xf]
      %v387 = vld [vmem:[%s273 + $0x16c] sm:$0xf]
      %v388 = vld [vmem:[%s273 + $0x170] sm:$0xf]
      %v389 = vld [vmem:[%s273 + $0x174] sm:$0xf]
      %v390 = vld [vmem:[%s273 + $0x178] sm:$0xf]
      %v391 = vld [vmem:[%s273 + $0x17c] sm:$0xf]
      %v392 = vld [vmem:[%s273 + $0x180] sm:$0xf]
      %v393 = vld [vmem:[%s273 + $0x184] sm:$0xf]
      %v394 = vld [vmem:[%s273 + $0x188] sm:$0xf]
      %v395 = vld [vmem:[%s273 + $0x18c] sm:$0xf]
      %v396 = vld [vmem:[%s273 + $0x190] sm:$0xf]
      %v397 = vld [vmem:[%s273 + $0x194] sm:$0xf]
      %v398 = vld [vmem:[%s273 + $0x198] sm:$0xf]
      %v399 = vld [vmem:[%s273 + $0x19c] sm:$0xf]
      %v400 = vld [vmem:[%s273 + $0x1a0] sm:$0xf]
      %v401 = vld [vmem:[%s273 + $0x1a4] sm:$0xf]
      %v402 = vld [vmem:[%s273 + $0x1a8] sm:$0xf]
      %v403 = vld [vmem:[%s273 + $0x1ac] sm:$0xf]
      %v404 = vld [vmem:[%s2] sm:$0xff]
      %v405 = vld [vmem:[%s2 + $0x8] sm:$0xff]
      %v406 = vld [vmem:[%s2 + $0x10] sm:$0xff]
      %v407 = vld [vmem:[%s2 + $0x18] sm:$0xff]
      %409 = vset.pattern.permute.xlu0 0
      %410 = vperm.xlu0 %409, %v404
      %v411 = vpop.permute.xlu0 %410
      %414 = vset.pattern.permute.xlu0 0
      %415 = vperm.xlu0 %414, %v405
      %v416 = vpop.permute.xlu0 %415
      %419 = vset.pattern.permute.xlu0 0
      %420 = vperm.xlu0 %419, %v406
      %v421 = vpop.permute.xlu0 %420
      %424 = vset.pattern.permute.xlu0 0
      %425 = vperm.xlu0 %424, %v407
      %v426 = vpop.permute.xlu0 %425
      %v444 = vunpack.c.l.b16 %v280
      %v445 = vunpack.c.h.b16 %v280
      %v446 = vunpack.c.l.b16 %v281
      %v447 = vunpack.c.h.b16 %v281
      %v448 = vunpack.c.l.b16 %v282
      %v449 = vunpack.c.h.b16 %v282
      %v450 = vunpack.c.l.b16 %v283
      %v451 = vunpack.c.l.b16 %v284
      %v452 = vunpack.c.h.b16 %v284
      %v453 = vunpack.c.l.b16 %v285
      %v454 = vunpack.c.h.b16 %v285
      %v455 = vunpack.c.l.b16 %v286
      %v456 = vunpack.c.h.b16 %v286
      %v457 = vunpack.c.l.b16 %v287
      %v458 = vunpack.c.l.b16 %v288
      %v459 = vunpack.c.h.b16 %v288
      %v460 = vunpack.c.l.b16 %v289
      %v461 = vunpack.c.h.b16 %v289
      %v462 = vunpack.c.l.b16 %v290
      %v463 = vunpack.c.h.b16 %v290
      %v464 = vunpack.c.l.b16 %v291
      %v465 = vunpack.c.l.b16 %v292
      %v466 = vunpack.c.h.b16 %v292
      %v467 = vunpack.c.l.b16 %v293
      %v468 = vunpack.c.h.b16 %v293
      %v469 = vunpack.c.l.b16 %v294
      %v470 = vunpack.c.h.b16 %v294
      %v471 = vunpack.c.l.b16 %v295
      %v472 = vpack.c.b16 %v451, %v444
      %v473 = vpack.c.b16 %v452, %v445
      %v474 = vpack.c.b16 %v453, %v446
      %v475 = vpack.c.b16 %v454, %v447
      %v476 = vpack.c.b16 %v455, %v448
      %v477 = vpack.c.b16 %v456, %v449
      %v478 = vpack.c.b16 %v457, %v450
      %v479 = vpack.c.b16 %v465, %v458
      %v480 = vpack.c.b16 %v466, %v459
      %v481 = vpack.c.b16 %v467, %v460
      %v482 = vpack.c.b16 %v468, %v461
      %v483 = vpack.c.b16 %v469, %v462
      %v484 = vpack.c.b16 %v470, %v463
      %v485 = vpack.c.b16 %v471, %v464
      %v606 = vunpack.c.l.b16 %v296
      %v607 = vunpack.c.l.b16 %v297
      %v608 = vunpack.c.l.b16 %v298
      %v609 = vunpack.c.l.b16 %v299
      %v610 = vunpack.c.l.b16 %v300
      %v611 = vunpack.c.l.b16 %v301
      %v612 = vunpack.c.l.b16 %v302
      %v613 = vunpack.c.l.b16 %v303
      %v614 = vunpack.c.l.b16 %v304
      %v615 = vunpack.c.l.b16 %v305
      %v616 = vunpack.c.l.b16 %v306
      %v617 = vunpack.c.l.b16 %v307
      %v618 = vunpack.c.l.b16 %v308
      %v619 = vunpack.c.l.b16 %v309
      %v620 = vunpack.c.l.b16 %v310
      %v621 = vunpack.c.l.b16 %v311
      %v622 = vunpack.c.l.b16 %v312
      %v623 = vunpack.c.l.b16 %v313
      %v624 = vunpack.c.l.b16 %v314
      %v625 = vunpack.c.l.b16 %v315
      %v626 = vunpack.c.l.b16 %v316
      %v627 = vunpack.c.l.b16 %v317
      %v628 = vunpack.c.l.b16 %v318
      %v629 = vunpack.c.l.b16 %v319
      %v630 = vunpack.c.l.b16 %v320
      %v631 = vunpack.c.l.b16 %v321
      %v632 = vunpack.c.l.b16 %v322
      %v633 = vunpack.c.l.b16 %v323
      %v634 = vunpack.c.l.b16 %v324
      %v635 = vunpack.c.l.b16 %v325
      %v636 = vunpack.c.l.b16 %v326
      %v637 = vunpack.c.l.b16 %v327
      %v638 = vunpack.c.l.b16 %v328
      %v639 = vunpack.c.l.b16 %v329
      %v640 = vunpack.c.l.b16 %v330
      %v641 = vunpack.c.l.b16 %v331
      %v642 = vunpack.c.l.b16 %v332
      %v643 = vunpack.c.l.b16 %v333
      %v644 = vunpack.c.l.b16 %v334
      %v645 = vunpack.c.l.b16 %v335
      %v646 = vunpack.c.l.b16 %v336
      %v647 = vunpack.c.l.b16 %v337
      %v648 = vunpack.c.l.b16 %v338
      %v649 = vunpack.c.l.b16 %v339
      %v650 = vunpack.c.l.b16 %v340
      %v651 = vunpack.c.l.b16 %v341
      %v652 = vunpack.c.l.b16 %v342
      %v653 = vunpack.c.l.b16 %v343
      %v654 = vunpack.c.l.b16 %v344
      %v655 = vunpack.c.l.b16 %v345
      %v656 = vunpack.c.l.b16 %v346
      %v657 = vunpack.c.l.b16 %v347
      %v658 = vunpack.c.l.b16 %v348
      %v659 = vunpack.c.l.b16 %v349
      %v660 = vunpack.c.l.b16 %v350
      %v661 = vunpack.c.l.b16 %v351
      %v662 = vunpack.c.l.b16 %v352
      %v663 = vunpack.c.l.b16 %v353
      %v664 = vunpack.c.l.b16 %v354
      %v665 = vunpack.c.l.b16 %v355
      %v666 = vunpack.c.l.b16 %v356
      %v667 = vunpack.c.l.b16 %v357
      %v668 = vunpack.c.l.b16 %v358
      %v669 = vunpack.c.l.b16 %v359
      %v670 = vunpack.c.l.b16 %v360
      %v671 = vunpack.c.l.b16 %v361
      %v672 = vunpack.c.l.b16 %v362
      %v673 = vunpack.c.l.b16 %v363
      %v674 = vunpack.c.l.b16 %v364
      %v675 = vunpack.c.l.b16 %v365
      %v676 = vunpack.c.l.b16 %v366
      %v677 = vunpack.c.l.b16 %v367
      %v678 = vunpack.c.l.b16 %v368
      %v679 = vunpack.c.l.b16 %v369
      %v680 = vunpack.c.l.b16 %v370
      %v681 = vunpack.c.l.b16 %v371
      %v682 = vunpack.c.l.b16 %v372
      %v683 = vunpack.c.l.b16 %v373
      %v684 = vunpack.c.l.b16 %v374
      %v685 = vunpack.c.l.b16 %v375
      %v686 = vunpack.c.l.b16 %v376
      %v687 = vunpack.c.l.b16 %v377
      %v688 = vunpack.c.l.b16 %v378
      %v689 = vunpack.c.l.b16 %v379
      %v690 = vunpack.c.l.b16 %v380
      %v691 = vunpack.c.l.b16 %v381
      %v692 = vunpack.c.l.b16 %v382
      %v693 = vunpack.c.l.b16 %v383
      %v694 = vunpack.c.l.b16 %v384
      %v695 = vunpack.c.l.b16 %v385
      %v696 = vunpack.c.l.b16 %v386
      %v697 = vunpack.c.l.b16 %v387
      %v698 = vunpack.c.l.b16 %v388
      %v699 = vunpack.c.l.b16 %v389
      %v700 = vunpack.c.l.b16 %v390
      %v701 = vunpack.c.l.b16 %v391
      %v702 = vunpack.c.l.b16 %v392
      %v703 = vunpack.c.l.b16 %v393
      %v704 = vunpack.c.l.b16 %v394
      %v705 = vunpack.c.l.b16 %v395
      %v706 = vunpack.c.l.b16 %v396
      %v707 = vunpack.c.l.b16 %v397
      %v708 = vunpack.c.l.b16 %v398
      %v709 = vunpack.c.l.b16 %v399
      %v710 = vunpack.c.l.b16 %v400
      %v711 = vunpack.c.l.b16 %v401
      %v712 = vunpack.c.l.b16 %v402
      %v713 = vunpack.c.l.b16 %v403
      %v714 = vpack.c.b16 %v607, %v606
      %v715 = vpack.c.b16 %v609, %v608
      %v716 = vpack.c.b16 %v611, %v610
      %v717 = vpack.c.b16 %v613, %v612
      %v718 = vpack.c.b16 %v615, %v614
      %v719 = vpack.c.b16 %v617, %v616
      %v720 = vpack.c.b16 %v619, %v618
      %v721 = vpack.c.b16 %v621, %v620
      %v722 = vpack.c.b16 %v623, %v622
      %v723 = vpack.c.b16 %v625, %v624
      %v724 = vpack.c.b16 %v627, %v626
      %v725 = vpack.c.b16 %v629, %v628
      %v726 = vpack.c.b16 %v631, %v630
      %v727 = vpack.c.b16 %v633, %v632
      %v728 = vpack.c.b16 %v635, %v634
      %v729 = vpack.c.b16 %v637, %v636
      %v730 = vpack.c.b16 %v639, %v638
      %v731 = vpack.c.b16 %v641, %v640
      %v732 = vpack.c.b16 %v643, %v642
      %v733 = vpack.c.b16 %v645, %v644
      %v734 = vpack.c.b16 %v647, %v646
      %v735 = vpack.c.b16 %v649, %v648
      %v736 = vpack.c.b16 %v651, %v650
      %v737 = vpack.c.b16 %v653, %v652
      %v738 = vpack.c.b16 %v655, %v654
      %v739 = vpack.c.b16 %v657, %v656
      %v740 = vpack.c.b16 %v659, %v658
      %v741 = vpack.c.b16 %v661, %v660
      %v742 = vpack.c.b16 %v663, %v662
      %v743 = vpack.c.b16 %v665, %v664
      %v744 = vpack.c.b16 %v667, %v666
      %v745 = vpack.c.b16 %v669, %v668
      %v746 = vpack.c.b16 %v671, %v670
      %v747 = vpack.c.b16 %v673, %v672
      %v748 = vpack.c.b16 %v675, %v674
      %v749 = vpack.c.b16 %v677, %v676
      %v750 = vpack.c.b16 %v679, %v678
      %v751 = vpack.c.b16 %v681, %v680
      %v752 = vpack.c.b16 %v683, %v682
      %v753 = vpack.c.b16 %v685, %v684
      %v754 = vpack.c.b16 %v687, %v686
      %v755 = vpack.c.b16 %v689, %v688
      %v756 = vpack.c.b16 %v691, %v690
      %v757 = vpack.c.b16 %v693, %v692
      %v758 = vpack.c.b16 %v695, %v694
      %v759 = vpack.c.b16 %v697, %v696
      %v760 = vpack.c.b16 %v699, %v698
      %v761 = vpack.c.b16 %v701, %v700
      %v762 = vpack.c.b16 %v703, %v702
      %v763 = vpack.c.b16 %v705, %v704
      %v764 = vpack.c.b16 %v707, %v706
      %v765 = vpack.c.b16 %v709, %v708
      %v766 = vpack.c.b16 %v711, %v710
      %v767 = vpack.c.b16 %v713, %v712
      %vm822 = vcmask 785408
      %v824 = vsel %vm822, %v478, 0
      %v827 = vsel %vm822, %v485, 0
      %829 = vmatprep.subr.bf16.mxu0 0
      %830 = vmatpush1.bf16.msra.mxu0 %v714
      %831 = vmatprep.subr.bf16.mxu0 0
      %832 = vmatpush1.bf16.msra.mxu0 %v715
      %833 = vmatprep.subr.bf16.mxu0 0
      %834 = vmatpush1.bf16.msra.mxu0 %v716
      %835 = vmatprep.subr.bf16.mxu0 0
      %836 = vmatpush1.bf16.msra.mxu0 %v717
      %837 = vmatprep.subr.bf16.mxu0 0
      %838 = vmatpush1.bf16.msra.mxu0 %v718
      %839 = vmatprep.subr.bf16.mxu0 0
      %840 = vmatpush1.bf16.msra.mxu0 %v719
      %841 = vmatprep.subr.bf16.mxu0 0
      %842 = vmatpush1.bf16.msra.mxu0 %v720
      %843 = vmatprep.subr.bf16.mxu0 0
      %844 = vmatpush1.bf16.msra.mxu0 %v721
      %845 = vmatprep.subr.bf16.mxu0 0
      %846 = vmatpush1.bf16.msra.mxu0 %v722
      %847 = vmatprep.subr.bf16.mxu0 0
      %848 = vmatpush1.bf16.msra.mxu0 %v723
      %849 = vmatprep.subr.bf16.mxu0 0
      %850 = vmatpush1.bf16.msra.mxu0 %v724
      %851 = vmatprep.subr.bf16.mxu0 0
      %852 = vmatpush1.bf16.msra.mxu0 %v725
      %853 = vmatprep.subr.bf16.mxu0 0
      %854 = vmatpush1.bf16.msra.mxu0 %v726
      %855 = vmatprep.subr.bf16.mxu0 0
      %856 = vmatpush1.bf16.msra.mxu0 %v727
      %857 = vmatprep.subr.bf16.mxu0 0
      %858 = vmatpush1.bf16.msra.mxu0 %v728
      %859 = vmatprep.subr.bf16.mxu0 0
      %860 = vmatpush1.bf16.msra.mxu0 %v729
      %861 = vmatprep.mubr.bf16.mxu0 %v473
      %862 = vmatmul.mubr.bf16.gmra.mrb[0].mxu0 %v472
      %v863 = vpop.f32.mrb[0].mxu0
      %v864 = vadd.f32 %v411, %v863
      %v865 = vpop.f32.mrb[0].mxu0
      %v866 = vpop.f32.mrb[0].mxu0
      %v867 = vadd.f32 %v416, %v866
      %v868 = vpop.f32.mrb[0].mxu0
      %869 = vmatprep.mubr.bf16.mxu0 %v480
      %870 = vmatmul.mubr.bf16.gmra.mrb[0].mxu0 %v479
      %v871 = vpop.f32.mrb[0].mxu0
      %v872 = vadd.f32 %v421, %v871
      %v873 = vpop.f32.mrb[0].mxu0
      %v874 = vpop.f32.mrb[0].mxu0
      %v875 = vadd.f32 %v426, %v874
      %v876 = vpop.f32.mrb[0].mxu0
      %877 = vdwg.mxu0
      %878 = vmatprep.subr.bf16.mxu0 0
      %879 = vmatpush1.bf16.msra.mxu0 %v730
      %880 = vmatprep.subr.bf16.mxu0 0
      %881 = vmatpush1.bf16.msra.mxu0 %v731
      %882 = vmatprep.subr.bf16.mxu0 0
      %883 = vmatpush1.bf16.msra.mxu0 %v732
      %884 = vmatprep.subr.bf16.mxu0 0
      %885 = vmatpush1.bf16.msra.mxu0 %v733
      %886 = vmatprep.subr.bf16.mxu0 0
      %887 = vmatpush1.bf16.msra.mxu0 %v734
      %888 = vmatprep.subr.bf16.mxu0 0
      %889 = vmatpush1.bf16.msra.mxu0 %v735
      %890 = vmatprep.subr.bf16.mxu0 0
      %891 = vmatpush1.bf16.msra.mxu0 %v736
      %892 = vmatprep.subr.bf16.mxu0 0
      %893 = vmatpush1.bf16.msra.mxu0 %v737
      %894 = vmatprep.subr.bf16.mxu0 0
      %895 = vmatpush1.bf16.msra.mxu0 %v738
      %896 = vmatprep.subr.bf16.mxu0 0
      %897 = vmatpush1.bf16.msra.mxu0 %v739
      %898 = vmatprep.subr.bf16.mxu0 0
      %899 = vmatpush1.bf16.msra.mxu0 %v740
      %900 = vmatprep.subr.bf16.mxu0 0
      %901 = vmatpush1.bf16.msra.mxu0 %v741
      %902 = vmatprep.subr.bf16.mxu0 0
      %903 = vmatpush1.bf16.msra.mxu0 %v742
      %904 = vmatprep.subr.bf16.mxu0 0
      %905 = vmatpush1.bf16.msra.mxu0 %v743
      %906 = vmatprep.subr.bf16.mxu0 0
      %907 = vmatpush1.bf16.msra.mxu0 %v744
      %908 = vmatprep.subr.bf16.mxu0 0
      %909 = vmatpush1.bf16.msra.mxu0 %v745
      %910 = vmatprep.mubr.bf16.mxu0 %v475
      %911 = vmatmul.mubr.bf16.gmra.mrb[0].mxu0 %v474
      %v912 = vpop.f32.mrb[0].mxu0
      %v913 = vadd.f32 %v864, %v912
      %v914 = vpop.f32.mrb[0].mxu0
      %v915 = vpop.f32.mrb[0].mxu0
      %v916 = vadd.f32 %v867, %v915
      %v917 = vpop.f32.mrb[0].mxu0
      %918 = vmatprep.mubr.bf16.mxu0 %v482
      %919 = vmatmul.mubr.bf16.gmra.mrb[0].mxu0 %v481
      %v920 = vpop.f32.mrb[0].mxu0
      %v921 = vadd.f32 %v872, %v920
      %v922 = vpop.f32.mrb[0].mxu0
      %v923 = vpop.f32.mrb[0].mxu0
      %v924 = vadd.f32 %v875, %v923
      %v925 = vpop.f32.mrb[0].mxu0
      %926 = vdwg.mxu0
      %927 = vmatprep.subr.bf16.mxu0 0
      %928 = vmatpush1.bf16.msra.mxu0 %v746
      %929 = vmatprep.subr.bf16.mxu0 0
      %930 = vmatpush1.bf16.msra.mxu0 %v747
      %931 = vmatprep.subr.bf16.mxu0 0
      %932 = vmatpush1.bf16.msra.mxu0 %v748
      %933 = vmatprep.subr.bf16.mxu0 0
      %934 = vmatpush1.bf16.msra.mxu0 %v749
      %935 = vmatprep.subr.bf16.mxu0 0
      %936 = vmatpush1.bf16.msra.mxu0 %v750
      %937 = vmatprep.subr.bf16.mxu0 0
      %938 = vmatpush1.bf16.msra.mxu0 %v751
      %939 = vmatprep.subr.bf16.mxu0 0
      %940 = vmatpush1.bf16.msra.mxu0 %v752
      %941 = vmatprep.subr.bf16.mxu0 0
      %942 = vmatpush1.bf16.msra.mxu0 %v753
      %943 = vmatprep.subr.bf16.mxu0 0
      %944 = vmatpush1.bf16.msra.mxu0 %v754
      %945 = vmatprep.subr.bf16.mxu0 0
      %946 = vmatpush1.bf16.msra.mxu0 %v755
      %947 = vmatprep.subr.bf16.mxu0 0
      %948 = vmatpush1.bf16.msra.mxu0 %v756
      %949 = vmatprep.subr.bf16.mxu0 0
      %950 = vmatpush1.bf16.msra.mxu0 %v757
      %951 = vmatprep.subr.bf16.mxu0 0
      %952 = vmatpush1.bf16.msra.mxu0 %v758
      %953 = vmatprep.subr.bf16.mxu0 0
      %954 = vmatpush1.bf16.msra.mxu0 %v759
      %955 = vmatprep.subr.bf16.mxu0 0
      %956 = vmatpush1.bf16.msra.mxu0 %v760
      %957 = vmatprep.subr.bf16.mxu0 0
      %958 = vmatpush1.bf16.msra.mxu0 %v761
      %959 = vmatprep.mubr.bf16.mxu0 %v477
      %960 = vmatmul.mubr.bf16.gmra.mrb[0].mxu0 %v476
      %v961 = vpop.f32.mrb[0].mxu0
      %v962 = vadd.f32 %v913, %v961
      %v963 = vpop.f32.mrb[0].mxu0
      %v964 = vpop.f32.mrb[0].mxu0
      %v965 = vadd.f32 %v916, %v964
      %v966 = vpop.f32.mrb[0].mxu0
      %967 = vmatprep.mubr.bf16.mxu0 %v484
      %968 = vmatmul.mubr.bf16.gmra.mrb[0].mxu0 %v483
      %v969 = vpop.f32.mrb[0].mxu0
      %v970 = vadd.f32 %v921, %v969
      %v971 = vpop.f32.mrb[0].mxu0
      %v972 = vpop.f32.mrb[0].mxu0
      %v973 = vadd.f32 %v924, %v972
      %v974 = vpop.f32.mrb[0].mxu0
      %975 = vdwg.mxu0
      %976 = vmatprep.subr.bf16.mxu0 0
      %977 = vmatpush1.bf16.msra.mxu0 %v762
      %978 = vmatprep.subr.bf16.mxu0 0
      %979 = vmatpush1.bf16.msra.mxu0 %v763
      %980 = vmatprep.subr.bf16.mxu0 0
      %981 = vmatpush1.bf16.msra.mxu0 %v764
      %982 = vmatprep.subr.bf16.mxu0 0
      %983 = vmatpush1.bf16.msra.mxu0 %v765
      %984 = vmatprep.subr.bf16.mxu0 0
      %985 = vmatpush1.bf16.msra.mxu0 %v766
      %986 = vmatprep.subr.bf16.mxu0 0
      %987 = vmatpush1.bf16.msra.mxu0 %v767
      %988 = vmatprep.subr.bf16.mxu0 0
      %989 = vmatpush1.bf16.msra.mxu0 0
      %990 = vmatprep.subr.bf16.mxu0 0
      %991 = vmatpush1.bf16.msra.mxu0 0
      %992 = vmatprep.subr.bf16.mxu0 0
      %993 = vmatpush1.bf16.msra.mxu0 0
      %994 = vmatprep.subr.bf16.mxu0 0
      %995 = vmatpush1.bf16.msra.mxu0 0
      %996 = vmatprep.subr.bf16.mxu0 0
      %997 = vmatpush1.bf16.msra.mxu0 0
      %998 = vmatprep.subr.bf16.mxu0 0
      %999 = vmatpush1.bf16.msra.mxu0 0
      %1000 = vmatprep.subr.bf16.mxu0 0
      %1001 = vmatpush1.bf16.msra.mxu0 0
      %1002 = vmatprep.subr.bf16.mxu0 0
      %1003 = vmatpush1.bf16.msra.mxu0 0
      %1004 = vmatprep.subr.bf16.mxu0 0
      %1005 = vmatpush1.bf16.msra.mxu0 0
      %1006 = vmatprep.subr.bf16.mxu0 0
      %1007 = vmatpush1.bf16.msra.mxu0 0
      %1008 = vmatprep.mubr.bf16.mxu0 0
      %1009 = vmatmul.mubr.bf16.gmra.mrb[0].mxu0 %v824
      %v1010 = vpop.f32.mrb[0].mxu0
      %v1011 = vadd.f32 %v962, %v1010
      %v1012 = vpop.f32.mrb[0].mxu0
      %v1013 = vpop.f32.mrb[0].mxu0
      %v1014 = vadd.f32 %v965, %v1013
      %v1015 = vpop.f32.mrb[0].mxu0
      %1016 = vmatprep.mubr.bf16.mxu0 0
      %1017 = vmatmul.mubr.bf16.gmra.mrb[0].mxu0 %v827
      %v1018 = vpop.f32.mrb[0].mxu0
      %v1019 = vadd.f32 %v970, %v1018
      %v1020 = vpop.f32.mrb[0].mxu0
      %v1021 = vpop.f32.mrb[0].mxu0
      %v1022 = vadd.f32 %v973, %v1021
      %v1023 = vpop.f32.mrb[0].mxu0
      %1024 = vdwg.mxu0
      %vm1025 = vcmask 64512
      %v1026 = vsel %vm1025, %v1011, 0.0
      %1027 = vadd.xlane.f32.xlu0 %v1026
      %v1028 = vpop.xlane.xlu0 %1027
      %v1029 = vsel %vm1025, %v1014, 0.0
      %1030 = vadd.xlane.f32.xlu0 %v1029
      %v1031 = vpop.xlane.xlu0 %1030
      %v1032 = vsel %vm1025, %v1019, 0.0
      %1033 = vadd.xlane.f32.xlu0 %v1032
      %v1034 = vpop.xlane.xlu0 %1033
      %v1035 = vsel %vm1025, %v1022, 0.0
      %1036 = vadd.xlane.f32.xlu0 %v1035
      %v1037 = vpop.xlane.xlu0 %1036
      %v1038 = vmul.f32 %v1011, %v1011
      %v1039 = vmul.f32 %v1014, %v1014
      %v1040 = vmul.f32 %v1019, %v1019
      %v1041 = vmul.f32 %v1022, %v1022
      %v1042 = vsel %vm1025, %v1038, 0.0
      %1043 = vadd.xlane.f32.xlu0 %v1042
      %v1044 = vpop.xlane.xlu0 %1043
      %v1045 = vsel %vm1025, %v1039, 0.0
      %1046 = vadd.xlane.f32.xlu0 %v1045
      %v1047 = vpop.xlane.xlu0 %1046
      %v1048 = vsel %vm1025, %v1040, 0.0
      %1049 = vadd.xlane.f32.xlu0 %v1048
      %v1050 = vpop.xlane.xlu0 %1049
      %v1051 = vsel %vm1025, %v1041, 0.0
      %1052 = vadd.xlane.f32.xlu0 %v1051
      %v1053 = vpop.xlane.xlu0 %1052
      %v1054 = vld [vmem:[%s5] sm:$0xff]
      %vm1055 = vcmask 261120
      %v1057 = vsel %vm1055, %v1054, 0
      %1059 = vmatprep.subr.mxu0 0.0
      %1060 = vmatpush1.msra.mxu0 %v1028
      %1061 = vmatprep.subr.mxu0 0.0
      %1062 = vmatpush1.msra.mxu0 %v1031
      %1063 = vmatprep.subr.mxu0 0.0
      %1064 = vmatpush1.msra.mxu0 %v1034
      %1065 = vmatprep.subr.mxu0 0.0
      %1066 = vmatpush1.msra.mxu0 %v1037
      %1067 = vmatprep.subr.mxu0 0.0
      %1068 = vmatpush1.msra.mxu0 0.0
      %1069 = vmatprep.subr.mxu0 0.0
      %1070 = vmatpush1.msra.mxu0 0.0
      %1071 = vmatprep.subr.mxu0 0.0
      %1072 = vmatpush1.msra.mxu0 0.0
      %1073 = vmatprep.subr.mxu0 0.0
      %1074 = vmatpush1.msra.mxu0 0.0
      %1075 = vmatprep.subr.mxu0 0.0
      %1076 = vmatpush1.msra.mxu0 0.0
      %1077 = vmatprep.subr.mxu0 0.0
      %1078 = vmatpush1.msra.mxu0 0.0
      %1079 = vmatprep.subr.mxu0 0.0
      %1080 = vmatpush1.msra.mxu0 0.0
      %1081 = vmatprep.subr.mxu0 0.0
      %1082 = vmatpush1.msra.mxu0 0.0
      %1083 = vmatprep.subr.mxu0 0.0
      %1084 = vmatpush1.msra.mxu0 0.0
      %1085 = vmatprep.subr.mxu0 0.0
      %1086 = vmatpush1.msra.mxu0 0.0
      %1087 = vmatprep.subr.mxu0 0.0
      %1088 = vmatpush1.msra.mxu0 0.0
      %1089 = vmatprep.subr.mxu0 0.0
      %1090 = vmatpush1.msra.mxu0 0.0
      %1091 = vmatprep.subr.mxu0 0.0
      %1092 = vmatpush1.msra.mxu0 0.0
      %1093 = vmatprep.subr.mxu0 0.0
      %1094 = vmatpush1.msra.mxu0 0.0
      %1095 = vmatprep.subr.mxu0 0.0
      %1096 = vmatpush1.msra.mxu0 0.0
      %1097 = vmatprep.subr.mxu0 0.0
      %1098 = vmatpush1.msra.mxu0 0.0
      %1099 = vmatprep.subr.mxu0 0.0
      %1100 = vmatpush1.msra.mxu0 0.0
      %1101 = vmatprep.subr.mxu0 0.0
      %1102 = vmatpush1.msra.mxu0 0.0
      %1103 = vmatprep.subr.mxu0 0.0
      %1104 = vmatpush1.msra.mxu0 0.0
      %1105 = vmatprep.subr.mxu0 0.0
      %1106 = vmatpush1.msra.mxu0 0.0
      %1107 = vmatprep.subr.mxu0 0.0
      %1108 = vmatpush1.msra.mxu0 0.0
      %1109 = vmatprep.subr.mxu0 0.0
      %1110 = vmatpush1.msra.mxu0 0.0
      %1111 = vmatprep.subr.mxu0 0.0
      %1112 = vmatpush1.msra.mxu0 0.0
      %1113 = vmatprep.subr.mxu0 0.0
      %1114 = vmatpush1.msra.mxu0 0.0
      %1115 = vmatprep.subr.mxu0 0.0
      %1116 = vmatpush1.msra.mxu0 0.0
      %1117 = vmatprep.subr.mxu0 0.0
      %1118 = vmatpush1.msra.mxu0 0.0
      %1119 = vmatprep.subr.mxu0 0.0
      %1120 = vmatpush1.msra.mxu0 0.0
      %1121 = vmatprep.subr.mxu0 0.0
      %1122 = vmatpush1.msra.mxu0 0.0
      %1123 = vmatprep.mubr.f32.mxu0 0.0
      %1124 = vmatmul.mubr.f32.gmra.mrb[0].mxu0 %v1057
      %v1125 = vpop.f32.mrb[0].mxu0
      %v1126 = vadd.f32 0.0, %v1125
      %v1127 = vpop.f32.mrb[0].mxu0
      %1128 = vdwg.mxu0
      %1129 = vmatprep.subr.mxu0 0.0
      %1130 = vmatpush1.msra.mxu0 %v1044
      %1131 = vmatprep.subr.mxu0 0.0
      %1132 = vmatpush1.msra.mxu0 %v1047
      %1133 = vmatprep.subr.mxu0 0.0
      %1134 = vmatpush1.msra.mxu0 %v1050
      %1135 = vmatprep.subr.mxu0 0.0
      %1136 = vmatpush1.msra.mxu0 %v1053
      %1137 = vmatprep.subr.mxu0 0.0
      %1138 = vmatpush1.msra.mxu0 0.0
      %1139 = vmatprep.subr.mxu0 0.0
      %1140 = vmatpush1.msra.mxu0 0.0
      %1141 = vmatprep.subr.mxu0 0.0
      %1142 = vmatpush1.msra.mxu0 0.0
      %1143 = vmatprep.subr.mxu0 0.0
      %1144 = vmatpush1.msra.mxu0 0.0
      %1145 = vmatprep.subr.mxu0 0.0
      %1146 = vmatpush1.msra.mxu0 0.0
      %1147 = vmatprep.subr.mxu0 0.0
      %1148 = vmatpush1.msra.mxu0 0.0
      %1149 = vmatprep.subr.mxu0 0.0
      %1150 = vmatpush1.msra.mxu0 0.0
      %1151 = vmatprep.subr.mxu0 0.0
      %1152 = vmatpush1.msra.mxu0 0.0
      %1153 = vmatprep.subr.mxu0 0.0
      %1154 = vmatpush1.msra.mxu0 0.0
      %1155 = vmatprep.subr.mxu0 0.0
      %1156 = vmatpush1.msra.mxu0 0.0
      %1157 = vmatprep.subr.mxu0 0.0
      %1158 = vmatpush1.msra.mxu0 0.0
      %1159 = vmatprep.subr.mxu0 0.0
      %1160 = vmatpush1.msra.mxu0 0.0
      %1161 = vmatprep.subr.mxu0 0.0
      %1162 = vmatpush1.msra.mxu0 0.0
      %1163 = vmatprep.subr.mxu0 0.0
      %1164 = vmatpush1.msra.mxu0 0.0
      %1165 = vmatprep.subr.mxu0 0.0
      %1166 = vmatpush1.msra.mxu0 0.0
      %1167 = vmatprep.subr.mxu0 0.0
      %1168 = vmatpush1.msra.mxu0 0.0
      %1169 = vmatprep.subr.mxu0 0.0
      %1170 = vmatpush1.msra.mxu0 0.0
      %1171 = vmatprep.subr.mxu0 0.0
      %1172 = vmatpush1.msra.mxu0 0.0
      %1173 = vmatprep.subr.mxu0 0.0
      %1174 = vmatpush1.msra.mxu0 0.0
      %1175 = vmatprep.subr.mxu0 0.0
      %1176 = vmatpush1.msra.mxu0 0.0
      %1177 = vmatprep.subr.mxu0 0.0
      %1178 = vmatpush1.msra.mxu0 0.0
      %1179 = vmatprep.subr.mxu0 0.0
      %1180 = vmatpush1.msra.mxu0 0.0
      %1181 = vmatprep.subr.mxu0 0.0
      %1182 = vmatpush1.msra.mxu0 0.0
      %1183 = vmatprep.subr.mxu0 0.0
      %1184 = vmatpush1.msra.mxu0 0.0
      %1185 = vmatprep.subr.mxu0 0.0
      %1186 = vmatpush1.msra.mxu0 0.0
      %1187 = vmatprep.subr.mxu0 0.0
      %1188 = vmatpush1.msra.mxu0 0.0
      %1189 = vmatprep.subr.mxu0 0.0
      %1190 = vmatpush1.msra.mxu0 0.0
      %1191 = vmatprep.subr.mxu0 0.0
      %1192 = vmatpush1.msra.mxu0 0.0
      %1193 = vmatprep.mubr.f32.mxu0 0.0
      %1194 = vmatmul.mubr.f32.gmra.mrb[0].mxu0 %v1057
      %v1195 = vpop.f32.mrb[0].mxu0
      %v1196 = vadd.f32 0.0, %v1195
      %v1197 = vpop.f32.mrb[0].mxu0
      %1198 = vdwg.mxu0
      %v1199 = vld [vmem:[%s6] sm:$0xff]
      %v1200 = vld [vmem:[%s6 + $0x8] sm:$0xff]
      %v1201 = vld [vmem:[%s6 + $0x10] sm:$0xff]
      %v1202 = vld [vmem:[%s6 + $0x18] sm:$0xff]
      %v1204 = vsel %vm1025, %v1199, 0
      %v1207 = vsel %vm1025, %v1200, 0
      %v1210 = vsel %vm1025, %v1201, 0
      %v1213 = vsel %vm1025, %v1202, 0
      %1215 = vmatprep.subr.mxu0 0.0
      %1216 = vmatpush1.msra.mxu0 %v1126
      %1217 = vmatprep.subr.mxu0 0.0
      %1218 = vmatpush1.msra.mxu0 0.0
      %1219 = vmatprep.subr.mxu0 0.0
      %1220 = vmatpush1.msra.mxu0 0.0
      %1221 = vmatprep.subr.mxu0 0.0
      %1222 = vmatpush1.msra.mxu0 0.0
      %1223 = vmatprep.subr.mxu0 0.0
      %1224 = vmatpush1.msra.mxu0 0.0
      %1225 = vmatprep.subr.mxu0 0.0
      %1226 = vmatpush1.msra.mxu0 0.0
      %1227 = vmatprep.subr.mxu0 0.0
      %1228 = vmatpush1.msra.mxu0 0.0
      %1229 = vmatprep.subr.mxu0 0.0
      %1230 = vmatpush1.msra.mxu0 0.0
      %1231 = vmatprep.subr.mxu0 0.0
      %1232 = vmatpush1.msra.mxu0 0.0
      %1233 = vmatprep.subr.mxu0 0.0
      %1234 = vmatpush1.msra.mxu0 0.0
      %1235 = vmatprep.subr.mxu0 0.0
      %1236 = vmatpush1.msra.mxu0 0.0
      %1237 = vmatprep.subr.mxu0 0.0
      %1238 = vmatpush1.msra.mxu0 0.0
      %1239 = vmatprep.subr.mxu0 0.0
      %1240 = vmatpush1.msra.mxu0 0.0
      %1241 = vmatprep.subr.mxu0 0.0
      %1242 = vmatpush1.msra.mxu0 0.0
      %1243 = vmatprep.subr.mxu0 0.0
      %1244 = vmatpush1.msra.mxu0 0.0
      %1245 = vmatprep.subr.mxu0 0.0
      %1246 = vmatpush1.msra.mxu0 0.0
      %1247 = vmatprep.subr.mxu0 0.0
      %1248 = vmatpush1.msra.mxu0 0.0
      %1249 = vmatprep.subr.mxu0 0.0
      %1250 = vmatpush1.msra.mxu0 0.0
      %1251 = vmatprep.subr.mxu0 0.0
      %1252 = vmatpush1.msra.mxu0 0.0
      %1253 = vmatprep.subr.mxu0 0.0
      %1254 = vmatpush1.msra.mxu0 0.0
      %1255 = vmatprep.subr.mxu0 0.0
      %1256 = vmatpush1.msra.mxu0 0.0
      %1257 = vmatprep.subr.mxu0 0.0
      %1258 = vmatpush1.msra.mxu0 0.0
      %1259 = vmatprep.subr.mxu0 0.0
      %1260 = vmatpush1.msra.mxu0 0.0
      %1261 = vmatprep.subr.mxu0 0.0
      %1262 = vmatpush1.msra.mxu0 0.0
      %1263 = vmatprep.subr.mxu0 0.0
      %1264 = vmatpush1.msra.mxu0 0.0
      %1265 = vmatprep.subr.mxu0 0.0
      %1266 = vmatpush1.msra.mxu0 0.0
      %1267 = vmatprep.subr.mxu0 0.0
      %1268 = vmatpush1.msra.mxu0 0.0
      %1269 = vmatprep.subr.mxu0 0.0
      %1270 = vmatpush1.msra.mxu0 0.0
      %1271 = vmatprep.subr.mxu0 0.0
      %1272 = vmatpush1.msra.mxu0 0.0
      %1273 = vmatprep.subr.mxu0 0.0
      %1274 = vmatpush1.msra.mxu0 0.0
      %1275 = vmatprep.subr.mxu0 0.0
      %1276 = vmatpush1.msra.mxu0 0.0
      %1277 = vmatprep.subr.mxu0 0.0
      %1278 = vmatpush1.msra.mxu0 0.0
      %1279 = vmatprep.mubr.f32.mxu0 0.0
      %1280 = vmatmul.mubr.f32.gmra.mrb[0].mxu0 %v1204
      %v1281 = vpop.f32.mrb[0].mxu0
      %v1282 = vadd.f32 0.0, %v1281
      %v1283 = vpop.f32.mrb[0].mxu0
      %1284 = vmatprep.mubr.f32.mxu0 0.0
      %1285 = vmatmul.mubr.f32.gmra.mrb[0].mxu0 %v1207
      %v1286 = vpop.f32.mrb[0].mxu0
      %v1287 = vadd.f32 0.0, %v1286
      %v1288 = vpop.f32.mrb[0].mxu0
      %1289 = vmatprep.mubr.f32.mxu0 0.0
      %1290 = vmatmul.mubr.f32.gmra.mrb[0].mxu0 %v1210
      %v1291 = vpop.f32.mrb[0].mxu0
      %v1292 = vadd.f32 0.0, %v1291
      %v1293 = vpop.f32.mrb[0].mxu0
      %1294 = vmatprep.mubr.f32.mxu0 0.0
      %1295 = vmatmul.mubr.f32.gmra.mrb[0].mxu0 %v1213
      %v1296 = vpop.f32.mrb[0].mxu0
      %v1297 = vadd.f32 0.0, %v1296
      %v1298 = vpop.f32.mrb[0].mxu0
      %1299 = vdwg.mxu0
      %1300 = vmatprep.subr.mxu0 0.0
      %1301 = vmatpush1.msra.mxu0 %v1196
      %1302 = vmatprep.subr.mxu0 0.0
      %1303 = vmatpush1.msra.mxu0 0.0
      %1304 = vmatprep.subr.mxu0 0.0
      %1305 = vmatpush1.msra.mxu0 0.0
      %1306 = vmatprep.subr.mxu0 0.0
      %1307 = vmatpush1.msra.mxu0 0.0
      %1308 = vmatprep.subr.mxu0 0.0
      %1309 = vmatpush1.msra.mxu0 0.0
      %1310 = vmatprep.subr.mxu0 0.0
      %1311 = vmatpush1.msra.mxu0 0.0
      %1312 = vmatprep.subr.mxu0 0.0
      %1313 = vmatpush1.msra.mxu0 0.0
      %1314 = vmatprep.subr.mxu0 0.0
      %1315 = vmatpush1.msra.mxu0 0.0
      %1316 = vmatprep.subr.mxu0 0.0
      %1317 = vmatpush1.msra.mxu0 0.0
      %1318 = vmatprep.subr.mxu0 0.0
      %1319 = vmatpush1.msra.mxu0 0.0
      %1320 = vmatprep.subr.mxu0 0.0
      %1321 = vmatpush1.msra.mxu0 0.0
      %1322 = vmatprep.subr.mxu0 0.0
      %1323 = vmatpush1.msra.mxu0 0.0
      %1324 = vmatprep.subr.mxu0 0.0
      %1325 = vmatpush1.msra.mxu0 0.0
      %1326 = vmatprep.subr.mxu0 0.0
      %1327 = vmatpush1.msra.mxu0 0.0
      %1328 = vmatprep.subr.mxu0 0.0
      %1329 = vmatpush1.msra.mxu0 0.0
      %1330 = vmatprep.subr.mxu0 0.0
      %1331 = vmatpush1.msra.mxu0 0.0
      %1332 = vmatprep.subr.mxu0 0.0
      %1333 = vmatpush1.msra.mxu0 0.0
      %1334 = vmatprep.subr.mxu0 0.0
      %1335 = vmatpush1.msra.mxu0 0.0
      %1336 = vmatprep.subr.mxu0 0.0
      %1337 = vmatpush1.msra.mxu0 0.0
      %1338 = vmatprep.subr.mxu0 0.0
      %1339 = vmatpush1.msra.mxu0 0.0
      %1340 = vmatprep.subr.mxu0 0.0
      %1341 = vmatpush1.msra.mxu0 0.0
      %1342 = vmatprep.subr.mxu0 0.0
      %1343 = vmatpush1.msra.mxu0 0.0
      %1344 = vmatprep.subr.mxu0 0.0
      %1345 = vmatpush1.msra.mxu0 0.0
      %1346 = vmatprep.subr.mxu0 0.0
      %1347 = vmatpush1.msra.mxu0 0.0
      %1348 = vmatprep.subr.mxu0 0.0
      %1349 = vmatpush1.msra.mxu0 0.0
      %1350 = vmatprep.subr.mxu0 0.0
      %1351 = vmatpush1.msra.mxu0 0.0
      %1352 = vmatprep.subr.mxu0 0.0
      %1353 = vmatpush1.msra.mxu0 0.0
      %1354 = vmatprep.subr.mxu0 0.0
      %1355 = vmatpush1.msra.mxu0 0.0
      %1356 = vmatprep.subr.mxu0 0.0
      %1357 = vmatpush1.msra.mxu0 0.0
      %1358 = vmatprep.subr.mxu0 0.0
      %1359 = vmatpush1.msra.mxu0 0.0
      %1360 = vmatprep.subr.mxu0 0.0
      %1361 = vmatpush1.msra.mxu0 0.0
      %1362 = vmatprep.subr.mxu0 0.0
      %1363 = vmatpush1.msra.mxu0 0.0
      %1364 = vmatprep.mubr.f32.mxu0 0.0
      %1365 = vmatmul.mubr.f32.gmra.mrb[0].mxu0 %v1204
      %v1366 = vpop.f32.mrb[0].mxu0
      %v1367 = vadd.f32 0.0, %v1366
      %v1368 = vpop.f32.mrb[0].mxu0
      %1369 = vmatprep.mubr.f32.mxu0 0.0
      %1370 = vmatmul.mubr.f32.gmra.mrb[0].mxu0 %v1207
      %v1371 = vpop.f32.mrb[0].mxu0
      %v1372 = vadd.f32 0.0, %v1371
      %v1373 = vpop.f32.mrb[0].mxu0
      %1374 = vmatprep.mubr.f32.mxu0 0.0
      %1375 = vmatmul.mubr.f32.gmra.mrb[0].mxu0 %v1210
      %v1376 = vpop.f32.mrb[0].mxu0
      %v1377 = vadd.f32 0.0, %v1376
      %v1378 = vpop.f32.mrb[0].mxu0
      %1379 = vmatprep.mubr.f32.mxu0 0.0
      %1380 = vmatmul.mubr.f32.gmra.mrb[0].mxu0 %v1213
      %v1381 = vpop.f32.mrb[0].mxu0
      %v1382 = vadd.f32 0.0, %v1381
      %v1383 = vpop.f32.mrb[0].mxu0
      %1384 = vdwg.mxu0
      %v1385 = vmul.f32 %v1282, %v1282
      %v1386 = vmul.f32 %v1287, %v1287
      %v1387 = vmul.f32 %v1292, %v1292
      %v1388 = vmul.f32 %v1297, %v1297
      %v1389 = vsub.f32 %v1367, %v1385
      %v1390 = vsub.f32 %v1372, %v1386
      %v1391 = vsub.f32 %v1377, %v1387
      %v1392 = vsub.f32 %v1382, %v1388
      %v1393 = vmax.f32 %v1389, 0.0
      %v1394 = vmax.f32 %v1390, 0.0
      %v1395 = vmax.f32 %v1391, 0.0
      %v1396 = vmax.f32 %v1392, 0.0
      %1398 = vset.pattern.permute.xlu0 0
      %1399 = vperm.xlu0 %1398, %v1282
      %v1400 = vpop.permute.xlu0 %1399
      %1403 = vset.pattern.permute.xlu0 0
      %1404 = vperm.xlu0 %1403, %v1287
      %v1405 = vpop.permute.xlu0 %1404
      %1408 = vset.pattern.permute.xlu0 0
      %1409 = vperm.xlu0 %1408, %v1292
      %v1410 = vpop.permute.xlu0 %1409
      %1413 = vset.pattern.permute.xlu0 0
      %1414 = vperm.xlu0 %1413, %v1297
      %v1415 = vpop.permute.xlu0 %1414
      %v1417 = vsub.f32 %v1011, %v1400
      %v1418 = vsub.f32 %v1014, %v1405
      %v1419 = vsub.f32 %v1019, %v1410
      %v1420 = vsub.f32 %v1022, %v1415
      %v1421 = vadd.f32 %v1393, 1e-05
      %v1422 = vadd.f32 %v1394, 1e-05
      %v1423 = vadd.f32 %v1395, 1e-05
      %v1424 = vadd.f32 %v1396, 1e-05
      %v1425 = vrsqrt.pop %v1421
      %v1426 = vrsqrt.pop %v1422
      %v1427 = vrsqrt.pop %v1423
      %v1428 = vrsqrt.pop %v1424
      %1430 = vset.pattern.permute.xlu0 0
      %1431 = vperm.xlu0 %1430, %v1425
      %v1432 = vpop.permute.xlu0 %1431
      %1435 = vset.pattern.permute.xlu0 0
      %1436 = vperm.xlu0 %1435, %v1426
      %v1437 = vpop.permute.xlu0 %1436
      %1440 = vset.pattern.permute.xlu0 0
      %1441 = vperm.xlu0 %1440, %v1427
      %v1442 = vpop.permute.xlu0 %1441
      %1445 = vset.pattern.permute.xlu0 0
      %1446 = vperm.xlu0 %1445, %v1428
      %v1447 = vpop.permute.xlu0 %1446
      %v1449 = vmul.f32 %v1417, %v1432
      %v1450 = vmul.f32 %v1418, %v1437
      %v1451 = vmul.f32 %v1419, %v1442
      %v1452 = vmul.f32 %v1420, %v1447
      %v1453 = vld [vmem:[%s3] sm:$0xff]
      %v1454 = vld [vmem:[%s3 + $0x8] sm:$0xff]
      %v1455 = vld [vmem:[%s3 + $0x10] sm:$0xff]
      %v1456 = vld [vmem:[%s3 + $0x18] sm:$0xff]
      %1458 = vset.pattern.permute.xlu0 0
      %1459 = vperm.xlu0 %1458, %v1453
      %v1460 = vpop.permute.xlu0 %1459
      %1463 = vset.pattern.permute.xlu0 0
      %1464 = vperm.xlu0 %1463, %v1454
      %v1465 = vpop.permute.xlu0 %1464
      %1468 = vset.pattern.permute.xlu0 0
      %1469 = vperm.xlu0 %1468, %v1455
      %v1470 = vpop.permute.xlu0 %1469
      %1473 = vset.pattern.permute.xlu0 0
      %1474 = vperm.xlu0 %1473, %v1456
      %v1475 = vpop.permute.xlu0 %1474
      %v1477 = vmul.f32 %v1449, %v1460
      %v1478 = vmul.f32 %v1450, %v1465
      %v1479 = vmul.f32 %v1451, %v1470
      %v1480 = vmul.f32 %v1452, %v1475
      %v1481 = vld [vmem:[%s4] sm:$0xff]
      %v1482 = vld [vmem:[%s4 + $0x8] sm:$0xff]
      %v1483 = vld [vmem:[%s4 + $0x10] sm:$0xff]
      %v1484 = vld [vmem:[%s4 + $0x18] sm:$0xff]
      %1486 = vset.pattern.permute.xlu0 0
      %1487 = vperm.xlu0 %1486, %v1481
      %v1488 = vpop.permute.xlu0 %1487
      %1491 = vset.pattern.permute.xlu0 0
      %1492 = vperm.xlu0 %1491, %v1482
      %v1493 = vpop.permute.xlu0 %1492
      %1496 = vset.pattern.permute.xlu0 0
      %1497 = vperm.xlu0 %1496, %v1483
      %v1498 = vpop.permute.xlu0 %1497
      %1501 = vset.pattern.permute.xlu0 0
      %1502 = vperm.xlu0 %1501, %v1484
      %v1503 = vpop.permute.xlu0 %1502
      %v1505 = vadd.f32 %v1477, %v1488
      %v1506 = vadd.f32 %v1478, %v1493
      %v1507 = vadd.f32 %v1479, %v1498
      %v1508 = vadd.f32 %v1480, %v1503
      %v1509 = vmax.f32 %v1505, 0.0
      %v1510 = vmax.f32 %v1506, 0.0
      %v1511 = vmax.f32 %v1507, 0.0
      %v1512 = vmax.f32 %v1508, 0.0
      %1513 = vst.msk [vmem:[%s278] sm:$0xff] %vm1025, %v1509
      %1514 = vst.msk [vmem:[%s278 + $0x8] sm:$0xff] %vm1025, %v1510
      %1515 = vst.msk [vmem:[%s278 + $0x10] sm:$0xff] %vm1025, %v1511
      %1516 = vst.msk [vmem:[%s278 + $0x18] sm:$0xff] %vm1025, %v1512
      %p1517 = scmp.lt.s32.totalorder %s18, 1
      %s1518 = scalar_select %p1517, %s18, 1
      %s1519 = smul.addr %s1518, 4
      %s1520 = smul.addr %s1519, 8
      %s1521 = scalar_lea.vmem %s7, %s1520
      // Predicated region
      $region49: #{stereonet_forward.16} parent=47 // pred_check
        %p1522 = pneg %p188
      $region50: #{stereonet_forward.16} parent=47 // pred_check_branch
        %1524 = sbr.rel (%p1522) target = $region52
      $region51: #{stereonet_forward.16} parent=47 // pred_region
        _
      $region52: #{stereonet_forward.16} parent=47 // pred_fallthru
        _
    $region48: #{stereonet_forward.16} parent=5 // pred_fallthru
      _
    %p1525 = scmp.le.s32.totalorder 2, %s13
    // Predicated region
    $region53: #{stereonet_forward.16} parent=5 // pred_check
      %p1526 = pneg %p1525
    $region54: #{stereonet_forward.16} parent=5 // pred_check_branch
      %1528 = sbr.rel (%p1526) target = $region56
    $region55: #{stereonet_forward.16} parent=5 // pred_region
      %s1529 = ssub.s32 %s13, 2
      // Predicated region
      $region57: #{stereonet_forward.16} parent=55 // pred_check
        %p1530 = pneg %p194
      $region58: #{stereonet_forward.16} parent=55 // pred_check_branch
        %1532 = sbr.rel (%p1530) target = $region60
      $region59: #{stereonet_forward.16} parent=55 // pred_region
        %p1533 = scmp.lt.s32.totalorder %s19, 1
        %s1534 = scalar_select %p1533, %s19, 1
        %s1535 = smul.addr %s1534, 4
        %s1536 = smul.addr %s1535, 8
        %s1537 = scalar_lea.vmem %s7, %s1536
      $region60: #{stereonet_forward.16} parent=55 // pred_fallthru
        _
    $region56: #{stereonet_forward.16} parent=5 // pred_fallthru
      _
  $region6: #{stereonet_forward.16} parent=0 // loop_footer
    %s17 = sadd.s32 1, %s13
  $region7: #{stereonet_forward.16} parent=0 // loop_footer_branch
    %12 = sbr.rel target = $region3
  $region8: #{stereonet_forward.16} parent=0 // loop_exit
    _

// kernel: tile.23
$region0: #{tile.23}
  #allocation0 [shape = 's32[1]{0}', space=sflag, size = 0x4, scoped, tag = 'scoped memory for tile.23']
  %s0 = inlined_call_operand.vmem [shape: f32[16], index: 0, kind: input, shape index: {}]
  %s1 = inlined_call_operand.vmem [shape: f32[8,16], index: 1, kind: output, shape index: {}]
  // Predicated region
  $region2: #{tile.23} parent=0 // pred_check
    _
  $region3: #{tile.23} parent=0 // pred_check_branch
    %3 = sbr.rel (0) target = $region5
  $region4: #{tile.23} parent=0 // pred_region
    _
  $region5: #{tile.23} parent=0 // pred_fallthru
    _
  %v4 = vld [vmem:[%s0] ss:$0 sm:$0xff]
  %5 = vst [vmem:[%s1] sm:$0xff] %v4

// kernel: tile.0
$region0: #{tile.0}
  %s0 = inlined_call_operand.vmem [shape: f32[8,16], index: 0, kind: input, shape index: {}]
  %s1 = inlined_call_operand.vmem [shape: f32[128,1], index: 1, kind: output, shape index: {}]
  %v2 = vld [vmem:[%s0] sm:$0xff]
  %vm3 = vcmask 7168
  %4 = vst.msk [vmem:[%s1] ss:$16 sm:$0x3] %vm3, %v2
  %5 = vst.msk [vmem:[%s1] ss:$16 sm:$0xc] %vm3, %v2
  %6 = vst.msk [vmem:[%s1] ss:$16 sm:$0x30] %vm3, %v2
  %7 = vst.msk [vmem:[%s1] ss:$16 sm:$0xc0] %vm3, %v2
  %v8 = vld [vmem:[%s0] sm:$0xff]
  %9 = vrot.lane.b32.xlu0 %v8, 127
  %v10 = vpop.permute.xlu0 %9
  %vm11 = vcmask 7168
  %s12 = scalar_lea.vmem %s1, 1
  %13 = vst.msk [vmem:[%s12] ss:$16 sm:$0x3] %vm11, %v10
  %s14 = scalar_lea.vmem %s1, 1
  %15 = vst.msk [vmem:[%s14] ss:$16 sm:$0xc] %vm11, %v10
  %s16 = scalar_lea.vmem %s1, 1
  %17 = vst.msk [vmem:[%s16] ss:$16 sm:$0x30] %vm11, %v10
  %s18 = scalar_lea.vmem %s1, 1
  %19 = vst.msk [vmem:[%s18] ss:$16 sm:$0xc0] %vm11, %v10
  %v20 = vld [vmem:[%s0] sm:$0xff]
  %21 = vrot.lane.b32.xlu0 %v20, 126
  %v22 = vpop.permute.xlu0 %21
  %vm23 = vcmask 7168
  %s24 = scalar_lea.vmem %s1, 2
  %25 = vst.msk [vmem:[%s24] ss:$16 sm:$0x3] %vm23, %v22
  %s26 = scalar_lea.vmem %s1, 2
  %27 = vst.msk [vmem:[%s26] ss:$16 sm:$0xc] %vm23, %v22
  %s28 = scalar_lea.vmem %s1, 2
  %29 = vst.msk [vmem:[%s28] ss:$16 sm:$0x30] %vm23, %v22
  %s30 = scalar_lea.vmem %s1, 2
  %31 = vst.msk [vmem:[%s30] ss:$16 sm:$0xc0] %vm23, %v22
  %v32 = vld [vmem:[%s0] sm:$0xff]
  %33 = vrot.lane.b32.xlu0 %v32, 125
  %v34 = vpop.permute.xlu0 %33
  %vm35 = vcmask 7168
  %s36 = scalar_lea.vmem %s1, 3
  %37 = vst.msk [vmem:[%s36] ss:$16 sm:$0x3] %vm35, %v34
  %s38 = scalar_lea.vmem %s1, 3
  %39 = vst.msk [vmem:[%s38] ss:$16 sm:$0xc] %vm35, %v34
  %s40 = scalar_lea.vmem %s1, 3
  %41 = vst.msk [vmem:[%s40] ss:$16 sm:$0x30] %vm35, %v34
  %s42 = scalar_lea.vmem %s1, 3
  %43 = vst.msk [vmem:[%s42] ss:$16 sm:$0xc0] %vm35, %v34
  %v44 = vld [vmem:[%s0] sm:$0xff]
  %45 = vrot.lane.b32.xlu0 %v44, 124
  %v46 = vpop.permute.xlu0 %45
  %vm47 = vcmask 7168
  %s48 = scalar_lea.vmem %s1, 4
  %49 = vst.msk [vmem:[%s48] ss:$16 sm:$0x3] %vm47, %v46
  %s50 = scalar_lea.vmem %s1, 4
  %51 = vst.msk [vmem:[%s50] ss:$16 sm:$0xc] %vm47, %v46
  %s52 = scalar_lea.vmem %s1, 4
  %53 = vst.msk [vmem:[%s52] ss:$16 sm:$0x30] %vm47, %v46
  %s54 = scalar_lea.vmem %s1, 4
  %55 = vst.msk [vmem:[%s54] ss:$16 sm:$0xc0] %vm47, %v46
  %v56 = vld [vmem:[%s0] sm:$0xff]
  %57 = vrot.lane.b32.xlu0 %v56, 123
  %v58 = vpop.permute.xlu0 %57
  %vm59 = vcmask 7168
  %s60 = scalar_lea.vmem %s1, 5
  %61 = vst.msk [vmem:[%s60] ss:$16 sm:$0x3] %vm59, %v58
  %s62 = scalar_lea.vmem %s1, 5
  %63 = vst.msk [vmem:[%s62] ss:$16 sm:$0xc] %vm59, %v58
  %s64 = scalar_lea.vmem %s1, 5
  %65 = vst.msk [vmem:[%s64] ss:$16 sm:$0x30] %vm59, %v58
  %s66 = scalar_lea.vmem %s1, 5
  %67 = vst.msk [vmem:[%s66] ss:$16 sm:$0xc0] %vm59, %v58
  %v68 = vld [vmem:[%s0] sm:$0xff]
  %69 = vrot.lane.b32.xlu0 %v68, 122
  %v70 = vpop.permute.xlu0 %69
  %vm71 = vcmask 7168
  %s72 = scalar_lea.vmem %s1, 6
  %73 = vst.msk [vmem:[%s72] ss:$16 sm:$0x3] %vm71, %v70
  %s74 = scalar_lea.vmem %s1, 6
  %75 = vst.msk [vmem:[%s74] ss:$16 sm:$0xc] %vm71, %v70
  %s76 = scalar_lea.vmem %s1, 6
  %77 = vst.msk [vmem:[%s76] ss:$16 sm:$0x30] %vm71, %v70
  %s78 = scalar_lea.vmem %s1, 6
  %79 = vst.msk [vmem:[%s78] ss:$16 sm:$0xc0] %vm71, %v70
  %v80 = vld [vmem:[%s0] sm:$0xff]
  %81 = vrot.lane.b32.xlu0 %v80, 121
  %v82 = vpop.permute.xlu0 %81
  %vm83 = vcmask 7168
  %s84 = scalar_lea.vmem %s1, 7
  %85 = vst.msk [vmem:[%s84] ss:$16 sm:$0x3] %vm83, %v82
  %s86 = scalar_lea.vmem %s1, 7
  %87 = vst.msk [vmem:[%s86] ss:$16 sm:$0xc] %vm83, %v82
  %s88 = scalar_lea.vmem %s1, 7
  %89 = vst.msk [vmem:[%s88] ss:$16 sm:$0x30] %vm83, %v82
  %s90 = scalar_lea.vmem %s1, 7
  %91 = vst.msk [vmem:[%s90] ss:$16 sm:$0xc0] %vm83, %v82
  %v92 = vld [vmem:[%s0] sm:$0xff]
  %93 = vrot.lane.b32.xlu0 %v92, 120
  %v94 = vpop.permute.xlu0 %93
  %vm95 = vcmask 7168
  %s96 = scalar_lea.vmem %s1, 8
  %97 = vst.msk [vmem:[%s96] ss:$16 sm:$0x3] %vm95, %v94
  %s98 = scalar_lea.vmem %s1, 8
  %99 = vst.msk [vmem:[%s98] ss:$16 sm:$0xc] %vm95, %v94
  %s100 = scalar_lea.vmem %s1, 8
  %101 = vst.msk [vmem:[%s100] ss:$16 sm:$0x30] %vm95, %v94
  %s102 = scalar_lea.vmem %s1, 8
  %103 = vst.msk [vmem:[%s102] ss:$16 sm:$0xc0] %vm95, %v94
  %v104 = vld [vmem:[%s0] sm:$0xff]
  %105 = vrot.lane.b32.xlu0 %v104, 119
  %v106 = vpop.permute.xlu0 %105
  %vm107 = vcmask 7168
  %s108 = scalar_lea.vmem %s1, 9
  %109 = vst.msk [vmem:[%s108] ss:$16 sm:$0x3] %vm107, %v106
  %s110 = scalar_lea.vmem %s1, 9
  %111 = vst.msk [vmem:[%s110] ss:$16 sm:$0xc] %vm107, %v106
  %s112 = scalar_lea.vmem %s1, 9
  %113 = vst.msk [vmem:[%s112] ss:$16 sm:$0x30] %vm107, %v106
  %s114 = scalar_lea.vmem %s1, 9
  %115 = vst.msk [vmem:[%s114] ss:$16 sm:$0xc0] %vm107, %v106
  %v116 = vld [vmem:[%s0] sm:$0xff]
  %117 = vrot.lane.b32.xlu0 %v116, 118
  %v118 = vpop.permute.xlu0 %117
  %vm119 = vcmask 7168
  %s120 = scalar_lea.vmem %s1, 10
  %121 = vst.msk [vmem:[%s120] ss:$16 sm:$0x3] %vm119, %v118
  %s122 = scalar_lea.vmem %s1, 10
  %123 = vst.msk [vmem:[%s122] ss:$16 sm:$0xc] %vm119, %v118
  %s124 = scalar_lea.vmem %s1, 10
  %125 = vst.msk [vmem:[%s124] ss:$16 sm:$0x30] %vm119, %v118
  %s126 = scalar_lea.vmem %s1, 10
  %127 = vst.msk [vmem:[%s126] ss:$16 sm:$0xc0] %vm119, %v118
  %v128 = vld [vmem:[%s0] sm:$0xff]
  %129 = vrot.lane.b32.xlu0 %v128, 117
  %v130 = vpop.permute.xlu0 %129
  %vm131 = vcmask 7168
  %s132 = scalar_lea.vmem %s1, 11
  %133 = vst.msk [vmem:[%s132] ss:$16 sm:$0x3] %vm131, %v130
  %s134 = scalar_lea.vmem %s1, 11
  %135 = vst.msk [vmem:[%s134] ss:$16 sm:$0xc] %vm131, %v130
  %s136 = scalar_lea.vmem %s1, 11
  %137 = vst.msk [vmem:[%s136] ss:$16 sm:$0x30] %vm131, %v130
  %s138 = scalar_lea.vmem %s1, 11
  %139 = vst.msk [vmem:[%s138] ss:$16 sm:$0xc0] %vm131, %v130
  %v140 = vld [vmem:[%s0] sm:$0xff]
  %141 = vrot.lane.b32.xlu0 %v140, 116
  %v142 = vpop.permute.xlu0 %141
  %vm143 = vcmask 7168
  %s144 = scalar_lea.vmem %s1, 12
  %145 = vst.msk [vmem:[%s144] ss:$16 sm:$0x3] %vm143, %v142
  %s146 = scalar_lea.vmem %s1, 12
  %147 = vst.msk [vmem:[%s146] ss:$16 sm:$0xc] %vm143, %v142
  %s148 = scalar_lea.vmem %s1, 12
  %149 = vst.msk [vmem:[%s148] ss:$16 sm:$0x30] %vm143, %v142
  %s150 = scalar_lea.vmem %s1, 12
  %151 = vst.msk [vmem:[%s150] ss:$16 sm:$0xc0] %vm143, %v142
  %v152 = vld [vmem:[%s0] sm:$0xff]
  %153 = vrot.lane.b32.xlu0 %v152, 115
  %v154 = vpop.permute.xlu0 %153
  %vm155 = vcmask 7168
  %s156 = scalar_lea.vmem %s1, 13
  %157 = vst.msk [vmem:[%s156] ss:$16 sm:$0x3] %vm155, %v154
  %s158 = scalar_lea.vmem %s1, 13
  %159 = vst.msk [vmem:[%s158] ss:$16 sm:$0xc] %vm155, %v154
  %s160 = scalar_lea.vmem %s1, 13
  %161 = vst.msk [vmem:[%s160] ss:$16 sm:$0x30] %vm155, %v154
  %s162 = scalar_lea.vmem %s1, 13
  %163 = vst.msk [vmem:[%s162] ss:$16 sm:$0xc0] %vm155, %v154
  %v164 = vld [vmem:[%s0] sm:$0xff]
  %165 = vrot.lane.b32.xlu0 %v164, 114
  %v166 = vpop.permute.xlu0 %165
  %vm167 = vcmask 7168
  %s168 = scalar_lea.vmem %s1, 14
  %169 = vst.msk [vmem:[%s168] ss:$16 sm:$0x3] %vm167, %v166
  %s170 = scalar_lea.vmem %s1, 14
  %171 = vst.msk [vmem:[%s170] ss:$16 sm:$0xc] %vm167, %v166
  %s172 = scalar_lea.vmem %s1, 14
  %173 = vst.msk [vmem:[%s172] ss:$16 sm:$0x30] %vm167, %v166
  %s174 = scalar_lea.vmem %s1, 14
  %175 = vst.msk [vmem:[%s174] ss:$16 sm:$0xc0] %vm167, %v166
  %v176 = vld [vmem:[%s0] sm:$0xff]
  %177 = vrot.lane.b32.xlu0 %v176, 113
  %v178 = vpop.permute.xlu0 %177
  %vm179 = vcmask 7168
  %s180 = scalar_lea.vmem %s1, 15
  %181 = vst.msk [vmem:[%s180] ss:$16 sm:$0x3] %vm179, %v178
  %s182 = scalar_lea.vmem %s1, 15
  %183 = vst.msk [vmem:[%s182] ss:$16 sm:$0xc] %vm179, %v178
  %s184 = scalar_lea.vmem %s1, 15
  %185 = vst.msk [vmem:[%s184] ss:$16 sm:$0x30] %vm179, %v178
  %s186 = scalar_lea.vmem %s1, 15
  %187 = vst.msk [vmem:[%s186] ss:$16 sm:$0xc0] %vm179, %v178

// kernel: stereonet_forward.18
$region0: #{stereonet_forward.18}
  #allocation0 [shape = 'u32[]', space=smem, size = 0x4, offset = 0x4, fixed_abs, tag = 'smem constant byte address 0x4 - core index']
  #allocation1 [shape = 'u32[144,128]{1,0:T(1,128)}', space=vmem, size = 0x12000, scoped, tag = 'internal scratch']
  %s0 = inlined_call_operand.vmem [shape: bf16[2,256,8], index: 0, kind: input, shape index: {}]
  %s1 = inlined_call_operand.vmem [shape: bf16[128,256], index: 1, kind: input, shape index: {}]
  %s2 = inlined_call_operand.vmem [shape: f32[128,1], index: 2, kind: input, shape index: {}]
  %s3 = inlined_call_operand.vmem [shape: f32[128,1], index: 3, kind: input, shape index: {}]
  %s4 = inlined_call_operand.vmem [shape: f32[128,1], index: 4, kind: input, shape index: {}]
  %s5 = inlined_call_operand.vmem [shape: f32[8,128], index: 5, kind: input, shape index: {}]
  %s6 = inlined_call_operand.vmem [shape: f32[128,8], index: 6, kind: input, shape index: {}]
  %s7 = inlined_call_operand.vmem [shape: f32[2,128,8], index: 7, kind: output, shape index: {}]
  %s8 = sld [smem:[#allocation0]]
  $region61: #{stereonet_forward.18} parent=0
    _
  %s10 = ssub.s32 1, %s8
  %s11 = scalar_select 0, %s10, %s8
  loop: start=0, step=1, limit=4
  $region2: #{stereonet_forward.18} parent=0 // loop_pre_header
    _
  $region3: #{stereonet_forward.18} parent=0 // loop_header
    %s13 = sphi 0, %s17
    %p14 = scmp.ge.s32.totalorder %s13, 4
    %s23 = sphi 0, %s25
    %s26 = sphi 0, %s23
    %s27 = sphi 0, %s26
    %s43 = sphi 0, %s27
    %s47 = sphi 0, %s47
    %s49 = sphi 0, %s47
    %s50 = sphi 0, %s49
    %s64 = sphi 0, %s50
    %s68 = sphi 0, %s68
    %s70 = sphi 0, %s68
    %s71 = sphi 0, %s70
    %s85 = sphi 0, %s71
    %s89 = sphi 0, %s89
    %s91 = sphi 0, %s89
    %s92 = sphi 0, %s91
    %s106 = sphi 0, %s92
    %s110 = sphi 0, %s110
    %s112 = sphi 0, %s110
    %s113 = sphi 0, %s112
    %s127 = sphi 0, %s113
    %s131 = sphi 0, %s131
    %s133 = sphi 0, %s131
    %s134 = sphi 0, %s133
    %s148 = sphi 0, %s134
    %s152 = sphi 0, %s152
    %s154 = sphi 0, %s152
    %s155 = sphi 0, %s154
    %s169 = sphi 0, %s155
    %s175 = sphi 0, %s177
    %s178 = sphi 0, %s175
    %s179 = sphi 0, %s178
    %s195 = sphi 0, %s179
  $region4: #{stereonet_forward.18} parent=0 // loop_header_branch
    %16 = sbr.rel (%p14) target = $region8
  $region5: #{stereonet_forward.18} parent=0 // loop_body
    %s18 = ssub.s32 %s13, 1
    %s19 = ssub.s32 %s13, 2
    %s20 = sadd.s32 %s13, 1
    %s21 = ssub.s32 %s13, %s20
    %p22 = scmp.eq.s32.totalorder %s21, 0
    %s24 = sadd.s32 %s23, 1
    %s25 = scalar_select %p22, %s23, %s24
    %p28 = pneg %p22
    %p29 = scmp.eq.s32.totalorder %s13, 1
    %p30 = por %p28, %p29
    %p31 = scmp.ne.s32.totalorder %s23, %s26
    %p32 = scmp.eq.s32.totalorder %s13, 0
    %p33 = por %p31, %p32
    %p34 = scmp.ne.s32.totalorder %s23, %s26
    %p35 = scmp.eq.s32.totalorder %s18, 1
    %p36 = por %p34, %p35
    %p37 = scmp.ne.s32.totalorder %s26, %s27
    %p38 = scmp.eq.s32.totalorder %s18, 0
    %p39 = por %p37, %p38
    %p40 = scmp.ne.s32.totalorder %s26, %s27
    %p41 = scmp.eq.s32.totalorder %s19, 1
    %p42 = por %p40, %p41
    %p44 = scmp.ne.s32.totalorder %s27, %s43
    %p45 = scmp.eq.s32.totalorder %s19, 0
    %p46 = por %p44, %p45
    %s48 = sadd.s32 %s47, 1
    %p51 = scmp.eq.s32.totalorder %s13, 1
    %p52 = scmp.ne.s32.totalorder %s47, %s49
    %p53 = scmp.eq.s32.totalorder %s13, 0
    %p54 = por %p52, %p53
    %p55 = scmp.ne.s32.totalorder %s47, %s49
    %p56 = scmp.eq.s32.totalorder %s18, 1
    %p57 = por %p55, %p56
    %p58 = scmp.ne.s32.totalorder %s49, %s50
    %p59 = scmp.eq.s32.totalorder %s18, 0
    %p60 = por %p58, %p59
    %p61 = scmp.ne.s32.totalorder %s49, %s50
    %p62 = scmp.eq.s32.totalorder %s19, 1
    %p63 = por %p61, %p62
    %p65 = scmp.ne.s32.totalorder %s50, %s64
    %p66 = scmp.eq.s32.totalorder %s19, 0
    %p67 = por %p65, %p66
    %s69 = sadd.s32 %s68, 1
    %p72 = scmp.eq.s32.totalorder %s13, 1
    %p73 = scmp.ne.s32.totalorder %s68, %s70
    %p74 = scmp.eq.s32.totalorder %s13, 0
    %p75 = por %p73, %p74
    %p76 = scmp.ne.s32.totalorder %s68, %s70
    %p77 = scmp.eq.s32.totalorder %s18, 1
    %p78 = por %p76, %p77
    %p79 = scmp.ne.s32.totalorder %s70, %s71
    %p80 = scmp.eq.s32.totalorder %s18, 0
    %p81 = por %p79, %p80
    %p82 = scmp.ne.s32.totalorder %s70, %s71
    %p83 = scmp.eq.s32.totalorder %s19, 1
    %p84 = por %p82, %p83
    %p86 = scmp.ne.s32.totalorder %s71, %s85
    %p87 = scmp.eq.s32.totalorder %s19, 0
    %p88 = por %p86, %p87
    %s90 = sadd.s32 %s89, 1
    %p93 = scmp.eq.s32.totalorder %s13, 1
    %p94 = scmp.ne.s32.totalorder %s89, %s91
    %p95 = scmp.eq.s32.totalorder %s13, 0
    %p96 = por %p94, %p95
    %p97 = scmp.ne.s32.totalorder %s89, %s91
    %p98 = scmp.eq.s32.totalorder %s18, 1
    %p99 = por %p97, %p98
    %p100 = scmp.ne.s32.totalorder %s91, %s92
    %p101 = scmp.eq.s32.totalorder %s18, 0
    %p102 = por %p100, %p101
    %p103 = scmp.ne.s32.totalorder %s91, %s92
    %p104 = scmp.eq.s32.totalorder %s19, 1
    %p105 = por %p103, %p104
    %p107 = scmp.ne.s32.totalorder %s92, %s106
    %p108 = scmp.eq.s32.totalorder %s19, 0
    %p109 = por %p107, %p108
    %s111 = sadd.s32 %s110, 1
    %p114 = scmp.eq.s32.totalorder %s13, 1
    %p115 = scmp.ne.s32.totalorder %s110, %s112
    %p116 = scmp.eq.s32.totalorder %s13, 0
    %p117 = por %p115, %p116
    %p118 = scmp.ne.s32.totalorder %s110, %s112
    %p119 = scmp.eq.s32.totalorder %s18, 1
    %p120 = por %p118, %p119
    %p121 = scmp.ne.s32.totalorder %s112, %s113
    %p122 = scmp.eq.s32.totalorder %s18, 0
    %p123 = por %p121, %p122
    %p124 = scmp.ne.s32.totalorder %s112, %s113
    %p125 = scmp.eq.s32.totalorder %s19, 1
    %p126 = por %p124, %p125
    %p128 = scmp.ne.s32.totalorder %s113, %s127
    %p129 = scmp.eq.s32.totalorder %s19, 0
    %p130 = por %p128, %p129
    %s132 = sadd.s32 %s131, 1
    %p135 = scmp.eq.s32.totalorder %s13, 1
    %p136 = scmp.ne.s32.totalorder %s131, %s133
    %p137 = scmp.eq.s32.totalorder %s13, 0
    %p138 = por %p136, %p137
    %p139 = scmp.ne.s32.totalorder %s131, %s133
    %p140 = scmp.eq.s32.totalorder %s18, 1
    %p141 = por %p139, %p140
    %p142 = scmp.ne.s32.totalorder %s133, %s134
    %p143 = scmp.eq.s32.totalorder %s18, 0
    %p144 = por %p142, %p143
    %p145 = scmp.ne.s32.totalorder %s133, %s134
    %p146 = scmp.eq.s32.totalorder %s19, 1
    %p147 = por %p145, %p146
    %p149 = scmp.ne.s32.totalorder %s134, %s148
    %p150 = scmp.eq.s32.totalorder %s19, 0
    %p151 = por %p149, %p150
    %s153 = sadd.s32 %s152, 1
    %p156 = scmp.eq.s32.totalorder %s13, 1
    %p157 = scmp.ne.s32.totalorder %s152, %s154
    %p158 = scmp.eq.s32.totalorder %s13, 0
    %p159 = por %p157, %p158
    %p160 = scmp.ne.s32.totalorder %s152, %s154
    %p161 = scmp.eq.s32.totalorder %s18, 1
    %p162 = por %p160, %p161
    %p163 = scmp.ne.s32.totalorder %s154, %s155
    %p164 = scmp.eq.s32.totalorder %s18, 0
    %p165 = por %p163, %p164
    %p166 = scmp.ne.s32.totalorder %s154, %s155
    %p167 = scmp.eq.s32.totalorder %s19, 1
    %p168 = por %p166, %p167
    %p170 = scmp.ne.s32.totalorder %s155, %s169
    %p171 = scmp.eq.s32.totalorder %s19, 0
    %p172 = por %p170, %p171
    %s173 = ssub.s32 %s13, %s20
    %p174 = scmp.eq.s32.totalorder %s173, 0
    %s176 = sadd.s32 %s175, 1
    %s177 = scalar_select %p174, %s175, %s176
    %p180 = pneg %p174
    %p181 = scmp.eq.s32.totalorder %s13, 1
    %p182 = por %p180, %p181
    %p183 = scmp.ne.s32.totalorder %s175, %s178
    %p184 = scmp.eq.s32.totalorder %s13, 0
    %p185 = por %p183, %p184
    %p186 = scmp.ne.s32.totalorder %s175, %s178
    %p187 = scmp.eq.s32.totalorder %s18, 1
    %p188 = por %p186, %p187
    %p189 = scmp.ne.s32.totalorder %s178, %s179
    %p190 = scmp.eq.s32.totalorder %s18, 0
    %p191 = por %p189, %p190
    %p192 = scmp.ne.s32.totalorder %s178, %s179
    %p193 = scmp.eq.s32.totalorder %s19, 1
    %p194 = por %p192, %p193
    %p196 = scmp.ne.s32.totalorder %s179, %s195
    %p197 = scmp.eq.s32.totalorder %s19, 0
    %p198 = por %p196, %p197
    %p199 = scmp.le.s32.totalorder 1, %s13
    %p200 = scmp.lt.s32.totalorder %s13, 3
    %p201 = pnand %p199, %p200
    %p202 = pneg %p201
    // Predicated region
    $region9: #{stereonet_forward.18} parent=5 // pred_check
      _
    $region10: #{stereonet_forward.18} parent=5 // pred_check_branch
      %204 = sbr.rel (%p201) target = $region12
    $region11: #{stereonet_forward.18} parent=5 // pred_region
      %s205 = ssub.s32 %s13, 1
      // Predicated region
      $region13: #{stereonet_forward.18} parent=11 // pred_check
        %p206 = pneg %p60
      $region14: #{stereonet_forward.18} parent=11 // pred_check_branch
        %208 = sbr.rel (%p206) target = $region16
      $region15: #{stereonet_forward.18} parent=11 // pred_region
        _
      $region16: #{stereonet_forward.18} parent=11 // pred_fallthru
        _
      // Predicated region
      $region17: #{stereonet_forward.18} parent=11 // pred_check
        %p209 = pneg %p81
      $region18: #{stereonet_forward.18} parent=11 // pred_check_branch
        %211 = sbr.rel (%p209) target = $region20
      $region19: #{stereonet_forward.18} parent=11 // pred_region
        _
      $region20: #{stereonet_forward.18} parent=11 // pred_fallthru
        _
      // Predicated region
      $region21: #{stereonet_forward.18} parent=11 // pred_check
        %p212 = pneg %p102
      $region22: #{stereonet_forward.18} parent=11 // pred_check_branch
        %214 = sbr.rel (%p212) target = $region24
      $region23: #{stereonet_forward.18} parent=11 // pred_region
        _
      $region24: #{stereonet_forward.18} parent=11 // pred_fallthru
        _
      // Predicated region
      $region25: #{stereonet_forward.18} parent=11 // pred_check
        %p215 = pneg %p123
      $region26: #{stereonet_forward.18} parent=11 // pred_check_branch
        %217 = sbr.rel (%p215) target = $region28
      $region27: #{stereonet_forward.18} parent=11 // pred_region
        _
      $region28: #{stereonet_forward.18} parent=11 // pred_fallthru
        _
      // Predicated region
      $region29: #{stereonet_forward.18} parent=11 // pred_check
        %p218 = pneg %p144
      $region30: #{stereonet_forward.18} parent=11 // pred_check_branch
        %220 = sbr.rel (%p218) target = $region32
      $region31: #{stereonet_forward.18} parent=11 // pred_region
        _
      $region32: #{stereonet_forward.18} parent=11 // pred_fallthru
        _
      // Predicated region
      $region33: #{stereonet_forward.18} parent=11 // pred_check
        %p221 = pneg %p165
      $region34: #{stereonet_forward.18} parent=11 // pred_check_branch
        %223 = sbr.rel (%p221) target = $region36
      $region35: #{stereonet_forward.18} parent=11 // pred_region
        _
      $region36: #{stereonet_forward.18} parent=11 // pred_fallthru
        _
    $region12: #{stereonet_forward.18} parent=5 // pred_fallthru
      _
    %p224 = scmp.lt.s32.totalorder %s13, 2
    // Predicated region
    $region37: #{stereonet_forward.18} parent=5 // pred_check
      %p225 = pneg %p224
    $region38: #{stereonet_forward.18} parent=5 // pred_check_branch
      %227 = sbr.rel (%p225) target = $region40
    $region39: #{stereonet_forward.18} parent=5 // pred_region
      // Predicated region
      $region41: #{stereonet_forward.18} parent=39 // pred_check
        %p228 = pneg %p33
      $region42: #{stereonet_forward.18} parent=39 // pred_check_branch
        %230 = sbr.rel (%p228) target = $region44
      $region43: #{stereonet_forward.18} parent=39 // pred_region
        %p231 = scmp.lt.s32.totalorder %s13, 1
        %s232 = scalar_select %p231, %s13, 1
        %s233 = smul.addr %s232, 32
        %s234 = smul.addr %s233, 4
        %s235 = scalar_lea.vmem %s0, %s234
      $region44: #{stereonet_forward.18} parent=39 // pred_fallthru
        _
    $region40: #{stereonet_forward.18} parent=5 // pred_fallthru
      _
    %p236 = scmp.le.s32.totalorder 1, %s13
    %p237 = scmp.lt.s32.totalorder %s13, 3
    %p238 = pnand %p236, %p237
    %p239 = pneg %p238
    // Predicated region
    $region45: #{stereonet_forward.18} parent=5 // pred_check
      _
    $region46: #{stereonet_forward.18} parent=5 // pred_check_branch
      %241 = sbr.rel (%p238) target = $region48
    $region47: #{stereonet_forward.18} parent=5 // pred_region
      %s242 = ssub.s32 %s13, 1
      %p243 = scmp.lt.s32.totalorder %s18, 1
      %s244 = scalar_select %p243, %s18, 1
      %s245 = smul.addr %s244, 32
      %s246 = smul.addr %s245, 4
      %s247 = scalar_lea.vmem %s0, %s246
      %p248 = pneg %p39
      %p249 = pneg %p36
      %p250 = pneg %p60
      %p251 = pneg %p57
      %p252 = pneg %p81
      %p253 = pneg %p78
      %p254 = pneg %p102
      %p255 = pneg %p99
      %p256 = pneg %p123
      %p257 = pneg %p120
      %p258 = pneg %p144
      %p259 = pneg %p141
      %p260 = pneg %p165
      %p261 = pneg %p162
      %p262 = pneg %p191
      %p263 = pneg %p188
      %p264 = scmp.lt.s32.totalorder %s18, 1
      %s265 = scalar_select %p264, %s18, 1
      %s266 = smul.addr %s265, 16
      %s267 = smul.addr %s266, 8
      %s268 = scalar_lea.vmem %s7, %s267
      %p269 = scmp.lt.s32.totalorder %s18, 1
      %s270 = scalar_select %p269, %s18, 1
      %s271 = smul.addr %s270, 32
      %s272 = smul.addr %s271, 4
      %s273 = scalar_lea.vmem %s0, %s272
      %p274 = scmp.lt.s32.totalorder %s18, 1
      %s275 = scalar_select %p274, %s18, 1
      %s276 = smul.addr %s275, 16
      %s277 = smul.addr %s276, 8
      %s278 = scalar_lea.vmem %s7, %s277
      %v280 = vld [vmem:[%s1] sm:$0xff]
      %v281 = vld [vmem:[%s1 + $0x8] sm:$0xff]
      %v282 = vld [vmem:[%s1 + $0x10] sm:$0xff]
      %v283 = vld [vmem:[%s1 + $0x18] sm:$0xff]
      %v284 = vld [vmem:[%s1 + $0x20] sm:$0xff]
      %v285 = vld [vmem:[%s1 + $0x28] sm:$0xff]
      %v286 = vld [vmem:[%s1 + $0x30] sm:$0xff]
      %v287 = vld [vmem:[%s1 + $0x38] sm:$0xff]
      %v288 = vld [vmem:[%s1 + $0x40] sm:$0xff]
      %v289 = vld [vmem:[%s1 + $0x48] sm:$0xff]
      %v290 = vld [vmem:[%s1 + $0x50] sm:$0xff]
      %v291 = vld [vmem:[%s1 + $0x58] sm:$0xff]
      %v292 = vld [vmem:[%s1 + $0x60] sm:$0xff]
      %v293 = vld [vmem:[%s1 + $0x68] sm:$0xff]
      %v294 = vld [vmem:[%s1 + $0x70] sm:$0xff]
      %v295 = vld [vmem:[%s1 + $0x78] sm:$0xff]
      %v296 = vld [vmem:[%s273] sm:$0xf]
      %v297 = vld [vmem:[%s273 + $0x4] sm:$0xf]
      %v298 = vld [vmem:[%s273 + $0x8] sm:$0xf]
      %v299 = vld [vmem:[%s273 + $0xc] sm:$0xf]
      %v300 = vld [vmem:[%s273 + $0x10] sm:$0xf]
      %v301 = vld [vmem:[%s273 + $0x14] sm:$0xf]
      %v302 = vld [vmem:[%s273 + $0x18] sm:$0xf]
      %v303 = vld [vmem:[%s273 + $0x1c] sm:$0xf]
      %v304 = vld [vmem:[%s273 + $0x20] sm:$0xf]
      %v305 = vld [vmem:[%s273 + $0x24] sm:$0xf]
      %v306 = vld [vmem:[%s273 + $0x28] sm:$0xf]
      %v307 = vld [vmem:[%s273 + $0x2c] sm:$0xf]
      %v308 = vld [vmem:[%s273 + $0x30] sm:$0xf]
      %v309 = vld [vmem:[%s273 + $0x34] sm:$0xf]
      %v310 = vld [vmem:[%s273 + $0x38] sm:$0xf]
      %v311 = vld [vmem:[%s273 + $0x3c] sm:$0xf]
      %v312 = vld [vmem:[%s273 + $0x40] sm:$0xf]
      %v313 = vld [vmem:[%s273 + $0x44] sm:$0xf]
      %v314 = vld [vmem:[%s273 + $0x48] sm:$0xf]
      %v315 = vld [vmem:[%s273 + $0x4c] sm:$0xf]
      %v316 = vld [vmem:[%s273 + $0x50] sm:$0xf]
      %v317 = vld [vmem:[%s273 + $0x54] sm:$0xf]
      %v318 = vld [vmem:[%s273 + $0x58] sm:$0xf]
      %v319 = vld [vmem:[%s273 + $0x5c] sm:$0xf]
      %v320 = vld [vmem:[%s273 + $0x60] sm:$0xf]
      %v321 = vld [vmem:[%s273 + $0x64] sm:$0xf]
      %v322 = vld [vmem:[%s273 + $0x68] sm:$0xf]
      %v323 = vld [vmem:[%s273 + $0x6c] sm:$0xf]
      %v324 = vld [vmem:[%s273 + $0x70] sm:$0xf]
      %v325 = vld [vmem:[%s273 + $0x74] sm:$0xf]
      %v326 = vld [vmem:[%s273 + $0x78] sm:$0xf]
      %v327 = vld [vmem:[%s273 + $0x7c] sm:$0xf]
      %v328 = vld [vmem:[%s2] sm:$0xff]
      %v329 = vld [vmem:[%s2 + $0x8] sm:$0xff]
      %v330 = vld [vmem:[%s2 + $0x10] sm:$0xff]
      %v331 = vld [vmem:[%s2 + $0x18] sm:$0xff]
      %v332 = vld [vmem:[%s2 + $0x20] sm:$0xff]
      %v333 = vld [vmem:[%s2 + $0x28] sm:$0xff]
      %v334 = vld [vmem:[%s2 + $0x30] sm:$0xff]
      %v335 = vld [vmem:[%s2 + $0x38] sm:$0xff]
      %v336 = vld [vmem:[%s2 + $0x40] sm:$0xff]
      %v337 = vld [vmem:[%s2 + $0x48] sm:$0xff]
      %v338 = vld [vmem:[%s2 + $0x50] sm:$0xff]
      %v339 = vld [vmem:[%s2 + $0x58] sm:$0xff]
      %v340 = vld [vmem:[%s2 + $0x60] sm:$0xff]
      %v341 = vld [vmem:[%s2 + $0x68] sm:$0xff]
      %v342 = vld [vmem:[%s2 + $0x70] sm:$0xff]
      %v343 = vld [vmem:[%s2 + $0x78] sm:$0xff]
      %345 = vset.pattern.permute.xlu0 0
      %346 = vperm.xlu0 %345, %v328
      %v347 = vpop.permute.xlu0 %346
      %350 = vset.pattern.permute.xlu0 0
      %351 = vperm.xlu0 %350, %v329
      %v352 = vpop.permute.xlu0 %351
      %355 = vset.pattern.permute.xlu0 0
      %356 = vperm.xlu0 %355, %v330
      %v357 = vpop.permute.xlu0 %356
      %360 = vset.pattern.permute.xlu0 0
      %361 = vperm.xlu0 %360, %v331
      %v362 = vpop.permute.xlu0 %361
      %365 = vset.pattern.permute.xlu0 0
      %366 = vperm.xlu0 %365, %v332
      %v367 = vpop.permute.xlu0 %366
      %370 = vset.pattern.permute.xlu0 0
      %371 = vperm.xlu0 %370, %v333
      %v372 = vpop.permute.xlu0 %371
      %375 = vset.pattern.permute.xlu0 0
      %376 = vperm.xlu0 %375, %v334
      %v377 = vpop.permute.xlu0 %376
      %380 = vset.pattern.permute.xlu0 0
      %381 = vperm.xlu0 %380, %v335
      %v382 = vpop.permute.xlu0 %381
      %385 = vset.pattern.permute.xlu0 0
      %386 = vperm.xlu0 %385, %v336
      %v387 = vpop.permute.xlu0 %386
      %390 = vset.pattern.permute.xlu0 0
      %391 = vperm.xlu0 %390, %v337
      %v392 = vpop.permute.xlu0 %391
      %395 = vset.pattern.permute.xlu0 0
      %396 = vperm.xlu0 %395, %v338
      %v397 = vpop.permute.xlu0 %396
      %400 = vset.pattern.permute.xlu0 0
      %401 = vperm.xlu0 %400, %v339
      %v402 = vpop.permute.xlu0 %401
      %405 = vset.pattern.permute.xlu0 0
      %406 = vperm.xlu0 %405, %v340
      %v407 = vpop.permute.xlu0 %406
      %410 = vset.pattern.permute.xlu0 0
      %411 = vperm.xlu0 %410, %v341
      %v412 = vpop.permute.xlu0 %411
      %415 = vset.pattern.permute.xlu0 0
      %416 = vperm.xlu0 %415, %v342
      %v417 = vpop.permute.xlu0 %416
      %420 = vset.pattern.permute.xlu0 0
      %421 = vperm.xlu0 %420, %v343
      %v422 = vpop.permute.xlu0 %421
      %v440 = vunpack.c.l.b16 %v280
      %v441 = vunpack.c.h.b16 %v280
      %v442 = vunpack.c.l.b16 %v281
      %v443 = vunpack.c.h.b16 %v281
      %v444 = vunpack.c.l.b16 %v282
      %v445 = vunpack.c.h.b16 %v282
      %v446 = vunpack.c.l.b16 %v283
      %v447 = vunpack.c.h.b16 %v283
      %v448 = vunpack.c.l.b16 %v284
      %v449 = vunpack.c.h.b16 %v284
      %v450 = vunpack.c.l.b16 %v285
      %v451 = vunpack.c.h.b16 %v285
      %v452 = vunpack.c.l.b16 %v286
      %v453 = vunpack.c.h.b16 %v286
      %v454 = vunpack.c.l.b16 %v287
      %v455 = vunpack.c.h.b16 %v287
      %v456 = vunpack.c.l.b16 %v288
      %v457 = vunpack.c.h.b16 %v288
      %v458 = vunpack.c.l.b16 %v289
      %v459 = vunpack.c.h.b16 %v289
      %v460 = vunpack.c.l.b16 %v290
      %v461 = vunpack.c.h.b16 %v290
      %v462 = vunpack.c.l.b16 %v291
      %v463 = vunpack.c.h.b16 %v291
      %v464 = vunpack.c.l.b16 %v292
      %v465 = vunpack.c.h.b16 %v292
      %v466 = vunpack.c.l.b16 %v293
      %v467 = vunpack.c.h.b16 %v293
      %v468 = vunpack.c.l.b16 %v294
      %v469 = vunpack.c.h.b16 %v294
      %v470 = vunpack.c.l.b16 %v295
      %v471 = vunpack.c.h.b16 %v295
      %v472 = vpack.c.b16 %v442, %v440
      %v473 = vpack.c.b16 %v443, %v441
      %v474 = vpack.c.b16 %v446, %v444
      %v475 = vpack.c.b16 %v447, %v445
      %v476 = vpack.c.b16 %v450, %v448
      %v477 = vpack.c.b16 %v451, %v449
      %v478 = vpack.c.b16 %v454, %v452
      %v479 = vpack.c.b16 %v455, %v453
      %v480 = vpack.c.b16 %v458, %v456
      %v481 = vpack.c.b16 %v459, %v457
      %v482 = vpack.c.b16 %v462, %v460
      %v483 = vpack.c.b16 %v463, %v461
      %v484 = vpack.c.b16 %v466, %v464
      %v485 = vpack.c.b16 %v467, %v465
      %v486 = vpack.c.b16 %v470, %v468
      %v487 = vpack.c.b16 %v471, %v469
      %v536 = vunpack.c.l.b16 %v296
      %v537 = vunpack.c.l.b16 %v297
      %v538 = vunpack.c.l.b16 %v298
      %v539 = vunpack.c.l.b16 %v299
      %v540 = vunpack.c.l.b16 %v300
      %v541 = vunpack.c.l.b16 %v301
      %v542 = vunpack.c.l.b16 %v302
      %v543 = vunpack.c.l.b16 %v303
      %v544 = vunpack.c.l.b16 %v304
      %v545 = vunpack.c.l.b16 %v305
      %v546 = vunpack.c.l.b16 %v306
      %v547 = vunpack.c.l.b16 %v307
      %v548 = vunpack.c.l.b16 %v308
      %v549 = vunpack.c.l.b16 %v309
      %v550 = vunpack.c.l.b16 %v310
      %v551 = vunpack.c.l.b16 %v311
      %v552 = vunpack.c.l.b16 %v312
      %v553 = vunpack.c.l.b16 %v313
      %v554 = vunpack.c.l.b16 %v314
      %v555 = vunpack.c.l.b16 %v315
      %v556 = vunpack.c.l.b16 %v316
      %v557 = vunpack.c.l.b16 %v317
      %v558 = vunpack.c.l.b16 %v318
      %v559 = vunpack.c.l.b16 %v319
      %v560 = vunpack.c.l.b16 %v320
      %v561 = vunpack.c.l.b16 %v321
      %v562 = vunpack.c.l.b16 %v322
      %v563 = vunpack.c.l.b16 %v323
      %v564 = vunpack.c.l.b16 %v324
      %v565 = vunpack.c.l.b16 %v325
      %v566 = vunpack.c.l.b16 %v326
      %v567 = vunpack.c.l.b16 %v327
      %v568 = vpack.c.b16 %v537, %v536
      %v569 = vpack.c.b16 %v539, %v538
      %v570 = vpack.c.b16 %v541, %v540
      %v571 = vpack.c.b16 %v543, %v542
      %v572 = vpack.c.b16 %v545, %v544
      %v573 = vpack.c.b16 %v547, %v546
      %v574 = vpack.c.b16 %v549, %v548
      %v575 = vpack.c.b16 %v551, %v550
      %v576 = vpack.c.b16 %v553, %v552
      %v577 = vpack.c.b16 %v555, %v554
      %v578 = vpack.c.b16 %v557, %v556
      %v579 = vpack.c.b16 %v559, %v558
      %v580 = vpack.c.b16 %v561, %v560
      %v581 = vpack.c.b16 %v563, %v562
      %v582 = vpack.c.b16 %v565, %v564
      %v583 = vpack.c.b16 %v567, %v566
      %600 = vmatprep.subr.bf16.mxu0 0
      %601 = vmatpush1.bf16.msra.mxu0 %v568
      %602 = vmatprep.subr.bf16.mxu0 0
      %603 = vmatpush1.bf16.msra.mxu0 %v569
      %604 = vmatprep.subr.bf16.mxu0 0
      %605 = vmatpush1.bf16.msra.mxu0 %v570
      %606 = vmatprep.subr.bf16.mxu0 0
      %607 = vmatpush1.bf16.msra.mxu0 %v571
      %608 = vmatprep.subr.bf16.mxu0 0
      %609 = vmatpush1.bf16.msra.mxu0 %v572
      %610 = vmatprep.subr.bf16.mxu0 0
      %611 = vmatpush1.bf16.msra.mxu0 %v573
      %612 = vmatprep.subr.bf16.mxu0 0
      %613 = vmatpush1.bf16.msra.mxu0 %v574
      %614 = vmatprep.subr.bf16.mxu0 0
      %615 = vmatpush1.bf16.msra.mxu0 %v575
      %616 = vmatprep.subr.bf16.mxu0 0
      %617 = vmatpush1.bf16.msra.mxu0 %v576
      %618 = vmatprep.subr.bf16.mxu0 0
      %619 = vmatpush1.bf16.msra.mxu0 %v577
      %620 = vmatprep.subr.bf16.mxu0 0
      %621 = vmatpush1.bf16.msra.mxu0 %v578
      %622 = vmatprep.subr.bf16.mxu0 0
      %623 = vmatpush1.bf16.msra.mxu0 %v579
      %624 = vmatprep.subr.bf16.mxu0 0
      %625 = vmatpush1.bf16.msra.mxu0 %v580
      %626 = vmatprep.subr.bf16.mxu0 0
      %627 = vmatpush1.bf16.msra.mxu0 %v581
      %628 = vmatprep.subr.bf16.mxu0 0
      %629 = vmatpush1.bf16.msra.mxu0 %v582
      %630 = vmatprep.subr.bf16.mxu0 0
      %631 = vmatpush1.bf16.msra.mxu0 %v583
      %632 = vmatprep.mubr.bf16.mxu0 %v473
      %633 = vmatmul.mubr.bf16.gmra.mrb[0].mxu0 %v472
      %v634 = vpop.f32.mrb[0].mxu0
      %v635 = vadd.f32 %v347, %v634
      %v636 = vpop.f32.mrb[0].mxu0
      %v637 = vpop.f32.mrb[0].mxu0
      %v638 = vadd.f32 %v352, %v637
      %v639 = vpop.f32.mrb[0].mxu0
      %640 = vmatprep.mubr.bf16.mxu0 %v475
      %641 = vmatmul.mubr.bf16.gmra.mrb[0].mxu0 %v474
      %v642 = vpop.f32.mrb[0].mxu0
      %v643 = vadd.f32 %v357, %v642
      %v644 = vpop.f32.mrb[0].mxu0
      %v645 = vpop.f32.mrb[0].mxu0
      %v646 = vadd.f32 %v362, %v645
      %v647 = vpop.f32.mrb[0].mxu0
      %648 = vmatprep.mubr.bf16.mxu0 %v477
      %649 = vmatmul.mubr.bf16.gmra.mrb[0].mxu0 %v476
      %v650 = vpop.f32.mrb[0].mxu0
      %v651 = vadd.f32 %v367, %v650
      %v652 = vpop.f32.mrb[0].mxu0
      %v653 = vpop.f32.mrb[0].mxu0
      %v654 = vadd.f32 %v372, %v653
      %v655 = vpop.f32.mrb[0].mxu0
      %656 = vmatprep.mubr.bf16.mxu0 %v479
      %657 = vmatmul.mubr.bf16.gmra.mrb[0].mxu0 %v478
      %v658 = vpop.f32.mrb[0].mxu0
      %v659 = vadd.f32 %v377, %v658
      %v660 = vpop.f32.mrb[0].mxu0
      %v661 = vpop.f32.mrb[0].mxu0
      %v662 = vadd.f32 %v382, %v661
      %v663 = vpop.f32.mrb[0].mxu0
      %664 = vmatprep.mubr.bf16.mxu0 %v481
      %665 = vmatmul.mubr.bf16.gmra.mrb[0].mxu0 %v480
      %v666 = vpop.f32.mrb[0].mxu0
      %v667 = vadd.f32 %v387, %v666
      %v668 = vpop.f32.mrb[0].mxu0
      %v669 = vpop.f32.mrb[0].mxu0
      %v670 = vadd.f32 %v392, %v669
      %v671 = vpop.f32.mrb[0].mxu0
      %672 = vmatprep.mubr.bf16.mxu0 %v483
      %673 = vmatmul.mubr.bf16.gmra.mrb[0].mxu0 %v482
      %v674 = vpop.f32.mrb[0].mxu0
      %v675 = vadd.f32 %v397, %v674
      %v676 = vpop.f32.mrb[0].mxu0
      %v677 = vpop.f32.mrb[0].mxu0
      %v678 = vadd.f32 %v402, %v677
      %v679 = vpop.f32.mrb[0].mxu0
      %680 = vmatprep.mubr.bf16.mxu0 %v485
      %681 = vmatmul.mubr.bf16.gmra.mrb[0].mxu0 %v484
      %v682 = vpop.f32.mrb[0].mxu0
      %v683 = vadd.f32 %v407, %v682
      %v684 = vpop.f32.mrb[0].mxu0
      %v685 = vpop.f32.mrb[0].mxu0
      %v686 = vadd.f32 %v412, %v685
      %v687 = vpop.f32.mrb[0].mxu0
      %688 = vmatprep.mubr.bf16.mxu0 %v487
      %689 = vmatmul.mubr.bf16.gmra.mrb[0].mxu0 %v486
      %v690 = vpop.f32.mrb[0].mxu0
      %v691 = vadd.f32 %v417, %v690
      %v692 = vpop.f32.mrb[0].mxu0
      %v693 = vpop.f32.mrb[0].mxu0
      %v694 = vadd.f32 %v422, %v693
      %v695 = vpop.f32.mrb[0].mxu0
      %696 = vdwg.mxu0
      %vm697 = vcmask 64512
      %v698 = vsel %vm697, %v635, 0.0
      %699 = vadd.xlane.f32.xlu0 %v698
      %v700 = vpop.xlane.xlu0 %699
      %v701 = vsel %vm697, %v638, 0.0
      %702 = vadd.xlane.f32.xlu0 %v701
      %v703 = vpop.xlane.xlu0 %702
      %v704 = vsel %vm697, %v643, 0.0
      %705 = vadd.xlane.f32.xlu0 %v704
      %v706 = vpop.xlane.xlu0 %705
      %v707 = vsel %vm697, %v646, 0.0
      %708 = vadd.xlane.f32.xlu0 %v707
      %v709 = vpop.xlane.xlu0 %708
      %v710 = vsel %vm697, %v651, 0.0
      %711 = vadd.xlane.f32.xlu0 %v710
      %v712 = vpop.xlane.xlu0 %711
      %v713 = vsel %vm697, %v654, 0.0
      %714 = vadd.xlane.f32.xlu0 %v713
      %v715 = vpop.xlane.xlu0 %714
      %v716 = vsel %vm697, %v659, 0.0
      %717 = vadd.xlane.f32.xlu0 %v716
      %v718 = vpop.xlane.xlu0 %717
      %v719 = vsel %vm697, %v662, 0.0
      %720 = vadd.xlane.f32.xlu0 %v719
      %v721 = vpop.xlane.xlu0 %720
      %v722 = vsel %vm697, %v667, 0.0
      %723 = vadd.xlane.f32.xlu0 %v722
      %v724 = vpop.xlane.xlu0 %723
      %v725 = vsel %vm697, %v670, 0.0
      %726 = vadd.xlane.f32.xlu0 %v725
      %v727 = vpop.xlane.xlu0 %726
      %v728 = vsel %vm697, %v675, 0.0
      %729 = vadd.xlane.f32.xlu0 %v728
      %v730 = vpop.xlane.xlu0 %729
      %v731 = vsel %vm697, %v678, 0.0
      %732 = vadd.xlane.f32.xlu0 %v731
      %v733 = vpop.xlane.xlu0 %732
      %v734 = vsel %vm697, %v683, 0.0
      %735 = vadd.xlane.f32.xlu0 %v734
      %v736 = vpop.xlane.xlu0 %735
      %v737 = vsel %vm697, %v686, 0.0
      %738 = vadd.xlane.f32.xlu0 %v737
      %v739 = vpop.xlane.xlu0 %738
      %v740 = vsel %vm697, %v691, 0.0
      %741 = vadd.xlane.f32.xlu0 %v740
      %v742 = vpop.xlane.xlu0 %741
      %v743 = vsel %vm697, %v694, 0.0
      %744 = vadd.xlane.f32.xlu0 %v743
      %v745 = vpop.xlane.xlu0 %744
      %v746 = vmul.f32 %v635, %v635
      %v747 = vmul.f32 %v638, %v638
      %v748 = vmul.f32 %v643, %v643
      %v749 = vmul.f32 %v646, %v646
      %v750 = vmul.f32 %v651, %v651
      %v751 = vmul.f32 %v654, %v654
      %v752 = vmul.f32 %v659, %v659
      %v753 = vmul.f32 %v662, %v662
      %v754 = vmul.f32 %v667, %v667
      %v755 = vmul.f32 %v670, %v670
      %v756 = vmul.f32 %v675, %v675
      %v757 = vmul.f32 %v678, %v678
      %v758 = vmul.f32 %v683, %v683
      %v759 = vmul.f32 %v686, %v686
      %v760 = vmul.f32 %v691, %v691
      %v761 = vmul.f32 %v694, %v694
      %v762 = vsel %vm697, %v746, 0.0
      %763 = vadd.xlane.f32.xlu0 %v762
      %v764 = vpop.xlane.xlu0 %763
      %v765 = vsel %vm697, %v747, 0.0
      %766 = vadd.xlane.f32.xlu0 %v765
      %v767 = vpop.xlane.xlu0 %766
      %v768 = vsel %vm697, %v748, 0.0
      %769 = vadd.xlane.f32.xlu0 %v768
      %v770 = vpop.xlane.xlu0 %769
      %v771 = vsel %vm697, %v749, 0.0
      %772 = vadd.xlane.f32.xlu0 %v771
      %v773 = vpop.xlane.xlu0 %772
      %v774 = vsel %vm697, %v750, 0.0
      %775 = vadd.xlane.f32.xlu0 %v774
      %v776 = vpop.xlane.xlu0 %775
      %v777 = vsel %vm697, %v751, 0.0
      %778 = vadd.xlane.f32.xlu0 %v777
      %v779 = vpop.xlane.xlu0 %778
      %v780 = vsel %vm697, %v752, 0.0
      %781 = vadd.xlane.f32.xlu0 %v780
      %v782 = vpop.xlane.xlu0 %781
      %v783 = vsel %vm697, %v753, 0.0
      %784 = vadd.xlane.f32.xlu0 %v783
      %v785 = vpop.xlane.xlu0 %784
      %v786 = vsel %vm697, %v754, 0.0
      %787 = vadd.xlane.f32.xlu0 %v786
      %v788 = vpop.xlane.xlu0 %787
      %v789 = vsel %vm697, %v755, 0.0
      %790 = vadd.xlane.f32.xlu0 %v789
      %v791 = vpop.xlane.xlu0 %790
      %v792 = vsel %vm697, %v756, 0.0
      %793 = vadd.xlane.f32.xlu0 %v792
      %v794 = vpop.xlane.xlu0 %793
      %v795 = vsel %vm697, %v757, 0.0
      %796 = vadd.xlane.f32.xlu0 %v795
      %v797 = vpop.xlane.xlu0 %796
      %v798 = vsel %vm697, %v758, 0.0
      %799 = vadd.xlane.f32.xlu0 %v798
      %v800 = vpop.xlane.xlu0 %799
      %v801 = vsel %vm697, %v759, 0.0
      %802 = vadd.xlane.f32.xlu0 %v801
      %v803 = vpop.xlane.xlu0 %802
      %v804 = vsel %vm697, %v760, 0.0
      %805 = vadd.xlane.f32.xlu0 %v804
      %v806 = vpop.xlane.xlu0 %805
      %v807 = vsel %vm697, %v761, 0.0
      %808 = vadd.xlane.f32.xlu0 %v807
      %v809 = vpop.xlane.xlu0 %808
      %v810 = vld [vmem:[%s5] sm:$0xff]
      %811 = vmatprep.subr.mxu0 0.0
      %812 = vmatpush1.msra.mxu0 %v700
      %813 = vmatprep.subr.mxu0 0.0
      %814 = vmatpush1.msra.mxu0 %v703
      %815 = vmatprep.subr.mxu0 0.0
      %816 = vmatpush1.msra.mxu0 %v706
      %817 = vmatprep.subr.mxu0 0.0
      %818 = vmatpush1.msra.mxu0 %v709
      %819 = vmatprep.subr.mxu0 0.0
      %820 = vmatpush1.msra.mxu0 %v712
      %821 = vmatprep.subr.mxu0 0.0
      %822 = vmatpush1.msra.mxu0 %v715
      %823 = vmatprep.subr.mxu0 0.0
      %824 = vmatpush1.msra.mxu0 %v718
      %825 = vmatprep.subr.mxu0 0.0
      %826 = vmatpush1.msra.mxu0 %v721
      %827 = vmatprep.subr.mxu0 0.0
      %828 = vmatpush1.msra.mxu0 %v724
      %829 = vmatprep.subr.mxu0 0.0
      %830 = vmatpush1.msra.mxu0 %v727
      %831 = vmatprep.subr.mxu0 0.0
      %832 = vmatpush1.msra.mxu0 %v730
      %833 = vmatprep.subr.mxu0 0.0
      %834 = vmatpush1.msra.mxu0 %v733
      %835 = vmatprep.subr.mxu0 0.0
      %836 = vmatpush1.msra.mxu0 %v736
      %837 = vmatprep.subr.mxu0 0.0
      %838 = vmatpush1.msra.mxu0 %v739
      %839 = vmatprep.subr.mxu0 0.0
      %840 = vmatpush1.msra.mxu0 %v742
      %841 = vmatprep.subr.mxu0 0.0
      %842 = vmatpush1.msra.mxu0 %v745
      %843 = vmatprep.subr.mxu0 0.0
      %844 = vmatpush1.msra.mxu0 0.0
      %845 = vmatprep.subr.mxu0 0.0
      %846 = vmatpush1.msra.mxu0 0.0
      %847 = vmatprep.subr.mxu0 0.0
      %848 = vmatpush1.msra.mxu0 0.0
      %849 = vmatprep.subr.mxu0 0.0
      %850 = vmatpush1.msra.mxu0 0.0
      %851 = vmatprep.subr.mxu0 0.0
      %852 = vmatpush1.msra.mxu0 0.0
      %853 = vmatprep.subr.mxu0 0.0
      %854 = vmatpush1.msra.mxu0 0.0
      %855 = vmatprep.subr.mxu0 0.0
      %856 = vmatpush1.msra.mxu0 0.0
      %857 = vmatprep.subr.mxu0 0.0
      %858 = vmatpush1.msra.mxu0 0.0
      %859 = vmatprep.subr.mxu0 0.0
      %860 = vmatpush1.msra.mxu0 0.0
      %861 = vmatprep.subr.mxu0 0.0
      %862 = vmatpush1.msra.mxu0 0.0
      %863 = vmatprep.subr.mxu0 0.0
      %864 = vmatpush1.msra.mxu0 0.0
      %865 = vmatprep.subr.mxu0 0.0
      %866 = vmatpush1.msra.mxu0 0.0
      %867 = vmatprep.subr.mxu0 0.0
      %868 = vmatpush1.msra.mxu0 0.0
      %869 = vmatprep.subr.mxu0 0.0
      %870 = vmatpush1.msra.mxu0 0.0
      %871 = vmatprep.subr.mxu0 0.0
      %872 = vmatpush1.msra.mxu0 0.0
      %873 = vmatprep.subr.mxu0 0.0
      %874 = vmatpush1.msra.mxu0 0.0
      %875 = vmatprep.mubr.f32.mxu0 0.0
      %876 = vmatmul.mubr.f32.gmra.mrb[0].mxu0 %v810
      %v877 = vpop.f32.mrb[0].mxu0
      %v878 = vadd.f32 0.0, %v877
      %v879 = vpop.f32.mrb[0].mxu0
      %880 = vdwg.mxu0
      %881 = vmatprep.subr.mxu0 0.0
      %882 = vmatpush1.msra.mxu0 %v764
      %883 = vmatprep.subr.mxu0 0.0
      %884 = vmatpush1.msra.mxu0 %v767
      %885 = vmatprep.subr.mxu0 0.0
      %886 = vmatpush1.msra.mxu0 %v770
      %887 = vmatprep.subr.mxu0 0.0
      %888 = vmatpush1.msra.mxu0 %v773
      %889 = vmatprep.subr.mxu0 0.0
      %890 = vmatpush1.msra.mxu0 %v776
      %891 = vmatprep.subr.mxu0 0.0
      %892 = vmatpush1.msra.mxu0 %v779
      %893 = vmatprep.subr.mxu0 0.0
      %894 = vmatpush1.msra.mxu0 %v782
      %895 = vmatprep.subr.mxu0 0.0
      %896 = vmatpush1.msra.mxu0 %v785
      %897 = vmatprep.subr.mxu0 0.0
      %898 = vmatpush1.msra.mxu0 %v788
      %899 = vmatprep.subr.mxu0 0.0
      %900 = vmatpush1.msra.mxu0 %v791
      %901 = vmatprep.subr.mxu0 0.0
      %902 = vmatpush1.msra.mxu0 %v794
      %903 = vmatprep.subr.mxu0 0.0
      %904 = vmatpush1.msra.mxu0 %v797
      %905 = vmatprep.subr.mxu0 0.0
      %906 = vmatpush1.msra.mxu0 %v800
      %907 = vmatprep.subr.mxu0 0.0
      %908 = vmatpush1.msra.mxu0 %v803
      %909 = vmatprep.subr.mxu0 0.0
      %910 = vmatpush1.msra.mxu0 %v806
      %911 = vmatprep.subr.mxu0 0.0
      %912 = vmatpush1.msra.mxu0 %v809
      %913 = vmatprep.subr.mxu0 0.0
      %914 = vmatpush1.msra.mxu0 0.0
      %915 = vmatprep.subr.mxu0 0.0
      %916 = vmatpush1.msra.mxu0 0.0
      %917 = vmatprep.subr.mxu0 0.0
      %918 = vmatpush1.msra.mxu0 0.0
      %919 = vmatprep.subr.mxu0 0.0
      %920 = vmatpush1.msra.mxu0 0.0
      %921 = vmatprep.subr.mxu0 0.0
      %922 = vmatpush1.msra.mxu0 0.0
      %923 = vmatprep.subr.mxu0 0.0
      %924 = vmatpush1.msra.mxu0 0.0
      %925 = vmatprep.subr.mxu0 0.0
      %926 = vmatpush1.msra.mxu0 0.0
      %927 = vmatprep.subr.mxu0 0.0
      %928 = vmatpush1.msra.mxu0 0.0
      %929 = vmatprep.subr.mxu0 0.0
      %930 = vmatpush1.msra.mxu0 0.0
      %931 = vmatprep.subr.mxu0 0.0
      %932 = vmatpush1.msra.mxu0 0.0
      %933 = vmatprep.subr.mxu0 0.0
      %934 = vmatpush1.msra.mxu0 0.0
      %935 = vmatprep.subr.mxu0 0.0
      %936 = vmatpush1.msra.mxu0 0.0
      %937 = vmatprep.subr.mxu0 0.0
      %938 = vmatpush1.msra.mxu0 0.0
      %939 = vmatprep.subr.mxu0 0.0
      %940 = vmatpush1.msra.mxu0 0.0
      %941 = vmatprep.subr.mxu0 0.0
      %942 = vmatpush1.msra.mxu0 0.0
      %943 = vmatprep.subr.mxu0 0.0
      %944 = vmatpush1.msra.mxu0 0.0
      %945 = vmatprep.mubr.f32.mxu0 0.0
      %946 = vmatmul.mubr.f32.gmra.mrb[0].mxu0 %v810
      %v947 = vpop.f32.mrb[0].mxu0
      %v948 = vadd.f32 0.0, %v947
      %v949 = vpop.f32.mrb[0].mxu0
      %950 = vdwg.mxu0
      %v951 = vld [vmem:[%s6] sm:$0xff]
      %v952 = vld [vmem:[%s6 + $0x8] sm:$0xff]
      %v953 = vld [vmem:[%s6 + $0x10] sm:$0xff]
      %v954 = vld [vmem:[%s6 + $0x18] sm:$0xff]
      %v955 = vld [vmem:[%s6 + $0x20] sm:$0xff]
      %v956 = vld [vmem:[%s6 + $0x28] sm:$0xff]
      %v957 = vld [vmem:[%s6 + $0x30] sm:$0xff]
      %v958 = vld [vmem:[%s6 + $0x38] sm:$0xff]
      %v959 = vld [vmem:[%s6 + $0x40] sm:$0xff]
      %v960 = vld [vmem:[%s6 + $0x48] sm:$0xff]
      %v961 = vld [vmem:[%s6 + $0x50] sm:$0xff]
      %v962 = vld [vmem:[%s6 + $0x58] sm:$0xff]
      %v963 = vld [vmem:[%s6 + $0x60] sm:$0xff]
      %v964 = vld [vmem:[%s6 + $0x68] sm:$0xff]
      %v965 = vld [vmem:[%s6 + $0x70] sm:$0xff]
      %v966 = vld [vmem:[%s6 + $0x78] sm:$0xff]
      %v968 = vsel %vm697, %v951, 0
      %v971 = vsel %vm697, %v952, 0
      %v974 = vsel %vm697, %v953, 0
      %v977 = vsel %vm697, %v954, 0
      %v980 = vsel %vm697, %v955, 0
      %v983 = vsel %vm697, %v956, 0
      %v986 = vsel %vm697, %v957, 0
      %v989 = vsel %vm697, %v958, 0
      %v992 = vsel %vm697, %v959, 0
      %v995 = vsel %vm697, %v960, 0
      %v998 = vsel %vm697, %v961, 0
      %v1001 = vsel %vm697, %v962, 0
      %v1004 = vsel %vm697, %v963, 0
      %v1007 = vsel %vm697, %v964, 0
      %v1010 = vsel %vm697, %v965, 0
      %v1013 = vsel %vm697, %v966, 0
      %1015 = vmatprep.subr.mxu0 0.0
      %1016 = vmatpush1.msra.mxu0 %v878
      %1017 = vmatprep.subr.mxu0 0.0
      %1018 = vmatpush1.msra.mxu0 0.0
      %1019 = vmatprep.subr.mxu0 0.0
      %1020 = vmatpush1.msra.mxu0 0.0
      %1021 = vmatprep.subr.mxu0 0.0
      %1022 = vmatpush1.msra.mxu0 0.0
      %1023 = vmatprep.subr.mxu0 0.0
      %1024 = vmatpush1.msra.mxu0 0.0
      %1025 = vmatprep.subr.mxu0 0.0
      %1026 = vmatpush1.msra.mxu0 0.0
      %1027 = vmatprep.subr.mxu0 0.0
      %1028 = vmatpush1.msra.mxu0 0.0
      %1029 = vmatprep.subr.mxu0 0.0
      %1030 = vmatpush1.msra.mxu0 0.0
      %1031 = vmatprep.subr.mxu0 0.0
      %1032 = vmatpush1.msra.mxu0 0.0
      %1033 = vmatprep.subr.mxu0 0.0
      %1034 = vmatpush1.msra.mxu0 0.0
      %1035 = vmatprep.subr.mxu0 0.0
      %1036 = vmatpush1.msra.mxu0 0.0
      %1037 = vmatprep.subr.mxu0 0.0
      %1038 = vmatpush1.msra.mxu0 0.0
      %1039 = vmatprep.subr.mxu0 0.0
      %1040 = vmatpush1.msra.mxu0 0.0
      %1041 = vmatprep.subr.mxu0 0.0
      %1042 = vmatpush1.msra.mxu0 0.0
      %1043 = vmatprep.subr.mxu0 0.0
      %1044 = vmatpush1.msra.mxu0 0.0
      %1045 = vmatprep.subr.mxu0 0.0
      %1046 = vmatpush1.msra.mxu0 0.0
      %1047 = vmatprep.subr.mxu0 0.0
      %1048 = vmatpush1.msra.mxu0 0.0
      %1049 = vmatprep.subr.mxu0 0.0
      %1050 = vmatpush1.msra.mxu0 0.0
      %1051 = vmatprep.subr.mxu0 0.0
      %1052 = vmatpush1.msra.mxu0 0.0
      %1053 = vmatprep.subr.mxu0 0.0
      %1054 = vmatpush1.msra.mxu0 0.0
      %1055 = vmatprep.subr.mxu0 0.0
      %1056 = vmatpush1.msra.mxu0 0.0
      %1057 = vmatprep.subr.mxu0 0.0
      %1058 = vmatpush1.msra.mxu0 0.0
      %1059 = vmatprep.subr.mxu0 0.0
      %1060 = vmatpush1.msra.mxu0 0.0
      %1061 = vmatprep.subr.mxu0 0.0
      %1062 = vmatpush1.msra.mxu0 0.0
      %1063 = vmatprep.subr.mxu0 0.0
      %1064 = vmatpush1.msra.mxu0 0.0
      %1065 = vmatprep.subr.mxu0 0.0
      %1066 = vmatpush1.msra.mxu0 0.0
      %1067 = vmatprep.subr.mxu0 0.0
      %1068 = vmatpush1.msra.mxu0 0.0
      %1069 = vmatprep.subr.mxu0 0.0
      %1070 = vmatpush1.msra.mxu0 0.0
      %1071 = vmatprep.subr.mxu0 0.0
      %1072 = vmatpush1.msra.mxu0 0.0
      %1073 = vmatprep.subr.mxu0 0.0
      %1074 = vmatpush1.msra.mxu0 0.0
      %1075 = vmatprep.subr.mxu0 0.0
      %1076 = vmatpush1.msra.mxu0 0.0
      %1077 = vmatprep.subr.mxu0 0.0
      %1078 = vmatpush1.msra.mxu0 0.0
      %1079 = vmatprep.mubr.f32.mxu0 0.0
      %1080 = vmatmul.mubr.f32.gmra.mrb[0].mxu0 %v968
      %v1081 = vpop.f32.mrb[0].mxu0
      %v1082 = vadd.f32 0.0, %v1081
      %v1083 = vpop.f32.mrb[0].mxu0
      %1084 = vmatprep.mubr.f32.mxu0 0.0
      %1085 = vmatmul.mubr.f32.gmra.mrb[0].mxu0 %v971
      %v1086 = vpop.f32.mrb[0].mxu0
      %v1087 = vadd.f32 0.0, %v1086
      %v1088 = vpop.f32.mrb[0].mxu0
      %1089 = vmatprep.mubr.f32.mxu0 0.0
      %1090 = vmatmul.mubr.f32.gmra.mrb[0].mxu0 %v974
      %v1091 = vpop.f32.mrb[0].mxu0
      %v1092 = vadd.f32 0.0, %v1091
      %v1093 = vpop.f32.mrb[0].mxu0
      %1094 = vmatprep.mubr.f32.mxu0 0.0
      %1095 = vmatmul.mubr.f32.gmra.mrb[0].mxu0 %v977
      %v1096 = vpop.f32.mrb[0].mxu0
      %v1097 = vadd.f32 0.0, %v1096
      %v1098 = vpop.f32.mrb[0].mxu0
      %1099 = vmatprep.mubr.f32.mxu0 0.0
      %1100 = vmatmul.mubr.f32.gmra.mrb[0].mxu0 %v980
      %v1101 = vpop.f32.mrb[0].mxu0
      %v1102 = vadd.f32 0.0, %v1101
      %v1103 = vpop.f32.mrb[0].mxu0
      %1104 = vmatprep.mubr.f32.mxu0 0.0
      %1105 = vmatmul.mubr.f32.gmra.mrb[0].mxu0 %v983
      %v1106 = vpop.f32.mrb[0].mxu0
      %v1107 = vadd.f32 0.0, %v1106
      %v1108 = vpop.f32.mrb[0].mxu0
      %1109 = vmatprep.mubr.f32.mxu0 0.0
      %1110 = vmatmul.mubr.f32.gmra.mrb[0].mxu0 %v986
      %v1111 = vpop.f32.mrb[0].mxu0
      %v1112 = vadd.f32 0.0, %v1111
      %v1113 = vpop.f32.mrb[0].mxu0
      %1114 = vmatprep.mubr.f32.mxu0 0.0
      %1115 = vmatmul.mubr.f32.gmra.mrb[0].mxu0 %v989
      %v1116 = vpop.f32.mrb[0].mxu0
      %v1117 = vadd.f32 0.0, %v1116
      %v1118 = vpop.f32.mrb[0].mxu0
      %1119 = vmatprep.mubr.f32.mxu0 0.0
      %1120 = vmatmul.mubr.f32.gmra.mrb[0].mxu0 %v992
      %v1121 = vpop.f32.mrb[0].mxu0
      %v1122 = vadd.f32 0.0, %v1121
      %v1123 = vpop.f32.mrb[0].mxu0
      %1124 = vmatprep.mubr.f32.mxu0 0.0
      %1125 = vmatmul.mubr.f32.gmra.mrb[0].mxu0 %v995
      %v1126 = vpop.f32.mrb[0].mxu0
      %v1127 = vadd.f32 0.0, %v1126
      %v1128 = vpop.f32.mrb[0].mxu0
      %1129 = vmatprep.mubr.f32.mxu0 0.0
      %1130 = vmatmul.mubr.f32.gmra.mrb[0].mxu0 %v998
      %v1131 = vpop.f32.mrb[0].mxu0
      %v1132 = vadd.f32 0.0, %v1131
      %v1133 = vpop.f32.mrb[0].mxu0
      %1134 = vmatprep.mubr.f32.mxu0 0.0
      %1135 = vmatmul.mubr.f32.gmra.mrb[0].mxu0 %v1001
      %v1136 = vpop.f32.mrb[0].mxu0
      %v1137 = vadd.f32 0.0, %v1136
      %v1138 = vpop.f32.mrb[0].mxu0
      %1139 = vmatprep.mubr.f32.mxu0 0.0
      %1140 = vmatmul.mubr.f32.gmra.mrb[0].mxu0 %v1004
      %v1141 = vpop.f32.mrb[0].mxu0
      %v1142 = vadd.f32 0.0, %v1141
      %v1143 = vpop.f32.mrb[0].mxu0
      %1144 = vmatprep.mubr.f32.mxu0 0.0
      %1145 = vmatmul.mubr.f32.gmra.mrb[0].mxu0 %v1007
      %v1146 = vpop.f32.mrb[0].mxu0
      %v1147 = vadd.f32 0.0, %v1146
      %v1148 = vpop.f32.mrb[0].mxu0
      %1149 = vmatprep.mubr.f32.mxu0 0.0
      %1150 = vmatmul.mubr.f32.gmra.mrb[0].mxu0 %v1010
      %v1151 = vpop.f32.mrb[0].mxu0
      %v1152 = vadd.f32 0.0, %v1151
      %v1153 = vpop.f32.mrb[0].mxu0
      %1154 = vmatprep.mubr.f32.mxu0 0.0
      %1155 = vmatmul.mubr.f32.gmra.mrb[0].mxu0 %v1013
      %v1156 = vpop.f32.mrb[0].mxu0
      %v1157 = vadd.f32 0.0, %v1156
      %v1158 = vpop.f32.mrb[0].mxu0
      %1159 = vdwg.mxu0
      %1160 = vmatprep.subr.mxu0 0.0
      %1161 = vmatpush1.msra.mxu0 %v948
      %1162 = vmatprep.subr.mxu0 0.0
      %1163 = vmatpush1.msra.mxu0 0.0
      %1164 = vmatprep.subr.mxu0 0.0
      %1165 = vmatpush1.msra.mxu0 0.0
      %1166 = vmatprep.subr.mxu0 0.0
      %1167 = vmatpush1.msra.mxu0 0.0
      %1168 = vmatprep.subr.mxu0 0.0
      %1169 = vmatpush1.msra.mxu0 0.0
      %1170 = vmatprep.subr.mxu0 0.0
      %1171 = vmatpush1.msra.mxu0 0.0
      %1172 = vmatprep.subr.mxu0 0.0
      %1173 = vmatpush1.msra.mxu0 0.0
      %1174 = vmatprep.subr.mxu0 0.0
      %1175 = vmatpush1.msra.mxu0 0.0
      %1176 = vmatprep.subr.mxu0 0.0
      %1177 = vmatpush1.msra.mxu0 0.0
      %1178 = vmatprep.subr.mxu0 0.0
      %1179 = vmatpush1.msra.mxu0 0.0
      %1180 = vmatprep.subr.mxu0 0.0
      %1181 = vmatpush1.msra.mxu0 0.0
      %1182 = vmatprep.subr.mxu0 0.0
      %1183 = vmatpush1.msra.mxu0 0.0
      %1184 = vmatprep.subr.mxu0 0.0
      %1185 = vmatpush1.msra.mxu0 0.0
      %1186 = vmatprep.subr.mxu0 0.0
      %1187 = vmatpush1.msra.mxu0 0.0
      %1188 = vmatprep.subr.mxu0 0.0
      %1189 = vmatpush1.msra.mxu0 0.0
      %1190 = vmatprep.subr.mxu0 0.0
      %1191 = vmatpush1.msra.mxu0 0.0
      %1192 = vmatprep.subr.mxu0 0.0
      %1193 = vmatpush1.msra.mxu0 0.0
      %1194 = vmatprep.subr.mxu0 0.0
      %1195 = vmatpush1.msra.mxu0 0.0
      %1196 = vmatprep.subr.mxu0 0.0
      %1197 = vmatpush1.msra.mxu0 0.0
      %1198 = vmatprep.subr.mxu0 0.0
      %1199 = vmatpush1.msra.mxu0 0.0
      %1200 = vmatprep.subr.mxu0 0.0
      %1201 = vmatpush1.msra.mxu0 0.0
      %1202 = vmatprep.subr.mxu0 0.0
      %1203 = vmatpush1.msra.mxu0 0.0
      %1204 = vmatprep.subr.mxu0 0.0
      %1205 = vmatpush1.msra.mxu0 0.0
      %1206 = vmatprep.subr.mxu0 0.0
      %1207 = vmatpush1.msra.mxu0 0.0
      %1208 = vmatprep.subr.mxu0 0.0
      %1209 = vmatpush1.msra.mxu0 0.0
      %1210 = vmatprep.subr.mxu0 0.0
      %1211 = vmatpush1.msra.mxu0 0.0
      %1212 = vmatprep.subr.mxu0 0.0
      %1213 = vmatpush1.msra.mxu0 0.0
      %1214 = vmatprep.subr.mxu0 0.0
      %1215 = vmatpush1.msra.mxu0 0.0
      %1216 = vmatprep.subr.mxu0 0.0
      %1217 = vmatpush1.msra.mxu0 0.0
      %1218 = vmatprep.subr.mxu0 0.0
      %1219 = vmatpush1.msra.mxu0 0.0
      %1220 = vmatprep.subr.mxu0 0.0
      %1221 = vmatpush1.msra.mxu0 0.0
      %1222 = vmatprep.subr.mxu0 0.0
      %1223 = vmatpush1.msra.mxu0 0.0
      %1224 = vmatprep.mubr.f32.mxu0 0.0
      %1225 = vmatmul.mubr.f32.gmra.mrb[0].mxu0 %v968
      %v1226 = vpop.f32.mrb[0].mxu0
      %v1227 = vadd.f32 0.0, %v1226
      %v1228 = vpop.f32.mrb[0].mxu0
      %1229 = vmatprep.mubr.f32.mxu0 0.0
      %1230 = vmatmul.mubr.f32.gmra.mrb[0].mxu0 %v971
      %v1231 = vpop.f32.mrb[0].mxu0
      %v1232 = vadd.f32 0.0, %v1231
      %v1233 = vpop.f32.mrb[0].mxu0
      %1234 = vmatprep.mubr.f32.mxu0 0.0
      %1235 = vmatmul.mubr.f32.gmra.mrb[0].mxu0 %v974
      %v1236 = vpop.f32.mrb[0].mxu0
      %v1237 = vadd.f32 0.0, %v1236
      %v1238 = vpop.f32.mrb[0].mxu0
      %1239 = vmatprep.mubr.f32.mxu0 0.0
      %1240 = vmatmul.mubr.f32.gmra.mrb[0].mxu0 %v977
      %v1241 = vpop.f32.mrb[0].mxu0
      %v1242 = vadd.f32 0.0, %v1241
      %v1243 = vpop.f32.mrb[0].mxu0
      %1244 = vmatprep.mubr.f32.mxu0 0.0
      %1245 = vmatmul.mubr.f32.gmra.mrb[0].mxu0 %v980
      %v1246 = vpop.f32.mrb[0].mxu0
      %v1247 = vadd.f32 0.0, %v1246
      %v1248 = vpop.f32.mrb[0].mxu0
      %1249 = vmatprep.mubr.f32.mxu0 0.0
      %1250 = vmatmul.mubr.f32.gmra.mrb[0].mxu0 %v983
      %v1251 = vpop.f32.mrb[0].mxu0
      %v1252 = vadd.f32 0.0, %v1251
      %v1253 = vpop.f32.mrb[0].mxu0
      %1254 = vmatprep.mubr.f32.mxu0 0.0
      %1255 = vmatmul.mubr.f32.gmra.mrb[0].mxu0 %v986
      %v1256 = vpop.f32.mrb[0].mxu0
      %v1257 = vadd.f32 0.0, %v1256
      %v1258 = vpop.f32.mrb[0].mxu0
      %1259 = vmatprep.mubr.f32.mxu0 0.0
      %1260 = vmatmul.mubr.f32.gmra.mrb[0].mxu0 %v989
      %v1261 = vpop.f32.mrb[0].mxu0
      %v1262 = vadd.f32 0.0, %v1261
      %v1263 = vpop.f32.mrb[0].mxu0
      %1264 = vmatprep.mubr.f32.mxu0 0.0
      %1265 = vmatmul.mubr.f32.gmra.mrb[0].mxu0 %v992
      %v1266 = vpop.f32.mrb[0].mxu0
      %v1267 = vadd.f32 0.0, %v1266
      %v1268 = vpop.f32.mrb[0].mxu0
      %1269 = vmatprep.mubr.f32.mxu0 0.0
      %1270 = vmatmul.mubr.f32.gmra.mrb[0].mxu0 %v995
      %v1271 = vpop.f32.mrb[0].mxu0
      %v1272 = vadd.f32 0.0, %v1271
      %v1273 = vpop.f32.mrb[0].mxu0
      %1274 = vmatprep.mubr.f32.mxu0 0.0
      %1275 = vmatmul.mubr.f32.gmra.mrb[0].mxu0 %v998
      %v1276 = vpop.f32.mrb[0].mxu0
      %v1277 = vadd.f32 0.0, %v1276
      %v1278 = vpop.f32.mrb[0].mxu0
      %1279 = vmatprep.mubr.f32.mxu0 0.0
      %1280 = vmatmul.mubr.f32.gmra.mrb[0].mxu0 %v1001
      %v1281 = vpop.f32.mrb[0].mxu0
      %v1282 = vadd.f32 0.0, %v1281
      %v1283 = vpop.f32.mrb[0].mxu0
      %1284 = vmatprep.mubr.f32.mxu0 0.0
      %1285 = vmatmul.mubr.f32.gmra.mrb[0].mxu0 %v1004
      %v1286 = vpop.f32.mrb[0].mxu0
      %v1287 = vadd.f32 0.0, %v1286
      %v1288 = vpop.f32.mrb[0].mxu0
      %1289 = vmatprep.mubr.f32.mxu0 0.0
      %1290 = vmatmul.mubr.f32.gmra.mrb[0].mxu0 %v1007
      %v1291 = vpop.f32.mrb[0].mxu0
      %v1292 = vadd.f32 0.0, %v1291
      %v1293 = vpop.f32.mrb[0].mxu0
      %1294 = vmatprep.mubr.f32.mxu0 0.0
      %1295 = vmatmul.mubr.f32.gmra.mrb[0].mxu0 %v1010
      %v1296 = vpop.f32.mrb[0].mxu0
      %v1297 = vadd.f32 0.0, %v1296
      %v1298 = vpop.f32.mrb[0].mxu0
      %1299 = vmatprep.mubr.f32.mxu0 0.0
      %1300 = vmatmul.mubr.f32.gmra.mrb[0].mxu0 %v1013
      %v1301 = vpop.f32.mrb[0].mxu0
      %v1302 = vadd.f32 0.0, %v1301
      %v1303 = vpop.f32.mrb[0].mxu0
      %1304 = vdwg.mxu0
      %v1305 = vmul.f32 %v1082, %v1082
      %v1306 = vmul.f32 %v1087, %v1087
      %v1307 = vmul.f32 %v1092, %v1092
      %v1308 = vmul.f32 %v1097, %v1097
      %v1309 = vmul.f32 %v1102, %v1102
      %v1310 = vmul.f32 %v1107, %v1107
      %v1311 = vmul.f32 %v1112, %v1112
      %v1312 = vmul.f32 %v1117, %v1117
      %v1313 = vmul.f32 %v1122, %v1122
      %v1314 = vmul.f32 %v1127, %v1127
      %v1315 = vmul.f32 %v1132, %v1132
      %v1316 = vmul.f32 %v1137, %v1137
      %v1317 = vmul.f32 %v1142, %v1142
      %v1318 = vmul.f32 %v1147, %v1147
      %v1319 = vmul.f32 %v1152, %v1152
      %v1320 = vmul.f32 %v1157, %v1157
      %v1321 = vsub.f32 %v1227, %v1305
      %v1322 = vsub.f32 %v1232, %v1306
      %v1323 = vsub.f32 %v1237, %v1307
      %v1324 = vsub.f32 %v1242, %v1308
      %v1325 = vsub.f32 %v1247, %v1309
      %v1326 = vsub.f32 %v1252, %v1310
      %v1327 = vsub.f32 %v1257, %v1311
      %v1328 = vsub.f32 %v1262, %v1312
      %v1329 = vsub.f32 %v1267, %v1313
      %v1330 = vsub.f32 %v1272, %v1314
      %v1331 = vsub.f32 %v1277, %v1315
      %v1332 = vsub.f32 %v1282, %v1316
      %v1333 = vsub.f32 %v1287, %v1317
      %v1334 = vsub.f32 %v1292, %v1318
      %v1335 = vsub.f32 %v1297, %v1319
      %v1336 = vsub.f32 %v1302, %v1320
      %v1337 = vmax.f32 %v1321, 0.0
      %v1338 = vmax.f32 %v1322, 0.0
      %v1339 = vmax.f32 %v1323, 0.0
      %v1340 = vmax.f32 %v1324, 0.0
      %v1341 = vmax.f32 %v1325, 0.0
      %v1342 = vmax.f32 %v1326, 0.0
      %v1343 = vmax.f32 %v1327, 0.0
      %v1344 = vmax.f32 %v1328, 0.0
      %v1345 = vmax.f32 %v1329, 0.0
      %v1346 = vmax.f32 %v1330, 0.0
      %v1347 = vmax.f32 %v1331, 0.0
      %v1348 = vmax.f32 %v1332, 0.0
      %v1349 = vmax.f32 %v1333, 0.0
      %v1350 = vmax.f32 %v1334, 0.0
      %v1351 = vmax.f32 %v1335, 0.0
      %v1352 = vmax.f32 %v1336, 0.0
      %1354 = vset.pattern.permute.xlu0 0
      %1355 = vperm.xlu0 %1354, %v1082
      %v1356 = vpop.permute.xlu0 %1355
      %1359 = vset.pattern.permute.xlu0 0
      %1360 = vperm.xlu0 %1359, %v1087
      %v1361 = vpop.permute.xlu0 %1360
      %1364 = vset.pattern.permute.xlu0 0
      %1365 = vperm.xlu0 %1364, %v1092
      %v1366 = vpop.permute.xlu0 %1365
      %1369 = vset.pattern.permute.xlu0 0
      %1370 = vperm.xlu0 %1369, %v1097
      %v1371 = vpop.permute.xlu0 %1370
      %1374 = vset.pattern.permute.xlu0 0
      %1375 = vperm.xlu0 %1374, %v1102
      %v1376 = vpop.permute.xlu0 %1375
      %1379 = vset.pattern.permute.xlu0 0
      %1380 = vperm.xlu0 %1379, %v1107
      %v1381 = vpop.permute.xlu0 %1380
      %1384 = vset.pattern.permute.xlu0 0
      %1385 = vperm.xlu0 %1384, %v1112
      %v1386 = vpop.permute.xlu0 %1385
      %1389 = vset.pattern.permute.xlu0 0
      %1390 = vperm.xlu0 %1389, %v1117
      %v1391 = vpop.permute.xlu0 %1390
      %1394 = vset.pattern.permute.xlu0 0
      %1395 = vperm.xlu0 %1394, %v1122
      %v1396 = vpop.permute.xlu0 %1395
      %1399 = vset.pattern.permute.xlu0 0
      %1400 = vperm.xlu0 %1399, %v1127
      %v1401 = vpop.permute.xlu0 %1400
      %1404 = vset.pattern.permute.xlu0 0
      %1405 = vperm.xlu0 %1404, %v1132
      %v1406 = vpop.permute.xlu0 %1405
      %1409 = vset.pattern.permute.xlu0 0
      %1410 = vperm.xlu0 %1409, %v1137
      %v1411 = vpop.permute.xlu0 %1410
      %1414 = vset.pattern.permute.xlu0 0
      %1415 = vperm.xlu0 %1414, %v1142
      %v1416 = vpop.permute.xlu0 %1415
      %1419 = vset.pattern.permute.xlu0 0
      %1420 = vperm.xlu0 %1419, %v1147
      %v1421 = vpop.permute.xlu0 %1420
      %1424 = vset.pattern.permute.xlu0 0
      %1425 = vperm.xlu0 %1424, %v1152
      %v1426 = vpop.permute.xlu0 %1425
      %1429 = vset.pattern.permute.xlu0 0
      %1430 = vperm.xlu0 %1429, %v1157
      %v1431 = vpop.permute.xlu0 %1430
      %v1433 = vsub.f32 %v635, %v1356
      %v1434 = vsub.f32 %v638, %v1361
      %v1435 = vsub.f32 %v643, %v1366
      %v1436 = vsub.f32 %v646, %v1371
      %v1437 = vsub.f32 %v651, %v1376
      %v1438 = vsub.f32 %v654, %v1381
      %v1439 = vsub.f32 %v659, %v1386
      %v1440 = vsub.f32 %v662, %v1391
      %v1441 = vsub.f32 %v667, %v1396
      %v1442 = vsub.f32 %v670, %v1401
      %v1443 = vsub.f32 %v675, %v1406
      %v1444 = vsub.f32 %v678, %v1411
      %v1445 = vsub.f32 %v683, %v1416
      %v1446 = vsub.f32 %v686, %v1421
      %v1447 = vsub.f32 %v691, %v1426
      %v1448 = vsub.f32 %v694, %v1431
      %v1449 = vadd.f32 %v1337, 1e-05
      %v1450 = vadd.f32 %v1338, 1e-05
      %v1451 = vadd.f32 %v1339, 1e-05
      %v1452 = vadd.f32 %v1340, 1e-05
      %v1453 = vadd.f32 %v1341, 1e-05
      %v1454 = vadd.f32 %v1342, 1e-05
      %v1455 = vadd.f32 %v1343, 1e-05
      %v1456 = vadd.f32 %v1344, 1e-05
      %v1457 = vadd.f32 %v1345, 1e-05
      %v1458 = vadd.f32 %v1346, 1e-05
      %v1459 = vadd.f32 %v1347, 1e-05
      %v1460 = vadd.f32 %v1348, 1e-05
      %v1461 = vadd.f32 %v1349, 1e-05
      %v1462 = vadd.f32 %v1350, 1e-05
      %v1463 = vadd.f32 %v1351, 1e-05
      %v1464 = vadd.f32 %v1352, 1e-05
      %v1465 = vrsqrt.pop %v1449
      %v1466 = vrsqrt.pop %v1450
      %v1467 = vrsqrt.pop %v1451
      %v1468 = vrsqrt.pop %v1452
      %v1469 = vrsqrt.pop %v1453
      %v1470 = vrsqrt.pop %v1454
      %v1471 = vrsqrt.pop %v1455
      %v1472 = vrsqrt.pop %v1456
      %v1473 = vrsqrt.pop %v1457
      %v1474 = vrsqrt.pop %v1458
      %v1475 = vrsqrt.pop %v1459
      %v1476 = vrsqrt.pop %v1460
      %v1477 = vrsqrt.pop %v1461
      %v1478 = vrsqrt.pop %v1462
      %v1479 = vrsqrt.pop %v1463
      %v1480 = vrsqrt.pop %v1464
      %1482 = vset.pattern.permute.xlu0 0
      %1483 = vperm.xlu0 %1482, %v1465
      %v1484 = vpop.permute.xlu0 %1483
      %1487 = vset.pattern.permute.xlu0 0
      %1488 = vperm.xlu0 %1487, %v1466
      %v1489 = vpop.permute.xlu0 %1488
      %1492 = vset.pattern.permute.xlu0 0
      %1493 = vperm.xlu0 %1492, %v1467
      %v1494 = vpop.permute.xlu0 %1493
      %1497 = vset.pattern.permute.xlu0 0
      %1498 = vperm.xlu0 %1497, %v1468
      %v1499 = vpop.permute.xlu0 %1498
      %1502 = vset.pattern.permute.xlu0 0
      %1503 = vperm.xlu0 %1502, %v1469
      %v1504 = vpop.permute.xlu0 %1503
      %1507 = vset.pattern.permute.xlu0 0
      %1508 = vperm.xlu0 %1507, %v1470
      %v1509 = vpop.permute.xlu0 %1508
      %1512 = vset.pattern.permute.xlu0 0
      %1513 = vperm.xlu0 %1512, %v1471
      %v1514 = vpop.permute.xlu0 %1513
      %1517 = vset.pattern.permute.xlu0 0
      %1518 = vperm.xlu0 %1517, %v1472
      %v1519 = vpop.permute.xlu0 %1518
      %1522 = vset.pattern.permute.xlu0 0
      %1523 = vperm.xlu0 %1522, %v1473
      %v1524 = vpop.permute.xlu0 %1523
      %1527 = vset.pattern.permute.xlu0 0
      %1528 = vperm.xlu0 %1527, %v1474
      %v1529 = vpop.permute.xlu0 %1528
      %1532 = vset.pattern.permute.xlu0 0
      %1533 = vperm.xlu0 %1532, %v1475
      %v1534 = vpop.permute.xlu0 %1533
      %1537 = vset.pattern.permute.xlu0 0
      %1538 = vperm.xlu0 %1537, %v1476
      %v1539 = vpop.permute.xlu0 %1538
      %1542 = vset.pattern.permute.xlu0 0
      %1543 = vperm.xlu0 %1542, %v1477
      %v1544 = vpop.permute.xlu0 %1543
      %1547 = vset.pattern.permute.xlu0 0
      %1548 = vperm.xlu0 %1547, %v1478
      %v1549 = vpop.permute.xlu0 %1548
      %1552 = vset.pattern.permute.xlu0 0
      %1553 = vperm.xlu0 %1552, %v1479
      %v1554 = vpop.permute.xlu0 %1553
      %1557 = vset.pattern.permute.xlu0 0
      %1558 = vperm.xlu0 %1557, %v1480
      %v1559 = vpop.permute.xlu0 %1558
      %v1561 = vmul.f32 %v1433, %v1484
      %v1562 = vmul.f32 %v1434, %v1489
      %v1563 = vmul.f32 %v1435, %v1494
      %v1564 = vmul.f32 %v1436, %v1499
      %v1565 = vmul.f32 %v1437, %v1504
      %v1566 = vmul.f32 %v1438, %v1509
      %v1567 = vmul.f32 %v1439, %v1514
      %v1568 = vmul.f32 %v1440, %v1519
      %v1569 = vmul.f32 %v1441, %v1524
      %v1570 = vmul.f32 %v1442, %v1529
      %v1571 = vmul.f32 %v1443, %v1534
      %v1572 = vmul.f32 %v1444, %v1539
      %v1573 = vmul.f32 %v1445, %v1544
      %v1574 = vmul.f32 %v1446, %v1549
      %v1575 = vmul.f32 %v1447, %v1554
      %v1576 = vmul.f32 %v1448, %v1559
      %v1577 = vld [vmem:[%s3] sm:$0xff]
      %v1578 = vld [vmem:[%s3 + $0x8] sm:$0xff]
      %v1579 = vld [vmem:[%s3 + $0x10] sm:$0xff]
      %v1580 = vld [vmem:[%s3 + $0x18] sm:$0xff]
      %v1581 = vld [vmem:[%s3 + $0x20] sm:$0xff]
      %v1582 = vld [vmem:[%s3 + $0x28] sm:$0xff]
      %v1583 = vld [vmem:[%s3 + $0x30] sm:$0xff]
      %v1584 = vld [vmem:[%s3 + $0x38] sm:$0xff]
      %v1585 = vld [vmem:[%s3 + $0x40] sm:$0xff]
      %v1586 = vld [vmem:[%s3 + $0x48] sm:$0xff]
      %v1587 = vld [vmem:[%s3 + $0x50] sm:$0xff]
      %v1588 = vld [vmem:[%s3 + $0x58] sm:$0xff]
      %v1589 = vld [vmem:[%s3 + $0x60] sm:$0xff]
      %v1590 = vld [vmem:[%s3 + $0x68] sm:$0xff]
      %v1591 = vld [vmem:[%s3 + $0x70] sm:$0xff]
      %v1592 = vld [vmem:[%s3 + $0x78] sm:$0xff]
      %1594 = vset.pattern.permute.xlu0 0
      %1595 = vperm.xlu0 %1594, %v1577
      %v1596 = vpop.permute.xlu0 %1595
      %1599 = vset.pattern.permute.xlu0 0
      %1600 = vperm.xlu0 %1599, %v1578
      %v1601 = vpop.permute.xlu0 %1600
      %1604 = vset.pattern.permute.xlu0 0
      %1605 = vperm.xlu0 %1604, %v1579
      %v1606 = vpop.permute.xlu0 %1605
      %1609 = vset.pattern.permute.xlu0 0
      %1610 = vperm.xlu0 %1609, %v1580
      %v1611 = vpop.permute.xlu0 %1610
      %1614 = vset.pattern.permute.xlu0 0
      %1615 = vperm.xlu0 %1614, %v1581
      %v1616 = vpop.permute.xlu0 %1615
      %1619 = vset.pattern.permute.xlu0 0
      %1620 = vperm.xlu0 %1619, %v1582
      %v1621 = vpop.permute.xlu0 %1620
      %1624 = vset.pattern.permute.xlu0 0
      %1625 = vperm.xlu0 %1624, %v1583
      %v1626 = vpop.permute.xlu0 %1625
      %1629 = vset.pattern.permute.xlu0 0
      %1630 = vperm.xlu0 %1629, %v1584
      %v1631 = vpop.permute.xlu0 %1630
      %1634 = vset.pattern.permute.xlu0 0
      %1635 = vperm.xlu0 %1634, %v1585
      %v1636 = vpop.permute.xlu0 %1635
      %1639 = vset.pattern.permute.xlu0 0
      %1640 = vperm.xlu0 %1639, %v1586
      %v1641 = vpop.permute.xlu0 %1640
      %1644 = vset.pattern.permute.xlu0 0
      %1645 = vperm.xlu0 %1644, %v1587
      %v1646 = vpop.permute.xlu0 %1645
      %1649 = vset.pattern.permute.xlu0 0
      %1650 = vperm.xlu0 %1649, %v1588
      %v1651 = vpop.permute.xlu0 %1650
      %1654 = vset.pattern.permute.xlu0 0
      %1655 = vperm.xlu0 %1654, %v1589
      %v1656 = vpop.permute.xlu0 %1655
      %1659 = vset.pattern.permute.xlu0 0
      %1660 = vperm.xlu0 %1659, %v1590
      %v1661 = vpop.permute.xlu0 %1660
      %1664 = vset.pattern.permute.xlu0 0
      %1665 = vperm.xlu0 %1664, %v1591
      %v1666 = vpop.permute.xlu0 %1665
      %1669 = vset.pattern.permute.xlu0 0
      %1670 = vperm.xlu0 %1669, %v1592
      %v1671 = vpop.permute.xlu0 %1670
      %v1673 = vmul.f32 %v1561, %v1596
      %v1674 = vmul.f32 %v1562, %v1601
      %v1675 = vmul.f32 %v1563, %v1606
      %v1676 = vmul.f32 %v1564, %v1611
      %v1677 = vmul.f32 %v1565, %v1616
      %v1678 = vmul.f32 %v1566, %v1621
      %v1679 = vmul.f32 %v1567, %v1626
      %v1680 = vmul.f32 %v1568, %v1631
      %v1681 = vmul.f32 %v1569, %v1636
      %v1682 = vmul.f32 %v1570, %v1641
      %v1683 = vmul.f32 %v1571, %v1646
      %v1684 = vmul.f32 %v1572, %v1651
      %v1685 = vmul.f32 %v1573, %v1656
      %v1686 = vmul.f32 %v1574, %v1661
      %v1687 = vmul.f32 %v1575, %v1666
      %v1688 = vmul.f32 %v1576, %v1671
      %v1689 = vld [vmem:[%s4] sm:$0xff]
      %v1690 = vld [vmem:[%s4 + $0x8] sm:$0xff]
      %v1691 = vld [vmem:[%s4 + $0x10] sm:$0xff]
      %v1692 = vld [vmem:[%s4 + $0x18] sm:$0xff]
      %v1693 = vld [vmem:[%s4 + $0x20] sm:$0xff]
      %v1694 = vld [vmem:[%s4 + $0x28] sm:$0xff]
      %v1695 = vld [vmem:[%s4 + $0x30] sm:$0xff]
      %v1696 = vld [vmem:[%s4 + $0x38] sm:$0xff]
      %v1697 = vld [vmem:[%s4 + $0x40] sm:$0xff]
      %v1698 = vld [vmem:[%s4 + $0x48] sm:$0xff]
      %v1699 = vld [vmem:[%s4 + $0x50] sm:$0xff]
      %v1700 = vld [vmem:[%s4 + $0x58] sm:$0xff]
      %v1701 = vld [vmem:[%s4 + $0x60] sm:$0xff]
      %v1702 = vld [vmem:[%s4 + $0x68] sm:$0xff]
      %v1703 = vld [vmem:[%s4 + $0x70] sm:$0xff]
      %v1704 = vld [vmem:[%s4 + $0x78] sm:$0xff]
      %1706 = vset.pattern.permute.xlu0 0
      %1707 = vperm.xlu0 %1706, %v1689
      %v1708 = vpop.permute.xlu0 %1707
      %1711 = vset.pattern.permute.xlu0 0
      %1712 = vperm.xlu0 %1711, %v1690
      %v1713 = vpop.permute.xlu0 %1712
      %1716 = vset.pattern.permute.xlu0 0
      %1717 = vperm.xlu0 %1716, %v1691
      %v1718 = vpop.permute.xlu0 %1717
      %1721 = vset.pattern.permute.xlu0 0
      %1722 = vperm.xlu0 %1721, %v1692
      %v1723 = vpop.permute.xlu0 %1722
      %1726 = vset.pattern.permute.xlu0 0
      %1727 = vperm.xlu0 %1726, %v1693
      %v1728 = vpop.permute.xlu0 %1727
      %1731 = vset.pattern.permute.xlu0 0
      %1732 = vperm.xlu0 %1731, %v1694
      %v1733 = vpop.permute.xlu0 %1732
      %1736 = vset.pattern.permute.xlu0 0
      %1737 = vperm.xlu0 %1736, %v1695
      %v1738 = vpop.permute.xlu0 %1737
      %1741 = vset.pattern.permute.xlu0 0
      %1742 = vperm.xlu0 %1741, %v1696
      %v1743 = vpop.permute.xlu0 %1742
      %1746 = vset.pattern.permute.xlu0 0
      %1747 = vperm.xlu0 %1746, %v1697
      %v1748 = vpop.permute.xlu0 %1747
      %1751 = vset.pattern.permute.xlu0 0
      %1752 = vperm.xlu0 %1751, %v1698
      %v1753 = vpop.permute.xlu0 %1752
      %1756 = vset.pattern.permute.xlu0 0
      %1757 = vperm.xlu0 %1756, %v1699
      %v1758 = vpop.permute.xlu0 %1757
      %1761 = vset.pattern.permute.xlu0 0
      %1762 = vperm.xlu0 %1761, %v1700
      %v1763 = vpop.permute.xlu0 %1762
      %1766 = vset.pattern.permute.xlu0 0
      %1767 = vperm.xlu0 %1766, %v1701
      %v1768 = vpop.permute.xlu0 %1767
      %1771 = vset.pattern.permute.xlu0 0
      %1772 = vperm.xlu0 %1771, %v1702
      %v1773 = vpop.permute.xlu0 %1772
      %1776 = vset.pattern.permute.xlu0 0
      %1777 = vperm.xlu0 %1776, %v1703
      %v1778 = vpop.permute.xlu0 %1777
      %1781 = vset.pattern.permute.xlu0 0
      %1782 = vperm.xlu0 %1781, %v1704
      %v1783 = vpop.permute.xlu0 %1782
      %v1785 = vadd.f32 %v1673, %v1708
      %v1786 = vadd.f32 %v1674, %v1713
      %v1787 = vadd.f32 %v1675, %v1718
      %v1788 = vadd.f32 %v1676, %v1723
      %v1789 = vadd.f32 %v1677, %v1728
      %v1790 = vadd.f32 %v1678, %v1733
      %v1791 = vadd.f32 %v1679, %v1738
      %v1792 = vadd.f32 %v1680, %v1743
      %v1793 = vadd.f32 %v1681, %v1748
      %v1794 = vadd.f32 %v1682, %v1753
      %v1795 = vadd.f32 %v1683, %v1758
      %v1796 = vadd.f32 %v1684, %v1763
      %v1797 = vadd.f32 %v1685, %v1768
      %v1798 = vadd.f32 %v1686, %v1773
      %v1799 = vadd.f32 %v1687, %v1778
      %v1800 = vadd.f32 %v1688, %v1783
      %v1801 = vmax.f32 %v1785, 0.0
      %v1802 = vmax.f32 %v1786, 0.0
      %v1803 = vmax.f32 %v1787, 0.0
      %v1804 = vmax.f32 %v1788, 0.0
      %v1805 = vmax.f32 %v1789, 0.0
      %v1806 = vmax.f32 %v1790, 0.0
      %v1807 = vmax.f32 %v1791, 0.0
      %v1808 = vmax.f32 %v1792, 0.0
      %v1809 = vmax.f32 %v1793, 0.0
      %v1810 = vmax.f32 %v1794, 0.0
      %v1811 = vmax.f32 %v1795, 0.0
      %v1812 = vmax.f32 %v1796, 0.0
      %v1813 = vmax.f32 %v1797, 0.0
      %v1814 = vmax.f32 %v1798, 0.0
      %v1815 = vmax.f32 %v1799, 0.0
      %v1816 = vmax.f32 %v1800, 0.0
      %1817 = vst.msk [vmem:[%s278] sm:$0xff] %vm697, %v1801
      %1818 = vst.msk [vmem:[%s278 + $0x8] sm:$0xff] %vm697, %v1802
      %1819 = vst.msk [vmem:[%s278 + $0x10] sm:$0xff] %vm697, %v1803
      %1820 = vst.msk [vmem:[%s278 + $0x18] sm:$0xff] %vm697, %v1804
      %1821 = vst.msk [vmem:[%s278 + $0x20] sm:$0xff] %vm697, %v1805
      %1822 = vst.msk [vmem:[%s278 + $0x28] sm:$0xff] %vm697, %v1806
      %1823 = vst.msk [vmem:[%s278 + $0x30] sm:$0xff] %vm697, %v1807
      %1824 = vst.msk [vmem:[%s278 + $0x38] sm:$0xff] %vm697, %v1808
      %1825 = vst.msk [vmem:[%s278 + $0x40] sm:$0xff] %vm697, %v1809
      %1826 = vst.msk [vmem:[%s278 + $0x48] sm:$0xff] %vm697, %v1810
      %1827 = vst.msk [vmem:[%s278 + $0x50] sm:$0xff] %vm697, %v1811
      %1828 = vst.msk [vmem:[%s278 + $0x58] sm:$0xff] %vm697, %v1812
      %1829 = vst.msk [vmem:[%s278 + $0x60] sm:$0xff] %vm697, %v1813
      %1830 = vst.msk [vmem:[%s278 + $0x68] sm:$0xff] %vm697, %v1814
      %1831 = vst.msk [vmem:[%s278 + $0x70] sm:$0xff] %vm697, %v1815
      %1832 = vst.msk [vmem:[%s278 + $0x78] sm:$0xff] %vm697, %v1816
      %p1833 = scmp.lt.s32.totalorder %s18, 1
      %s1834 = scalar_select %p1833, %s18, 1
      %s1835 = smul.addr %s1834, 16
      %s1836 = smul.addr %s1835, 8
      %s1837 = scalar_lea.vmem %s7, %s1836
      // Predicated region
      $region49: #{stereonet_forward.18} parent=47 // pred_check
        %p1838 = pneg %p188
      $region50: #{stereonet_forward.18} parent=47 // pred_check_branch
        %1840 = sbr.rel (%p1838) target = $region52
      $region51: #{stereonet_forward.18} parent=47 // pred_region
        _
      $region52: #{stereonet_forward.18} parent=47 // pred_fallthru
        _
    $region48: #{stereonet_forward.18} parent=5 // pred_fallthru
      _
    %p1841 = scmp.le.s32.totalorder 2, %s13
    // Predicated region
    $region53: #{stereonet_forward.18} parent=5 // pred_check
      %p1842 = pneg %p1841
    $region54: #{stereonet_forward.18} parent=5 // pred_check_branch
      %1844 = sbr.rel (%p1842) target = $region56
    $region55: #{stereonet_forward.18} parent=5 // pred_region
      %s1845 = ssub.s32 %s13, 2
      // Predicated region
      $region57: #{stereonet_forward.18} parent=55 // pred_check
        %p1846 = pneg %p194
      $region58: #{stereonet_forward.18} parent=55 // pred_check_branch
        %1848 = sbr.rel (%p1846) target = $region60
      $region59: #{stereonet_forward.18} parent=55 // pred_region
        %p1849 = scmp.lt.s32.totalorder %s19, 1
        %s1850 = scalar_select %p1849, %s19, 1
        %s1851 = smul.addr %s1850, 16
        %s1852 = smul.addr %s1851, 8
        %s1853 = scalar_lea.vmem %s7, %s1852
      $region60: #{stereonet_forward.18} parent=55 // pred_fallthru
        _
    $region56: #{stereonet_forward.18} parent=5 // pred_fallthru
      _
  $region6: #{stereonet_forward.18} parent=0 // loop_footer
    %s17 = sadd.s32 1, %s13
  $region7: #{stereonet_forward.18} parent=0 // loop_footer_branch
    %12 = sbr.rel target = $region3
  $region8: #{stereonet_forward.18} parent=0 // loop_exit
    _

// kernel: tile.33
$region0: #{tile.33}
  #allocation0 [shape = 's32[1]{0}', space=sflag, size = 0x4, scoped, tag = 'scoped memory for tile.33']
  %s0 = inlined_call_operand.vmem [shape: f32[8], index: 0, kind: input, shape index: {}]
  %s1 = inlined_call_operand.vmem [shape: f32[8,8], index: 1, kind: output, shape index: {}]
  // Predicated region
  $region2: #{tile.33} parent=0 // pred_check
    _
  $region3: #{tile.33} parent=0 // pred_check_branch
    %3 = sbr.rel (0) target = $region5
  $region4: #{tile.33} parent=0 // pred_region
    _
  $region5: #{tile.33} parent=0 // pred_fallthru
    _
  %v4 = vld [vmem:[%s0] ss:$0 sm:$0xff]
  %5 = vst [vmem:[%s1] sm:$0xff] %v4

// kernel: tile.2
$region0: #{tile.2}
  %s0 = inlined_call_operand.vmem [shape: f32[8,8], index: 0, kind: input, shape index: {}]
  %s1 = inlined_call_operand.vmem [shape: f32[64,1], index: 1, kind: output, shape index: {}]
  %v2 = vld [vmem:[%s0] sm:$0xff]
  %vm3 = vcmask 7168
  %4 = vst.msk [vmem:[%s1] ss:$8 sm:$0xf] %vm3, %v2
  %5 = vst.msk [vmem:[%s1] ss:$8 sm:$0xf0] %vm3, %v2
  %v6 = vld [vmem:[%s0] sm:$0xff]
  %7 = vrot.lane.b32.xlu0 %v6, 127
  %v8 = vpop.permute.xlu0 %7
  %vm9 = vcmask 7168
  %s10 = scalar_lea.vmem %s1, 1
  %11 = vst.msk [vmem:[%s10] ss:$8 sm:$0xf] %vm9, %v8
  %s12 = scalar_lea.vmem %s1, 1
  %13 = vst.msk [vmem:[%s12] ss:$8 sm:$0xf0] %vm9, %v8
  %v14 = vld [vmem:[%s0] sm:$0xff]
  %15 = vrot.lane.b32.xlu0 %v14, 126
  %v16 = vpop.permute.xlu0 %15
  %vm17 = vcmask 7168
  %s18 = scalar_lea.vmem %s1, 2
  %19 = vst.msk [vmem:[%s18] ss:$8 sm:$0xf] %vm17, %v16
  %s20 = scalar_lea.vmem %s1, 2
  %21 = vst.msk [vmem:[%s20] ss:$8 sm:$0xf0] %vm17, %v16
  %v22 = vld [vmem:[%s0] sm:$0xff]
  %23 = vrot.lane.b32.xlu0 %v22, 125
  %v24 = vpop.permute.xlu0 %23
  %vm25 = vcmask 7168
  %s26 = scalar_lea.vmem %s1, 3
  %27 = vst.msk [vmem:[%s26] ss:$8 sm:$0xf] %vm25, %v24
  %s28 = scalar_lea.vmem %s1, 3
  %29 = vst.msk [vmem:[%s28] ss:$8 sm:$0xf0] %vm25, %v24
  %v30 = vld [vmem:[%s0] sm:$0xff]
  %31 = vrot.lane.b32.xlu0 %v30, 124
  %v32 = vpop.permute.xlu0 %31
  %vm33 = vcmask 7168
  %s34 = scalar_lea.vmem %s1, 4
  %35 = vst.msk [vmem:[%s34] ss:$8 sm:$0xf] %vm33, %v32
  %s36 = scalar_lea.vmem %s1, 4
  %37 = vst.msk [vmem:[%s36] ss:$8 sm:$0xf0] %vm33, %v32
  %v38 = vld [vmem:[%s0] sm:$0xff]
  %39 = vrot.lane.b32.xlu0 %v38, 123
  %v40 = vpop.permute.xlu0 %39
  %vm41 = vcmask 7168
  %s42 = scalar_lea.vmem %s1, 5
  %43 = vst.msk [vmem:[%s42] ss:$8 sm:$0xf] %vm41, %v40
  %s44 = scalar_lea.vmem %s1, 5
  %45 = vst.msk [vmem:[%s44] ss:$8 sm:$0xf0] %vm41, %v40
  %v46 = vld [vmem:[%s0] sm:$0xff]
  %47 = vrot.lane.b32.xlu0 %v46, 122
  %v48 = vpop.permute.xlu0 %47
  %vm49 = vcmask 7168
  %s50 = scalar_lea.vmem %s1, 6
  %51 = vst.msk [vmem:[%s50] ss:$8 sm:$0xf] %vm49, %v48
  %s52 = scalar_lea.vmem %s1, 6
  %53 = vst.msk [vmem:[%s52] ss:$8 sm:$0xf0] %vm49, %v48
  %v54 = vld [vmem:[%s0] sm:$0xff]
  %55 = vrot.lane.b32.xlu0 %v54, 121
  %v56 = vpop.permute.xlu0 %55
  %vm57 = vcmask 7168
  %s58 = scalar_lea.vmem %s1, 7
  %59 = vst.msk [vmem:[%s58] ss:$8 sm:$0xf] %vm57, %v56
  %s60 = scalar_lea.vmem %s1, 7
  %61 = vst.msk [vmem:[%s60] ss:$8 sm:$0xf0] %vm57, %v56

// kernel: stereonet_forward.19
$region0: #{stereonet_forward.19}
  #allocation0 [shape = 'u32[]', space=smem, size = 0x4, offset = 0x4, fixed_abs, tag = 'smem constant byte address 0x4 - core index']
  #allocation1 [shape = 'u32[144,128]{1,0:T(1,128)}', space=vmem, size = 0x12000, scoped, tag = 'internal scratch']
  %s0 = inlined_call_operand.vmem [shape: bf16[2,128,64], index: 0, kind: input, shape index: {}]
  %s1 = inlined_call_operand.vmem [shape: bf16[64,128], index: 1, kind: input, shape index: {}]
  %s2 = inlined_call_operand.vmem [shape: f32[64,1], index: 2, kind: input, shape index: {}]
  %s3 = inlined_call_operand.vmem [shape: f32[64,1], index: 3, kind: input, shape index: {}]
  %s4 = inlined_call_operand.vmem [shape: f32[64,1], index: 4, kind: input, shape index: {}]
  %s5 = inlined_call_operand.vmem [shape: f32[8,64], index: 5, kind: input, shape index: {}]
  %s6 = inlined_call_operand.vmem [shape: f32[64,8], index: 6, kind: input, shape index: {}]
  %s7 = inlined_call_operand.vmem [shape: f32[2,64,64], index: 7, kind: output, shape index: {}]
  %s8 = sld [smem:[#allocation0]]
  $region61: #{stereonet_forward.19} parent=0
    _
  %s10 = ssub.s32 1, %s8
  %s11 = scalar_select 0, %s10, %s8
  loop: start=0, step=1, limit=4
  $region2: #{stereonet_forward.19} parent=0 // loop_pre_header
    _
  $region3: #{stereonet_forward.19} parent=0 // loop_header
    %s13 = sphi 0, %s17
    %p14 = scmp.ge.s32.totalorder %s13, 4
    %s23 = sphi 0, %s25
    %s26 = sphi 0, %s23
    %s27 = sphi 0, %s26
    %s43 = sphi 0, %s27
    %s47 = sphi 0, %s47
    %s49 = sphi 0, %s47
    %s50 = sphi 0, %s49
    %s64 = sphi 0, %s50
    %s68 = sphi 0, %s68
    %s70 = sphi 0, %s68
    %s71 = sphi 0, %s70
    %s85 = sphi 0, %s71
    %s89 = sphi 0, %s89
    %s91 = sphi 0, %s89
    %s92 = sphi 0, %s91
    %s106 = sphi 0, %s92
    %s110 = sphi 0, %s110
    %s112 = sphi 0, %s110
    %s113 = sphi 0, %s112
    %s127 = sphi 0, %s113
    %s131 = sphi 0, %s131
    %s133 = sphi 0, %s131
    %s134 = sphi 0, %s133
    %s148 = sphi 0, %s134
    %s152 = sphi 0, %s152
    %s154 = sphi 0, %s152
    %s155 = sphi 0, %s154
    %s169 = sphi 0, %s155
    %s175 = sphi 0, %s177
    %s178 = sphi 0, %s175
    %s179 = sphi 0, %s178
    %s195 = sphi 0, %s179
  $region4: #{stereonet_forward.19} parent=0 // loop_header_branch
    %16 = sbr.rel (%p14) target = $region8
  $region5: #{stereonet_forward.19} parent=0 // loop_body
    %s18 = ssub.s32 %s13, 1
    %s19 = ssub.s32 %s13, 2
    %s20 = sadd.s32 %s13, 1
    %s21 = ssub.s32 %s13, %s20
    %p22 = scmp.eq.s32.totalorder %s21, 0
    %s24 = sadd.s32 %s23, 1
    %s25 = scalar_select %p22, %s23, %s24
    %p28 = pneg %p22
    %p29 = scmp.eq.s32.totalorder %s13, 1
    %p30 = por %p28, %p29
    %p31 = scmp.ne.s32.totalorder %s23, %s26
    %p32 = scmp.eq.s32.totalorder %s13, 0
    %p33 = por %p31, %p32
    %p34 = scmp.ne.s32.totalorder %s23, %s26
    %p35 = scmp.eq.s32.totalorder %s18, 1
    %p36 = por %p34, %p35
    %p37 = scmp.ne.s32.totalorder %s26, %s27
    %p38 = scmp.eq.s32.totalorder %s18, 0
    %p39 = por %p37, %p38
    %p40 = scmp.ne.s32.totalorder %s26, %s27
    %p41 = scmp.eq.s32.totalorder %s19, 1
    %p42 = por %p40, %p41
    %p44 = scmp.ne.s32.totalorder %s27, %s43
    %p45 = scmp.eq.s32.totalorder %s19, 0
    %p46 = por %p44, %p45
    %s48 = sadd.s32 %s47, 1
    %p51 = scmp.eq.s32.totalorder %s13, 1
    %p52 = scmp.ne.s32.totalorder %s47, %s49
    %p53 = scmp.eq.s32.totalorder %s13, 0
    %p54 = por %p52, %p53
    %p55 = scmp.ne.s32.totalorder %s47, %s49
    %p56 = scmp.eq.s32.totalorder %s18, 1
    %p57 = por %p55, %p56
    %p58 = scmp.ne.s32.totalorder %s49, %s50
    %p59 = scmp.eq.s32.totalorder %s18, 0
    %p60 = por %p58, %p59
    %p61 = scmp.ne.s32.totalorder %s49, %s50
    %p62 = scmp.eq.s32.totalorder %s19, 1
    %p63 = por %p61, %p62
    %p65 = scmp.ne.s32.totalorder %s50, %s64
    %p66 = scmp.eq.s32.totalorder %s19, 0
    %p67 = por %p65, %p66
    %s69 = sadd.s32 %s68, 1
    %p72 = scmp.eq.s32.totalorder %s13, 1
    %p73 = scmp.ne.s32.totalorder %s68, %s70
    %p74 = scmp.eq.s32.totalorder %s13, 0
    %p75 = por %p73, %p74
    %p76 = scmp.ne.s32.totalorder %s68, %s70
    %p77 = scmp.eq.s32.totalorder %s18, 1
    %p78 = por %p76, %p77
    %p79 = scmp.ne.s32.totalorder %s70, %s71
    %p80 = scmp.eq.s32.totalorder %s18, 0
    %p81 = por %p79, %p80
    %p82 = scmp.ne.s32.totalorder %s70, %s71
    %p83 = scmp.eq.s32.totalorder %s19, 1
    %p84 = por %p82, %p83
    %p86 = scmp.ne.s32.totalorder %s71, %s85
    %p87 = scmp.eq.s32.totalorder %s19, 0
    %p88 = por %p86, %p87
    %s90 = sadd.s32 %s89, 1
    %p93 = scmp.eq.s32.totalorder %s13, 1
    %p94 = scmp.ne.s32.totalorder %s89, %s91
    %p95 = scmp.eq.s32.totalorder %s13, 0
    %p96 = por %p94, %p95
    %p97 = scmp.ne.s32.totalorder %s89, %s91
    %p98 = scmp.eq.s32.totalorder %s18, 1
    %p99 = por %p97, %p98
    %p100 = scmp.ne.s32.totalorder %s91, %s92
    %p101 = scmp.eq.s32.totalorder %s18, 0
    %p102 = por %p100, %p101
    %p103 = scmp.ne.s32.totalorder %s91, %s92
    %p104 = scmp.eq.s32.totalorder %s19, 1
    %p105 = por %p103, %p104
    %p107 = scmp.ne.s32.totalorder %s92, %s106
    %p108 = scmp.eq.s32.totalorder %s19, 0
    %p109 = por %p107, %p108
    %s111 = sadd.s32 %s110, 1
    %p114 = scmp.eq.s32.totalorder %s13, 1
    %p115 = scmp.ne.s32.totalorder %s110, %s112
    %p116 = scmp.eq.s32.totalorder %s13, 0
    %p117 = por %p115, %p116
    %p118 = scmp.ne.s32.totalorder %s110, %s112
    %p119 = scmp.eq.s32.totalorder %s18, 1
    %p120 = por %p118, %p119
    %p121 = scmp.ne.s32.totalorder %s112, %s113
    %p122 = scmp.eq.s32.totalorder %s18, 0
    %p123 = por %p121, %p122
    %p124 = scmp.ne.s32.totalorder %s112, %s113
    %p125 = scmp.eq.s32.totalorder %s19, 1
    %p126 = por %p124, %p125
    %p128 = scmp.ne.s32.totalorder %s113, %s127
    %p129 = scmp.eq.s32.totalorder %s19, 0
    %p130 = por %p128, %p129
    %s132 = sadd.s32 %s131, 1
    %p135 = scmp.eq.s32.totalorder %s13, 1
    %p136 = scmp.ne.s32.totalorder %s131, %s133
    %p137 = scmp.eq.s32.totalorder %s13, 0
    %p138 = por %p136, %p137
    %p139 = scmp.ne.s32.totalorder %s131, %s133
    %p140 = scmp.eq.s32.totalorder %s18, 1
    %p141 = por %p139, %p140
    %p142 = scmp.ne.s32.totalorder %s133, %s134
    %p143 = scmp.eq.s32.totalorder %s18, 0
    %p144 = por %p142, %p143
    %p145 = scmp.ne.s32.totalorder %s133, %s134
    %p146 = scmp.eq.s32.totalorder %s19, 1
    %p147 = por %p145, %p146
    %p149 = scmp.ne.s32.totalorder %s134, %s148
    %p150 = scmp.eq.s32.totalorder %s19, 0
    %p151 = por %p149, %p150
    %s153 = sadd.s32 %s152, 1
    %p156 = scmp.eq.s32.totalorder %s13, 1
    %p157 = scmp.ne.s32.totalorder %s152, %s154
    %p158 = scmp.eq.s32.totalorder %s13, 0
    %p159 = por %p157, %p158
    %p160 = scmp.ne.s32.totalorder %s152, %s154
    %p161 = scmp.eq.s32.totalorder %s18, 1
    %p162 = por %p160, %p161
    %p163 = scmp.ne.s32.totalorder %s154, %s155
    %p164 = scmp.eq.s32.totalorder %s18, 0
    %p165 = por %p163, %p164
    %p166 = scmp.ne.s32.totalorder %s154, %s155
    %p167 = scmp.eq.s32.totalorder %s19, 1
    %p168 = por %p166, %p167
    %p170 = scmp.ne.s32.totalorder %s155, %s169
    %p171 = scmp.eq.s32.totalorder %s19, 0
    %p172 = por %p170, %p171
    %s173 = ssub.s32 %s13, %s20
    %p174 = scmp.eq.s32.totalorder %s173, 0
    %s176 = sadd.s32 %s175, 1
    %s177 = scalar_select %p174, %s175, %s176
    %p180 = pneg %p174
    %p181 = scmp.eq.s32.totalorder %s13, 1
    %p182 = por %p180, %p181
    %p183 = scmp.ne.s32.totalorder %s175, %s178
    %p184 = scmp.eq.s32.totalorder %s13, 0
    %p185 = por %p183, %p184
    %p186 = scmp.ne.s32.totalorder %s175, %s178
    %p187 = scmp.eq.s32.totalorder %s18, 1
    %p188 = por %p186, %p187
    %p189 = scmp.ne.s32.totalorder %s178, %s179
    %p190 = scmp.eq.s32.totalorder %s18, 0
    %p191 = por %p189, %p190
    %p192 = scmp.ne.s32.totalorder %s178, %s179
    %p193 = scmp.eq.s32.totalorder %s19, 1
    %p194 = por %p192, %p193
    %p196 = scmp.ne.s32.totalorder %s179, %s195
    %p197 = scmp.eq.s32.totalorder %s19, 0
    %p198 = por %p196, %p197
    %p199 = scmp.le.s32.totalorder 1, %s13
    %p200 = scmp.lt.s32.totalorder %s13, 3
    %p201 = pnand %p199, %p200
    %p202 = pneg %p201
    // Predicated region
    $region9: #{stereonet_forward.19} parent=5 // pred_check
      _
    $region10: #{stereonet_forward.19} parent=5 // pred_check_branch
      %204 = sbr.rel (%p201) target = $region12
    $region11: #{stereonet_forward.19} parent=5 // pred_region
      %s205 = ssub.s32 %s13, 1
      // Predicated region
      $region13: #{stereonet_forward.19} parent=11 // pred_check
        %p206 = pneg %p60
      $region14: #{stereonet_forward.19} parent=11 // pred_check_branch
        %208 = sbr.rel (%p206) target = $region16
      $region15: #{stereonet_forward.19} parent=11 // pred_region
        _
      $region16: #{stereonet_forward.19} parent=11 // pred_fallthru
        _
      // Predicated region
      $region17: #{stereonet_forward.19} parent=11 // pred_check
        %p209 = pneg %p81
      $region18: #{stereonet_forward.19} parent=11 // pred_check_branch
        %211 = sbr.rel (%p209) target = $region20
      $region19: #{stereonet_forward.19} parent=11 // pred_region
        _
      $region20: #{stereonet_forward.19} parent=11 // pred_fallthru
        _
      // Predicated region
      $region21: #{stereonet_forward.19} parent=11 // pred_check
        %p212 = pneg %p102
      $region22: #{stereonet_forward.19} parent=11 // pred_check_branch
        %214 = sbr.rel (%p212) target = $region24
      $region23: #{stereonet_forward.19} parent=11 // pred_region
        _
      $region24: #{stereonet_forward.19} parent=11 // pred_fallthru
        _
      // Predicated region
      $region25: #{stereonet_forward.19} parent=11 // pred_check
        %p215 = pneg %p123
      $region26: #{stereonet_forward.19} parent=11 // pred_check_branch
        %217 = sbr.rel (%p215) target = $region28
      $region27: #{stereonet_forward.19} parent=11 // pred_region
        _
      $region28: #{stereonet_forward.19} parent=11 // pred_fallthru
        _
      // Predicated region
      $region29: #{stereonet_forward.19} parent=11 // pred_check
        %p218 = pneg %p144
      $region30: #{stereonet_forward.19} parent=11 // pred_check_branch
        %220 = sbr.rel (%p218) target = $region32
      $region31: #{stereonet_forward.19} parent=11 // pred_region
        _
      $region32: #{stereonet_forward.19} parent=11 // pred_fallthru
        _
      // Predicated region
      $region33: #{stereonet_forward.19} parent=11 // pred_check
        %p221 = pneg %p165
      $region34: #{stereonet_forward.19} parent=11 // pred_check_branch
        %223 = sbr.rel (%p221) target = $region36
      $region35: #{stereonet_forward.19} parent=11 // pred_region
        _
      $region36: #{stereonet_forward.19} parent=11 // pred_fallthru
        _
    $region12: #{stereonet_forward.19} parent=5 // pred_fallthru
      _
    %p224 = scmp.lt.s32.totalorder %s13, 2
    // Predicated region
    $region37: #{stereonet_forward.19} parent=5 // pred_check
      %p225 = pneg %p224
    $region38: #{stereonet_forward.19} parent=5 // pred_check_branch
      %227 = sbr.rel (%p225) target = $region40
    $region39: #{stereonet_forward.19} parent=5 // pred_region
      // Predicated region
      $region41: #{stereonet_forward.19} parent=39 // pred_check
        %p228 = pneg %p33
      $region42: #{stereonet_forward.19} parent=39 // pred_check_branch
        %230 = sbr.rel (%p228) target = $region44
      $region43: #{stereonet_forward.19} parent=39 // pred_region
        %p231 = scmp.lt.s32.totalorder %s13, 1
        %s232 = scalar_select %p231, %s13, 1
        %s233 = smul.addr %s232, 16
        %s234 = smul.addr %s233, 4
        %s235 = scalar_lea.vmem %s0, %s234
      $region44: #{stereonet_forward.19} parent=39 // pred_fallthru
        _
    $region40: #{stereonet_forward.19} parent=5 // pred_fallthru
      _
    %p236 = scmp.le.s32.totalorder 1, %s13
    %p237 = scmp.lt.s32.totalorder %s13, 3
    %p238 = pnand %p236, %p237
    %p239 = pneg %p238
    // Predicated region
    $region45: #{stereonet_forward.19} parent=5 // pred_check
      _
    $region46: #{stereonet_forward.19} parent=5 // pred_check_branch
      %241 = sbr.rel (%p238) target = $region48
    $region47: #{stereonet_forward.19} parent=5 // pred_region
      %s242 = ssub.s32 %s13, 1
      %p243 = scmp.lt.s32.totalorder %s18, 1
      %s244 = scalar_select %p243, %s18, 1
      %s245 = smul.addr %s244, 16
      %s246 = smul.addr %s245, 4
      %s247 = scalar_lea.vmem %s0, %s246
      %p248 = pneg %p39
      %p249 = pneg %p36
      %p250 = pneg %p60
      %p251 = pneg %p57
      %p252 = pneg %p81
      %p253 = pneg %p78
      %p254 = pneg %p102
      %p255 = pneg %p99
      %p256 = pneg %p123
      %p257 = pneg %p120
      %p258 = pneg %p144
      %p259 = pneg %p141
      %p260 = pneg %p165
      %p261 = pneg %p162
      %p262 = pneg %p191
      %p263 = pneg %p188
      %p264 = scmp.lt.s32.totalorder %s18, 1
      %s265 = scalar_select %p264, %s18, 1
      %s266 = smul.addr %s265, 8
      %s267 = smul.addr %s266, 8
      %s268 = scalar_lea.vmem %s7, %s267
      %p269 = scmp.lt.s32.totalorder %s18, 1
      %s270 = scalar_select %p269, %s18, 1
      %s271 = smul.addr %s270, 16
      %s272 = smul.addr %s271, 4
      %s273 = scalar_lea.vmem %s0, %s272
      %p274 = scmp.lt.s32.totalorder %s18, 1
      %s275 = scalar_select %p274, %s18, 1
      %s276 = smul.addr %s275, 8
      %s277 = smul.addr %s276, 8
      %s278 = scalar_lea.vmem %s7, %s277
      %v280 = vld [vmem:[%s1] sm:$0xf]
      %v281 = vld [vmem:[%s1 + $0x4] sm:$0xf]
      %v282 = vld [vmem:[%s1 + $0x8] sm:$0xf]
      %v283 = vld [vmem:[%s1 + $0xc] sm:$0xf]
      %v284 = vld [vmem:[%s1 + $0x10] sm:$0xf]
      %v285 = vld [vmem:[%s1 + $0x14] sm:$0xf]
      %v286 = vld [vmem:[%s1 + $0x18] sm:$0xf]
      %v287 = vld [vmem:[%s1 + $0x1c] sm:$0xf]
      %v288 = vld [vmem:[%s273] sm:$0xf]
      %v289 = vld [vmem:[%s273 + $0x4] sm:$0xf]
      %v290 = vld [vmem:[%s273 + $0x8] sm:$0xf]
      %v291 = vld [vmem:[%s273 + $0xc] sm:$0xf]
      %v292 = vld [vmem:[%s273 + $0x10] sm:$0xf]
      %v293 = vld [vmem:[%s273 + $0x14] sm:$0xf]
      %v294 = vld [vmem:[%s273 + $0x18] sm:$0xf]
      %v295 = vld [vmem:[%s273 + $0x1c] sm:$0xf]
      %v296 = vld [vmem:[%s273 + $0x20] sm:$0xf]
      %v297 = vld [vmem:[%s273 + $0x24] sm:$0xf]
      %v298 = vld [vmem:[%s273 + $0x28] sm:$0xf]
      %v299 = vld [vmem:[%s273 + $0x2c] sm:$0xf]
      %v300 = vld [vmem:[%s273 + $0x30] sm:$0xf]
      %v301 = vld [vmem:[%s273 + $0x34] sm:$0xf]
      %v302 = vld [vmem:[%s273 + $0x38] sm:$0xf]
      %v303 = vld [vmem:[%s273 + $0x3c] sm:$0xf]
      %v304 = vld [vmem:[%s2] sm:$0xff]
      %v305 = vld [vmem:[%s2 + $0x8] sm:$0xff]
      %v306 = vld [vmem:[%s2 + $0x10] sm:$0xff]
      %v307 = vld [vmem:[%s2 + $0x18] sm:$0xff]
      %v308 = vld [vmem:[%s2 + $0x20] sm:$0xff]
      %v309 = vld [vmem:[%s2 + $0x28] sm:$0xff]
      %v310 = vld [vmem:[%s2 + $0x30] sm:$0xff]
      %v311 = vld [vmem:[%s2 + $0x38] sm:$0xff]
      %313 = vset.pattern.permute.xlu0 0
      %314 = vperm.xlu0 %313, %v304
      %v315 = vpop.permute.xlu0 %314
      %318 = vset.pattern.permute.xlu0 0
      %319 = vperm.xlu0 %318, %v305
      %v320 = vpop.permute.xlu0 %319
      %323 = vset.pattern.permute.xlu0 0
      %324 = vperm.xlu0 %323, %v306
      %v325 = vpop.permute.xlu0 %324
      %328 = vset.pattern.permute.xlu0 0
      %329 = vperm.xlu0 %328, %v307
      %v330 = vpop.permute.xlu0 %329
      %333 = vset.pattern.permute.xlu0 0
      %334 = vperm.xlu0 %333, %v308
      %v335 = vpop.permute.xlu0 %334
      %338 = vset.pattern.permute.xlu0 0
      %339 = vperm.xlu0 %338, %v309
      %v340 = vpop.permute.xlu0 %339
      %343 = vset.pattern.permute.xlu0 0
      %344 = vperm.xlu0 %343, %v310
      %v345 = vpop.permute.xlu0 %344
      %348 = vset.pattern.permute.xlu0 0
      %349 = vperm.xlu0 %348, %v311
      %v350 = vpop.permute.xlu0 %349
      %v360 = vunpack.c.l.b16 %v280
      %v361 = vunpack.c.l.b16 %v281
      %v362 = vunpack.c.l.b16 %v282
      %v363 = vunpack.c.l.b16 %v283
      %v364 = vunpack.c.l.b16 %v284
      %v365 = vunpack.c.l.b16 %v285
      %v366 = vunpack.c.l.b16 %v286
      %v367 = vunpack.c.l.b16 %v287
      %v368 = vpack.c.b16 %v361, %v360
      %v369 = vpack.c.b16 %v363, %v362
      %v370 = vpack.c.b16 %v365, %v364
      %v371 = vpack.c.b16 %v367, %v366
      %v392 = vunpack.c.l.b16 %v288
      %v393 = vunpack.c.l.b16 %v289
      %v394 = vunpack.c.l.b16 %v290
      %v395 = vunpack.c.l.b16 %v291
      %v396 = vunpack.c.l.b16 %v292
      %v397 = vunpack.c.l.b16 %v293
      %v398 = vunpack.c.l.b16 %v294
      %v399 = vunpack.c.l.b16 %v295
      %v400 = vunpack.c.l.b16 %v296
      %v401 = vunpack.c.l.b16 %v297
      %v402 = vunpack.c.l.b16 %v298
      %v403 = vunpack.c.l.b16 %v299
      %v404 = vunpack.c.l.b16 %v300
      %v405 = vunpack.c.l.b16 %v301
      %v406 = vunpack.c.l.b16 %v302
      %v407 = vunpack.c.l.b16 %v303
      %v408 = vpack.c.b16 %v393, %v392
      %v409 = vpack.c.b16 %v395, %v394
      %v410 = vpack.c.b16 %v397, %v396
      %v411 = vpack.c.b16 %v399, %v398
      %v412 = vpack.c.b16 %v401, %v400
      %v413 = vpack.c.b16 %v403, %v402
      %v414 = vpack.c.b16 %v405, %v404
      %v415 = vpack.c.b16 %v407, %v406
      %424 = vmatprep.subr.bf16.mxu0 0
      %425 = vmatpush1.bf16.msra.mxu0 %v408
      %426 = vmatprep.subr.bf16.mxu0 0
      %427 = vmatpush1.bf16.msra.mxu0 %v409
      %428 = vmatprep.subr.bf16.mxu0 0
      %429 = vmatpush1.bf16.msra.mxu0 %v410
      %430 = vmatprep.subr.bf16.mxu0 0
      %431 = vmatpush1.bf16.msra.mxu0 %v411
      %432 = vmatprep.subr.bf16.mxu0 0
      %433 = vmatpush1.bf16.msra.mxu0 %v412
      %434 = vmatprep.subr.bf16.mxu0 0
      %435 = vmatpush1.bf16.msra.mxu0 %v413
      %436 = vmatprep.subr.bf16.mxu0 0
      %437 = vmatpush1.bf16.msra.mxu0 %v414
      %438 = vmatprep.subr.bf16.mxu0 0
      %439 = vmatpush1.bf16.msra.mxu0 %v415
      %440 = vmatprep.subr.bf16.mxu0 0
      %441 = vmatpush1.bf16.msra.mxu0 0
      %442 = vmatprep.subr.bf16.mxu0 0
      %443 = vmatpush1.bf16.msra.mxu0 0
      %444 = vmatprep.subr.bf16.mxu0 0
      %445 = vmatpush1.bf16.msra.mxu0 0
      %446 = vmatprep.subr.bf16.mxu0 0
      %447 = vmatpush1.bf16.msra.mxu0 0
      %448 = vmatprep.subr.bf16.mxu0 0
      %449 = vmatpush1.bf16.msra.mxu0 0
      %450 = vmatprep.subr.bf16.mxu0 0
      %451 = vmatpush1.bf16.msra.mxu0 0
      %452 = vmatprep.subr.bf16.mxu0 0
      %453 = vmatpush1.bf16.msra.mxu0 0
      %454 = vmatprep.subr.bf16.mxu0 0
      %455 = vmatpush1.bf16.msra.mxu0 0
      %456 = vmatprep.mubr.bf16.mxu0 0
      %457 = vmatmul.mubr.bf16.gmra.mrb[0].mxu0 %v368
      %v458 = vpop.f32.mrb[0].mxu0
      %v459 = vadd.f32 %v315, %v458
      %v460 = vpop.f32.mrb[0].mxu0
      %v461 = vpop.f32.mrb[0].mxu0
      %v462 = vadd.f32 %v320, %v461
      %v463 = vpop.f32.mrb[0].mxu0
      %464 = vmatprep.mubr.bf16.mxu0 0
      %465 = vmatmul.mubr.bf16.gmra.mrb[0].mxu0 %v369
      %v466 = vpop.f32.mrb[0].mxu0
      %v467 = vadd.f32 %v325, %v466
      %v468 = vpop.f32.mrb[0].mxu0
      %v469 = vpop.f32.mrb[0].mxu0
      %v470 = vadd.f32 %v330, %v469
      %v471 = vpop.f32.mrb[0].mxu0
      %472 = vmatprep.mubr.bf16.mxu0 0
      %473 = vmatmul.mubr.bf16.gmra.mrb[0].mxu0 %v370
      %v474 = vpop.f32.mrb[0].mxu0
      %v475 = vadd.f32 %v335, %v474
      %v476 = vpop.f32.mrb[0].mxu0
      %v477 = vpop.f32.mrb[0].mxu0
      %v478 = vadd.f32 %v340, %v477
      %v479 = vpop.f32.mrb[0].mxu0
      %480 = vmatprep.mubr.bf16.mxu0 0
      %481 = vmatmul.mubr.bf16.gmra.mrb[0].mxu0 %v371
      %v482 = vpop.f32.mrb[0].mxu0
      %v483 = vadd.f32 %v345, %v482
      %v484 = vpop.f32.mrb[0].mxu0
      %v485 = vpop.f32.mrb[0].mxu0
      %v486 = vadd.f32 %v350, %v485
      %v487 = vpop.f32.mrb[0].mxu0
      %488 = vdwg.mxu0
      %vm489 = vcmask 523264
      %v490 = vsel %vm489, %v459, 0.0
      %491 = vadd.xlane.f32.xlu0 %v490
      %v492 = vpop.xlane.xlu0 %491
      %v493 = vsel %vm489, %v462, 0.0
      %494 = vadd.xlane.f32.xlu0 %v493
      %v495 = vpop.xlane.xlu0 %494
      %v496 = vsel %vm489, %v467, 0.0
      %497 = vadd.xlane.f32.xlu0 %v496
      %v498 = vpop.xlane.xlu0 %497
      %v499 = vsel %vm489, %v470, 0.0
      %500 = vadd.xlane.f32.xlu0 %v499
      %v501 = vpop.xlane.xlu0 %500
      %v502 = vsel %vm489, %v475, 0.0
      %503 = vadd.xlane.f32.xlu0 %v502
      %v504 = vpop.xlane.xlu0 %503
      %v505 = vsel %vm489, %v478, 0.0
      %506 = vadd.xlane.f32.xlu0 %v505
      %v507 = vpop.xlane.xlu0 %506
      %v508 = vsel %vm489, %v483, 0.0
      %509 = vadd.xlane.f32.xlu0 %v508
      %v510 = vpop.xlane.xlu0 %509
      %v511 = vsel %vm489, %v486, 0.0
      %512 = vadd.xlane.f32.xlu0 %v511
      %v513 = vpop.xlane.xlu0 %512
      %v514 = vmul.f32 %v459, %v459
      %v515 = vmul.f32 %v462, %v462
      %v516 = vmul.f32 %v467, %v467
      %v517 = vmul.f32 %v470, %v470
      %v518 = vmul.f32 %v475, %v475
      %v519 = vmul.f32 %v478, %v478
      %v520 = vmul.f32 %v483, %v483
      %v521 = vmul.f32 %v486, %v486
      %v522 = vsel %vm489, %v514, 0.0
      %523 = vadd.xlane.f32.xlu0 %v522
      %v524 = vpop.xlane.xlu0 %523
      %v525 = vsel %vm489, %v515, 0.0
      %526 = vadd.xlane.f32.xlu0 %v525
      %v527 = vpop.xlane.xlu0 %526
      %v528 = vsel %vm489, %v516, 0.0
      %529 = vadd.xlane.f32.xlu0 %v528
      %v530 = vpop.xlane.xlu0 %529
      %v531 = vsel %vm489, %v517, 0.0
      %532 = vadd.xlane.f32.xlu0 %v531
      %v533 = vpop.xlane.xlu0 %532
      %v534 = vsel %vm489, %v518, 0.0
      %535 = vadd.xlane.f32.xlu0 %v534
      %v536 = vpop.xlane.xlu0 %535
      %v537 = vsel %vm489, %v519, 0.0
      %538 = vadd.xlane.f32.xlu0 %v537
      %v539 = vpop.xlane.xlu0 %538
      %v540 = vsel %vm489, %v520, 0.0
      %541 = vadd.xlane.f32.xlu0 %v540
      %v542 = vpop.xlane.xlu0 %541
      %v543 = vsel %vm489, %v521, 0.0
      %544 = vadd.xlane.f32.xlu0 %v543
      %v545 = vpop.xlane.xlu0 %544
      %v546 = vld [vmem:[%s5] sm:$0xff]
      %v548 = vsel %vm489, %v546, 0
      %550 = vmatprep.subr.mxu0 0.0
      %551 = vmatpush1.msra.mxu0 %v492
      %552 = vmatprep.subr.mxu0 0.0
      %553 = vmatpush1.msra.mxu0 %v495
      %554 = vmatprep.subr.mxu0 0.0
      %555 = vmatpush1.msra.mxu0 %v498
      %556 = vmatprep.subr.mxu0 0.0
      %557 = vmatpush1.msra.mxu0 %v501
      %558 = vmatprep.subr.mxu0 0.0
      %559 = vmatpush1.msra.mxu0 %v504
      %560 = vmatprep.subr.mxu0 0.0
      %561 = vmatpush1.msra.mxu0 %v507
      %562 = vmatprep.subr.mxu0 0.0
      %563 = vmatpush1.msra.mxu0 %v510
      %564 = vmatprep.subr.mxu0 0.0
      %565 = vmatpush1.msra.mxu0 %v513
      %566 = vmatprep.subr.mxu0 0.0
      %567 = vmatpush1.msra.mxu0 0.0
      %568 = vmatprep.subr.mxu0 0.0
      %569 = vmatpush1.msra.mxu0 0.0
      %570 = vmatprep.subr.mxu0 0.0
      %571 = vmatpush1.msra.mxu0 0.0
      %572 = vmatprep.subr.mxu0 0.0
      %573 = vmatpush1.msra.mxu0 0.0
      %574 = vmatprep.subr.mxu0 0.0
      %575 = vmatpush1.msra.mxu0 0.0
      %576 = vmatprep.subr.mxu0 0.0
      %577 = vmatpush1.msra.mxu0 0.0
      %578 = vmatprep.subr.mxu0 0.0
      %579 = vmatpush1.msra.mxu0 0.0
      %580 = vmatprep.subr.mxu0 0.0
      %581 = vmatpush1.msra.mxu0 0.0
      %582 = vmatprep.subr.mxu0 0.0
      %583 = vmatpush1.msra.mxu0 0.0
      %584 = vmatprep.subr.mxu0 0.0
      %585 = vmatpush1.msra.mxu0 0.0
      %586 = vmatprep.subr.mxu0 0.0
      %587 = vmatpush1.msra.mxu0 0.0
      %588 = vmatprep.subr.mxu0 0.0
      %589 = vmatpush1.msra.mxu0 0.0
      %590 = vmatprep.subr.mxu0 0.0
      %591 = vmatpush1.msra.mxu0 0.0
      %592 = vmatprep.subr.mxu0 0.0
      %593 = vmatpush1.msra.mxu0 0.0
      %594 = vmatprep.subr.mxu0 0.0
      %595 = vmatpush1.msra.mxu0 0.0
      %596 = vmatprep.subr.mxu0 0.0
      %597 = vmatpush1.msra.mxu0 0.0
      %598 = vmatprep.subr.mxu0 0.0
      %599 = vmatpush1.msra.mxu0 0.0
      %600 = vmatprep.subr.mxu0 0.0
      %601 = vmatpush1.msra.mxu0 0.0
      %602 = vmatprep.subr.mxu0 0.0
      %603 = vmatpush1.msra.mxu0 0.0
      %604 = vmatprep.subr.mxu0 0.0
      %605 = vmatpush1.msra.mxu0 0.0
      %606 = vmatprep.subr.mxu0 0.0
      %607 = vmatpush1.msra.mxu0 0.0
      %608 = vmatprep.subr.mxu0 0.0
      %609 = vmatpush1.msra.mxu0 0.0
      %610 = vmatprep.subr.mxu0 0.0
      %611 = vmatpush1.msra.mxu0 0.0
      %612 = vmatprep.subr.mxu0 0.0
      %613 = vmatpush1.msra.mxu0 0.0
      %614 = vmatprep.mubr.f32.mxu0 0.0
      %615 = vmatmul.mubr.f32.gmra.mrb[0].mxu0 %v548
      %v616 = vpop.f32.mrb[0].mxu0
      %v617 = vadd.f32 0.0, %v616
      %v618 = vpop.f32.mrb[0].mxu0
      %619 = vdwg.mxu0
      %620 = vmatprep.subr.mxu0 0.0
      %621 = vmatpush1.msra.mxu0 %v524
      %622 = vmatprep.subr.mxu0 0.0
      %623 = vmatpush1.msra.mxu0 %v527
      %624 = vmatprep.subr.mxu0 0.0
      %625 = vmatpush1.msra.mxu0 %v530
      %626 = vmatprep.subr.mxu0 0.0
      %627 = vmatpush1.msra.mxu0 %v533
      %628 = vmatprep.subr.mxu0 0.0
      %629 = vmatpush1.msra.mxu0 %v536
      %630 = vmatprep.subr.mxu0 0.0
      %631 = vmatpush1.msra.mxu0 %v539
      %632 = vmatprep.subr.mxu0 0.0
      %633 = vmatpush1.msra.mxu0 %v542
      %634 = vmatprep.subr.mxu0 0.0
      %635 = vmatpush1.msra.mxu0 %v545
      %636 = vmatprep.subr.mxu0 0.0
      %637 = vmatpush1.msra.mxu0 0.0
      %638 = vmatprep.subr.mxu0 0.0
      %639 = vmatpush1.msra.mxu0 0.0
      %640 = vmatprep.subr.mxu0 0.0
      %641 = vmatpush1.msra.mxu0 0.0
      %642 = vmatprep.subr.mxu0 0.0
      %643 = vmatpush1.msra.mxu0 0.0
      %644 = vmatprep.subr.mxu0 0.0
      %645 = vmatpush1.msra.mxu0 0.0
      %646 = vmatprep.subr.mxu0 0.0
      %647 = vmatpush1.msra.mxu0 0.0
      %648 = vmatprep.subr.mxu0 0.0
      %649 = vmatpush1.msra.mxu0 0.0
      %650 = vmatprep.subr.mxu0 0.0
      %651 = vmatpush1.msra.mxu0 0.0
      %652 = vmatprep.subr.mxu0 0.0
      %653 = vmatpush1.msra.mxu0 0.0
      %654 = vmatprep.subr.mxu0 0.0
      %655 = vmatpush1.msra.mxu0 0.0
      %656 = vmatprep.subr.mxu0 0.0
      %657 = vmatpush1.msra.mxu0 0.0
      %658 = vmatprep.subr.mxu0 0.0
      %659 = vmatpush1.msra.mxu0 0.0
      %660 = vmatprep.subr.mxu0 0.0
      %661 = vmatpush1.msra.mxu0 0.0
      %662 = vmatprep.subr.mxu0 0.0
      %663 = vmatpush1.msra.mxu0 0.0
      %664 = vmatprep.subr.mxu0 0.0
      %665 = vmatpush1.msra.mxu0 0.0
      %666 = vmatprep.subr.mxu0 0.0
      %667 = vmatpush1.msra.mxu0 0.0
      %668 = vmatprep.subr.mxu0 0.0
      %669 = vmatpush1.msra.mxu0 0.0
      %670 = vmatprep.subr.mxu0 0.0
      %671 = vmatpush1.msra.mxu0 0.0
      %672 = vmatprep.subr.mxu0 0.0
      %673 = vmatpush1.msra.mxu0 0.0
      %674 = vmatprep.subr.mxu0 0.0
      %675 = vmatpush1.msra.mxu0 0.0
      %676 = vmatprep.subr.mxu0 0.0
      %677 = vmatpush1.msra.mxu0 0.0
      %678 = vmatprep.subr.mxu0 0.0
      %679 = vmatpush1.msra.mxu0 0.0
      %680 = vmatprep.subr.mxu0 0.0
      %681 = vmatpush1.msra.mxu0 0.0
      %682 = vmatprep.subr.mxu0 0.0
      %683 = vmatpush1.msra.mxu0 0.0
      %684 = vmatprep.mubr.f32.mxu0 0.0
      %685 = vmatmul.mubr.f32.gmra.mrb[0].mxu0 %v548
      %v686 = vpop.f32.mrb[0].mxu0
      %v687 = vadd.f32 0.0, %v686
      %v688 = vpop.f32.mrb[0].mxu0
      %689 = vdwg.mxu0
      %v690 = vld [vmem:[%s6] sm:$0xff]
      %v691 = vld [vmem:[%s6 + $0x8] sm:$0xff]
      %v692 = vld [vmem:[%s6 + $0x10] sm:$0xff]
      %v693 = vld [vmem:[%s6 + $0x18] sm:$0xff]
      %v694 = vld [vmem:[%s6 + $0x20] sm:$0xff]
      %v695 = vld [vmem:[%s6 + $0x28] sm:$0xff]
      %v696 = vld [vmem:[%s6 + $0x30] sm:$0xff]
      %v697 = vld [vmem:[%s6 + $0x38] sm:$0xff]
      %vm698 = vcmask 64512
      %v700 = vsel %vm698, %v690, 0
      %v703 = vsel %vm698, %v691, 0
      %v706 = vsel %vm698, %v692, 0
      %v709 = vsel %vm698, %v693, 0
      %v712 = vsel %vm698, %v694, 0
      %v715 = vsel %vm698, %v695, 0
      %v718 = vsel %vm698, %v696, 0
      %v721 = vsel %vm698, %v697, 0
      %723 = vmatprep.subr.mxu0 0.0
      %724 = vmatpush1.msra.mxu0 %v617
      %725 = vmatprep.subr.mxu0 0.0
      %726 = vmatpush1.msra.mxu0 0.0
      %727 = vmatprep.subr.mxu0 0.0
      %728 = vmatpush1.msra.mxu0 0.0
      %729 = vmatprep.subr.mxu0 0.0
      %730 = vmatpush1.msra.mxu0 0.0
      %731 = vmatprep.subr.mxu0 0.0
      %732 = vmatpush1.msra.mxu0 0.0
      %733 = vmatprep.subr.mxu0 0.0
      %734 = vmatpush1.msra.mxu0 0.0
      %735 = vmatprep.subr.mxu0 0.0
      %736 = vmatpush1.msra.mxu0 0.0
      %737 = vmatprep.subr.mxu0 0.0
      %738 = vmatpush1.msra.mxu0 0.0
      %739 = vmatprep.subr.mxu0 0.0
      %740 = vmatpush1.msra.mxu0 0.0
      %741 = vmatprep.subr.mxu0 0.0
      %742 = vmatpush1.msra.mxu0 0.0
      %743 = vmatprep.subr.mxu0 0.0
      %744 = vmatpush1.msra.mxu0 0.0
      %745 = vmatprep.subr.mxu0 0.0
      %746 = vmatpush1.msra.mxu0 0.0
      %747 = vmatprep.subr.mxu0 0.0
      %748 = vmatpush1.msra.mxu0 0.0
      %749 = vmatprep.subr.mxu0 0.0
      %750 = vmatpush1.msra.mxu0 0.0
      %751 = vmatprep.subr.mxu0 0.0
      %752 = vmatpush1.msra.mxu0 0.0
      %753 = vmatprep.subr.mxu0 0.0
      %754 = vmatpush1.msra.mxu0 0.0
      %755 = vmatprep.subr.mxu0 0.0
      %756 = vmatpush1.msra.mxu0 0.0
      %757 = vmatprep.subr.mxu0 0.0
      %758 = vmatpush1.msra.mxu0 0.0
      %759 = vmatprep.subr.mxu0 0.0
      %760 = vmatpush1.msra.mxu0 0.0
      %761 = vmatprep.subr.mxu0 0.0
      %762 = vmatpush1.msra.mxu0 0.0
      %763 = vmatprep.subr.mxu0 0.0
      %764 = vmatpush1.msra.mxu0 0.0
      %765 = vmatprep.subr.mxu0 0.0
      %766 = vmatpush1.msra.mxu0 0.0
      %767 = vmatprep.subr.mxu0 0.0
      %768 = vmatpush1.msra.mxu0 0.0
      %769 = vmatprep.subr.mxu0 0.0
      %770 = vmatpush1.msra.mxu0 0.0
      %771 = vmatprep.subr.mxu0 0.0
      %772 = vmatpush1.msra.mxu0 0.0
      %773 = vmatprep.subr.mxu0 0.0
      %774 = vmatpush1.msra.mxu0 0.0
      %775 = vmatprep.subr.mxu0 0.0
      %776 = vmatpush1.msra.mxu0 0.0
      %777 = vmatprep.subr.mxu0 0.0
      %778 = vmatpush1.msra.mxu0 0.0
      %779 = vmatprep.subr.mxu0 0.0
      %780 = vmatpush1.msra.mxu0 0.0
      %781 = vmatprep.subr.mxu0 0.0
      %782 = vmatpush1.msra.mxu0 0.0
      %783 = vmatprep.subr.mxu0 0.0
      %784 = vmatpush1.msra.mxu0 0.0
      %785 = vmatprep.subr.mxu0 0.0
      %786 = vmatpush1.msra.mxu0 0.0
      %787 = vmatprep.mubr.f32.mxu0 0.0
      %788 = vmatmul.mubr.f32.gmra.mrb[0].mxu0 %v700
      %v789 = vpop.f32.mrb[0].mxu0
      %v790 = vadd.f32 0.0, %v789
      %v791 = vpop.f32.mrb[0].mxu0
      %792 = vmatprep.mubr.f32.mxu0 0.0
      %793 = vmatmul.mubr.f32.gmra.mrb[0].mxu0 %v703
      %v794 = vpop.f32.mrb[0].mxu0
      %v795 = vadd.f32 0.0, %v794
      %v796 = vpop.f32.mrb[0].mxu0
      %797 = vmatprep.mubr.f32.mxu0 0.0
      %798 = vmatmul.mubr.f32.gmra.mrb[0].mxu0 %v706
      %v799 = vpop.f32.mrb[0].mxu0
      %v800 = vadd.f32 0.0, %v799
      %v801 = vpop.f32.mrb[0].mxu0
      %802 = vmatprep.mubr.f32.mxu0 0.0
      %803 = vmatmul.mubr.f32.gmra.mrb[0].mxu0 %v709
      %v804 = vpop.f32.mrb[0].mxu0
      %v805 = vadd.f32 0.0, %v804
      %v806 = vpop.f32.mrb[0].mxu0
      %807 = vmatprep.mubr.f32.mxu0 0.0
      %808 = vmatmul.mubr.f32.gmra.mrb[0].mxu0 %v712
      %v809 = vpop.f32.mrb[0].mxu0
      %v810 = vadd.f32 0.0, %v809
      %v811 = vpop.f32.mrb[0].mxu0
      %812 = vmatprep.mubr.f32.mxu0 0.0
      %813 = vmatmul.mubr.f32.gmra.mrb[0].mxu0 %v715
      %v814 = vpop.f32.mrb[0].mxu0
      %v815 = vadd.f32 0.0, %v814
      %v816 = vpop.f32.mrb[0].mxu0
      %817 = vmatprep.mubr.f32.mxu0 0.0
      %818 = vmatmul.mubr.f32.gmra.mrb[0].mxu0 %v718
      %v819 = vpop.f32.mrb[0].mxu0
      %v820 = vadd.f32 0.0, %v819
      %v821 = vpop.f32.mrb[0].mxu0
      %822 = vmatprep.mubr.f32.mxu0 0.0
      %823 = vmatmul.mubr.f32.gmra.mrb[0].mxu0 %v721
      %v824 = vpop.f32.mrb[0].mxu0
      %v825 = vadd.f32 0.0, %v824
      %v826 = vpop.f32.mrb[0].mxu0
      %827 = vdwg.mxu0
      %828 = vmatprep.subr.mxu0 0.0
      %829 = vmatpush1.msra.mxu0 %v687
      %830 = vmatprep.subr.mxu0 0.0
      %831 = vmatpush1.msra.mxu0 0.0
      %832 = vmatprep.subr.mxu0 0.0
      %833 = vmatpush1.msra.mxu0 0.0
      %834 = vmatprep.subr.mxu0 0.0
      %835 = vmatpush1.msra.mxu0 0.0
      %836 = vmatprep.subr.mxu0 0.0
      %837 = vmatpush1.msra.mxu0 0.0
      %838 = vmatprep.subr.mxu0 0.0
      %839 = vmatpush1.msra.mxu0 0.0
      %840 = vmatprep.subr.mxu0 0.0
      %841 = vmatpush1.msra.mxu0 0.0
      %842 = vmatprep.subr.mxu0 0.0
      %843 = vmatpush1.msra.mxu0 0.0
      %844 = vmatprep.subr.mxu0 0.0
      %845 = vmatpush1.msra.mxu0 0.0
      %846 = vmatprep.subr.mxu0 0.0
      %847 = vmatpush1.msra.mxu0 0.0
      %848 = vmatprep.subr.mxu0 0.0
      %849 = vmatpush1.msra.mxu0 0.0
      %850 = vmatprep.subr.mxu0 0.0
      %851 = vmatpush1.msra.mxu0 0.0
      %852 = vmatprep.subr.mxu0 0.0
      %853 = vmatpush1.msra.mxu0 0.0
      %854 = vmatprep.subr.mxu0 0.0
      %855 = vmatpush1.msra.mxu0 0.0
      %856 = vmatprep.subr.mxu0 0.0
      %857 = vmatpush1.msra.mxu0 0.0
      %858 = vmatprep.subr.mxu0 0.0
      %859 = vmatpush1.msra.mxu0 0.0
      %860 = vmatprep.subr.mxu0 0.0
      %861 = vmatpush1.msra.mxu0 0.0
      %862 = vmatprep.subr.mxu0 0.0
      %863 = vmatpush1.msra.mxu0 0.0
      %864 = vmatprep.subr.mxu0 0.0
      %865 = vmatpush1.msra.mxu0 0.0
      %866 = vmatprep.subr.mxu0 0.0
      %867 = vmatpush1.msra.mxu0 0.0
      %868 = vmatprep.subr.mxu0 0.0
      %869 = vmatpush1.msra.mxu0 0.0
      %870 = vmatprep.subr.mxu0 0.0
      %871 = vmatpush1.msra.mxu0 0.0
      %872 = vmatprep.subr.mxu0 0.0
      %873 = vmatpush1.msra.mxu0 0.0
      %874 = vmatprep.subr.mxu0 0.0
      %875 = vmatpush1.msra.mxu0 0.0
      %876 = vmatprep.subr.mxu0 0.0
      %877 = vmatpush1.msra.mxu0 0.0
      %878 = vmatprep.subr.mxu0 0.0
      %879 = vmatpush1.msra.mxu0 0.0
      %880 = vmatprep.subr.mxu0 0.0
      %881 = vmatpush1.msra.mxu0 0.0
      %882 = vmatprep.subr.mxu0 0.0
      %883 = vmatpush1.msra.mxu0 0.0
      %884 = vmatprep.subr.mxu0 0.0
      %885 = vmatpush1.msra.mxu0 0.0
      %886 = vmatprep.subr.mxu0 0.0
      %887 = vmatpush1.msra.mxu0 0.0
      %888 = vmatprep.subr.mxu0 0.0
      %889 = vmatpush1.msra.mxu0 0.0
      %890 = vmatprep.subr.mxu0 0.0
      %891 = vmatpush1.msra.mxu0 0.0
      %892 = vmatprep.mubr.f32.mxu0 0.0
      %893 = vmatmul.mubr.f32.gmra.mrb[0].mxu0 %v700
      %v894 = vpop.f32.mrb[0].mxu0
      %v895 = vadd.f32 0.0, %v894
      %v896 = vpop.f32.mrb[0].mxu0
      %897 = vmatprep.mubr.f32.mxu0 0.0
      %898 = vmatmul.mubr.f32.gmra.mrb[0].mxu0 %v703
      %v899 = vpop.f32.mrb[0].mxu0
      %v900 = vadd.f32 0.0, %v899
      %v901 = vpop.f32.mrb[0].mxu0
      %902 = vmatprep.mubr.f32.mxu0 0.0
      %903 = vmatmul.mubr.f32.gmra.mrb[0].mxu0 %v706
      %v904 = vpop.f32.mrb[0].mxu0
      %v905 = vadd.f32 0.0, %v904
      %v906 = vpop.f32.mrb[0].mxu0
      %907 = vmatprep.mubr.f32.mxu0 0.0
      %908 = vmatmul.mubr.f32.gmra.mrb[0].mxu0 %v709
      %v909 = vpop.f32.mrb[0].mxu0
      %v910 = vadd.f32 0.0, %v909
      %v911 = vpop.f32.mrb[0].mxu0
      %912 = vmatprep.mubr.f32.mxu0 0.0
      %913 = vmatmul.mubr.f32.gmra.mrb[0].mxu0 %v712
      %v914 = vpop.f32.mrb[0].mxu0
      %v915 = vadd.f32 0.0, %v914
      %v916 = vpop.f32.mrb[0].mxu0
      %917 = vmatprep.mubr.f32.mxu0 0.0
      %918 = vmatmul.mubr.f32.gmra.mrb[0].mxu0 %v715
      %v919 = vpop.f32.mrb[0].mxu0
      %v920 = vadd.f32 0.0, %v919
      %v921 = vpop.f32.mrb[0].mxu0
      %922 = vmatprep.mubr.f32.mxu0 0.0
      %923 = vmatmul.mubr.f32.gmra.mrb[0].mxu0 %v718
      %v924 = vpop.f32.mrb[0].mxu0
      %v925 = vadd.f32 0.0, %v924
      %v926 = vpop.f32.mrb[0].mxu0
      %927 = vmatprep.mubr.f32.mxu0 0.0
      %928 = vmatmul.mubr.f32.gmra.mrb[0].mxu0 %v721
      %v929 = vpop.f32.mrb[0].mxu0
      %v930 = vadd.f32 0.0, %v929
      %v931 = vpop.f32.mrb[0].mxu0
      %932 = vdwg.mxu0
      %v933 = vmul.f32 %v790, %v790
      %v934 = vmul.f32 %v795, %v795
      %v935 = vmul.f32 %v800, %v800
      %v936 = vmul.f32 %v805, %v805
      %v937 = vmul.f32 %v810, %v810
      %v938 = vmul.f32 %v815, %v815
      %v939 = vmul.f32 %v820, %v820
      %v940 = vmul.f32 %v825, %v825
      %v941 = vsub.f32 %v895, %v933
      %v942 = vsub.f32 %v900, %v934
      %v943 = vsub.f32 %v905, %v935
      %v944 = vsub.f32 %v910, %v936
      %v945 = vsub.f32 %v915, %v937
      %v946 = vsub.f32 %v920, %v938
      %v947 = vsub.f32 %v925, %v939
      %v948 = vsub.f32 %v930, %v940
      %v949 = vmax.f32 %v941, 0.0
      %v950 = vmax.f32 %v942, 0.0
      %v951 = vmax.f32 %v943, 0.0
      %v952 = vmax.f32 %v944, 0.0
      %v953 = vmax.f32 %v945, 0.0
      %v954 = vmax.f32 %v946, 0.0
      %v955 = vmax.f32 %v947, 0.0
      %v956 = vmax.f32 %v948, 0.0
      %958 = vset.pattern.permute.xlu0 0
      %959 = vperm.xlu0 %958, %v790
      %v960 = vpop.permute.xlu0 %959
      %963 = vset.pattern.permute.xlu0 0
      %964 = vperm.xlu0 %963, %v795
      %v965 = vpop.permute.xlu0 %964
      %968 = vset.pattern.permute.xlu0 0
      %969 = vperm.xlu0 %968, %v800
      %v970 = vpop.permute.xlu0 %969
      %973 = vset.pattern.permute.xlu0 0
      %974 = vperm.xlu0 %973, %v805
      %v975 = vpop.permute.xlu0 %974
      %978 = vset.pattern.permute.xlu0 0
      %979 = vperm.xlu0 %978, %v810
      %v980 = vpop.permute.xlu0 %979
      %983 = vset.pattern.permute.xlu0 0
      %984 = vperm.xlu0 %983, %v815
      %v985 = vpop.permute.xlu0 %984
      %988 = vset.pattern.permute.xlu0 0
      %989 = vperm.xlu0 %988, %v820
      %v990 = vpop.permute.xlu0 %989
      %993 = vset.pattern.permute.xlu0 0
      %994 = vperm.xlu0 %993, %v825
      %v995 = vpop.permute.xlu0 %994
      %v997 = vsub.f32 %v459, %v960
      %v998 = vsub.f32 %v462, %v965
      %v999 = vsub.f32 %v467, %v970
      %v1000 = vsub.f32 %v470, %v975
      %v1001 = vsub.f32 %v475, %v980
      %v1002 = vsub.f32 %v478, %v985
      %v1003 = vsub.f32 %v483, %v990
      %v1004 = vsub.f32 %v486, %v995
      %v1005 = vadd.f32 %v949, 1e-05
      %v1006 = vadd.f32 %v950, 1e-05
      %v1007 = vadd.f32 %v951, 1e-05
      %v1008 = vadd.f32 %v952, 1e-05
      %v1009 = vadd.f32 %v953, 1e-05
      %v1010 = vadd.f32 %v954, 1e-05
      %v1011 = vadd.f32 %v955, 1e-05
      %v1012 = vadd.f32 %v956, 1e-05
      %v1013 = vrsqrt.pop %v1005
      %v1014 = vrsqrt.pop %v1006
      %v1015 = vrsqrt.pop %v1007
      %v1016 = vrsqrt.pop %v1008
      %v1017 = vrsqrt.pop %v1009
      %v1018 = vrsqrt.pop %v1010
      %v1019 = vrsqrt.pop %v1011
      %v1020 = vrsqrt.pop %v1012
      %1022 = vset.pattern.permute.xlu0 0
      %1023 = vperm.xlu0 %1022, %v1013
      %v1024 = vpop.permute.xlu0 %1023
      %1027 = vset.pattern.permute.xlu0 0
      %1028 = vperm.xlu0 %1027, %v1014
      %v1029 = vpop.permute.xlu0 %1028
      %1032 = vset.pattern.permute.xlu0 0
      %1033 = vperm.xlu0 %1032, %v1015
      %v1034 = vpop.permute.xlu0 %1033
      %1037 = vset.pattern.permute.xlu0 0
      %1038 = vperm.xlu0 %1037, %v1016
      %v1039 = vpop.permute.xlu0 %1038
      %1042 = vset.pattern.permute.xlu0 0
      %1043 = vperm.xlu0 %1042, %v1017
      %v1044 = vpop.permute.xlu0 %1043
      %1047 = vset.pattern.permute.xlu0 0
      %1048 = vperm.xlu0 %1047, %v1018
      %v1049 = vpop.permute.xlu0 %1048
      %1052 = vset.pattern.permute.xlu0 0
      %1053 = vperm.xlu0 %1052, %v1019
      %v1054 = vpop.permute.xlu0 %1053
      %1057 = vset.pattern.permute.xlu0 0
      %1058 = vperm.xlu0 %1057, %v1020
      %v1059 = vpop.permute.xlu0 %1058
      %v1061 = vmul.f32 %v997, %v1024
      %v1062 = vmul.f32 %v998, %v1029
      %v1063 = vmul.f32 %v999, %v1034
      %v1064 = vmul.f32 %v1000, %v1039
      %v1065 = vmul.f32 %v1001, %v1044
      %v1066 = vmul.f32 %v1002, %v1049
      %v1067 = vmul.f32 %v1003, %v1054
      %v1068 = vmul.f32 %v1004, %v1059
      %v1069 = vld [vmem:[%s3] sm:$0xff]
      %v1070 = vld [vmem:[%s3 + $0x8] sm:$0xff]
      %v1071 = vld [vmem:[%s3 + $0x10] sm:$0xff]
      %v1072 = vld [vmem:[%s3 + $0x18] sm:$0xff]
      %v1073 = vld [vmem:[%s3 + $0x20] sm:$0xff]
      %v1074 = vld [vmem:[%s3 + $0x28] sm:$0xff]
      %v1075 = vld [vmem:[%s3 + $0x30] sm:$0xff]
      %v1076 = vld [vmem:[%s3 + $0x38] sm:$0xff]
      %1078 = vset.pattern.permute.xlu0 0
      %1079 = vperm.xlu0 %1078, %v1069
      %v1080 = vpop.permute.xlu0 %1079
      %1083 = vset.pattern.permute.xlu0 0
      %1084 = vperm.xlu0 %1083, %v1070
      %v1085 = vpop.permute.xlu0 %1084
      %1088 = vset.pattern.permute.xlu0 0
      %1089 = vperm.xlu0 %1088, %v1071
      %v1090 = vpop.permute.xlu0 %1089
      %1093 = vset.pattern.permute.xlu0 0
      %1094 = vperm.xlu0 %1093, %v1072
      %v1095 = vpop.permute.xlu0 %1094
      %1098 = vset.pattern.permute.xlu0 0
      %1099 = vperm.xlu0 %1098, %v1073
      %v1100 = vpop.permute.xlu0 %1099
      %1103 = vset.pattern.permute.xlu0 0
      %1104 = vperm.xlu0 %1103, %v1074
      %v1105 = vpop.permute.xlu0 %1104
      %1108 = vset.pattern.permute.xlu0 0
      %1109 = vperm.xlu0 %1108, %v1075
      %v1110 = vpop.permute.xlu0 %1109
      %1113 = vset.pattern.permute.xlu0 0
      %1114 = vperm.xlu0 %1113, %v1076
      %v1115 = vpop.permute.xlu0 %1114
      %v1117 = vmul.f32 %v1061, %v1080
      %v1118 = vmul.f32 %v1062, %v1085
      %v1119 = vmul.f32 %v1063, %v1090
      %v1120 = vmul.f32 %v1064, %v1095
      %v1121 = vmul.f32 %v1065, %v1100
      %v1122 = vmul.f32 %v1066, %v1105
      %v1123 = vmul.f32 %v1067, %v1110
      %v1124 = vmul.f32 %v1068, %v1115
      %v1125 = vld [vmem:[%s4] sm:$0xff]
      %v1126 = vld [vmem:[%s4 + $0x8] sm:$0xff]
      %v1127 = vld [vmem:[%s4 + $0x10] sm:$0xff]
      %v1128 = vld [vmem:[%s4 + $0x18] sm:$0xff]
      %v1129 = vld [vmem:[%s4 + $0x20] sm:$0xff]
      %v1130 = vld [vmem:[%s4 + $0x28] sm:$0xff]
      %v1131 = vld [vmem:[%s4 + $0x30] sm:$0xff]
      %v1132 = vld [vmem:[%s4 + $0x38] sm:$0xff]
      %1134 = vset.pattern.permute.xlu0 0
      %1135 = vperm.xlu0 %1134, %v1125
      %v1136 = vpop.permute.xlu0 %1135
      %1139 = vset.pattern.permute.xlu0 0
      %1140 = vperm.xlu0 %1139, %v1126
      %v1141 = vpop.permute.xlu0 %1140
      %1144 = vset.pattern.permute.xlu0 0
      %1145 = vperm.xlu0 %1144, %v1127
      %v1146 = vpop.permute.xlu0 %1145
      %1149 = vset.pattern.permute.xlu0 0
      %1150 = vperm.xlu0 %1149, %v1128
      %v1151 = vpop.permute.xlu0 %1150
      %1154 = vset.pattern.permute.xlu0 0
      %1155 = vperm.xlu0 %1154, %v1129
      %v1156 = vpop.permute.xlu0 %1155
      %1159 = vset.pattern.permute.xlu0 0
      %1160 = vperm.xlu0 %1159, %v1130
      %v1161 = vpop.permute.xlu0 %1160
      %1164 = vset.pattern.permute.xlu0 0
      %1165 = vperm.xlu0 %1164, %v1131
      %v1166 = vpop.permute.xlu0 %1165
      %1169 = vset.pattern.permute.xlu0 0
      %1170 = vperm.xlu0 %1169, %v1132
      %v1171 = vpop.permute.xlu0 %1170
      %v1173 = vadd.f32 %v1117, %v1136
      %v1174 = vadd.f32 %v1118, %v1141
      %v1175 = vadd.f32 %v1119, %v1146
      %v1176 = vadd.f32 %v1120, %v1151
      %v1177 = vadd.f32 %v1121, %v1156
      %v1178 = vadd.f32 %v1122, %v1161
      %v1179 = vadd.f32 %v1123, %v1166
      %v1180 = vadd.f32 %v1124, %v1171
      %v1181 = vmax.f32 %v1173, 0.0
      %v1182 = vmax.f32 %v1174, 0.0
      %v1183 = vmax.f32 %v1175, 0.0
      %v1184 = vmax.f32 %v1176, 0.0
      %v1185 = vmax.f32 %v1177, 0.0
      %v1186 = vmax.f32 %v1178, 0.0
      %v1187 = vmax.f32 %v1179, 0.0
      %v1188 = vmax.f32 %v1180, 0.0
      %1189 = vst.msk [vmem:[%s278] sm:$0xff] %vm489, %v1181
      %1190 = vst.msk [vmem:[%s278 + $0x8] sm:$0xff] %vm489, %v1182
      %1191 = vst.msk [vmem:[%s278 + $0x10] sm:$0xff] %vm489, %v1183
      %1192 = vst.msk [vmem:[%s278 + $0x18] sm:$0xff] %vm489, %v1184
      %1193 = vst.msk [vmem:[%s278 + $0x20] sm:$0xff] %vm489, %v1185
      %1194 = vst.msk [vmem:[%s278 + $0x28] sm:$0xff] %vm489, %v1186
      %1195 = vst.msk [vmem:[%s278 + $0x30] sm:$0xff] %vm489, %v1187
      %1196 = vst.msk [vmem:[%s278 + $0x38] sm:$0xff] %vm489, %v1188
      %p1197 = scmp.lt.s32.totalorder %s18, 1
      %s1198 = scalar_select %p1197, %s18, 1
      %s1199 = smul.addr %s1198, 8
      %s1200 = smul.addr %s1199, 8
      %s1201 = scalar_lea.vmem %s7, %s1200
      // Predicated region
      $region49: #{stereonet_forward.19} parent=47 // pred_check
        %p1202 = pneg %p188
      $region50: #{stereonet_forward.19} parent=47 // pred_check_branch
        %1204 = sbr.rel (%p1202) target = $region52
      $region51: #{stereonet_forward.19} parent=47 // pred_region
        _
      $region52: #{stereonet_forward.19} parent=47 // pred_fallthru
        _
    $region48: #{stereonet_forward.19} parent=5 // pred_fallthru
      _
    %p1205 = scmp.le.s32.totalorder 2, %s13
    // Predicated region
    $region53: #{stereonet_forward.19} parent=5 // pred_check
      %p1206 = pneg %p1205
    $region54: #{stereonet_forward.19} parent=5 // pred_check_branch
      %1208 = sbr.rel (%p1206) target = $region56
    $region55: #{stereonet_forward.19} parent=5 // pred_region
      %s1209 = ssub.s32 %s13, 2
      // Predicated region
      $region57: #{stereonet_forward.19} parent=55 // pred_check
        %p1210 = pneg %p194
      $region58: #{stereonet_forward.19} parent=55 // pred_check_branch
        %1212 = sbr.rel (%p1210) target = $region60
      $region59: #{stereonet_forward.19} parent=55 // pred_region
        %p1213 = scmp.lt.s32.totalorder %s19, 1
        %s1214 = scalar_select %p1213, %s19, 1
        %s1215 = smul.addr %s1214, 8
        %s1216 = smul.addr %s1215, 8
        %s1217 = scalar_lea.vmem %s7, %s1216
      $region60: #{stereonet_forward.19} parent=55 // pred_fallthru
        _
    $region56: #{stereonet_forward.19} parent=5 // pred_fallthru
      _
  $region6: #{stereonet_forward.19} parent=0 // loop_footer
    %s17 = sadd.s32 1, %s13
  $region7: #{stereonet_forward.19} parent=0 // loop_footer_branch
    %12 = sbr.rel target = $region3
  $region8: #{stereonet_forward.19} parent=0 // loop_exit
    _

// kernel: stereonet_forward.20
$region0: #{stereonet_forward.20}
  #allocation0 [shape = 'u32[]', space=smem, size = 0x4, offset = 0x4, fixed_abs, tag = 'smem constant byte address 0x4 - core index']
  #allocation1 [shape = 'u32[144,128]{1,0:T(1,128)}', space=vmem, size = 0x12000, scoped, tag = 'internal scratch']
  %s0 = inlined_call_operand.vmem [shape: bf16[2,216,512], index: 0, kind: input, shape index: {}]
  %s1 = inlined_call_operand.vmem [shape: bf16[8,216], index: 1, kind: input, shape index: {}]
  %s2 = inlined_call_operand.vmem [shape: f32[8,1], index: 2, kind: input, shape index: {}]
  %s3 = inlined_call_operand.vmem [shape: f32[2,8,512], index: 3, kind: output, shape index: {}]
  %s4 = sld [smem:[#allocation0]]
  $region45: #{stereonet_forward.20} parent=0
    _
  %s6 = ssub.s32 1, %s4
  %s7 = scalar_select 0, %s6, %s4
  loop: start=0, step=1, limit=4
  $region2: #{stereonet_forward.20} parent=0 // loop_pre_header
    _
  $region3: #{stereonet_forward.20} parent=0 // loop_header
    %s9 = sphi 0, %s13
    %p10 = scmp.ge.s32.totalorder %s9, 4
    %s19 = sphi 0, %s21
    %s22 = sphi 0, %s19
    %s23 = sphi 0, %s22
    %s39 = sphi 0, %s23
    %s43 = sphi 0, %s43
    %s45 = sphi 0, %s43
    %s46 = sphi 0, %s45
    %s60 = sphi 0, %s46
    %s64 = sphi 0, %s64
    %s66 = sphi 0, %s64
    %s67 = sphi 0, %s66
    %s81 = sphi 0, %s67
    %s87 = sphi 0, %s89
    %s90 = sphi 0, %s87
    %s91 = sphi 0, %s90
    %s107 = sphi 0, %s91
  $region4: #{stereonet_forward.20} parent=0 // loop_header_branch
    %12 = sbr.rel (%p10) target = $region8
  $region5: #{stereonet_forward.20} parent=0 // loop_body
    %s14 = ssub.s32 %s9, 1
    %s15 = ssub.s32 %s9, 2
    %s16 = sadd.s32 %s9, 1
    %s17 = ssub.s32 %s9, %s16
    %p18 = scmp.eq.s32.totalorder %s17, 0
    %s20 = sadd.s32 %s19, 1
    %s21 = scalar_select %p18, %s19, %s20
    %p24 = pneg %p18
    %p25 = scmp.eq.s32.totalorder %s9, 1
    %p26 = por %p24, %p25
    %p27 = scmp.ne.s32.totalorder %s19, %s22
    %p28 = scmp.eq.s32.totalorder %s9, 0
    %p29 = por %p27, %p28
    %p30 = scmp.ne.s32.totalorder %s19, %s22
    %p31 = scmp.eq.s32.totalorder %s14, 1
    %p32 = por %p30, %p31
    %p33 = scmp.ne.s32.totalorder %s22, %s23
    %p34 = scmp.eq.s32.totalorder %s14, 0
    %p35 = por %p33, %p34
    %p36 = scmp.ne.s32.totalorder %s22, %s23
    %p37 = scmp.eq.s32.totalorder %s15, 1
    %p38 = por %p36, %p37
    %p40 = scmp.ne.s32.totalorder %s23, %s39
    %p41 = scmp.eq.s32.totalorder %s15, 0
    %p42 = por %p40, %p41
    %s44 = sadd.s32 %s43, 1
    %p47 = scmp.eq.s32.totalorder %s9, 1
    %p48 = scmp.ne.s32.totalorder %s43, %s45
    %p49 = scmp.eq.s32.totalorder %s9, 0
    %p50 = por %p48, %p49
    %p51 = scmp.ne.s32.totalorder %s43, %s45
    %p52 = scmp.eq.s32.totalorder %s14, 1
    %p53 = por %p51, %p52
    %p54 = scmp.ne.s32.totalorder %s45, %s46
    %p55 = scmp.eq.s32.totalorder %s14, 0
    %p56 = por %p54, %p55
    %p57 = scmp.ne.s32.totalorder %s45, %s46
    %p58 = scmp.eq.s32.totalorder %s15, 1
    %p59 = por %p57, %p58
    %p61 = scmp.ne.s32.totalorder %s46, %s60
    %p62 = scmp.eq.s32.totalorder %s15, 0
    %p63 = por %p61, %p62
    %s65 = sadd.s32 %s64, 1
    %p68 = scmp.eq.s32.totalorder %s9, 1
    %p69 = scmp.ne.s32.totalorder %s64, %s66
    %p70 = scmp.eq.s32.totalorder %s9, 0
    %p71 = por %p69, %p70
    %p72 = scmp.ne.s32.totalorder %s64, %s66
    %p73 = scmp.eq.s32.totalorder %s14, 1
    %p74 = por %p72, %p73
    %p75 = scmp.ne.s32.totalorder %s66, %s67
    %p76 = scmp.eq.s32.totalorder %s14, 0
    %p77 = por %p75, %p76
    %p78 = scmp.ne.s32.totalorder %s66, %s67
    %p79 = scmp.eq.s32.totalorder %s15, 1
    %p80 = por %p78, %p79
    %p82 = scmp.ne.s32.totalorder %s67, %s81
    %p83 = scmp.eq.s32.totalorder %s15, 0
    %p84 = por %p82, %p83
    %s85 = ssub.s32 %s9, %s16
    %p86 = scmp.eq.s32.totalorder %s85, 0
    %s88 = sadd.s32 %s87, 1
    %s89 = scalar_select %p86, %s87, %s88
    %p92 = pneg %p86
    %p93 = scmp.eq.s32.totalorder %s9, 1
    %p94 = por %p92, %p93
    %p95 = scmp.ne.s32.totalorder %s87, %s90
    %p96 = scmp.eq.s32.totalorder %s9, 0
    %p97 = por %p95, %p96
    %p98 = scmp.ne.s32.totalorder %s87, %s90
    %p99 = scmp.eq.s32.totalorder %s14, 1
    %p100 = por %p98, %p99
    %p101 = scmp.ne.s32.totalorder %s90, %s91
    %p102 = scmp.eq.s32.totalorder %s14, 0
    %p103 = por %p101, %p102
    %p104 = scmp.ne.s32.totalorder %s90, %s91
    %p105 = scmp.eq.s32.totalorder %s15, 1
    %p106 = por %p104, %p105
    %p108 = scmp.ne.s32.totalorder %s91, %s107
    %p109 = scmp.eq.s32.totalorder %s15, 0
    %p110 = por %p108, %p109
    %p111 = scmp.le.s32.totalorder 1, %s9
    %p112 = scmp.lt.s32.totalorder %s9, 3
    %p113 = pnand %p111, %p112
    %p114 = pneg %p113
    // Predicated region
    $region9: #{stereonet_forward.20} parent=5 // pred_check
      _
    $region10: #{stereonet_forward.20} parent=5 // pred_check_branch
      %116 = sbr.rel (%p113) target = $region12
    $region11: #{stereonet_forward.20} parent=5 // pred_region
      %s117 = ssub.s32 %s9, 1
      // Predicated region
      $region13: #{stereonet_forward.20} parent=11 // pred_check
        %p118 = pneg %p56
      $region14: #{stereonet_forward.20} parent=11 // pred_check_branch
        %120 = sbr.rel (%p118) target = $region16
      $region15: #{stereonet_forward.20} parent=11 // pred_region
        _
      $region16: #{stereonet_forward.20} parent=11 // pred_fallthru
        _
      // Predicated region
      $region17: #{stereonet_forward.20} parent=11 // pred_check
        %p121 = pneg %p77
      $region18: #{stereonet_forward.20} parent=11 // pred_check_branch
        %123 = sbr.rel (%p121) target = $region20
      $region19: #{stereonet_forward.20} parent=11 // pred_region
        _
      $region20: #{stereonet_forward.20} parent=11 // pred_fallthru
        _
    $region12: #{stereonet_forward.20} parent=5 // pred_fallthru
      _
    %p124 = scmp.lt.s32.totalorder %s9, 2
    // Predicated region
    $region21: #{stereonet_forward.20} parent=5 // pred_check
      %p125 = pneg %p124
    $region22: #{stereonet_forward.20} parent=5 // pred_check_branch
      %127 = sbr.rel (%p125) target = $region24
    $region23: #{stereonet_forward.20} parent=5 // pred_region
      // Predicated region
      $region25: #{stereonet_forward.20} parent=23 // pred_check
        %p128 = pneg %p29
      $region26: #{stereonet_forward.20} parent=23 // pred_check_branch
        %130 = sbr.rel (%p128) target = $region28
      $region27: #{stereonet_forward.20} parent=23 // pred_region
        %p131 = scmp.lt.s32.totalorder %s9, 1
        %s132 = scalar_select %p131, %s9, 1
        %s133 = smul.addr %s132, 108
        %s134 = smul.addr %s133, 4
        %s135 = scalar_lea.vmem %s0, %s134
      $region28: #{stereonet_forward.20} parent=23 // pred_fallthru
        _
    $region24: #{stereonet_forward.20} parent=5 // pred_fallthru
      _
    %p136 = scmp.le.s32.totalorder 1, %s9
    %p137 = scmp.lt.s32.totalorder %s9, 3
    %p138 = pnand %p136, %p137
    %p139 = pneg %p138
    // Predicated region
    $region29: #{stereonet_forward.20} parent=5 // pred_check
      _
    $region30: #{stereonet_forward.20} parent=5 // pred_check_branch
      %141 = sbr.rel (%p138) target = $region32
    $region31: #{stereonet_forward.20} parent=5 // pred_region
      %s142 = ssub.s32 %s9, 1
      %p143 = scmp.lt.s32.totalorder %s14, 1
      %s144 = scalar_select %p143, %s14, 1
      %s145 = smul.addr %s144, 108
      %s146 = smul.addr %s145, 4
      %s147 = scalar_lea.vmem %s0, %s146
      %p148 = pneg %p35
      %p149 = pneg %p32
      %p150 = pneg %p56
      %p151 = pneg %p53
      %p152 = pneg %p77
      %p153 = pneg %p74
      %p154 = pneg %p103
      %p155 = pneg %p100
      %p156 = scmp.lt.s32.totalorder %s14, 1
      %s157 = scalar_select %p156, %s14, 1
      %s158 = smul.addr %s157, 4
      %s159 = smul.addr %s158, 8
      %s160 = scalar_lea.vmem %s3, %s159
      %p161 = scmp.lt.s32.totalorder %s14, 1
      %s162 = scalar_select %p161, %s14, 1
      %s163 = smul.addr %s162, 108
      %s164 = smul.addr %s163, 4
      %s165 = scalar_lea.vmem %s0, %s164
      %p166 = scmp.lt.s32.totalorder %s14, 1
      %s167 = scalar_select %p166, %s14, 1
      %s168 = smul.addr %s167, 4
      %s169 = smul.addr %s168, 8
      %s170 = scalar_lea.vmem %s3, %s169
      %v172 = vld [vmem:[%s1] sm:$0xff]
      %v173 = vld [vmem:[%s165] sm:$0xff]
      %v174 = vld [vmem:[%s165 + $0x8] sm:$0xff]
      %v175 = vld [vmem:[%s165 + $0x10] sm:$0xff]
      %v176 = vld [vmem:[%s165 + $0x18] sm:$0xff]
      %v177 = vld [vmem:[%s165 + $0x20] sm:$0xff]
      %v178 = vld [vmem:[%s165 + $0x28] sm:$0xff]
      %v179 = vld [vmem:[%s165 + $0x30] sm:$0xff]
      %v180 = vld [vmem:[%s165 + $0x38] sm:$0xff]
      %v181 = vld [vmem:[%s165 + $0x40] sm:$0xff]
      %v182 = vld [vmem:[%s165 + $0x48] sm:$0xff]
      %v183 = vld [vmem:[%s165 + $0x50] sm:$0xff]
      %v184 = vld [vmem:[%s165 + $0x58] sm:$0xff]
      %v185 = vld [vmem:[%s165 + $0x60] sm:$0xff]
      %v186 = vld [vmem:[%s165 + $0x68] sm:$0xff]
      %v187 = vld [vmem:[%s165 + $0x70] sm:$0xff]
      %v188 = vld [vmem:[%s165 + $0x78] sm:$0xff]
      %v189 = vld [vmem:[%s165 + $0x80] sm:$0xff]
      %v190 = vld [vmem:[%s165 + $0x88] sm:$0xff]
      %v191 = vld [vmem:[%s165 + $0x90] sm:$0xff]
      %v192 = vld [vmem:[%s165 + $0x98] sm:$0xff]
      %v193 = vld [vmem:[%s165 + $0xa0] sm:$0xff]
      %v194 = vld [vmem:[%s165 + $0xa8] sm:$0xff]
      %v195 = vld [vmem:[%s165 + $0xb0] sm:$0xff]
      %v196 = vld [vmem:[%s165 + $0xb8] sm:$0xff]
      %v197 = vld [vmem:[%s165 + $0xc0] sm:$0xff]
      %v198 = vld [vmem:[%s165 + $0xc8] sm:$0xff]
      %v199 = vld [vmem:[%s165 + $0xd0] sm:$0xff]
      %v200 = vld [vmem:[%s165 + $0xd8] sm:$0xff]
      %v201 = vld [vmem:[%s165 + $0xe0] sm:$0xff]
      %v202 = vld [vmem:[%s165 + $0xe8] sm:$0xff]
      %v203 = vld [vmem:[%s165 + $0xf0] sm:$0xff]
      %v204 = vld [vmem:[%s165 + $0xf8] sm:$0xff]
      %v205 = vld [vmem:[%s165 + $0x100] sm:$0xff]
      %v206 = vld [vmem:[%s165 + $0x108] sm:$0xff]
      %v207 = vld [vmem:[%s165 + $0x110] sm:$0xff]
      %v208 = vld [vmem:[%s165 + $0x118] sm:$0xff]
      %v209 = vld [vmem:[%s165 + $0x120] sm:$0xff]
      %v210 = vld [vmem:[%s165 + $0x128] sm:$0xff]
      %v211 = vld [vmem:[%s165 + $0x130] sm:$0xff]
      %v212 = vld [vmem:[%s165 + $0x138] sm:$0xff]
      %v213 = vld [vmem:[%s165 + $0x140] sm:$0xff]
      %v214 = vld [vmem:[%s165 + $0x148] sm:$0xff]
      %v215 = vld [vmem:[%s165 + $0x150] sm:$0xff]
      %v216 = vld [vmem:[%s165 + $0x158] sm:$0xff]
      %v217 = vld [vmem:[%s165 + $0x160] sm:$0xff]
      %v218 = vld [vmem:[%s165 + $0x168] sm:$0xff]
      %v219 = vld [vmem:[%s165 + $0x170] sm:$0xff]
      %v220 = vld [vmem:[%s165 + $0x178] sm:$0xff]
      %v221 = vld [vmem:[%s165 + $0x180] sm:$0xff]
      %v222 = vld [vmem:[%s165 + $0x188] sm:$0xff]
      %v223 = vld [vmem:[%s165 + $0x190] sm:$0xff]
      %v224 = vld [vmem:[%s165 + $0x198] sm:$0xff]
      %v225 = vld [vmem:[%s165 + $0x1a0] sm:$0xff]
      %v226 = vld [vmem:[%s165 + $0x1a8] sm:$0xff]
      %v227 = vld [vmem:[%s2] sm:$0xff]
      %229 = vset.pattern.permute.xlu0 0
      %230 = vperm.xlu0 %229, %v227
      %v231 = vpop.permute.xlu0 %230
      %v234 = vunpack.c.l.b16 %v172
      %v235 = vunpack.c.h.b16 %v172
      %v236 = vpack.c.b16 %v234, %v234
      %v237 = vpack.c.b16 %v235, %v235
      %v293 = vunpack.c.l.b16 %v173
      %v294 = vunpack.c.h.b16 %v173
      %v295 = vunpack.c.l.b16 %v174
      %v296 = vunpack.c.h.b16 %v174
      %v297 = vunpack.c.l.b16 %v175
      %v298 = vunpack.c.h.b16 %v175
      %v299 = vunpack.c.l.b16 %v176
      %v300 = vunpack.c.h.b16 %v176
      %v301 = vunpack.c.l.b16 %v177
      %v302 = vunpack.c.h.b16 %v177
      %v303 = vunpack.c.l.b16 %v178
      %v304 = vunpack.c.h.b16 %v178
      %v305 = vunpack.c.l.b16 %v179
      %v306 = vunpack.c.h.b16 %v179
      %v307 = vunpack.c.l.b16 %v180
      %v308 = vunpack.c.h.b16 %v180
      %v309 = vunpack.c.l.b16 %v181
      %v310 = vunpack.c.h.b16 %v181
      %v311 = vunpack.c.l.b16 %v182
      %v312 = vunpack.c.h.b16 %v182
      %v313 = vunpack.c.l.b16 %v183
      %v314 = vunpack.c.h.b16 %v183
      %v315 = vunpack.c.l.b16 %v184
      %v316 = vunpack.c.h.b16 %v184
      %v317 = vunpack.c.l.b16 %v185
      %v318 = vunpack.c.h.b16 %v185
      %v319 = vunpack.c.l.b16 %v186
      %v320 = vunpack.c.h.b16 %v186
      %v321 = vunpack.c.l.b16 %v187
      %v322 = vunpack.c.h.b16 %v187
      %v323 = vunpack.c.l.b16 %v188
      %v324 = vunpack.c.h.b16 %v188
      %v325 = vunpack.c.l.b16 %v189
      %v326 = vunpack.c.h.b16 %v189
      %v327 = vunpack.c.l.b16 %v190
      %v328 = vunpack.c.h.b16 %v190
      %v329 = vunpack.c.l.b16 %v191
      %v330 = vunpack.c.h.b16 %v191
      %v331 = vunpack.c.l.b16 %v192
      %v332 = vunpack.c.h.b16 %v192
      %v333 = vunpack.c.l.b16 %v193
      %v334 = vunpack.c.h.b16 %v193
      %v335 = vunpack.c.l.b16 %v194
      %v336 = vunpack.c.h.b16 %v194
      %v337 = vunpack.c.l.b16 %v195
      %v338 = vunpack.c.h.b16 %v195
      %v339 = vunpack.c.l.b16 %v196
      %v340 = vunpack.c.h.b16 %v196
      %v341 = vunpack.c.l.b16 %v197
      %v342 = vunpack.c.h.b16 %v197
      %v343 = vunpack.c.l.b16 %v198
      %v344 = vunpack.c.h.b16 %v198
      %v345 = vunpack.c.l.b16 %v199
      %v346 = vunpack.c.h.b16 %v199
      %v347 = vunpack.c.l.b16 %v200
      %v348 = vunpack.c.h.b16 %v200
      %v349 = vunpack.c.l.b16 %v201
      %v350 = vunpack.c.h.b16 %v201
      %v351 = vunpack.c.l.b16 %v202
      %v352 = vunpack.c.h.b16 %v202
      %v353 = vunpack.c.l.b16 %v203
      %v354 = vunpack.c.h.b16 %v203
      %v355 = vunpack.c.l.b16 %v204
      %v356 = vunpack.c.h.b16 %v204
      %v357 = vunpack.c.l.b16 %v205
      %v358 = vunpack.c.h.b16 %v205
      %v359 = vunpack.c.l.b16 %v206
      %v360 = vunpack.c.h.b16 %v206
      %v361 = vunpack.c.l.b16 %v207
      %v362 = vunpack.c.h.b16 %v207
      %v363 = vunpack.c.l.b16 %v208
      %v364 = vunpack.c.h.b16 %v208
      %v365 = vunpack.c.l.b16 %v209
      %v366 = vunpack.c.h.b16 %v209
      %v367 = vunpack.c.l.b16 %v210
      %v368 = vunpack.c.h.b16 %v210
      %v369 = vunpack.c.l.b16 %v211
      %v370 = vunpack.c.h.b16 %v211
      %v371 = vunpack.c.l.b16 %v212
      %v372 = vunpack.c.h.b16 %v212
      %v373 = vunpack.c.l.b16 %v213
      %v374 = vunpack.c.h.b16 %v213
      %v375 = vunpack.c.l.b16 %v214
      %v376 = vunpack.c.h.b16 %v214
      %v377 = vunpack.c.l.b16 %v215
      %v378 = vunpack.c.h.b16 %v215
      %v379 = vunpack.c.l.b16 %v216
      %v380 = vunpack.c.h.b16 %v216
      %v381 = vunpack.c.l.b16 %v217
      %v382 = vunpack.c.h.b16 %v217
      %v383 = vunpack.c.l.b16 %v218
      %v384 = vunpack.c.h.b16 %v218
      %v385 = vunpack.c.l.b16 %v219
      %v386 = vunpack.c.h.b16 %v219
      %v387 = vunpack.c.l.b16 %v220
      %v388 = vunpack.c.h.b16 %v220
      %v389 = vunpack.c.l.b16 %v221
      %v390 = vunpack.c.h.b16 %v221
      %v391 = vunpack.c.l.b16 %v222
      %v392 = vunpack.c.h.b16 %v222
      %v393 = vunpack.c.l.b16 %v223
      %v394 = vunpack.c.h.b16 %v223
      %v395 = vunpack.c.l.b16 %v224
      %v396 = vunpack.c.h.b16 %v224
      %v397 = vunpack.c.l.b16 %v225
      %v398 = vunpack.c.h.b16 %v225
      %v399 = vunpack.c.l.b16 %v226
      %v400 = vunpack.c.h.b16 %v226
      %v401 = vpack.c.b16 %v297, %v293
      %v402 = vpack.c.b16 %v298, %v294
      %v403 = vpack.c.b16 %v299, %v295
      %v404 = vpack.c.b16 %v300, %v296
      %v405 = vpack.c.b16 %v305, %v301
      %v406 = vpack.c.b16 %v306, %v302
      %v407 = vpack.c.b16 %v307, %v303
      %v408 = vpack.c.b16 %v308, %v304
      %v409 = vpack.c.b16 %v313, %v309
      %v410 = vpack.c.b16 %v314, %v310
      %v411 = vpack.c.b16 %v315, %v311
      %v412 = vpack.c.b16 %v316, %v312
      %v413 = vpack.c.b16 %v321, %v317
      %v414 = vpack.c.b16 %v322, %v318
      %v415 = vpack.c.b16 %v323, %v319
      %v416 = vpack.c.b16 %v324, %v320
      %v417 = vpack.c.b16 %v329, %v325
      %v418 = vpack.c.b16 %v330, %v326
      %v419 = vpack.c.b16 %v331, %v327
      %v420 = vpack.c.b16 %v332, %v328
      %v421 = vpack.c.b16 %v337, %v333
      %v422 = vpack.c.b16 %v338, %v334
      %v423 = vpack.c.b16 %v339, %v335
      %v424 = vpack.c.b16 %v340, %v336
      %v425 = vpack.c.b16 %v345, %v341
      %v426 = vpack.c.b16 %v346, %v342
      %v427 = vpack.c.b16 %v347, %v343
      %v428 = vpack.c.b16 %v348, %v344
      %v429 = vpack.c.b16 %v353, %v349
      %v430 = vpack.c.b16 %v354, %v350
      %v431 = vpack.c.b16 %v355, %v351
      %v432 = vpack.c.b16 %v356, %v352
      %v433 = vpack.c.b16 %v361, %v357
      %v434 = vpack.c.b16 %v362, %v358
      %v435 = vpack.c.b16 %v363, %v359
      %v436 = vpack.c.b16 %v364, %v360
      %v437 = vpack.c.b16 %v369, %v365
      %v438 = vpack.c.b16 %v370, %v366
      %v439 = vpack.c.b16 %v371, %v367
      %v440 = vpack.c.b16 %v372, %v368
      %v441 = vpack.c.b16 %v377, %v373
      %v442 = vpack.c.b16 %v378, %v374
      %v443 = vpack.c.b16 %v379, %v375
      %v444 = vpack.c.b16 %v380, %v376
      %v445 = vpack.c.b16 %v385, %v381
      %v446 = vpack.c.b16 %v386, %v382
      %v447 = vpack.c.b16 %v387, %v383
      %v448 = vpack.c.b16 %v388, %v384
      %v449 = vpack.c.b16 %v393, %v389
      %v450 = vpack.c.b16 %v394, %v390
      %v451 = vpack.c.b16 %v395, %v391
      %v452 = vpack.c.b16 %v396, %v392
      %v453 = vpack.c.b16 %v397, %v397
      %v454 = vpack.c.b16 %v398, %v398
      %v455 = vpack.c.b16 %v399, %v399
      %v456 = vpack.c.b16 %v400, %v400
      %vm509 = vcmask 719872
      %v511 = vsel %vm509, %v237, 0
      %vm513 = vcmask 1043456
      %v515 = vsel %vm513, %v453, 0
      %v518 = vsel %vm513, %v454, 0
      %v521 = vsel %vm513, %v455, 0
      %v524 = vsel %vm513, %v456, 0
      %526 = vmatprep.subr.bf16.mxu0 %v402
      %527 = vmatpush1.bf16.msra.mxu0 %v401
      %528 = vmatprep.subr.bf16.mxu0 %v406
      %529 = vmatpush1.bf16.msra.mxu0 %v405
      %530 = vmatprep.subr.bf16.mxu0 %v410
      %531 = vmatpush1.bf16.msra.mxu0 %v409
      %532 = vmatprep.subr.bf16.mxu0 %v414
      %533 = vmatpush1.bf16.msra.mxu0 %v413
      %534 = vmatprep.subr.bf16.mxu0 %v418
      %535 = vmatpush1.bf16.msra.mxu0 %v417
      %536 = vmatprep.subr.bf16.mxu0 %v422
      %537 = vmatpush1.bf16.msra.mxu0 %v421
      %538 = vmatprep.subr.bf16.mxu0 %v426
      %539 = vmatpush1.bf16.msra.mxu0 %v425
      %540 = vmatprep.subr.bf16.mxu0 %v430
      %541 = vmatpush1.bf16.msra.mxu0 %v429
      %542 = vmatprep.subr.bf16.mxu0 %v434
      %543 = vmatpush1.bf16.msra.mxu0 %v433
      %544 = vmatprep.subr.bf16.mxu0 %v438
      %545 = vmatpush1.bf16.msra.mxu0 %v437
      %546 = vmatprep.subr.bf16.mxu0 %v442
      %547 = vmatpush1.bf16.msra.mxu0 %v441
      %548 = vmatprep.subr.bf16.mxu0 %v446
      %549 = vmatpush1.bf16.msra.mxu0 %v445
      %550 = vmatprep.subr.bf16.mxu0 %v450
      %551 = vmatpush1.bf16.msra.mxu0 %v449
      %552 = vmatprep.subr.bf16.mxu0 %v518
      %553 = vmatpush1.bf16.msra.mxu0 %v515
      %554 = vmatprep.subr.bf16.mxu0 0
      %555 = vmatpush1.bf16.msra.mxu0 0
      %556 = vmatprep.subr.bf16.mxu0 0
      %557 = vmatpush1.bf16.msra.mxu0 0
      %558 = vmatprep.mubr.bf16.mxu0 %v511
      %559 = vmatmul.mubr.bf16.gmra.mrb[0].mxu0 %v236
      %v560 = vpop.f32.mrb[0].mxu0
      %v561 = vadd.f32 %v231, %v560
      %v562 = vpop.f32.mrb[0].mxu0
      %v563 = vadd.f32 %v231, %v562
      %v564 = vpop.f32.mrb[0].mxu0
      %v565 = vpop.f32.mrb[0].mxu0
      %566 = vdwg.mxu0
      %567 = vmatprep.subr.bf16.mxu0 %v404
      %568 = vmatpush1.bf16.msra.mxu0 %v403
      %569 = vmatprep.subr.bf16.mxu0 %v408
      %570 = vmatpush1.bf16.msra.mxu0 %v407
      %571 = vmatprep.subr.bf16.mxu0 %v412
      %572 = vmatpush1.bf16.msra.mxu0 %v411
      %573 = vmatprep.subr.bf16.mxu0 %v416
      %574 = vmatpush1.bf16.msra.mxu0 %v415
      %575 = vmatprep.subr.bf16.mxu0 %v420
      %576 = vmatpush1.bf16.msra.mxu0 %v419
      %577 = vmatprep.subr.bf16.mxu0 %v424
      %578 = vmatpush1.bf16.msra.mxu0 %v423
      %579 = vmatprep.subr.bf16.mxu0 %v428
      %580 = vmatpush1.bf16.msra.mxu0 %v427
      %581 = vmatprep.subr.bf16.mxu0 %v432
      %582 = vmatpush1.bf16.msra.mxu0 %v431
      %583 = vmatprep.subr.bf16.mxu0 %v436
      %584 = vmatpush1.bf16.msra.mxu0 %v435
      %585 = vmatprep.subr.bf16.mxu0 %v440
      %586 = vmatpush1.bf16.msra.mxu0 %v439
      %587 = vmatprep.subr.bf16.mxu0 %v444
      %588 = vmatpush1.bf16.msra.mxu0 %v443
      %589 = vmatprep.subr.bf16.mxu0 %v448
      %590 = vmatpush1.bf16.msra.mxu0 %v447
      %591 = vmatprep.subr.bf16.mxu0 %v452
      %592 = vmatpush1.bf16.msra.mxu0 %v451
      %593 = vmatprep.subr.bf16.mxu0 %v524
      %594 = vmatpush1.bf16.msra.mxu0 %v521
      %595 = vmatprep.subr.bf16.mxu0 0
      %596 = vmatpush1.bf16.msra.mxu0 0
      %597 = vmatprep.subr.bf16.mxu0 0
      %598 = vmatpush1.bf16.msra.mxu0 0
      %599 = vmatprep.mubr.bf16.mxu0 %v511
      %600 = vmatmul.mubr.bf16.gmra.mrb[0].mxu0 %v236
      %v601 = vpop.f32.mrb[0].mxu0
      %v602 = vadd.f32 %v231, %v601
      %v603 = vpop.f32.mrb[0].mxu0
      %v604 = vadd.f32 %v231, %v603
      %v605 = vpop.f32.mrb[0].mxu0
      %v606 = vpop.f32.mrb[0].mxu0
      %607 = vdwg.mxu0
      %608 = vst [vmem:[%s170] sm:$0xff] %v561
      %609 = vst [vmem:[%s170 + $0x8] sm:$0xff] %v563
      %610 = vst [vmem:[%s170 + $0x10] sm:$0xff] %v602
      %611 = vst [vmem:[%s170 + $0x18] sm:$0xff] %v604
      %p612 = scmp.lt.s32.totalorder %s14, 1
      %s613 = scalar_select %p612, %s14, 1
      %s614 = smul.addr %s613, 4
      %s615 = smul.addr %s614, 8
      %s616 = scalar_lea.vmem %s3, %s615
      // Predicated region
      $region33: #{stereonet_forward.20} parent=31 // pred_check
        %p617 = pneg %p100
      $region34: #{stereonet_forward.20} parent=31 // pred_check_branch
        %619 = sbr.rel (%p617) target = $region36
      $region35: #{stereonet_forward.20} parent=31 // pred_region
        _
      $region36: #{stereonet_forward.20} parent=31 // pred_fallthru
        _
    $region32: #{stereonet_forward.20} parent=5 // pred_fallthru
      _
    %p620 = scmp.le.s32.totalorder 2, %s9
    // Predicated region
    $region37: #{stereonet_forward.20} parent=5 // pred_check
      %p621 = pneg %p620
    $region38: #{stereonet_forward.20} parent=5 // pred_check_branch
      %623 = sbr.rel (%p621) target = $region40
    $region39: #{stereonet_forward.20} parent=5 // pred_region
      %s624 = ssub.s32 %s9, 2
      // Predicated region
      $region41: #{stereonet_forward.20} parent=39 // pred_check
        %p625 = pneg %p106
      $region42: #{stereonet_forward.20} parent=39 // pred_check_branch
        %627 = sbr.rel (%p625) target = $region44
      $region43: #{stereonet_forward.20} parent=39 // pred_region
        %p628 = scmp.lt.s32.totalorder %s15, 1
        %s629 = scalar_select %p628, %s15, 1
        %s630 = smul.addr %s629, 4
        %s631 = smul.addr %s630, 8
        %s632 = scalar_lea.vmem %s3, %s631
      $region44: #{stereonet_forward.20} parent=39 // pred_fallthru
        _
    $region40: #{stereonet_forward.20} parent=5 // pred_fallthru
      _
  $region6: #{stereonet_forward.20} parent=0 // loop_footer
    %s13 = sadd.s32 1, %s9
  $region7: #{stereonet_forward.20} parent=0 // loop_footer_branch
    %8 = sbr.rel target = $region3
  $region8: #{stereonet_forward.20} parent=0 // loop_exit
    _

// kernel: stereonet_forward.21
$region0: #{stereonet_forward.21}
  #allocation0 [shape = 'u32[]', space=smem, size = 0x4, offset = 0x4, fixed_abs, tag = 'smem constant byte address 0x4 - core index']
  #allocation1 [shape = 'u32[144,128]{1,0:T(1,128)}', space=vmem, size = 0x12000, scoped, tag = 'internal scratch']
  %s0 = inlined_call_operand.vmem [shape: f32[2,8,64], index: 0, kind: input, shape index: {}]
  %s1 = inlined_call_operand.vmem [shape: f32[2,8,8], index: 1, kind: input, shape index: {}]
  %s2 = inlined_call_operand.vmem [shape: f32[2,8,64], index: 2, kind: output, shape index: {}]
  %s3 = sld [smem:[#allocation0]]
  $region18: #{stereonet_forward.21} parent=0
    _
  %s5 = ssub.s32 1, %s3
  %s6 = scalar_select 0, %s5, %s3
  // Predicated region
  $region2: #{stereonet_forward.21} parent=0 // pred_check
    _
  $region3: #{stereonet_forward.21} parent=0 // pred_check_branch
    %8 = sbr.rel (0) target = $region5
  $region4: #{stereonet_forward.21} parent=0 // pred_region
    _
  $region5: #{stereonet_forward.21} parent=0 // pred_fallthru
    _
  // Predicated region
  $region6: #{stereonet_forward.21} parent=0 // pred_check
    _
  $region7: #{stereonet_forward.21} parent=0 // pred_check_branch
    %10 = sbr.rel (0) target = $region9
  $region8: #{stereonet_forward.21} parent=0 // pred_region
    _
  $region9: #{stereonet_forward.21} parent=0 // pred_fallthru
    _
  %v11 = vld [vmem:[%s0] sm:$0xff]
  %v12 = vld [vmem:[%s0 + $0x8] sm:$0xff]
  %vm13 = vcmask 523264
  %v14 = vsel %vm13, %v11, -inf
  %v15 = vrot.slane %v14, 4
  %v16 = vmax.f32 %v14, %v15
  %v17 = vrot.slane %v16, 2
  %v18 = vmax.f32 %v16, %v17
  %v19 = vrot.slane %v18, 1
  %v20 = vmax.f32 %v18, %v19
  %v21 = vsel %vm13, %v12, -inf
  %v22 = vrot.slane %v21, 4
  %v23 = vmax.f32 %v21, %v22
  %v24 = vrot.slane %v23, 2
  %v25 = vmax.f32 %v23, %v24
  %v26 = vrot.slane %v25, 1
  %v27 = vmax.f32 %v25, %v26
  %v28 = vsub.f32 %v11, %v20
  %v29 = vsub.f32 %v12, %v27
  %v30 = vmul.f32 %v28, 1.442695
  %v31 = vpow.pop %v30
  %v32 = vmul.f32 %v29, 1.442695
  %v33 = vpow.pop %v32
  %v34 = vsel %vm13, %v31, 0.0
  %v35 = vrot.slane %v34, 4
  %v36 = vadd.f32 %v34, %v35
  %v37 = vrot.slane %v36, 2
  %v38 = vadd.f32 %v36, %v37
  %v39 = vrot.slane %v38, 1
  %v40 = vadd.f32 %v38, %v39
  %v41 = vsel %vm13, %v33, 0.0
  %v42 = vrot.slane %v41, 4
  %v43 = vadd.f32 %v41, %v42
  %v44 = vrot.slane %v43, 2
  %v45 = vadd.f32 %v43, %v44
  %v46 = vrot.slane %v45, 1
  %v47 = vadd.f32 %v45, %v46
  %v48 = vrcp.pop %v40
  %v49 = vmul.f32 %v31, %v48
  %v50 = vrcp.pop %v47
  %v51 = vmul.f32 %v33, %v50
  %v52 = vld [vmem:[%s1] sm:$0xff]
  %v53 = vld [vmem:[%s1 + $0x8] sm:$0xff]
  %vm54 = vcmask 64512
  %v56 = vsel %vm54, %v52, 0
  %58 = vmatprep.subr.mxu0 0.0
  %59 = vmatpush1.msra.mxu0 %v49
  %60 = vmatprep.subr.mxu0 0.0
  %61 = vmatpush1.msra.mxu0 0.0
  %62 = vmatprep.subr.mxu0 0.0
  %63 = vmatpush1.msra.mxu0 0.0
  %64 = vmatprep.subr.mxu0 0.0
  %65 = vmatpush1.msra.mxu0 0.0
  %66 = vmatprep.subr.mxu0 0.0
  %67 = vmatpush1.msra.mxu0 0.0
  %68 = vmatprep.subr.mxu0 0.0
  %69 = vmatpush1.msra.mxu0 0.0
  %70 = vmatprep.subr.mxu0 0.0
  %71 = vmatpush1.msra.mxu0 0.0
  %72 = vmatprep.subr.mxu0 0.0
  %73 = vmatpush1.msra.mxu0 0.0
  %74 = vmatprep.subr.mxu0 0.0
  %75 = vmatpush1.msra.mxu0 0.0
  %76 = vmatprep.subr.mxu0 0.0
  %77 = vmatpush1.msra.mxu0 0.0
  %78 = vmatprep.subr.mxu0 0.0
  %79 = vmatpush1.msra.mxu0 0.0
  %80 = vmatprep.subr.mxu0 0.0
  %81 = vmatpush1.msra.mxu0 0.0
  %82 = vmatprep.subr.mxu0 0.0
  %83 = vmatpush1.msra.mxu0 0.0
  %84 = vmatprep.subr.mxu0 0.0
  %85 = vmatpush1.msra.mxu0 0.0
  %86 = vmatprep.subr.mxu0 0.0
  %87 = vmatpush1.msra.mxu0 0.0
  %88 = vmatprep.subr.mxu0 0.0
  %89 = vmatpush1.msra.mxu0 0.0
  %90 = vmatprep.subr.mxu0 0.0
  %91 = vmatpush1.msra.mxu0 0.0
  %92 = vmatprep.subr.mxu0 0.0
  %93 = vmatpush1.msra.mxu0 0.0
  %94 = vmatprep.subr.mxu0 0.0
  %95 = vmatpush1.msra.mxu0 0.0
  %96 = vmatprep.subr.mxu0 0.0
  %97 = vmatpush1.msra.mxu0 0.0
  %98 = vmatprep.subr.mxu0 0.0
  %99 = vmatpush1.msra.mxu0 0.0
  %100 = vmatprep.subr.mxu0 0.0
  %101 = vmatpush1.msra.mxu0 0.0
  %102 = vmatprep.subr.mxu0 0.0
  %103 = vmatpush1.msra.mxu0 0.0
  %104 = vmatprep.subr.mxu0 0.0
  %105 = vmatpush1.msra.mxu0 0.0
  %106 = vmatprep.subr.mxu0 0.0
  %107 = vmatpush1.msra.mxu0 0.0
  %108 = vmatprep.subr.mxu0 0.0
  %109 = vmatpush1.msra.mxu0 0.0
  %110 = vmatprep.subr.mxu0 0.0
  %111 = vmatpush1.msra.mxu0 0.0
  %112 = vmatprep.subr.mxu0 0.0
  %113 = vmatpush1.msra.mxu0 0.0
  %114 = vmatprep.subr.mxu0 0.0
  %115 = vmatpush1.msra.mxu0 0.0
  %116 = vmatprep.subr.mxu0 0.0
  %117 = vmatpush1.msra.mxu0 0.0
  %118 = vmatprep.subr.mxu0 0.0
  %119 = vmatpush1.msra.mxu0 0.0
  %120 = vmatprep.subr.mxu0 0.0
  %121 = vmatpush1.msra.mxu0 0.0
  %122 = vmatprep.mubr.f32.mxu0 0.0
  %123 = vmatmul.mubr.f32.gmra.mrb[0].mxu0 %v56
  %v124 = vpop.f32.mrb[0].mxu0
  %v125 = vadd.f32 0.0, %v124
  %v126 = vpop.f32.mrb[0].mxu0
  %127 = vdwg.mxu0
  %v129 = vsel %vm54, %v53, 0
  %131 = vmatprep.subr.mxu0 0.0
  %132 = vmatpush1.msra.mxu0 %v51
  %133 = vmatprep.subr.mxu0 0.0
  %134 = vmatpush1.msra.mxu0 0.0
  %135 = vmatprep.subr.mxu0 0.0
  %136 = vmatpush1.msra.mxu0 0.0
  %137 = vmatprep.subr.mxu0 0.0
  %138 = vmatpush1.msra.mxu0 0.0
  %139 = vmatprep.subr.mxu0 0.0
  %140 = vmatpush1.msra.mxu0 0.0
  %141 = vmatprep.subr.mxu0 0.0
  %142 = vmatpush1.msra.mxu0 0.0
  %143 = vmatprep.subr.mxu0 0.0
  %144 = vmatpush1.msra.mxu0 0.0
  %145 = vmatprep.subr.mxu0 0.0
  %146 = vmatpush1.msra.mxu0 0.0
  %147 = vmatprep.subr.mxu0 0.0
  %148 = vmatpush1.msra.mxu0 0.0
  %149 = vmatprep.subr.mxu0 0.0
  %150 = vmatpush1.msra.mxu0 0.0
  %151 = vmatprep.subr.mxu0 0.0
  %152 = vmatpush1.msra.mxu0 0.0
  %153 = vmatprep.subr.mxu0 0.0
  %154 = vmatpush1.msra.mxu0 0.0
  %155 = vmatprep.subr.mxu0 0.0
  %156 = vmatpush1.msra.mxu0 0.0
  %157 = vmatprep.subr.mxu0 0.0
  %158 = vmatpush1.msra.mxu0 0.0
  %159 = vmatprep.subr.mxu0 0.0
  %160 = vmatpush1.msra.mxu0 0.0
  %161 = vmatprep.subr.mxu0 0.0
  %162 = vmatpush1.msra.mxu0 0.0
  %163 = vmatprep.subr.mxu0 0.0
  %164 = vmatpush1.msra.mxu0 0.0
  %165 = vmatprep.subr.mxu0 0.0
  %166 = vmatpush1.msra.mxu0 0.0
  %167 = vmatprep.subr.mxu0 0.0
  %168 = vmatpush1.msra.mxu0 0.0
  %169 = vmatprep.subr.mxu0 0.0
  %170 = vmatpush1.msra.mxu0 0.0
  %171 = vmatprep.subr.mxu0 0.0
  %172 = vmatpush1.msra.mxu0 0.0
  %173 = vmatprep.subr.mxu0 0.0
  %174 = vmatpush1.msra.mxu0 0.0
  %175 = vmatprep.subr.mxu0 0.0
  %176 = vmatpush1.msra.mxu0 0.0
  %177 = vmatprep.subr.mxu0 0.0
  %178 = vmatpush1.msra.mxu0 0.0
  %179 = vmatprep.subr.mxu0 0.0
  %180 = vmatpush1.msra.mxu0 0.0
  %181 = vmatprep.subr.mxu0 0.0
  %182 = vmatpush1.msra.mxu0 0.0
  %183 = vmatprep.subr.mxu0 0.0
  %184 = vmatpush1.msra.mxu0 0.0
  %185 = vmatprep.subr.mxu0 0.0
  %186 = vmatpush1.msra.mxu0 0.0
  %187 = vmatprep.subr.mxu0 0.0
  %188 = vmatpush1.msra.mxu0 0.0
  %189 = vmatprep.subr.mxu0 0.0
  %190 = vmatpush1.msra.mxu0 0.0
  %191 = vmatprep.subr.mxu0 0.0
  %192 = vmatpush1.msra.mxu0 0.0
  %193 = vmatprep.subr.mxu0 0.0
  %194 = vmatpush1.msra.mxu0 0.0
  %195 = vmatprep.mubr.f32.mxu0 0.0
  %196 = vmatmul.mubr.f32.gmra.mrb[0].mxu0 %v129
  %v197 = vpop.f32.mrb[0].mxu0
  %v198 = vadd.f32 0.0, %v197
  %v199 = vpop.f32.mrb[0].mxu0
  %200 = vdwg.mxu0
  %201 = vst.msk [vmem:[%s2] sm:$0xff] %vm13, %v125
  %202 = vst.msk [vmem:[%s2 + $0x8] sm:$0xff] %vm13, %v198
  // Predicated region
  $region10: #{stereonet_forward.21} parent=0 // pred_check
    _
  $region11: #{stereonet_forward.21} parent=0 // pred_check_branch
    %204 = sbr.rel (0) target = $region13
  $region12: #{stereonet_forward.21} parent=0 // pred_region
    _
  $region13: #{stereonet_forward.21} parent=0 // pred_fallthru
    _
  // Predicated region
  $region14: #{stereonet_forward.21} parent=0 // pred_check
    _
  $region15: #{stereonet_forward.21} parent=0 // pred_check_branch
    %206 = sbr.rel (0) target = $region17
  $region16: #{stereonet_forward.21} parent=0 // pred_region
    _
  $region17: #{stereonet_forward.21} parent=0 // pred_fallthru
    _

</llo_original>
